<compile_context>
chip_gen: v6e
topology: v6e:2x2x1
jax: 0.10.0
libtpu: 0.0.40
codegen_flags: <defaults>
</compile_context>

<pallas_src>
import functools
import math

import jax
import jax.numpy as jnp
import numpy as np
from jax.experimental import pallas as pl
from jax.experimental.pallas import tpu as pltpu

_LN_EPS = 1e-5
_NEG = -1e9  # cross-window mask value (exp underflows to exactly 0 in f32)


# ----------------------------------------------------------------------------- kernel
def _basic_layer_kernel(x_ref, bias_ref, wqkv_ref, wproj_ref, wm1_ref, wm2_ref,
                        vec_ref, o_ref, *, depth, B, L, C, nh, hd, Ch, scale):
    T = B * L
    x = x_ref[...]                                   # (T, C) f32, resident across blocks

    def layer_norm(z, g, b):
        mu = jnp.mean(z, axis=-1, keepdims=True)
        d = z - mu
        var = jnp.mean(d * d, axis=-1, keepdims=True)
        return d * jax.lax.rsqrt(var + _LN_EPS) * g + b

    for d in range(depth):                           # static unroll over blocks
        vec = vec_ref[d]                             # (8, VW) f32
        g1, b1 = vec[0:1, :C], vec[1:2, :C]
        g2, b2 = vec[2:3, :C], vec[3:4, :C]
        qkv_b = vec[4:5, :3 * C]
        proj_b = vec[5:6, :C]
        mlp_b1 = vec[6:7, :Ch]
        mlp_b2 = vec[7:8, :C]

        # ---- attention branch (dense-bias formulation of shifted-window MHSA) --------
        xn = layer_norm(x, g1, b1)
        qkv = jnp.dot(xn.astype(jnp.bfloat16), wqkv_ref[d],
                      preferred_element_type=jnp.float32) + qkv_b      # (T, 3C) f32

        attn_out = jnp.zeros((T, C), jnp.float32)
        for h in range(nh):                          # static loop over heads
            q = (qkv[:, h * hd:(h + 1) * hd] * scale).reshape(B, L, hd)
            k = qkv[:, C + h * hd:C + (h + 1) * hd].reshape(B, L, hd)
            v = qkv[:, 2 * C + h * hd:2 * C + (h + 1) * hd].reshape(B, L, hd)

            s = jnp.einsum('bld,bmd->blm', q.astype(jnp.bfloat16),
                           k.astype(jnp.bfloat16),
                           preferred_element_type=jnp.float32)          # (B, L, L)
            s = s + bias_ref[d, h][None, :, :]        # rel-pos bias + window/shift mask

            m = jnp.max(s, axis=-1, keepdims=True)
            p = jnp.exp(s - m)
            a = p * pl.reciprocal(jnp.sum(p, axis=-1, keepdims=True), approx=True)

            o = jnp.einsum('blm,bmd->bld', a.astype(jnp.bfloat16),
                           v.astype(jnp.bfloat16),
                           preferred_element_type=jnp.float32)          # (B, L, hd)
            attn_out = attn_out + jnp.dot(
                o.reshape(T, hd).astype(jnp.bfloat16),
                wproj_ref[d, h],                      # (hd, C) rows of W_proj for head h
                preferred_element_type=jnp.float32)

        x = x + attn_out + proj_b                     # residual 1

        # ---- MLP branch ----------------------------------------------------------------
        xn2 = layer_norm(x, g2, b2)
        hmid = jnp.dot(xn2.astype(jnp.bfloat16), wm1_ref[d],
                       preferred_element_type=jnp.float32) + mlp_b1
        hmid = jax.nn.gelu(hmid, approximate=True)
        y = jnp.dot(hmid.astype(jnp.bfloat16), wm2_ref[d],
                    preferred_element_type=jnp.float32) + mlp_b2
        x = x + y                                     # residual 2

    o_ref[...] = x


def build_layer_fn(kp, *, depth, B, L, C, nh):
    """Returns jit'ed forward(x) for x: (B, L, C). One pallas_call for the whole stage."""
    hd = C // nh
    Ch = kp["w_mlp1"].shape[-1]
    scale = hd ** -0.5
    T = B * L
    kernel = functools.partial(_basic_layer_kernel, depth=depth, B=B, L=L, C=C,
                               nh=nh, hd=hd, Ch=Ch, scale=scale)
    vmem_spec = pl.BlockSpec(memory_space=pltpu.MemorySpace.VMEM)

    @jax.jit
    def forward(x):
        out = pl.pallas_call(
            kernel,
            out_shape=jax.ShapeDtypeStruct((T, C), jnp.float32),
            in_specs=[vmem_spec] * 7,
            out_specs=vmem_spec,
            compiler_params=pltpu.CompilerParams(vmem_limit_bytes=32 * 1024 * 1024),
        )(x.reshape(T, C), kp["bias"], kp["w_qkv"], kp["w_proj"],
          kp["w_mlp1"], kp["w_mlp2"], kp["vecs"])
        return out.reshape(B, L, C)

    return forward


# --------------------------------------------------------------------- param building
def _linear_params(key, fan_in, fan_out):
    kw, kb = jax.random.split(key)
    bound = 1.0 / math.sqrt(fan_in)
    w = jax.random.uniform(kw, (fan_in, fan_out), jnp.float32, -bound, bound)
    b = jax.random.uniform(kb, (fan_out,), jnp.float32, -bound, bound)
    return w, b


def _relative_position_index(ws):
    coords = np.stack(np.meshgrid(np.arange(ws), np.arange(ws), indexing="ij"))
    coords_flat = coords.reshape(2, -1)
    rel = coords_flat[:, :, None] - coords_flat[:, None, :]
    rel = rel.transpose(1, 2, 0).astype(np.int64)
    rel[:, :, 0] += ws - 1
    rel[:, :, 1] += ws - 1
    rel[:, :, 0] *= 2 * ws - 1
    return rel.sum(-1)                                                  # (N, N)


def _np_window_partition(x, ws):
    B, H, W, C = x.shape
    x = x.reshape(B, H // ws, ws, W // ws, ws, C)
    return x.transpose(0, 1, 3, 2, 4, 5).reshape(-1, ws, ws, C)


def _shift_attn_mask(H, W, ws, shift):
    img_mask = np.zeros((1, H, W, 1), np.float32)
    slices = (slice(0, -ws), slice(-ws, -shift), slice(-shift, None))
    cnt = 0
    for hs in slices:
        for wsl in slices:
            img_mask[:, hs, wsl, :] = cnt
            cnt += 1
    mw = _np_window_partition(img_mask, ws).reshape(-1, ws * ws)        # (nW, N)
    am = mw[:, None, :] - mw[:, :, None]
    return np.where(am != 0, -100.0, 0.0).astype(np.float32)            # (nW, N, N)


def _dense_window_bias(rpb, mask, H, W, ws, shift):
    """Fold roll + window partition + rel-pos bias + shift mask into a dense (nh, L, L) bias."""
    L = H * W
    nh = rpb.shape[0]
    idx = np.arange(L).reshape(H, W)
    rolled = np.roll(idx, (-shift, -shift), axis=(0, 1))
    wins = (rolled.reshape(H // ws, ws, W // ws, ws)
                  .transpose(0, 2, 1, 3)
                  .reshape(-1, ws * ws))                                # (nW, N) token ids
    dense = np.full((nh, L, L), _NEG, np.float32)
    for w, ids in enumerate(wins):
        dense[np.ix_(np.arange(nh), ids, ids)] = rpb + mask[w][None]
    return dense


def init_layer_params(key, *, depth, C, nh, ws, H, W, mlp_ratio):
    N = ws * ws
    nW = (H // ws) * (W // ws)
    Ch = int(C * mlp_ratio)
    hd = C // nh
    VW = max(3 * C, Ch)

    blocks = []            # f32 per-block params for the pure-JAX reference
    dense_list, vecs_list = [], []
    wqkv_l, wproj_l, wm1_l, wm2_l = [], [], [], []

    for i in range(depth):
        key, kb = jax.random.split(key)
        shift = 0 if i % 2 == 0 else ws // 2
        k_qkv, k_proj, k_m1, k_m2, k_rpb = jax.random.split(kb, 5)

        w_qkv, b_qkv = _linear_params(k_qkv, C, 3 * C)
        w_proj, b_proj = _linear_params(k_proj, C, C)
        w_m1, b_m1 = _linear_params(k_m1, C, Ch)
        w_m2, b_m2 = _linear_params(k_m2, Ch, C)
        g1 = jnp.ones((C,), jnp.float32); b1 = jnp.zeros((C,), jnp.float32)
        g2 = jnp.ones((C,), jnp.float32); b2 = jnp.zeros((C,), jnp.float32)

        rpb_table = 0.02 * jax.random.normal(k_rpb, ((2 * ws - 1) ** 2, nh), jnp.float32)
        rel_idx = _relative_position_index(ws)
        rpb = rpb_table[rel_idx.reshape(-1)].reshape(N, N, nh).transpose(2, 0, 1)  # (nh,N,N)

        if shift > 0:
            mask_np = _shift_attn_mask(H, W, ws, shift)                 # (nW, N, N)
            mask = jnp.asarray(mask_np)
        else:
            mask_np = np.zeros((nW, N, N), np.float32)
            mask = None

        blocks.append(dict(w_qkv=w_qkv, b_qkv=b_qkv, w_proj=w_proj, b_proj=b_proj,
                           w_mlp1=w_m1, b_mlp1=b_m1, w_mlp2=w_m2, b_mlp2=b_m2,
                           g1=g1, b1=b1, g2=g2, b2=b2, rpb=rpb, mask=mask, shift=shift))

        dense_list.append(_dense_window_bias(np.asarray(rpb), mask_np, H, W, ws, shift))

        vecs = jnp.zeros((8, VW), jnp.float32)
        vecs = vecs.at[0, :C].set(g1).at[1, :C].set(b1)
        vecs = vecs.at[2, :C].set(g2).at[3, :C].set(b2)
        vecs = vecs.at[4, :3 * C].set(b_qkv)
        vecs = vecs.at[5, :C].set(b_proj)
        vecs = vecs.at[6, :Ch].set(b_m1)
        vecs = vecs.at[7, :C].set(b_m2)
        vecs_list.append(vecs)

        wqkv_l.append(w_qkv)
        wproj_l.append(w_proj.reshape(nh, hd, C))      # per-head rows of W_proj
        wm1_l.append(w_m1)
        wm2_l.append(w_m2)

    kernel_params = dict(
        bias=jnp.asarray(np.stack(dense_list), jnp.float32),            # (depth, nh, L, L)
        w_qkv=jnp.stack(wqkv_l).astype(jnp.bfloat16),                    # (depth, C, 3C)
        w_proj=jnp.stack(wproj_l).astype(jnp.bfloat16),                  # (depth, nh, hd, C)
        w_mlp1=jnp.stack(wm1_l).astype(jnp.bfloat16),                    # (depth, C, Ch)
        w_mlp2=jnp.stack(wm2_l).astype(jnp.bfloat16),                    # (depth, Ch, C)
        vecs=jnp.stack(vecs_list),                                       # (depth, 8, VW)
    )
    return blocks, kernel_params


# --------------------------------------------------------------------- pure-JAX reference
def _layer_norm_ref(x, g, b):
    mu = jnp.mean(x, axis=-1, keepdims=True)
    var = jnp.mean((x - mu) ** 2, axis=-1, keepdims=True)
    return (x - mu) / jnp.sqrt(var + _LN_EPS) * g + b


def _swin_block_ref(x, p, H, W, ws, shift, nh):
    B, L, C = x.shape
    hd = C // nh
    scale = hd ** -0.5
    shortcut = x
    xn = _layer_norm_ref(x, p["g1"], p["b1"]).reshape(B, H, W, C)
    if shift > 0:
        xn = jnp.roll(xn, (-shift, -shift), axis=(1, 2))
    xw = (xn.reshape(B, H // ws, ws, W // ws, ws, C)
            .transpose(0, 1, 3, 2, 4, 5)
            .reshape(-1, ws * ws, C))
    B_, N, _ = xw.shape
    qkv = xw @ p["w_qkv"] + p["b_qkv"]
    qkv = qkv.reshape(B_, N, 3, nh, hd).transpose(2, 0, 3, 1, 4)
    q, k, v = qkv[0] * scale, qkv[1], qkv[2]
    attn = q @ jnp.swapaxes(k, -2, -1) + p["rpb"][None]
    if p["mask"] is not None:
        nW = p["mask"].shape[0]
        attn = attn.reshape(B_ // nW, nW, nh, N, N) + p["mask"][None, :, None]
        attn = attn.reshape(B_, nh, N, N)
    attn = jax.nn.softmax(attn, axis=-1)
    out = (attn @ v).transpose(0, 2, 1, 3).reshape(B_, N, C)
    out = out @ p["w_proj"] + p["b_proj"]
    out = (out.reshape(B, H // ws, W // ws, ws, ws, C)
              .transpose(0, 1, 3, 2, 4, 5)
              .reshape(B, H, W, C))
    if shift > 0:
        out = jnp.roll(out, (shift, shift), axis=(1, 2))
    x = shortcut + out.reshape(B, L, C)
    xn2 = _layer_norm_ref(x, p["g2"], p["b2"])
    h = jax.nn.gelu(xn2 @ p["w_mlp1"] + p["b_mlp1"], approximate=True)
    return x + h @ p["w_mlp2"] + p["b_mlp2"]


def _basic_layer_ref(x, blocks, H, W, ws, nh):
    for p in blocks:
        x = _swin_block_ref(x, p, H, W, ws, p["shift"], nh)
    return x


# --------------------------------------------------------------------------------- main
if __name__ == "__main__":
    # BasicLayer(dim, out_dim=C, input_resolution=(16,16), depth=2, num_heads=4,
    # window_size=4, downsample=None): blocks run at (8, 8) resolution -> L = 64 tokens.
    C = 32
    num_heads = 4
    window_size = 4
    depth = 2
    mlp_ratio = 4.0
    input_resolution = (16, 16)
    Hb, Wb = input_resolution[0] // 2, input_resolution[1] // 2
    B = 2
    L = Hb * Wb

    key = jax.random.PRNGKey(0)
    kx, kp = jax.random.split(key)
    x = jax.random.normal(kx, (B, L, C), jnp.float32)

    blocks, kernel_params = init_layer_params(
        kp, depth=depth, C=C, nh=num_heads, ws=window_size, H=Hb, W=Wb,
        mlp_ratio=mlp_ratio)

    layer = build_layer_fn(kernel_params, depth=depth, B=B, L=L, C=C, nh=num_heads)
    out = jax.block_until_ready(layer(x))

    ref = _basic_layer_ref(x, blocks, Hb, Wb, window_size, num_heads)
    assert out.shape == (B, L, C)
    err = float(jnp.max(jnp.abs(out - ref)))
    # Tolerance loosened vs. a pure-f32 reference because the kernel feeds the MXU bf16
    # operands (f32 accumulation), per the performance review.
    assert jnp.allclose(out, ref, atol=5e-2, rtol=5e-2), f"max abs err {err}"

    print("KERNEL_OK")
</pallas_src>

<mosaic_0001>
module attributes {stable_mosaic.version = 11 : i64} {
  func.func @_basic_layer_kernel(%arg0: memref<128x32xf32, #tpu.memory_space<vmem>>, %arg1: memref<2x4x64x64xf32, #tpu.memory_space<vmem>>, %arg2: memref<2x32x96xbf16, #tpu.memory_space<vmem>>, %arg3: memref<2x4x8x32xbf16, #tpu.memory_space<vmem>>, %arg4: memref<2x32x128xbf16, #tpu.memory_space<vmem>>, %arg5: memref<2x128x32xbf16, #tpu.memory_space<vmem>>, %arg6: memref<2x8x128xf32, #tpu.memory_space<vmem>>, %arg7: memref<128x32xf32, #tpu.memory_space<vmem>>) attributes {dimension_semantics = [], scalar_prefetch = 0 : i64, scratch_operands = 0 : i64, tpu.core_type = #tpu.core_type<tc>} {
    %c0 = arith.constant 0 : index
    %c0_0 = arith.constant 0 : index
    %0 = vector.load %arg0[%c0, %c0_0] : memref<128x32xf32, #tpu.memory_space<vmem>>, vector<128x32xf32>
    %c0_1 = arith.constant 0 : index
    %c0_2 = arith.constant 0 : index
    %c0_3 = arith.constant 0 : index
    %1 = vector.load %arg6[%c0_1, %c0_2, %c0_3] : memref<2x8x128xf32, #tpu.memory_space<vmem>>, vector<1x8x128xf32>
    %2 = vector.shape_cast %1 : vector<1x8x128xf32> to vector<8x128xf32>
    %3 = vector.extract_strided_slice %2 {offsets = [0, 0], sizes = [1, 32], strides = [1, 1]} : vector<8x128xf32> to vector<1x32xf32>
    %4 = vector.extract_strided_slice %2 {offsets = [1, 0], sizes = [1, 32], strides = [1, 1]} : vector<8x128xf32> to vector<1x32xf32>
    %5 = vector.extract_strided_slice %2 {offsets = [2, 0], sizes = [1, 32], strides = [1, 1]} : vector<8x128xf32> to vector<1x32xf32>
    %6 = vector.extract_strided_slice %2 {offsets = [3, 0], sizes = [1, 32], strides = [1, 1]} : vector<8x128xf32> to vector<1x32xf32>
    %7 = vector.extract_strided_slice %2 {offsets = [4, 0], sizes = [1, 96], strides = [1, 1]} : vector<8x128xf32> to vector<1x96xf32>
    %8 = vector.extract_strided_slice %2 {offsets = [5, 0], sizes = [1, 32], strides = [1, 1]} : vector<8x128xf32> to vector<1x32xf32>
    %9 = vector.extract_strided_slice %2 {offsets = [6, 0], sizes = [1, 128], strides = [1, 1]} : vector<8x128xf32> to vector<1x128xf32>
    %10 = vector.extract_strided_slice %2 {offsets = [7, 0], sizes = [1, 32], strides = [1, 1]} : vector<8x128xf32> to vector<1x32xf32>
    %cst = arith.constant dense<0.000000e+00> : vector<128xf32>
    %11 = vector.multi_reduction <add>, %0, %cst [1] : vector<128x32xf32> to vector<128xf32>
    %12 = vector.shape_cast %11 : vector<128xf32> to vector<128x1xf32>
    %cst_4 = arith.constant 3.200000e+01 : f32
    %13 = vector.broadcast %cst_4 : f32 to vector<128x1xf32>
    %14 = arith.divf %12, %13 : vector<128x1xf32>
    %15 = vector.broadcast %14 : vector<128x1xf32> to vector<128x32xf32>
    %16 = arith.subf %0, %15 : vector<128x32xf32>
    %17 = arith.mulf %16, %16 : vector<128x32xf32>
    %cst_5 = arith.constant dense<0.000000e+00> : vector<128xf32>
    %18 = vector.multi_reduction <add>, %17, %cst_5 [1] : vector<128x32xf32> to vector<128xf32>
    %19 = vector.shape_cast %18 : vector<128xf32> to vector<128x1xf32>
    %cst_6 = arith.constant 3.200000e+01 : f32
    %20 = vector.broadcast %cst_6 : f32 to vector<128x1xf32>
    %21 = arith.divf %19, %20 : vector<128x1xf32>
    %cst_7 = arith.constant 9.99999974E-6 : f32
    %22 = vector.broadcast %cst_7 : f32 to vector<128x1xf32>
    %23 = arith.addf %21, %22 : vector<128x1xf32>
    %24 = math.rsqrt %23 : vector<128x1xf32>
    %25 = vector.broadcast %24 : vector<128x1xf32> to vector<128x32xf32>
    %26 = arith.mulf %16, %25 : vector<128x32xf32>
    %27 = vector.broadcast %3 : vector<1x32xf32> to vector<128x32xf32>
    %28 = arith.mulf %26, %27 : vector<128x32xf32>
    %29 = vector.broadcast %4 : vector<1x32xf32> to vector<128x32xf32>
    %30 = arith.addf %28, %29 : vector<128x32xf32>
    %31 = arith.truncf %30 : vector<128x32xf32> to vector<128x32xbf16>
    %c0_8 = arith.constant 0 : index
    %c0_9 = arith.constant 0 : index
    %c0_10 = arith.constant 0 : index
    %32 = vector.load %arg2[%c0_8, %c0_9, %c0_10] : memref<2x32x96xbf16, #tpu.memory_space<vmem>>, vector<1x32x96xbf16>
    %33 = vector.shape_cast %32 : vector<1x32x96xbf16> to vector<32x96xbf16>
    %cst_11 = arith.constant dense<0.000000e+00> : vector<128x96xf32>
    %34 = tpu.matmul %31, %33, %cst_11 {dimension_numbers = #tpu.dot_dimension_numbers<[1], [0], [0], [1], [0, 0, 1, 1], [], []>} : vector<128x32xbf16>, vector<32x96xbf16>, vector<128x96xf32> -> vector<128x96xf32>
    %35 = vector.broadcast %7 : vector<1x96xf32> to vector<128x96xf32>
    %36 = arith.addf %34, %35 : vector<128x96xf32>
    %cst_12 = arith.constant 0.000000e+00 : f32
    %37 = vector.broadcast %cst_12 : f32 to vector<128x32xf32>
    %38 = vector.extract_strided_slice %36 {offsets = [0, 0], sizes = [128, 8], strides = [1, 1]} : vector<128x96xf32> to vector<128x8xf32>
    %cst_13 = arith.constant 0.353553385 : f32
    %39 = vector.broadcast %cst_13 : f32 to vector<128x8xf32>
    %40 = arith.mulf %38, %39 : vector<128x8xf32>
    %41 = vector.shape_cast %40 : vector<128x8xf32> to vector<2x64x8xf32>
    %42 = vector.extract_strided_slice %36 {offsets = [0, 32], sizes = [128, 8], strides = [1, 1]} : vector<128x96xf32> to vector<128x8xf32>
    %43 = vector.shape_cast %42 : vector<128x8xf32> to vector<2x64x8xf32>
    %44 = vector.extract_strided_slice %36 {offsets = [0, 64], sizes = [128, 8], strides = [1, 1]} : vector<128x96xf32> to vector<128x8xf32>
    %45 = vector.shape_cast %44 : vector<128x8xf32> to vector<2x64x8xf32>
    %46 = arith.truncf %41 : vector<2x64x8xf32> to vector<2x64x8xbf16>
    %47 = arith.truncf %43 : vector<2x64x8xf32> to vector<2x64x8xbf16>
    "tpu.trace_start"() <{level = 10 : i32, message = "bld,bmd->blm"}> : () -> ()
    %cst_14 = arith.constant dense<0.000000e+00> : vector<2x64x64xf32>
    %48 = tpu.matmul %46, %47, %cst_14 {dimension_numbers = #tpu.dot_dimension_numbers<[2], [2], [1], [1], [0, 0, 0, 1, 1, 1], [0], [0]>} : vector<2x64x8xbf16>, vector<2x64x8xbf16>, vector<2x64x64xf32> -> vector<2x64x64xf32>
    "tpu.trace_stop"() : () -> ()
    %c0_15 = arith.constant 0 : index
    %c0_16 = arith.constant 0 : index
    %c0_17 = arith.constant 0 : index
    %c0_18 = arith.constant 0 : index
    %49 = vector.load %arg1[%c0_15, %c0_16, %c0_17, %c0_18] : memref<2x4x64x64xf32, #tpu.memory_space<vmem>>, vector<1x1x64x64xf32>
    %50 = vector.shape_cast %49 : vector<1x1x64x64xf32> to vector<64x64xf32>
    %51 = vector.shape_cast %50 : vector<64x64xf32> to vector<1x64x64xf32>
    %52 = vector.broadcast %51 : vector<1x64x64xf32> to vector<2x64x64xf32>
    %53 = arith.addf %48, %52 : vector<2x64x64xf32>
    %cst_19 = arith.constant dense<0xFF800000> : vector<2x64xf32>
    %54 = vector.multi_reduction <maximumf>, %53, %cst_19 [2] : vector<2x64x64xf32> to vector<2x64xf32>
    %55 = vector.shape_cast %54 : vector<2x64xf32> to vector<2x64x1xf32>
    %56 = vector.broadcast %55 : vector<2x64x1xf32> to vector<2x64x64xf32>
    %57 = arith.subf %53, %56 : vector<2x64x64xf32>
    %58 = math.exp %57 : vector<2x64x64xf32>
    %cst_20 = arith.constant dense<0.000000e+00> : vector<2x64xf32>
    %59 = vector.multi_reduction <add>, %58, %cst_20 [2] : vector<2x64x64xf32> to vector<2x64xf32>
    %60 = vector.shape_cast %59 : vector<2x64xf32> to vector<2x64x1xf32>
    %61 = tpu.reciprocal %60 {approx = true} : vector<2x64x1xf32> -> vector<2x64x1xf32>
    %62 = vector.broadcast %61 : vector<2x64x1xf32> to vector<2x64x64xf32>
    %63 = arith.mulf %58, %62 : vector<2x64x64xf32>
    %64 = arith.truncf %63 : vector<2x64x64xf32> to vector<2x64x64xbf16>
    %65 = arith.truncf %45 : vector<2x64x8xf32> to vector<2x64x8xbf16>
    "tpu.trace_start"() <{level = 10 : i32, message = "blm,bmd->bld"}> : () -> ()
    %cst_21 = arith.constant dense<0.000000e+00> : vector<2x64x8xf32>
    %66 = tpu.matmul %64, %65, %cst_21 {dimension_numbers = #tpu.dot_dimension_numbers<[2], [1], [1], [2], [0, 0, 0, 1, 1, 2], [0], [0]>} : vector<2x64x64xbf16>, vector<2x64x8xbf16>, vector<2x64x8xf32> -> vector<2x64x8xf32>
    "tpu.trace_stop"() : () -> ()
    %67 = vector.shape_cast %66 : vector<2x64x8xf32> to vector<128x8xf32>
    %68 = arith.truncf %67 : vector<128x8xf32> to vector<128x8xbf16>
    %c0_22 = arith.constant 0 : index
    %c0_23 = arith.constant 0 : index
    %c0_24 = arith.constant 0 : index
    %c0_25 = arith.constant 0 : index
    %69 = vector.load %arg3[%c0_22, %c0_23, %c0_24, %c0_25] : memref<2x4x8x32xbf16, #tpu.memory_space<vmem>>, vector<1x1x8x32xbf16>
    %70 = vector.shape_cast %69 : vector<1x1x8x32xbf16> to vector<8x32xbf16>
    %cst_26 = arith.constant dense<0.000000e+00> : vector<128x32xf32>
    %71 = tpu.matmul %68, %70, %cst_26 {dimension_numbers = #tpu.dot_dimension_numbers<[1], [0], [0], [1], [0, 0, 1, 1], [], []>} : vector<128x8xbf16>, vector<8x32xbf16>, vector<128x32xf32> -> vector<128x32xf32>
    %72 = arith.addf %37, %71 : vector<128x32xf32>
    %73 = vector.extract_strided_slice %36 {offsets = [0, 8], sizes = [128, 8], strides = [1, 1]} : vector<128x96xf32> to vector<128x8xf32>
    %cst_27 = arith.constant 0.353553385 : f32
    %74 = vector.broadcast %cst_27 : f32 to vector<128x8xf32>
    %75 = arith.mulf %73, %74 : vector<128x8xf32>
    %76 = vector.shape_cast %75 : vector<128x8xf32> to vector<2x64x8xf32>
    %77 = vector.extract_strided_slice %36 {offsets = [0, 40], sizes = [128, 8], strides = [1, 1]} : vector<128x96xf32> to vector<128x8xf32>
    %78 = vector.shape_cast %77 : vector<128x8xf32> to vector<2x64x8xf32>
    %79 = vector.extract_strided_slice %36 {offsets = [0, 72], sizes = [128, 8], strides = [1, 1]} : vector<128x96xf32> to vector<128x8xf32>
    %80 = vector.shape_cast %79 : vector<128x8xf32> to vector<2x64x8xf32>
    %81 = arith.truncf %76 : vector<2x64x8xf32> to vector<2x64x8xbf16>
    %82 = arith.truncf %78 : vector<2x64x8xf32> to vector<2x64x8xbf16>
    "tpu.trace_start"() <{level = 10 : i32, message = "bld,bmd->blm"}> : () -> ()
    %cst_28 = arith.constant dense<0.000000e+00> : vector<2x64x64xf32>
    %83 = tpu.matmul %81, %82, %cst_28 {dimension_numbers = #tpu.dot_dimension_numbers<[2], [2], [1], [1], [0, 0, 0, 1, 1, 1], [0], [0]>} : vector<2x64x8xbf16>, vector<2x64x8xbf16>, vector<2x64x64xf32> -> vector<2x64x64xf32>
    "tpu.trace_stop"() : () -> ()
    %c0_29 = arith.constant 0 : index
    %c1 = arith.constant 1 : index
    %c0_30 = arith.constant 0 : index
    %c0_31 = arith.constant 0 : index
    %84 = vector.load %arg1[%c0_29, %c1, %c0_30, %c0_31] : memref<2x4x64x64xf32, #tpu.memory_space<vmem>>, vector<1x1x64x64xf32>
    %85 = vector.shape_cast %84 : vector<1x1x64x64xf32> to vector<64x64xf32>
    %86 = vector.shape_cast %85 : vector<64x64xf32> to vector<1x64x64xf32>
    %87 = vector.broadcast %86 : vector<1x64x64xf32> to vector<2x64x64xf32>
    %88 = arith.addf %83, %87 : vector<2x64x64xf32>
    %cst_32 = arith.constant dense<0xFF800000> : vector<2x64xf32>
    %89 = vector.multi_reduction <maximumf>, %88, %cst_32 [2] : vector<2x64x64xf32> to vector<2x64xf32>
    %90 = vector.shape_cast %89 : vector<2x64xf32> to vector<2x64x1xf32>
    %91 = vector.broadcast %90 : vector<2x64x1xf32> to vector<2x64x64xf32>
    %92 = arith.subf %88, %91 : vector<2x64x64xf32>
    %93 = math.exp %92 : vector<2x64x64xf32>
    %cst_33 = arith.constant dense<0.000000e+00> : vector<2x64xf32>
    %94 = vector.multi_reduction <add>, %93, %cst_33 [2] : vector<2x64x64xf32> to vector<2x64xf32>
    %95 = vector.shape_cast %94 : vector<2x64xf32> to vector<2x64x1xf32>
    %96 = tpu.reciprocal %95 {approx = true} : vector<2x64x1xf32> -> vector<2x64x1xf32>
    %97 = vector.broadcast %96 : vector<2x64x1xf32> to vector<2x64x64xf32>
    %98 = arith.mulf %93, %97 : vector<2x64x64xf32>
    %99 = arith.truncf %98 : vector<2x64x64xf32> to vector<2x64x64xbf16>
    %100 = arith.truncf %80 : vector<2x64x8xf32> to vector<2x64x8xbf16>
    "tpu.trace_start"() <{level = 10 : i32, message = "blm,bmd->bld"}> : () -> ()
    %cst_34 = arith.constant dense<0.000000e+00> : vector<2x64x8xf32>
    %101 = tpu.matmul %99, %100, %cst_34 {dimension_numbers = #tpu.dot_dimension_numbers<[2], [1], [1], [2], [0, 0, 0, 1, 1, 2], [0], [0]>} : vector<2x64x64xbf16>, vector<2x64x8xbf16>, vector<2x64x8xf32> -> vector<2x64x8xf32>
    "tpu.trace_stop"() : () -> ()
    %102 = vector.shape_cast %101 : vector<2x64x8xf32> to vector<128x8xf32>
    %103 = arith.truncf %102 : vector<128x8xf32> to vector<128x8xbf16>
    %c0_35 = arith.constant 0 : index
    %c1_36 = arith.constant 1 : index
    %c0_37 = arith.constant 0 : index
    %c0_38 = arith.constant 0 : index
    %104 = vector.load %arg3[%c0_35, %c1_36, %c0_37, %c0_38] : memref<2x4x8x32xbf16, #tpu.memory_space<vmem>>, vector<1x1x8x32xbf16>
    %105 = vector.shape_cast %104 : vector<1x1x8x32xbf16> to vector<8x32xbf16>
    %cst_39 = arith.constant dense<0.000000e+00> : vector<128x32xf32>
    %106 = tpu.matmul %103, %105, %cst_39 {dimension_numbers = #tpu.dot_dimension_numbers<[1], [0], [0], [1], [0, 0, 1, 1], [], []>} : vector<128x8xbf16>, vector<8x32xbf16>, vector<128x32xf32> -> vector<128x32xf32>
    %107 = arith.addf %72, %106 : vector<128x32xf32>
    %108 = vector.extract_strided_slice %36 {offsets = [0, 16], sizes = [128, 8], strides = [1, 1]} : vector<128x96xf32> to vector<128x8xf32>
    %cst_40 = arith.constant 0.353553385 : f32
    %109 = vector.broadcast %cst_40 : f32 to vector<128x8xf32>
    %110 = arith.mulf %108, %109 : vector<128x8xf32>
    %111 = vector.shape_cast %110 : vector<128x8xf32> to vector<2x64x8xf32>
    %112 = vector.extract_strided_slice %36 {offsets = [0, 48], sizes = [128, 8], strides = [1, 1]} : vector<128x96xf32> to vector<128x8xf32>
    %113 = vector.shape_cast %112 : vector<128x8xf32> to vector<2x64x8xf32>
    %114 = vector.extract_strided_slice %36 {offsets = [0, 80], sizes = [128, 8], strides = [1, 1]} : vector<128x96xf32> to vector<128x8xf32>
    %115 = vector.shape_cast %114 : vector<128x8xf32> to vector<2x64x8xf32>
    %116 = arith.truncf %111 : vector<2x64x8xf32> to vector<2x64x8xbf16>
    %117 = arith.truncf %113 : vector<2x64x8xf32> to vector<2x64x8xbf16>
    "tpu.trace_start"() <{level = 10 : i32, message = "bld,bmd->blm"}> : () -> ()
    %cst_41 = arith.constant dense<0.000000e+00> : vector<2x64x64xf32>
    %118 = tpu.matmul %116, %117, %cst_41 {dimension_numbers = #tpu.dot_dimension_numbers<[2], [2], [1], [1], [0, 0, 0, 1, 1, 1], [0], [0]>} : vector<2x64x8xbf16>, vector<2x64x8xbf16>, vector<2x64x64xf32> -> vector<2x64x64xf32>
    "tpu.trace_stop"() : () -> ()
    %c0_42 = arith.constant 0 : index
    %c2 = arith.constant 2 : index
    %c0_43 = arith.constant 0 : index
    %c0_44 = arith.constant 0 : index
    %119 = vector.load %arg1[%c0_42, %c2, %c0_43, %c0_44] : memref<2x4x64x64xf32, #tpu.memory_space<vmem>>, vector<1x1x64x64xf32>
    %120 = vector.shape_cast %119 : vector<1x1x64x64xf32> to vector<64x64xf32>
    %121 = vector.shape_cast %120 : vector<64x64xf32> to vector<1x64x64xf32>
    %122 = vector.broadcast %121 : vector<1x64x64xf32> to vector<2x64x64xf32>
    %123 = arith.addf %118, %122 : vector<2x64x64xf32>
    %cst_45 = arith.constant dense<0xFF800000> : vector<2x64xf32>
    %124 = vector.multi_reduction <maximumf>, %123, %cst_45 [2] : vector<2x64x64xf32> to vector<2x64xf32>
    %125 = vector.shape_cast %124 : vector<2x64xf32> to vector<2x64x1xf32>
    %126 = vector.broadcast %125 : vector<2x64x1xf32> to vector<2x64x64xf32>
    %127 = arith.subf %123, %126 : vector<2x64x64xf32>
    %128 = math.exp %127 : vector<2x64x64xf32>
    %cst_46 = arith.constant dense<0.000000e+00> : vector<2x64xf32>
    %129 = vector.multi_reduction <add>, %128, %cst_46 [2] : vector<2x64x64xf32> to vector<2x64xf32>
    %130 = vector.shape_cast %129 : vector<2x64xf32> to vector<2x64x1xf32>
    %131 = tpu.reciprocal %130 {approx = true} : vector<2x64x1xf32> -> vector<2x64x1xf32>
    %132 = vector.broadcast %131 : vector<2x64x1xf32> to vector<2x64x64xf32>
    %133 = arith.mulf %128, %132 : vector<2x64x64xf32>
    %134 = arith.truncf %133 : vector<2x64x64xf32> to vector<2x64x64xbf16>
    %135 = arith.truncf %115 : vector<2x64x8xf32> to vector<2x64x8xbf16>
    "tpu.trace_start"() <{level = 10 : i32, message = "blm,bmd->bld"}> : () -> ()
    %cst_47 = arith.constant dense<0.000000e+00> : vector<2x64x8xf32>
    %136 = tpu.matmul %134, %135, %cst_47 {dimension_numbers = #tpu.dot_dimension_numbers<[2], [1], [1], [2], [0, 0, 0, 1, 1, 2], [0], [0]>} : vector<2x64x64xbf16>, vector<2x64x8xbf16>, vector<2x64x8xf32> -> vector<2x64x8xf32>
    "tpu.trace_stop"() : () -> ()
    %137 = vector.shape_cast %136 : vector<2x64x8xf32> to vector<128x8xf32>
    %138 = arith.truncf %137 : vector<128x8xf32> to vector<128x8xbf16>
    %c0_48 = arith.constant 0 : index
    %c2_49 = arith.constant 2 : index
    %c0_50 = arith.constant 0 : index
    %c0_51 = arith.constant 0 : index
    %139 = vector.load %arg3[%c0_48, %c2_49, %c0_50, %c0_51] : memref<2x4x8x32xbf16, #tpu.memory_space<vmem>>, vector<1x1x8x32xbf16>
    %140 = vector.shape_cast %139 : vector<1x1x8x32xbf16> to vector<8x32xbf16>
    %cst_52 = arith.constant dense<0.000000e+00> : vector<128x32xf32>
    %141 = tpu.matmul %138, %140, %cst_52 {dimension_numbers = #tpu.dot_dimension_numbers<[1], [0], [0], [1], [0, 0, 1, 1], [], []>} : vector<128x8xbf16>, vector<8x32xbf16>, vector<128x32xf32> -> vector<128x32xf32>
    %142 = arith.addf %107, %141 : vector<128x32xf32>
    %143 = vector.extract_strided_slice %36 {offsets = [0, 24], sizes = [128, 8], strides = [1, 1]} : vector<128x96xf32> to vector<128x8xf32>
    %cst_53 = arith.constant 0.353553385 : f32
    %144 = vector.broadcast %cst_53 : f32 to vector<128x8xf32>
    %145 = arith.mulf %143, %144 : vector<128x8xf32>
    %146 = vector.shape_cast %145 : vector<128x8xf32> to vector<2x64x8xf32>
    %147 = vector.extract_strided_slice %36 {offsets = [0, 56], sizes = [128, 8], strides = [1, 1]} : vector<128x96xf32> to vector<128x8xf32>
    %148 = vector.shape_cast %147 : vector<128x8xf32> to vector<2x64x8xf32>
    %149 = vector.extract_strided_slice %36 {offsets = [0, 88], sizes = [128, 8], strides = [1, 1]} : vector<128x96xf32> to vector<128x8xf32>
    %150 = vector.shape_cast %149 : vector<128x8xf32> to vector<2x64x8xf32>
    %151 = arith.truncf %146 : vector<2x64x8xf32> to vector<2x64x8xbf16>
    %152 = arith.truncf %148 : vector<2x64x8xf32> to vector<2x64x8xbf16>
    "tpu.trace_start"() <{level = 10 : i32, message = "bld,bmd->blm"}> : () -> ()
    %cst_54 = arith.constant dense<0.000000e+00> : vector<2x64x64xf32>
    %153 = tpu.matmul %151, %152, %cst_54 {dimension_numbers = #tpu.dot_dimension_numbers<[2], [2], [1], [1], [0, 0, 0, 1, 1, 1], [0], [0]>} : vector<2x64x8xbf16>, vector<2x64x8xbf16>, vector<2x64x64xf32> -> vector<2x64x64xf32>
    "tpu.trace_stop"() : () -> ()
    %c0_55 = arith.constant 0 : index
    %c3 = arith.constant 3 : index
    %c0_56 = arith.constant 0 : index
    %c0_57 = arith.constant 0 : index
    %154 = vector.load %arg1[%c0_55, %c3, %c0_56, %c0_57] : memref<2x4x64x64xf32, #tpu.memory_space<vmem>>, vector<1x1x64x64xf32>
    %155 = vector.shape_cast %154 : vector<1x1x64x64xf32> to vector<64x64xf32>
    %156 = vector.shape_cast %155 : vector<64x64xf32> to vector<1x64x64xf32>
    %157 = vector.broadcast %156 : vector<1x64x64xf32> to vector<2x64x64xf32>
    %158 = arith.addf %153, %157 : vector<2x64x64xf32>
    %cst_58 = arith.constant dense<0xFF800000> : vector<2x64xf32>
    %159 = vector.multi_reduction <maximumf>, %158, %cst_58 [2] : vector<2x64x64xf32> to vector<2x64xf32>
    %160 = vector.shape_cast %159 : vector<2x64xf32> to vector<2x64x1xf32>
    %161 = vector.broadcast %160 : vector<2x64x1xf32> to vector<2x64x64xf32>
    %162 = arith.subf %158, %161 : vector<2x64x64xf32>
    %163 = math.exp %162 : vector<2x64x64xf32>
    %cst_59 = arith.constant dense<0.000000e+00> : vector<2x64xf32>
    %164 = vector.multi_reduction <add>, %163, %cst_59 [2] : vector<2x64x64xf32> to vector<2x64xf32>
    %165 = vector.shape_cast %164 : vector<2x64xf32> to vector<2x64x1xf32>
    %166 = tpu.reciprocal %165 {approx = true} : vector<2x64x1xf32> -> vector<2x64x1xf32>
    %167 = vector.broadcast %166 : vector<2x64x1xf32> to vector<2x64x64xf32>
    %168 = arith.mulf %163, %167 : vector<2x64x64xf32>
    %169 = arith.truncf %168 : vector<2x64x64xf32> to vector<2x64x64xbf16>
    %170 = arith.truncf %150 : vector<2x64x8xf32> to vector<2x64x8xbf16>
    "tpu.trace_start"() <{level = 10 : i32, message = "blm,bmd->bld"}> : () -> ()
    %cst_60 = arith.constant dense<0.000000e+00> : vector<2x64x8xf32>
    %171 = tpu.matmul %169, %170, %cst_60 {dimension_numbers = #tpu.dot_dimension_numbers<[2], [1], [1], [2], [0, 0, 0, 1, 1, 2], [0], [0]>} : vector<2x64x64xbf16>, vector<2x64x8xbf16>, vector<2x64x8xf32> -> vector<2x64x8xf32>
    "tpu.trace_stop"() : () -> ()
    %172 = vector.shape_cast %171 : vector<2x64x8xf32> to vector<128x8xf32>
    %173 = arith.truncf %172 : vector<128x8xf32> to vector<128x8xbf16>
    %c0_61 = arith.constant 0 : index
    %c3_62 = arith.constant 3 : index
    %c0_63 = arith.constant 0 : index
    %c0_64 = arith.constant 0 : index
    %174 = vector.load %arg3[%c0_61, %c3_62, %c0_63, %c0_64] : memref<2x4x8x32xbf16, #tpu.memory_space<vmem>>, vector<1x1x8x32xbf16>
    %175 = vector.shape_cast %174 : vector<1x1x8x32xbf16> to vector<8x32xbf16>
    %cst_65 = arith.constant dense<0.000000e+00> : vector<128x32xf32>
    %176 = tpu.matmul %173, %175, %cst_65 {dimension_numbers = #tpu.dot_dimension_numbers<[1], [0], [0], [1], [0, 0, 1, 1], [], []>} : vector<128x8xbf16>, vector<8x32xbf16>, vector<128x32xf32> -> vector<128x32xf32>
    %177 = arith.addf %142, %176 : vector<128x32xf32>
    %178 = arith.addf %0, %177 : vector<128x32xf32>
    %179 = vector.broadcast %8 : vector<1x32xf32> to vector<128x32xf32>
    %180 = arith.addf %178, %179 : vector<128x32xf32>
    %cst_66 = arith.constant dense<0.000000e+00> : vector<128xf32>
    %181 = vector.multi_reduction <add>, %180, %cst_66 [1] : vector<128x32xf32> to vector<128xf32>
    %182 = vector.shape_cast %181 : vector<128xf32> to vector<128x1xf32>
    %cst_67 = arith.constant 3.200000e+01 : f32
    %183 = vector.broadcast %cst_67 : f32 to vector<128x1xf32>
    %184 = arith.divf %182, %183 : vector<128x1xf32>
    %185 = vector.broadcast %184 : vector<128x1xf32> to vector<128x32xf32>
    %186 = arith.subf %180, %185 : vector<128x32xf32>
    %187 = arith.mulf %186, %186 : vector<128x32xf32>
    %cst_68 = arith.constant dense<0.000000e+00> : vector<128xf32>
    %188 = vector.multi_reduction <add>, %187, %cst_68 [1] : vector<128x32xf32> to vector<128xf32>
    %189 = vector.shape_cast %188 : vector<128xf32> to vector<128x1xf32>
    %cst_69 = arith.constant 3.200000e+01 : f32
    %190 = vector.broadcast %cst_69 : f32 to vector<128x1xf32>
    %191 = arith.divf %189, %190 : vector<128x1xf32>
    %cst_70 = arith.constant 9.99999974E-6 : f32
    %192 = vector.broadcast %cst_70 : f32 to vector<128x1xf32>
    %193 = arith.addf %191, %192 : vector<128x1xf32>
    %194 = math.rsqrt %193 : vector<128x1xf32>
    %195 = vector.broadcast %194 : vector<128x1xf32> to vector<128x32xf32>
    %196 = arith.mulf %186, %195 : vector<128x32xf32>
    %197 = vector.broadcast %5 : vector<1x32xf32> to vector<128x32xf32>
    %198 = arith.mulf %196, %197 : vector<128x32xf32>
    %199 = vector.broadcast %6 : vector<1x32xf32> to vector<128x32xf32>
    %200 = arith.addf %198, %199 : vector<128x32xf32>
    %201 = arith.truncf %200 : vector<128x32xf32> to vector<128x32xbf16>
    %c0_71 = arith.constant 0 : index
    %c0_72 = arith.constant 0 : index
    %c0_73 = arith.constant 0 : index
    %202 = vector.load %arg4[%c0_71, %c0_72, %c0_73] : memref<2x32x128xbf16, #tpu.memory_space<vmem>>, vector<1x32x128xbf16>
    %203 = vector.shape_cast %202 : vector<1x32x128xbf16> to vector<32x128xbf16>
    %cst_74 = arith.constant dense<0.000000e+00> : vector<128x128xf32>
    %204 = tpu.matmul %201, %203, %cst_74 {dimension_numbers = #tpu.dot_dimension_numbers<[1], [0], [0], [1], [0, 0, 1, 1], [], []>} : vector<128x32xbf16>, vector<32x128xbf16>, vector<128x128xf32> -> vector<128x128xf32>
    %205 = vector.broadcast %9 : vector<1x128xf32> to vector<128x128xf32>
    %206 = arith.addf %204, %205 : vector<128x128xf32>
    %207 = arith.mulf %206, %206 : vector<128x128xf32>
    %208 = arith.mulf %206, %207 : vector<128x128xf32>
    %cst_75 = arith.constant 4.471500e-02 : f32
    %209 = vector.broadcast %cst_75 : f32 to vector<128x128xf32>
    %210 = arith.mulf %209, %208 : vector<128x128xf32>
    %211 = arith.addf %206, %210 : vector<128x128xf32>
    %cst_76 = arith.constant 0.797884583 : f32
    %212 = vector.broadcast %cst_76 : f32 to vector<128x128xf32>
    %213 = arith.mulf %212, %211 : vector<128x128xf32>
    %214 = math.tanh %213 : vector<128x128xf32>
    %cst_77 = arith.constant 1.000000e+00 : f32
    %215 = vector.broadcast %cst_77 : f32 to vector<128x128xf32>
    %216 = arith.addf %215, %214 : vector<128x128xf32>
    %cst_78 = arith.constant 5.000000e-01 : f32
    %217 = vector.broadcast %cst_78 : f32 to vector<128x128xf32>
    %218 = arith.mulf %217, %216 : vector<128x128xf32>
    %219 = arith.mulf %206, %218 : vector<128x128xf32>
    %220 = arith.truncf %219 : vector<128x128xf32> to vector<128x128xbf16>
    %c0_79 = arith.constant 0 : index
    %c0_80 = arith.constant 0 : index
    %c0_81 = arith.constant 0 : index
    %221 = vector.load %arg5[%c0_79, %c0_80, %c0_81] : memref<2x128x32xbf16, #tpu.memory_space<vmem>>, vector<1x128x32xbf16>
    %222 = vector.shape_cast %221 : vector<1x128x32xbf16> to vector<128x32xbf16>
    %cst_82 = arith.constant dense<0.000000e+00> : vector<128x32xf32>
    %223 = tpu.matmul %220, %222, %cst_82 {dimension_numbers = #tpu.dot_dimension_numbers<[1], [0], [0], [1], [0, 0, 1, 1], [], []>} : vector<128x128xbf16>, vector<128x32xbf16>, vector<128x32xf32> -> vector<128x32xf32>
    %224 = vector.broadcast %10 : vector<1x32xf32> to vector<128x32xf32>
    %225 = arith.addf %223, %224 : vector<128x32xf32>
    %226 = arith.addf %180, %225 : vector<128x32xf32>
    %c1_83 = arith.constant 1 : index
    %c0_84 = arith.constant 0 : index
    %c0_85 = arith.constant 0 : index
    %227 = vector.load %arg6[%c1_83, %c0_84, %c0_85] : memref<2x8x128xf32, #tpu.memory_space<vmem>>, vector<1x8x128xf32>
    %228 = vector.shape_cast %227 : vector<1x8x128xf32> to vector<8x128xf32>
    %229 = vector.extract_strided_slice %228 {offsets = [0, 0], sizes = [1, 32], strides = [1, 1]} : vector<8x128xf32> to vector<1x32xf32>
    %230 = vector.extract_strided_slice %228 {offsets = [1, 0], sizes = [1, 32], strides = [1, 1]} : vector<8x128xf32> to vector<1x32xf32>
    %231 = vector.extract_strided_slice %228 {offsets = [2, 0], sizes = [1, 32], strides = [1, 1]} : vector<8x128xf32> to vector<1x32xf32>
    %232 = vector.extract_strided_slice %228 {offsets = [3, 0], sizes = [1, 32], strides = [1, 1]} : vector<8x128xf32> to vector<1x32xf32>
    %233 = vector.extract_strided_slice %228 {offsets = [4, 0], sizes = [1, 96], strides = [1, 1]} : vector<8x128xf32> to vector<1x96xf32>
    %234 = vector.extract_strided_slice %228 {offsets = [5, 0], sizes = [1, 32], strides = [1, 1]} : vector<8x128xf32> to vector<1x32xf32>
    %235 = vector.extract_strided_slice %228 {offsets = [6, 0], sizes = [1, 128], strides = [1, 1]} : vector<8x128xf32> to vector<1x128xf32>
    %236 = vector.extract_strided_slice %228 {offsets = [7, 0], sizes = [1, 32], strides = [1, 1]} : vector<8x128xf32> to vector<1x32xf32>
    %cst_86 = arith.constant dense<0.000000e+00> : vector<128xf32>
    %237 = vector.multi_reduction <add>, %226, %cst_86 [1] : vector<128x32xf32> to vector<128xf32>
    %238 = vector.shape_cast %237 : vector<128xf32> to vector<128x1xf32>
    %cst_87 = arith.constant 3.200000e+01 : f32
    %239 = vector.broadcast %cst_87 : f32 to vector<128x1xf32>
    %240 = arith.divf %238, %239 : vector<128x1xf32>
    %241 = vector.broadcast %240 : vector<128x1xf32> to vector<128x32xf32>
    %242 = arith.subf %226, %241 : vector<128x32xf32>
    %243 = arith.mulf %242, %242 : vector<128x32xf32>
    %cst_88 = arith.constant dense<0.000000e+00> : vector<128xf32>
    %244 = vector.multi_reduction <add>, %243, %cst_88 [1] : vector<128x32xf32> to vector<128xf32>
    %245 = vector.shape_cast %244 : vector<128xf32> to vector<128x1xf32>
    %cst_89 = arith.constant 3.200000e+01 : f32
    %246 = vector.broadcast %cst_89 : f32 to vector<128x1xf32>
    %247 = arith.divf %245, %246 : vector<128x1xf32>
    %cst_90 = arith.constant 9.99999974E-6 : f32
    %248 = vector.broadcast %cst_90 : f32 to vector<128x1xf32>
    %249 = arith.addf %247, %248 : vector<128x1xf32>
    %250 = math.rsqrt %249 : vector<128x1xf32>
    %251 = vector.broadcast %250 : vector<128x1xf32> to vector<128x32xf32>
    %252 = arith.mulf %242, %251 : vector<128x32xf32>
    %253 = vector.broadcast %229 : vector<1x32xf32> to vector<128x32xf32>
    %254 = arith.mulf %252, %253 : vector<128x32xf32>
    %255 = vector.broadcast %230 : vector<1x32xf32> to vector<128x32xf32>
    %256 = arith.addf %254, %255 : vector<128x32xf32>
    %257 = arith.truncf %256 : vector<128x32xf32> to vector<128x32xbf16>
    %c1_91 = arith.constant 1 : index
    %c0_92 = arith.constant 0 : index
    %c0_93 = arith.constant 0 : index
    %258 = vector.load %arg2[%c1_91, %c0_92, %c0_93] : memref<2x32x96xbf16, #tpu.memory_space<vmem>>, vector<1x32x96xbf16>
    %259 = vector.shape_cast %258 : vector<1x32x96xbf16> to vector<32x96xbf16>
    %cst_94 = arith.constant dense<0.000000e+00> : vector<128x96xf32>
    %260 = tpu.matmul %257, %259, %cst_94 {dimension_numbers = #tpu.dot_dimension_numbers<[1], [0], [0], [1], [0, 0, 1, 1], [], []>} : vector<128x32xbf16>, vector<32x96xbf16>, vector<128x96xf32> -> vector<128x96xf32>
    %261 = vector.broadcast %233 : vector<1x96xf32> to vector<128x96xf32>
    %262 = arith.addf %260, %261 : vector<128x96xf32>
    %cst_95 = arith.constant 0.000000e+00 : f32
    %263 = vector.broadcast %cst_95 : f32 to vector<128x32xf32>
    %264 = vector.extract_strided_slice %262 {offsets = [0, 0], sizes = [128, 8], strides = [1, 1]} : vector<128x96xf32> to vector<128x8xf32>
    %cst_96 = arith.constant 0.353553385 : f32
    %265 = vector.broadcast %cst_96 : f32 to vector<128x8xf32>
    %266 = arith.mulf %264, %265 : vector<128x8xf32>
    %267 = vector.shape_cast %266 : vector<128x8xf32> to vector<2x64x8xf32>
    %268 = vector.extract_strided_slice %262 {offsets = [0, 32], sizes = [128, 8], strides = [1, 1]} : vector<128x96xf32> to vector<128x8xf32>
    %269 = vector.shape_cast %268 : vector<128x8xf32> to vector<2x64x8xf32>
    %270 = vector.extract_strided_slice %262 {offsets = [0, 64], sizes = [128, 8], strides = [1, 1]} : vector<128x96xf32> to vector<128x8xf32>
    %271 = vector.shape_cast %270 : vector<128x8xf32> to vector<2x64x8xf32>
    %272 = arith.truncf %267 : vector<2x64x8xf32> to vector<2x64x8xbf16>
    %273 = arith.truncf %269 : vector<2x64x8xf32> to vector<2x64x8xbf16>
    "tpu.trace_start"() <{level = 10 : i32, message = "bld,bmd->blm"}> : () -> ()
    %cst_97 = arith.constant dense<0.000000e+00> : vector<2x64x64xf32>
    %274 = tpu.matmul %272, %273, %cst_97 {dimension_numbers = #tpu.dot_dimension_numbers<[2], [2], [1], [1], [0, 0, 0, 1, 1, 1], [0], [0]>} : vector<2x64x8xbf16>, vector<2x64x8xbf16>, vector<2x64x64xf32> -> vector<2x64x64xf32>
    "tpu.trace_stop"() : () -> ()
    %c1_98 = arith.constant 1 : index
    %c0_99 = arith.constant 0 : index
    %c0_100 = arith.constant 0 : index
    %c0_101 = arith.constant 0 : index
    %275 = vector.load %arg1[%c1_98, %c0_99, %c0_100, %c0_101] : memref<2x4x64x64xf32, #tpu.memory_space<vmem>>, vector<1x1x64x64xf32>
    %276 = vector.shape_cast %275 : vector<1x1x64x64xf32> to vector<64x64xf32>
    %277 = vector.shape_cast %276 : vector<64x64xf32> to vector<1x64x64xf32>
    %278 = vector.broadcast %277 : vector<1x64x64xf32> to vector<2x64x64xf32>
    %279 = arith.addf %274, %278 : vector<2x64x64xf32>
    %cst_102 = arith.constant dense<0xFF800000> : vector<2x64xf32>
    %280 = vector.multi_reduction <maximumf>, %279, %cst_102 [2] : vector<2x64x64xf32> to vector<2x64xf32>
    %281 = vector.shape_cast %280 : vector<2x64xf32> to vector<2x64x1xf32>
    %282 = vector.broadcast %281 : vector<2x64x1xf32> to vector<2x64x64xf32>
    %283 = arith.subf %279, %282 : vector<2x64x64xf32>
    %284 = math.exp %283 : vector<2x64x64xf32>
    %cst_103 = arith.constant dense<0.000000e+00> : vector<2x64xf32>
    %285 = vector.multi_reduction <add>, %284, %cst_103 [2] : vector<2x64x64xf32> to vector<2x64xf32>
    %286 = vector.shape_cast %285 : vector<2x64xf32> to vector<2x64x1xf32>
    %287 = tpu.reciprocal %286 {approx = true} : vector<2x64x1xf32> -> vector<2x64x1xf32>
    %288 = vector.broadcast %287 : vector<2x64x1xf32> to vector<2x64x64xf32>
    %289 = arith.mulf %284, %288 : vector<2x64x64xf32>
    %290 = arith.truncf %289 : vector<2x64x64xf32> to vector<2x64x64xbf16>
    %291 = arith.truncf %271 : vector<2x64x8xf32> to vector<2x64x8xbf16>
    "tpu.trace_start"() <{level = 10 : i32, message = "blm,bmd->bld"}> : () -> ()
    %cst_104 = arith.constant dense<0.000000e+00> : vector<2x64x8xf32>
    %292 = tpu.matmul %290, %291, %cst_104 {dimension_numbers = #tpu.dot_dimension_numbers<[2], [1], [1], [2], [0, 0, 0, 1, 1, 2], [0], [0]>} : vector<2x64x64xbf16>, vector<2x64x8xbf16>, vector<2x64x8xf32> -> vector<2x64x8xf32>
    "tpu.trace_stop"() : () -> ()
    %293 = vector.shape_cast %292 : vector<2x64x8xf32> to vector<128x8xf32>
    %294 = arith.truncf %293 : vector<128x8xf32> to vector<128x8xbf16>
    %c1_105 = arith.constant 1 : index
    %c0_106 = arith.constant 0 : index
    %c0_107 = arith.constant 0 : index
    %c0_108 = arith.constant 0 : index
    %295 = vector.load %arg3[%c1_105, %c0_106, %c0_107, %c0_108] : memref<2x4x8x32xbf16, #tpu.memory_space<vmem>>, vector<1x1x8x32xbf16>
    %296 = vector.shape_cast %295 : vector<1x1x8x32xbf16> to vector<8x32xbf16>
    %cst_109 = arith.constant dense<0.000000e+00> : vector<128x32xf32>
    %297 = tpu.matmul %294, %296, %cst_109 {dimension_numbers = #tpu.dot_dimension_numbers<[1], [0], [0], [1], [0, 0, 1, 1], [], []>} : vector<128x8xbf16>, vector<8x32xbf16>, vector<128x32xf32> -> vector<128x32xf32>
    %298 = arith.addf %263, %297 : vector<128x32xf32>
    %299 = vector.extract_strided_slice %262 {offsets = [0, 8], sizes = [128, 8], strides = [1, 1]} : vector<128x96xf32> to vector<128x8xf32>
    %cst_110 = arith.constant 0.353553385 : f32
    %300 = vector.broadcast %cst_110 : f32 to vector<128x8xf32>
    %301 = arith.mulf %299, %300 : vector<128x8xf32>
    %302 = vector.shape_cast %301 : vector<128x8xf32> to vector<2x64x8xf32>
    %303 = vector.extract_strided_slice %262 {offsets = [0, 40], sizes = [128, 8], strides = [1, 1]} : vector<128x96xf32> to vector<128x8xf32>
    %304 = vector.shape_cast %303 : vector<128x8xf32> to vector<2x64x8xf32>
    %305 = vector.extract_strided_slice %262 {offsets = [0, 72], sizes = [128, 8], strides = [1, 1]} : vector<128x96xf32> to vector<128x8xf32>
    %306 = vector.shape_cast %305 : vector<128x8xf32> to vector<2x64x8xf32>
    %307 = arith.truncf %302 : vector<2x64x8xf32> to vector<2x64x8xbf16>
    %308 = arith.truncf %304 : vector<2x64x8xf32> to vector<2x64x8xbf16>
    "tpu.trace_start"() <{level = 10 : i32, message = "bld,bmd->blm"}> : () -> ()
    %cst_111 = arith.constant dense<0.000000e+00> : vector<2x64x64xf32>
    %309 = tpu.matmul %307, %308, %cst_111 {dimension_numbers = #tpu.dot_dimension_numbers<[2], [2], [1], [1], [0, 0, 0, 1, 1, 1], [0], [0]>} : vector<2x64x8xbf16>, vector<2x64x8xbf16>, vector<2x64x64xf32> -> vector<2x64x64xf32>
    "tpu.trace_stop"() : () -> ()
    %c1_112 = arith.constant 1 : index
    %c1_113 = arith.constant 1 : index
    %c0_114 = arith.constant 0 : index
    %c0_115 = arith.constant 0 : index
    %310 = vector.load %arg1[%c1_112, %c1_113, %c0_114, %c0_115] : memref<2x4x64x64xf32, #tpu.memory_space<vmem>>, vector<1x1x64x64xf32>
    %311 = vector.shape_cast %310 : vector<1x1x64x64xf32> to vector<64x64xf32>
    %312 = vector.shape_cast %311 : vector<64x64xf32> to vector<1x64x64xf32>
    %313 = vector.broadcast %312 : vector<1x64x64xf32> to vector<2x64x64xf32>
    %314 = arith.addf %309, %313 : vector<2x64x64xf32>
    %cst_116 = arith.constant dense<0xFF800000> : vector<2x64xf32>
    %315 = vector.multi_reduction <maximumf>, %314, %cst_116 [2] : vector<2x64x64xf32> to vector<2x64xf32>
    %316 = vector.shape_cast %315 : vector<2x64xf32> to vector<2x64x1xf32>
    %317 = vector.broadcast %316 : vector<2x64x1xf32> to vector<2x64x64xf32>
    %318 = arith.subf %314, %317 : vector<2x64x64xf32>
    %319 = math.exp %318 : vector<2x64x64xf32>
    %cst_117 = arith.constant dense<0.000000e+00> : vector<2x64xf32>
    %320 = vector.multi_reduction <add>, %319, %cst_117 [2] : vector<2x64x64xf32> to vector<2x64xf32>
    %321 = vector.shape_cast %320 : vector<2x64xf32> to vector<2x64x1xf32>
    %322 = tpu.reciprocal %321 {approx = true} : vector<2x64x1xf32> -> vector<2x64x1xf32>
    %323 = vector.broadcast %322 : vector<2x64x1xf32> to vector<2x64x64xf32>
    %324 = arith.mulf %319, %323 : vector<2x64x64xf32>
    %325 = arith.truncf %324 : vector<2x64x64xf32> to vector<2x64x64xbf16>
    %326 = arith.truncf %306 : vector<2x64x8xf32> to vector<2x64x8xbf16>
    "tpu.trace_start"() <{level = 10 : i32, message = "blm,bmd->bld"}> : () -> ()
    %cst_118 = arith.constant dense<0.000000e+00> : vector<2x64x8xf32>
    %327 = tpu.matmul %325, %326, %cst_118 {dimension_numbers = #tpu.dot_dimension_numbers<[2], [1], [1], [2], [0, 0, 0, 1, 1, 2], [0], [0]>} : vector<2x64x64xbf16>, vector<2x64x8xbf16>, vector<2x64x8xf32> -> vector<2x64x8xf32>
    "tpu.trace_stop"() : () -> ()
    %328 = vector.shape_cast %327 : vector<2x64x8xf32> to vector<128x8xf32>
    %329 = arith.truncf %328 : vector<128x8xf32> to vector<128x8xbf16>
    %c1_119 = arith.constant 1 : index
    %c1_120 = arith.constant 1 : index
    %c0_121 = arith.constant 0 : index
    %c0_122 = arith.constant 0 : index
    %330 = vector.load %arg3[%c1_119, %c1_120, %c0_121, %c0_122] : memref<2x4x8x32xbf16, #tpu.memory_space<vmem>>, vector<1x1x8x32xbf16>
    %331 = vector.shape_cast %330 : vector<1x1x8x32xbf16> to vector<8x32xbf16>
    %cst_123 = arith.constant dense<0.000000e+00> : vector<128x32xf32>
    %332 = tpu.matmul %329, %331, %cst_123 {dimension_numbers = #tpu.dot_dimension_numbers<[1], [0], [0], [1], [0, 0, 1, 1], [], []>} : vector<128x8xbf16>, vector<8x32xbf16>, vector<128x32xf32> -> vector<128x32xf32>
    %333 = arith.addf %298, %332 : vector<128x32xf32>
    %334 = vector.extract_strided_slice %262 {offsets = [0, 16], sizes = [128, 8], strides = [1, 1]} : vector<128x96xf32> to vector<128x8xf32>
    %cst_124 = arith.constant 0.353553385 : f32
    %335 = vector.broadcast %cst_124 : f32 to vector<128x8xf32>
    %336 = arith.mulf %334, %335 : vector<128x8xf32>
    %337 = vector.shape_cast %336 : vector<128x8xf32> to vector<2x64x8xf32>
    %338 = vector.extract_strided_slice %262 {offsets = [0, 48], sizes = [128, 8], strides = [1, 1]} : vector<128x96xf32> to vector<128x8xf32>
    %339 = vector.shape_cast %338 : vector<128x8xf32> to vector<2x64x8xf32>
    %340 = vector.extract_strided_slice %262 {offsets = [0, 80], sizes = [128, 8], strides = [1, 1]} : vector<128x96xf32> to vector<128x8xf32>
    %341 = vector.shape_cast %340 : vector<128x8xf32> to vector<2x64x8xf32>
    %342 = arith.truncf %337 : vector<2x64x8xf32> to vector<2x64x8xbf16>
    %343 = arith.truncf %339 : vector<2x64x8xf32> to vector<2x64x8xbf16>
    "tpu.trace_start"() <{level = 10 : i32, message = "bld,bmd->blm"}> : () -> ()
    %cst_125 = arith.constant dense<0.000000e+00> : vector<2x64x64xf32>
    %344 = tpu.matmul %342, %343, %cst_125 {dimension_numbers = #tpu.dot_dimension_numbers<[2], [2], [1], [1], [0, 0, 0, 1, 1, 1], [0], [0]>} : vector<2x64x8xbf16>, vector<2x64x8xbf16>, vector<2x64x64xf32> -> vector<2x64x64xf32>
    "tpu.trace_stop"() : () -> ()
    %c1_126 = arith.constant 1 : index
    %c2_127 = arith.constant 2 : index
    %c0_128 = arith.constant 0 : index
    %c0_129 = arith.constant 0 : index
    %345 = vector.load %arg1[%c1_126, %c2_127, %c0_128, %c0_129] : memref<2x4x64x64xf32, #tpu.memory_space<vmem>>, vector<1x1x64x64xf32>
    %346 = vector.shape_cast %345 : vector<1x1x64x64xf32> to vector<64x64xf32>
    %347 = vector.shape_cast %346 : vector<64x64xf32> to vector<1x64x64xf32>
    %348 = vector.broadcast %347 : vector<1x64x64xf32> to vector<2x64x64xf32>
    %349 = arith.addf %344, %348 : vector<2x64x64xf32>
    %cst_130 = arith.constant dense<0xFF800000> : vector<2x64xf32>
    %350 = vector.multi_reduction <maximumf>, %349, %cst_130 [2] : vector<2x64x64xf32> to vector<2x64xf32>
    %351 = vector.shape_cast %350 : vector<2x64xf32> to vector<2x64x1xf32>
    %352 = vector.broadcast %351 : vector<2x64x1xf32> to vector<2x64x64xf32>
    %353 = arith.subf %349, %352 : vector<2x64x64xf32>
    %354 = math.exp %353 : vector<2x64x64xf32>
    %cst_131 = arith.constant dense<0.000000e+00> : vector<2x64xf32>
    %355 = vector.multi_reduction <add>, %354, %cst_131 [2] : vector<2x64x64xf32> to vector<2x64xf32>
    %356 = vector.shape_cast %355 : vector<2x64xf32> to vector<2x64x1xf32>
    %357 = tpu.reciprocal %356 {approx = true} : vector<2x64x1xf32> -> vector<2x64x1xf32>
    %358 = vector.broadcast %357 : vector<2x64x1xf32> to vector<2x64x64xf32>
    %359 = arith.mulf %354, %358 : vector<2x64x64xf32>
    %360 = arith.truncf %359 : vector<2x64x64xf32> to vector<2x64x64xbf16>
    %361 = arith.truncf %341 : vector<2x64x8xf32> to vector<2x64x8xbf16>
    "tpu.trace_start"() <{level = 10 : i32, message = "blm,bmd->bld"}> : () -> ()
    %cst_132 = arith.constant dense<0.000000e+00> : vector<2x64x8xf32>
    %362 = tpu.matmul %360, %361, %cst_132 {dimension_numbers = #tpu.dot_dimension_numbers<[2], [1], [1], [2], [0, 0, 0, 1, 1, 2], [0], [0]>} : vector<2x64x64xbf16>, vector<2x64x8xbf16>, vector<2x64x8xf32> -> vector<2x64x8xf32>
    "tpu.trace_stop"() : () -> ()
    %363 = vector.shape_cast %362 : vector<2x64x8xf32> to vector<128x8xf32>
    %364 = arith.truncf %363 : vector<128x8xf32> to vector<128x8xbf16>
    %c1_133 = arith.constant 1 : index
    %c2_134 = arith.constant 2 : index
    %c0_135 = arith.constant 0 : index
    %c0_136 = arith.constant 0 : index
    %365 = vector.load %arg3[%c1_133, %c2_134, %c0_135, %c0_136] : memref<2x4x8x32xbf16, #tpu.memory_space<vmem>>, vector<1x1x8x32xbf16>
    %366 = vector.shape_cast %365 : vector<1x1x8x32xbf16> to vector<8x32xbf16>
    %cst_137 = arith.constant dense<0.000000e+00> : vector<128x32xf32>
    %367 = tpu.matmul %364, %366, %cst_137 {dimension_numbers = #tpu.dot_dimension_numbers<[1], [0], [0], [1], [0, 0, 1, 1], [], []>} : vector<128x8xbf16>, vector<8x32xbf16>, vector<128x32xf32> -> vector<128x32xf32>
    %368 = arith.addf %333, %367 : vector<128x32xf32>
    %369 = vector.extract_strided_slice %262 {offsets = [0, 24], sizes = [128, 8], strides = [1, 1]} : vector<128x96xf32> to vector<128x8xf32>
    %cst_138 = arith.constant 0.353553385 : f32
    %370 = vector.broadcast %cst_138 : f32 to vector<128x8xf32>
    %371 = arith.mulf %369, %370 : vector<128x8xf32>
    %372 = vector.shape_cast %371 : vector<128x8xf32> to vector<2x64x8xf32>
    %373 = vector.extract_strided_slice %262 {offsets = [0, 56], sizes = [128, 8], strides = [1, 1]} : vector<128x96xf32> to vector<128x8xf32>
    %374 = vector.shape_cast %373 : vector<128x8xf32> to vector<2x64x8xf32>
    %375 = vector.extract_strided_slice %262 {offsets = [0, 88], sizes = [128, 8], strides = [1, 1]} : vector<128x96xf32> to vector<128x8xf32>
    %376 = vector.shape_cast %375 : vector<128x8xf32> to vector<2x64x8xf32>
    %377 = arith.truncf %372 : vector<2x64x8xf32> to vector<2x64x8xbf16>
    %378 = arith.truncf %374 : vector<2x64x8xf32> to vector<2x64x8xbf16>
    "tpu.trace_start"() <{level = 10 : i32, message = "bld,bmd->blm"}> : () -> ()
    %cst_139 = arith.constant dense<0.000000e+00> : vector<2x64x64xf32>
    %379 = tpu.matmul %377, %378, %cst_139 {dimension_numbers = #tpu.dot_dimension_numbers<[2], [2], [1], [1], [0, 0, 0, 1, 1, 1], [0], [0]>} : vector<2x64x8xbf16>, vector<2x64x8xbf16>, vector<2x64x64xf32> -> vector<2x64x64xf32>
    "tpu.trace_stop"() : () -> ()
    %c1_140 = arith.constant 1 : index
    %c3_141 = arith.constant 3 : index
    %c0_142 = arith.constant 0 : index
    %c0_143 = arith.constant 0 : index
    %380 = vector.load %arg1[%c1_140, %c3_141, %c0_142, %c0_143] : memref<2x4x64x64xf32, #tpu.memory_space<vmem>>, vector<1x1x64x64xf32>
    %381 = vector.shape_cast %380 : vector<1x1x64x64xf32> to vector<64x64xf32>
    %382 = vector.shape_cast %381 : vector<64x64xf32> to vector<1x64x64xf32>
    %383 = vector.broadcast %382 : vector<1x64x64xf32> to vector<2x64x64xf32>
    %384 = arith.addf %379, %383 : vector<2x64x64xf32>
    %cst_144 = arith.constant dense<0xFF800000> : vector<2x64xf32>
    %385 = vector.multi_reduction <maximumf>, %384, %cst_144 [2] : vector<2x64x64xf32> to vector<2x64xf32>
    %386 = vector.shape_cast %385 : vector<2x64xf32> to vector<2x64x1xf32>
    %387 = vector.broadcast %386 : vector<2x64x1xf32> to vector<2x64x64xf32>
    %388 = arith.subf %384, %387 : vector<2x64x64xf32>
    %389 = math.exp %388 : vector<2x64x64xf32>
    %cst_145 = arith.constant dense<0.000000e+00> : vector<2x64xf32>
    %390 = vector.multi_reduction <add>, %389, %cst_145 [2] : vector<2x64x64xf32> to vector<2x64xf32>
    %391 = vector.shape_cast %390 : vector<2x64xf32> to vector<2x64x1xf32>
    %392 = tpu.reciprocal %391 {approx = true} : vector<2x64x1xf32> -> vector<2x64x1xf32>
    %393 = vector.broadcast %392 : vector<2x64x1xf32> to vector<2x64x64xf32>
    %394 = arith.mulf %389, %393 : vector<2x64x64xf32>
    %395 = arith.truncf %394 : vector<2x64x64xf32> to vector<2x64x64xbf16>
    %396 = arith.truncf %376 : vector<2x64x8xf32> to vector<2x64x8xbf16>
    "tpu.trace_start"() <{level = 10 : i32, message = "blm,bmd->bld"}> : () -> ()
    %cst_146 = arith.constant dense<0.000000e+00> : vector<2x64x8xf32>
    %397 = tpu.matmul %395, %396, %cst_146 {dimension_numbers = #tpu.dot_dimension_numbers<[2], [1], [1], [2], [0, 0, 0, 1, 1, 2], [0], [0]>} : vector<2x64x64xbf16>, vector<2x64x8xbf16>, vector<2x64x8xf32> -> vector<2x64x8xf32>
    "tpu.trace_stop"() : () -> ()
    %398 = vector.shape_cast %397 : vector<2x64x8xf32> to vector<128x8xf32>
    %399 = arith.truncf %398 : vector<128x8xf32> to vector<128x8xbf16>
    %c1_147 = arith.constant 1 : index
    %c3_148 = arith.constant 3 : index
    %c0_149 = arith.constant 0 : index
    %c0_150 = arith.constant 0 : index
    %400 = vector.load %arg3[%c1_147, %c3_148, %c0_149, %c0_150] : memref<2x4x8x32xbf16, #tpu.memory_space<vmem>>, vector<1x1x8x32xbf16>
    %401 = vector.shape_cast %400 : vector<1x1x8x32xbf16> to vector<8x32xbf16>
    %cst_151 = arith.constant dense<0.000000e+00> : vector<128x32xf32>
    %402 = tpu.matmul %399, %401, %cst_151 {dimension_numbers = #tpu.dot_dimension_numbers<[1], [0], [0], [1], [0, 0, 1, 1], [], []>} : vector<128x8xbf16>, vector<8x32xbf16>, vector<128x32xf32> -> vector<128x32xf32>
    %403 = arith.addf %368, %402 : vector<128x32xf32>
    %404 = arith.addf %226, %403 : vector<128x32xf32>
    %405 = vector.broadcast %234 : vector<1x32xf32> to vector<128x32xf32>
    %406 = arith.addf %404, %405 : vector<128x32xf32>
    %cst_152 = arith.constant dense<0.000000e+00> : vector<128xf32>
    %407 = vector.multi_reduction <add>, %406, %cst_152 [1] : vector<128x32xf32> to vector<128xf32>
    %408 = vector.shape_cast %407 : vector<128xf32> to vector<128x1xf32>
    %cst_153 = arith.constant 3.200000e+01 : f32
    %409 = vector.broadcast %cst_153 : f32 to vector<128x1xf32>
    %410 = arith.divf %408, %409 : vector<128x1xf32>
    %411 = vector.broadcast %410 : vector<128x1xf32> to vector<128x32xf32>
    %412 = arith.subf %406, %411 : vector<128x32xf32>
    %413 = arith.mulf %412, %412 : vector<128x32xf32>
    %cst_154 = arith.constant dense<0.000000e+00> : vector<128xf32>
    %414 = vector.multi_reduction <add>, %413, %cst_154 [1] : vector<128x32xf32> to vector<128xf32>
    %415 = vector.shape_cast %414 : vector<128xf32> to vector<128x1xf32>
    %cst_155 = arith.constant 3.200000e+01 : f32
    %416 = vector.broadcast %cst_155 : f32 to vector<128x1xf32>
    %417 = arith.divf %415, %416 : vector<128x1xf32>
    %cst_156 = arith.constant 9.99999974E-6 : f32
    %418 = vector.broadcast %cst_156 : f32 to vector<128x1xf32>
    %419 = arith.addf %417, %418 : vector<128x1xf32>
    %420 = math.rsqrt %419 : vector<128x1xf32>
    %421 = vector.broadcast %420 : vector<128x1xf32> to vector<128x32xf32>
    %422 = arith.mulf %412, %421 : vector<128x32xf32>
    %423 = vector.broadcast %231 : vector<1x32xf32> to vector<128x32xf32>
    %424 = arith.mulf %422, %423 : vector<128x32xf32>
    %425 = vector.broadcast %232 : vector<1x32xf32> to vector<128x32xf32>
    %426 = arith.addf %424, %425 : vector<128x32xf32>
    %427 = arith.truncf %426 : vector<128x32xf32> to vector<128x32xbf16>
    %c1_157 = arith.constant 1 : index
    %c0_158 = arith.constant 0 : index
    %c0_159 = arith.constant 0 : index
    %428 = vector.load %arg4[%c1_157, %c0_158, %c0_159] : memref<2x32x128xbf16, #tpu.memory_space<vmem>>, vector<1x32x128xbf16>
    %429 = vector.shape_cast %428 : vector<1x32x128xbf16> to vector<32x128xbf16>
    %cst_160 = arith.constant dense<0.000000e+00> : vector<128x128xf32>
    %430 = tpu.matmul %427, %429, %cst_160 {dimension_numbers = #tpu.dot_dimension_numbers<[1], [0], [0], [1], [0, 0, 1, 1], [], []>} : vector<128x32xbf16>, vector<32x128xbf16>, vector<128x128xf32> -> vector<128x128xf32>
    %431 = vector.broadcast %235 : vector<1x128xf32> to vector<128x128xf32>
    %432 = arith.addf %430, %431 : vector<128x128xf32>
    %433 = arith.mulf %432, %432 : vector<128x128xf32>
    %434 = arith.mulf %432, %433 : vector<128x128xf32>
    %cst_161 = arith.constant 4.471500e-02 : f32
    %435 = vector.broadcast %cst_161 : f32 to vector<128x128xf32>
    %436 = arith.mulf %435, %434 : vector<128x128xf32>
    %437 = arith.addf %432, %436 : vector<128x128xf32>
    %cst_162 = arith.constant 0.797884583 : f32
    %438 = vector.broadcast %cst_162 : f32 to vector<128x128xf32>
    %439 = arith.mulf %438, %437 : vector<128x128xf32>
    %440 = math.tanh %439 : vector<128x128xf32>
    %cst_163 = arith.constant 1.000000e+00 : f32
    %441 = vector.broadcast %cst_163 : f32 to vector<128x128xf32>
    %442 = arith.addf %441, %440 : vector<128x128xf32>
    %cst_164 = arith.constant 5.000000e-01 : f32
    %443 = vector.broadcast %cst_164 : f32 to vector<128x128xf32>
    %444 = arith.mulf %443, %442 : vector<128x128xf32>
    %445 = arith.mulf %432, %444 : vector<128x128xf32>
    %446 = arith.truncf %445 : vector<128x128xf32> to vector<128x128xbf16>
    %c1_165 = arith.constant 1 : index
    %c0_166 = arith.constant 0 : index
    %c0_167 = arith.constant 0 : index
    %447 = vector.load %arg5[%c1_165, %c0_166, %c0_167] : memref<2x128x32xbf16, #tpu.memory_space<vmem>>, vector<1x128x32xbf16>
    %448 = vector.shape_cast %447 : vector<1x128x32xbf16> to vector<128x32xbf16>
    %cst_168 = arith.constant dense<0.000000e+00> : vector<128x32xf32>
    %449 = tpu.matmul %446, %448, %cst_168 {dimension_numbers = #tpu.dot_dimension_numbers<[1], [0], [0], [1], [0, 0, 1, 1], [], []>} : vector<128x128xbf16>, vector<128x32xbf16>, vector<128x32xf32> -> vector<128x32xf32>
    %450 = vector.broadcast %236 : vector<1x32xf32> to vector<128x32xf32>
    %451 = arith.addf %449, %450 : vector<128x32xf32>
    %452 = arith.addf %406, %451 : vector<128x32xf32>
    %c0_169 = arith.constant 0 : index
    %c0_170 = arith.constant 0 : index
    %453 = vector.load %arg7[%c0_169, %c0_170] : memref<128x32xf32, #tpu.memory_space<vmem>>, vector<128x32xf32>
    tpu.vector_store %arg7[%c0_169, %c0_170], %452 {strides = array<i32>} : memref<128x32xf32, #tpu.memory_space<vmem>>, vector<128x32xf32>,
    return
  }
}

</mosaic_0001>

<llo_original>
// kernel: forward.1
$region0: #{forward.1}
  #allocation0 [shape = 'u32[]', space=smem, size = 0x4, offset = 0x4, fixed_abs, tag = 'smem constant byte address 0x4 - core index']
  #allocation1 [shape = 'u32[144,128]{1,0:T(1,128)}', space=vmem, size = 0x12000, scoped, tag = 'internal scratch']
  %s0 = inlined_call_operand.vmem [shape: f32[128,32], index: 0, kind: input, shape index: {}]
  %s1 = inlined_call_operand.hbm [shape: f32[2,4,64,64], index: 1, kind: input, shape index: {}]
  %s2 = inlined_call_operand.hbm [shape: bf16[2,32,96], index: 2, kind: input, shape index: {}]
  %s3 = inlined_call_operand.vmem [shape: bf16[2,4,8,32], index: 3, kind: input, shape index: {}]
  %s4 = inlined_call_operand.vmem [shape: bf16[2,32,128], index: 4, kind: input, shape index: {}]
  %s5 = inlined_call_operand.vmem [shape: bf16[2,128,32], index: 5, kind: input, shape index: {}]
  %s6 = inlined_call_operand.hbm [shape: f32[2,8,128], index: 6, kind: input, shape index: {}]
  %s7 = inlined_call_operand.vmem [shape: f32[128,32], index: 7, kind: output, shape index: {}]
  %s8 = sld [smem:[#allocation0]]
  $region50: #{forward.1} parent=0
    _
  %s10 = ssub.s32 1, %s8
  %s11 = scalar_select 0, %s10, %s8
  $region1: #{forward.1} parent=0
    #allocation2 [shape = 'u8[262144]{0}', space=vmem, size = 0x40000, scoped, tag = 'input window, operand 1, single buffered']
    #allocation3 [shape = 's32[1]{0}', space=sflag, size = 0x4, scoped, tag = 'scoped memory for forward.1']
    #allocation4 [shape = 'u8[16384]{0}', space=vmem, size = 0x4000, scoped, tag = 'input window, operand 2, single buffered']
    #allocation5 [shape = 's32[1]{0}', space=sflag, size = 0x4, scoped, tag = 'scoped memory for forward.1']
    #allocation6 [shape = 'u8[8192]{0}', space=vmem, size = 0x2000, scoped, tag = 'input window, operand 6, single buffered']
    %12 = vsyncpa [#allocation3], 0
    %13 = vsyncpa [#allocation5], 0
    // Predicated region
    $region2: #{forward.1} parent=1 // pred_check
      _
    $region3: #{forward.1} parent=1 // pred_check_branch
      %15 = sbr.rel (0) target = $region5
    $region4: #{forward.1} parent=1 // pred_region
      _
    $region5: #{forward.1} parent=1 // pred_fallthru
      _
    // Predicated region
    $region6: #{forward.1} parent=1 // pred_check
      _
    $region7: #{forward.1} parent=1 // pred_check_branch
      %17 = sbr.rel (0) target = $region9
    $region8: #{forward.1} parent=1 // pred_region
      %s19 = ssub.s32 8192, 8192
      %20 = vsyncadd [#allocation3], %s19
      %s21 = sshll.u32 [#allocation2], 4
      %s22 = int_to_ptr.vmem [resolvable:$true] %s21
      %27 = dma.hbm_to_vmem [thread:$0]  %s1, 8192, %s22, [#allocation3], 128, 128, 8
    $region9: #{forward.1} parent=1 // pred_fallthru
      _
    // Predicated region
    $region10: #{forward.1} parent=1 // pred_check
      _
    $region11: #{forward.1} parent=1 // pred_check_branch
      %29 = sbr.rel (0) target = $region13
    $region12: #{forward.1} parent=1 // pred_region
      %s31 = ssub.s32 512, 512
      %32 = vsyncadd [#allocation5], %s31
      %s33 = sshll.u32 [#allocation4], 4
      %s34 = int_to_ptr.vmem [resolvable:$true] %s33
      %39 = dma.hbm_to_vmem [thread:$0]  %s2, 512, %s34, [#allocation5], 64, 64, 4
    $region13: #{forward.1} parent=1 // pred_fallthru
      _
    // Predicated region
    $region14: #{forward.1} parent=1 // pred_check
      _
    $region15: #{forward.1} parent=1 // pred_check_branch
      %41 = sbr.rel (0) target = $region17
    $region16: #{forward.1} parent=1 // pred_region
      _
    $region17: #{forward.1} parent=1 // pred_fallthru
      _
    // Predicated region
    $region18: #{forward.1} parent=1 // pred_check
      _
    $region19: #{forward.1} parent=1 // pred_check_branch
      %43 = sbr.rel (0) target = $region21
    $region20: #{forward.1} parent=1 // pred_region
      _
    $region21: #{forward.1} parent=1 // pred_fallthru
      _
    // Predicated region
    $region22: #{forward.1} parent=1 // pred_check
      _
    $region23: #{forward.1} parent=1 // pred_check_branch
      %45 = sbr.rel (0) target = $region25
    $region24: #{forward.1} parent=1 // pred_region
      _
    $region25: #{forward.1} parent=1 // pred_fallthru
      _
    // Predicated region
    $region26: #{forward.1} parent=1 // pred_check
      _
    $region27: #{forward.1} parent=1 // pred_check_branch
      %47 = sbr.rel (0) target = $region29
    $region28: #{forward.1} parent=1 // pred_region
      %s49 = ssub.s32 256, 256
      %50 = vsyncadd [#allocation5], %s49
      %s51 = sshll.u32 [#allocation6], 4
      %s52 = int_to_ptr.vmem [resolvable:$true] %s51
      %57 = dma.hbm_to_vmem [thread:$0]  %s6, 256, %s52, [#allocation5], 128, 128, 8
    $region29: #{forward.1} parent=1 // pred_fallthru
      _
    // Predicated region
    $region30: #{forward.1} parent=1 // pred_check
      _
    $region31: #{forward.1} parent=1 // pred_check_branch
      %59 = sbr.rel (0) target = $region33
    $region32: #{forward.1} parent=1 // pred_region
      %60 = dma.done [#allocation3], 8192
    $region33: #{forward.1} parent=1 // pred_fallthru
      _
    // Predicated region
    $region34: #{forward.1} parent=1 // pred_check
      _
    $region35: #{forward.1} parent=1 // pred_check_branch
      %62 = sbr.rel (0) target = $region37
    $region36: #{forward.1} parent=1 // pred_region
      %63 = dma.done [#allocation5], 512
    $region37: #{forward.1} parent=1 // pred_fallthru
      _
    // Predicated region
    $region38: #{forward.1} parent=1 // pred_check
      _
    $region39: #{forward.1} parent=1 // pred_check_branch
      %65 = sbr.rel (0) target = $region41
    $region40: #{forward.1} parent=1 // pred_region
      %66 = dma.done [#allocation5], 256
    $region41: #{forward.1} parent=1 // pred_fallthru
      _
    %v68 = vld [vmem:[%s0] sm:$0xff]
    %v69 = vld [vmem:[%s0 + $0x8] sm:$0xff]
    %v70 = vld [vmem:[%s0 + $0x10] sm:$0xff]
    %v71 = vld [vmem:[%s0 + $0x18] sm:$0xff]
    %v72 = vld [vmem:[%s0 + $0x20] sm:$0xff]
    %v73 = vld [vmem:[%s0 + $0x28] sm:$0xff]
    %v74 = vld [vmem:[%s0 + $0x30] sm:$0xff]
    %v75 = vld [vmem:[%s0 + $0x38] sm:$0xff]
    %v76 = vld [vmem:[%s0 + $0x40] sm:$0xff]
    %v77 = vld [vmem:[%s0 + $0x48] sm:$0xff]
    %v78 = vld [vmem:[%s0 + $0x50] sm:$0xff]
    %v79 = vld [vmem:[%s0 + $0x58] sm:$0xff]
    %v80 = vld [vmem:[%s0 + $0x60] sm:$0xff]
    %v81 = vld [vmem:[%s0 + $0x68] sm:$0xff]
    %v82 = vld [vmem:[%s0 + $0x70] sm:$0xff]
    %v83 = vld [vmem:[%s0 + $0x78] sm:$0xff]
    %v84 = vld [vmem:[#allocation6] sm:$0xff]
    %vm85 = vcmask 261120
    %v86 = vsel %vm85, %v68, 0.0
    %87 = vadd.xlane.f32.xlu0 %v86
    %v88 = vpop.xlane.xlu0 %87
    %v89 = vsel %vm85, %v69, 0.0
    %90 = vadd.xlane.f32.xlu0 %v89
    %v91 = vpop.xlane.xlu0 %90
    %v92 = vsel %vm85, %v70, 0.0
    %93 = vadd.xlane.f32.xlu0 %v92
    %v94 = vpop.xlane.xlu0 %93
    %v95 = vsel %vm85, %v71, 0.0
    %96 = vadd.xlane.f32.xlu0 %v95
    %v97 = vpop.xlane.xlu0 %96
    %v98 = vsel %vm85, %v72, 0.0
    %99 = vadd.xlane.f32.xlu0 %v98
    %v100 = vpop.xlane.xlu0 %99
    %v101 = vsel %vm85, %v73, 0.0
    %102 = vadd.xlane.f32.xlu0 %v101
    %v103 = vpop.xlane.xlu0 %102
    %v104 = vsel %vm85, %v74, 0.0
    %105 = vadd.xlane.f32.xlu0 %v104
    %v106 = vpop.xlane.xlu0 %105
    %v107 = vsel %vm85, %v75, 0.0
    %108 = vadd.xlane.f32.xlu0 %v107
    %v109 = vpop.xlane.xlu0 %108
    %v110 = vsel %vm85, %v76, 0.0
    %111 = vadd.xlane.f32.xlu0 %v110
    %v112 = vpop.xlane.xlu0 %111
    %v113 = vsel %vm85, %v77, 0.0
    %114 = vadd.xlane.f32.xlu0 %v113
    %v115 = vpop.xlane.xlu0 %114
    %v116 = vsel %vm85, %v78, 0.0
    %117 = vadd.xlane.f32.xlu0 %v116
    %v118 = vpop.xlane.xlu0 %117
    %v119 = vsel %vm85, %v79, 0.0
    %120 = vadd.xlane.f32.xlu0 %v119
    %v121 = vpop.xlane.xlu0 %120
    %v122 = vsel %vm85, %v80, 0.0
    %123 = vadd.xlane.f32.xlu0 %v122
    %v124 = vpop.xlane.xlu0 %123
    %v125 = vsel %vm85, %v81, 0.0
    %126 = vadd.xlane.f32.xlu0 %v125
    %v127 = vpop.xlane.xlu0 %126
    %v128 = vsel %vm85, %v82, 0.0
    %129 = vadd.xlane.f32.xlu0 %v128
    %v130 = vpop.xlane.xlu0 %129
    %v131 = vsel %vm85, %v83, 0.0
    %132 = vadd.xlane.f32.xlu0 %v131
    %v133 = vpop.xlane.xlu0 %132
    %v134 = vrcp.pop 32.0
    %v135 = vmul.f32 %v88, %v134
    %v136 = vmul.f32 %v91, %v134
    %v137 = vmul.f32 %v94, %v134
    %v138 = vmul.f32 %v97, %v134
    %v139 = vmul.f32 %v100, %v134
    %v140 = vmul.f32 %v103, %v134
    %v141 = vmul.f32 %v106, %v134
    %v142 = vmul.f32 %v109, %v134
    %v143 = vmul.f32 %v112, %v134
    %v144 = vmul.f32 %v115, %v134
    %v145 = vmul.f32 %v118, %v134
    %v146 = vmul.f32 %v121, %v134
    %v147 = vmul.f32 %v124, %v134
    %v148 = vmul.f32 %v127, %v134
    %v149 = vmul.f32 %v130, %v134
    %v150 = vmul.f32 %v133, %v134
    %v151 = vsub.f32 %v68, %v135
    %v152 = vsub.f32 %v69, %v136
    %v153 = vsub.f32 %v70, %v137
    %v154 = vsub.f32 %v71, %v138
    %v155 = vsub.f32 %v72, %v139
    %v156 = vsub.f32 %v73, %v140
    %v157 = vsub.f32 %v74, %v141
    %v158 = vsub.f32 %v75, %v142
    %v159 = vsub.f32 %v76, %v143
    %v160 = vsub.f32 %v77, %v144
    %v161 = vsub.f32 %v78, %v145
    %v162 = vsub.f32 %v79, %v146
    %v163 = vsub.f32 %v80, %v147
    %v164 = vsub.f32 %v81, %v148
    %v165 = vsub.f32 %v82, %v149
    %v166 = vsub.f32 %v83, %v150
    %v167 = vmul.f32 %v151, %v151
    %v168 = vmul.f32 %v152, %v152
    %v169 = vmul.f32 %v153, %v153
    %v170 = vmul.f32 %v154, %v154
    %v171 = vmul.f32 %v155, %v155
    %v172 = vmul.f32 %v156, %v156
    %v173 = vmul.f32 %v157, %v157
    %v174 = vmul.f32 %v158, %v158
    %v175 = vmul.f32 %v159, %v159
    %v176 = vmul.f32 %v160, %v160
    %v177 = vmul.f32 %v161, %v161
    %v178 = vmul.f32 %v162, %v162
    %v179 = vmul.f32 %v163, %v163
    %v180 = vmul.f32 %v164, %v164
    %v181 = vmul.f32 %v165, %v165
    %v182 = vmul.f32 %v166, %v166
    %v183 = vsel %vm85, %v167, 0.0
    %184 = vadd.xlane.f32.xlu0 %v183
    %v185 = vpop.xlane.xlu0 %184
    %v186 = vsel %vm85, %v168, 0.0
    %187 = vadd.xlane.f32.xlu0 %v186
    %v188 = vpop.xlane.xlu0 %187
    %v189 = vsel %vm85, %v169, 0.0
    %190 = vadd.xlane.f32.xlu0 %v189
    %v191 = vpop.xlane.xlu0 %190
    %v192 = vsel %vm85, %v170, 0.0
    %193 = vadd.xlane.f32.xlu0 %v192
    %v194 = vpop.xlane.xlu0 %193
    %v195 = vsel %vm85, %v171, 0.0
    %196 = vadd.xlane.f32.xlu0 %v195
    %v197 = vpop.xlane.xlu0 %196
    %v198 = vsel %vm85, %v172, 0.0
    %199 = vadd.xlane.f32.xlu0 %v198
    %v200 = vpop.xlane.xlu0 %199
    %v201 = vsel %vm85, %v173, 0.0
    %202 = vadd.xlane.f32.xlu0 %v201
    %v203 = vpop.xlane.xlu0 %202
    %v204 = vsel %vm85, %v174, 0.0
    %205 = vadd.xlane.f32.xlu0 %v204
    %v206 = vpop.xlane.xlu0 %205
    %v207 = vsel %vm85, %v175, 0.0
    %208 = vadd.xlane.f32.xlu0 %v207
    %v209 = vpop.xlane.xlu0 %208
    %v210 = vsel %vm85, %v176, 0.0
    %211 = vadd.xlane.f32.xlu0 %v210
    %v212 = vpop.xlane.xlu0 %211
    %v213 = vsel %vm85, %v177, 0.0
    %214 = vadd.xlane.f32.xlu0 %v213
    %v215 = vpop.xlane.xlu0 %214
    %v216 = vsel %vm85, %v178, 0.0
    %217 = vadd.xlane.f32.xlu0 %v216
    %v218 = vpop.xlane.xlu0 %217
    %v219 = vsel %vm85, %v179, 0.0
    %220 = vadd.xlane.f32.xlu0 %v219
    %v221 = vpop.xlane.xlu0 %220
    %v222 = vsel %vm85, %v180, 0.0
    %223 = vadd.xlane.f32.xlu0 %v222
    %v224 = vpop.xlane.xlu0 %223
    %v225 = vsel %vm85, %v181, 0.0
    %226 = vadd.xlane.f32.xlu0 %v225
    %v227 = vpop.xlane.xlu0 %226
    %v228 = vsel %vm85, %v182, 0.0
    %229 = vadd.xlane.f32.xlu0 %v228
    %v230 = vpop.xlane.xlu0 %229
    %v231 = vmul.f32 %v185, %v134
    %v232 = vmul.f32 %v188, %v134
    %v233 = vmul.f32 %v191, %v134
    %v234 = vmul.f32 %v194, %v134
    %v235 = vmul.f32 %v197, %v134
    %v236 = vmul.f32 %v200, %v134
    %v237 = vmul.f32 %v203, %v134
    %v238 = vmul.f32 %v206, %v134
    %v239 = vmul.f32 %v209, %v134
    %v240 = vmul.f32 %v212, %v134
    %v241 = vmul.f32 %v215, %v134
    %v242 = vmul.f32 %v218, %v134
    %v243 = vmul.f32 %v221, %v134
    %v244 = vmul.f32 %v224, %v134
    %v245 = vmul.f32 %v227, %v134
    %v246 = vmul.f32 %v230, %v134
    %v247 = vadd.f32 %v231, 1e-05
    %v248 = vadd.f32 %v232, 1e-05
    %v249 = vadd.f32 %v233, 1e-05
    %v250 = vadd.f32 %v234, 1e-05
    %v251 = vadd.f32 %v235, 1e-05
    %v252 = vadd.f32 %v236, 1e-05
    %v253 = vadd.f32 %v237, 1e-05
    %v254 = vadd.f32 %v238, 1e-05
    %v255 = vadd.f32 %v239, 1e-05
    %v256 = vadd.f32 %v240, 1e-05
    %v257 = vadd.f32 %v241, 1e-05
    %v258 = vadd.f32 %v242, 1e-05
    %v259 = vadd.f32 %v243, 1e-05
    %v260 = vadd.f32 %v244, 1e-05
    %v261 = vadd.f32 %v245, 1e-05
    %v262 = vadd.f32 %v246, 1e-05
    %v263 = vrsqrt.pop %v247
    %v264 = vrsqrt.pop %v248
    %v265 = vrsqrt.pop %v249
    %v266 = vrsqrt.pop %v250
    %v267 = vrsqrt.pop %v251
    %v268 = vrsqrt.pop %v252
    %v269 = vrsqrt.pop %v253
    %v270 = vrsqrt.pop %v254
    %v271 = vrsqrt.pop %v255
    %v272 = vrsqrt.pop %v256
    %v273 = vrsqrt.pop %v257
    %v274 = vrsqrt.pop %v258
    %v275 = vrsqrt.pop %v259
    %v276 = vrsqrt.pop %v260
    %v277 = vrsqrt.pop %v261
    %v278 = vrsqrt.pop %v262
    %v279 = vmul.f32 %v151, %v263
    %v280 = vmul.f32 %v152, %v264
    %v281 = vmul.f32 %v153, %v265
    %v282 = vmul.f32 %v154, %v266
    %v283 = vmul.f32 %v155, %v267
    %v284 = vmul.f32 %v156, %v268
    %v285 = vmul.f32 %v157, %v269
    %v286 = vmul.f32 %v158, %v270
    %v287 = vmul.f32 %v159, %v271
    %v288 = vmul.f32 %v160, %v272
    %v289 = vmul.f32 %v161, %v273
    %v290 = vmul.f32 %v162, %v274
    %v291 = vmul.f32 %v163, %v275
    %v292 = vmul.f32 %v164, %v276
    %v293 = vmul.f32 %v165, %v277
    %v294 = vmul.f32 %v166, %v278
    %v295 = vlaneseq
    %v296 = vshrl.u32 %v295, 7
    %v297 = vsub.s32 0, %v296
    %v298 = vrot.slane %v84, %v297
    %v299 = vmul.f32 %v279, %v298
    %v300 = vmul.f32 %v280, %v298
    %v301 = vmul.f32 %v281, %v298
    %v302 = vmul.f32 %v282, %v298
    %v303 = vmul.f32 %v283, %v298
    %v304 = vmul.f32 %v284, %v298
    %v305 = vmul.f32 %v285, %v298
    %v306 = vmul.f32 %v286, %v298
    %v307 = vmul.f32 %v287, %v298
    %v308 = vmul.f32 %v288, %v298
    %v309 = vmul.f32 %v289, %v298
    %v310 = vmul.f32 %v290, %v298
    %v311 = vmul.f32 %v291, %v298
    %v312 = vmul.f32 %v292, %v298
    %v313 = vmul.f32 %v293, %v298
    %v314 = vmul.f32 %v294, %v298
    %v315 = vlaneseq
    %v316 = vshrl.u32 %v315, 7
    %v317 = vsub.s32 1, %v316
    %v318 = vrot.slane %v84, %v317
    %v319 = vadd.f32 %v299, %v318
    %v320 = vadd.f32 %v300, %v318
    %v321 = vadd.f32 %v301, %v318
    %v322 = vadd.f32 %v302, %v318
    %v323 = vadd.f32 %v303, %v318
    %v324 = vadd.f32 %v304, %v318
    %v325 = vadd.f32 %v305, %v318
    %v326 = vadd.f32 %v306, %v318
    %v327 = vadd.f32 %v307, %v318
    %v328 = vadd.f32 %v308, %v318
    %v329 = vadd.f32 %v309, %v318
    %v330 = vadd.f32 %v310, %v318
    %v331 = vadd.f32 %v311, %v318
    %v332 = vadd.f32 %v312, %v318
    %v333 = vadd.f32 %v313, %v318
    %v334 = vadd.f32 %v314, %v318
    %v335 = vpack.c.bf16 %v320, %v319
    %v336 = vpack.c.bf16 %v322, %v321
    %v337 = vpack.c.bf16 %v324, %v323
    %v338 = vpack.c.bf16 %v326, %v325
    %v339 = vpack.c.bf16 %v328, %v327
    %v340 = vpack.c.bf16 %v330, %v329
    %v341 = vpack.c.bf16 %v332, %v331
    %v342 = vpack.c.bf16 %v334, %v333
    %v343 = vld [vmem:[#allocation4] sm:$0xf]
    %v344 = vld [vmem:[#allocation4 + $0x4] sm:$0xf]
    %v345 = vld [vmem:[#allocation4 + $0x8] sm:$0xf]
    %v346 = vld [vmem:[#allocation4 + $0xc] sm:$0xf]
    %v347 = vlaneseq
    %v348 = vshrl.u32 %v347, 7
    %v349 = vsub.s32 4, %v348
    %v350 = vrot.slane %v84, %v349
    %v355 = vunpack.c.l.b16 %v343
    %v356 = vunpack.c.l.b16 %v344
    %v357 = vunpack.c.l.b16 %v345
    %v358 = vunpack.c.l.b16 %v346
    %v359 = vpack.c.b16 %v356, %v355
    %v360 = vpack.c.b16 %v358, %v357
    %v364 = vsel %vm85, %v335, 0
    %v367 = vsel %vm85, %v336, 0
    %v370 = vsel %vm85, %v337, 0
    %v373 = vsel %vm85, %v338, 0
    %v376 = vsel %vm85, %v339, 0
    %v379 = vsel %vm85, %v340, 0
    %v382 = vsel %vm85, %v341, 0
    %v385 = vsel %vm85, %v342, 0
    %387 = vmatprep.subr.bf16.mxu0 0
    %388 = vmatpush1.bf16.msra.mxu0 0
    %389 = vmatprep.subr.bf16.mxu0 0
    %390 = vmatpush1.bf16.msra.mxu0 0
    %391 = vmatprep.subr.bf16.mxu0 0
    %392 = vmatpush1.bf16.msra.mxu0 0
    %393 = vmatprep.subr.bf16.mxu0 0
    %394 = vmatpush1.bf16.msra.mxu0 0
    %395 = vmatprep.subr.bf16.mxu0 0
    %396 = vmatpush1.bf16.msra.mxu0 0
    %397 = vmatprep.subr.bf16.mxu0 0
    %398 = vmatpush1.bf16.msra.mxu0 0
    %399 = vmatprep.subr.bf16.mxu0 0
    %400 = vmatpush1.bf16.msra.mxu0 %v360
    %401 = vmatprep.subr.bf16.mxu0 0
    %402 = vmatpush1.bf16.msra.mxu0 %v359
    %403 = vmatprep.subr.bf16.mxu0 0
    %404 = vmatpush2.bf16.msra.mxu0 0
    %405 = vmatprep.subr.bf16.mxu0 0
    %406 = vmatpush2.bf16.msra.mxu0 0
    %407 = vmatprep.subr.bf16.mxu0 0
    %408 = vmatpush2.bf16.msra.mxu0 0
    %409 = vmatprep.subr.bf16.mxu0 0
    %410 = vmatpush2.bf16.msra.mxu0 0
    %411 = vmatprep.subr.bf16.mxu0 0
    %412 = vmatpush2.bf16.msra.mxu0 0
    %413 = vmatprep.subr.bf16.mxu0 0
    %414 = vmatpush2.bf16.msra.mxu0 0
    %415 = vmatprep.subr.bf16.mxu0 0
    %416 = vmatpush2.bf16.msra.mxu0 0
    %417 = vmatprep.subr.bf16.mxu0 0
    %418 = vmatpush2.bf16.msra.mxu0 0
    %419 = vmatprep.mubr.bf16.mxu0 0
    %420 = vmatmul.mubr.bf16.gmra.mxu0 %v364
    %v421 = vpop.f32.mrf.mxu0
    %v422 = vadd.f32 %v350, %v421
    %v423 = vpop.f32.mrf.mxu0
    %v424 = vpop.f32.mrf.mxu0
    %v425 = vadd.f32 %v350, %v424
    %v426 = vpop.f32.mrf.mxu0
    %427 = vmatprep.mubr.bf16.mxu0 0
    %428 = vmatmul.mubr.bf16.gmra.mxu0 %v367
    %v429 = vpop.f32.mrf.mxu0
    %v430 = vadd.f32 %v350, %v429
    %v431 = vpop.f32.mrf.mxu0
    %v432 = vpop.f32.mrf.mxu0
    %v433 = vadd.f32 %v350, %v432
    %v434 = vpop.f32.mrf.mxu0
    %435 = vmatprep.mubr.bf16.mxu0 0
    %436 = vmatmul.mubr.bf16.gmra.mxu0 %v370
    %v437 = vpop.f32.mrf.mxu0
    %v438 = vadd.f32 %v350, %v437
    %v439 = vpop.f32.mrf.mxu0
    %v440 = vpop.f32.mrf.mxu0
    %v441 = vadd.f32 %v350, %v440
    %v442 = vpop.f32.mrf.mxu0
    %443 = vmatprep.mubr.bf16.mxu0 0
    %444 = vmatmul.mubr.bf16.gmra.mxu0 %v373
    %v445 = vpop.f32.mrf.mxu0
    %v446 = vadd.f32 %v350, %v445
    %v447 = vpop.f32.mrf.mxu0
    %v448 = vpop.f32.mrf.mxu0
    %v449 = vadd.f32 %v350, %v448
    %v450 = vpop.f32.mrf.mxu0
    %451 = vmatprep.mubr.bf16.mxu0 0
    %452 = vmatmul.mubr.bf16.gmra.mxu0 %v376
    %v453 = vpop.f32.mrf.mxu0
    %v454 = vadd.f32 %v350, %v453
    %v455 = vpop.f32.mrf.mxu0
    %v456 = vpop.f32.mrf.mxu0
    %v457 = vadd.f32 %v350, %v456
    %v458 = vpop.f32.mrf.mxu0
    %459 = vmatprep.mubr.bf16.mxu0 0
    %460 = vmatmul.mubr.bf16.gmra.mxu0 %v379
    %v461 = vpop.f32.mrf.mxu0
    %v462 = vadd.f32 %v350, %v461
    %v463 = vpop.f32.mrf.mxu0
    %v464 = vpop.f32.mrf.mxu0
    %v465 = vadd.f32 %v350, %v464
    %v466 = vpop.f32.mrf.mxu0
    %467 = vmatprep.mubr.bf16.mxu0 0
    %468 = vmatmul.mubr.bf16.gmra.mxu0 %v382
    %v469 = vpop.f32.mrf.mxu0
    %v470 = vadd.f32 %v350, %v469
    %v471 = vpop.f32.mrf.mxu0
    %v472 = vpop.f32.mrf.mxu0
    %v473 = vadd.f32 %v350, %v472
    %v474 = vpop.f32.mrf.mxu0
    %475 = vmatprep.mubr.bf16.mxu0 0
    %476 = vmatmul.mubr.bf16.gmra.mxu0 %v385
    %v477 = vpop.f32.mrf.mxu0
    %v478 = vadd.f32 %v350, %v477
    %v479 = vpop.f32.mrf.mxu0
    %v480 = vpop.f32.mrf.mxu0
    %v481 = vadd.f32 %v350, %v480
    %v482 = vpop.f32.mrf.mxu0
    %483 = vdwg.mxu0
    %v484 = vmul.f32 %v422, 0.35355338
    %v485 = vmul.f32 %v425, 0.35355338
    %v486 = vmul.f32 %v430, 0.35355338
    %v487 = vmul.f32 %v433, 0.35355338
    %v488 = vmul.f32 %v438, 0.35355338
    %v489 = vmul.f32 %v441, 0.35355338
    %v490 = vmul.f32 %v446, 0.35355338
    %v491 = vmul.f32 %v449, 0.35355338
    %v492 = vmul.f32 %v454, 0.35355338
    %v493 = vmul.f32 %v457, 0.35355338
    %v494 = vmul.f32 %v462, 0.35355338
    %v495 = vmul.f32 %v465, 0.35355338
    %v496 = vmul.f32 %v470, 0.35355338
    %v497 = vmul.f32 %v473, 0.35355338
    %v498 = vmul.f32 %v478, 0.35355338
    %v499 = vmul.f32 %v481, 0.35355338
    %v500 = vpack.c.bf16 %v485, %v484
    %v501 = vpack.c.bf16 %v487, %v486
    %v502 = vpack.c.bf16 %v489, %v488
    %v503 = vpack.c.bf16 %v491, %v490
    %v504 = vpack.c.bf16 %v493, %v492
    %v505 = vpack.c.bf16 %v495, %v494
    %v506 = vpack.c.bf16 %v497, %v496
    %v507 = vpack.c.bf16 %v499, %v498
    %v508 = vpack.c.bf16 %v425, %v422
    %v509 = vpack.c.bf16 %v433, %v430
    %v510 = vpack.c.bf16 %v441, %v438
    %v511 = vpack.c.bf16 %v449, %v446
    %v512 = vpack.c.bf16 %v457, %v454
    %v513 = vpack.c.bf16 %v465, %v462
    %v514 = vpack.c.bf16 %v473, %v470
    %v515 = vpack.c.bf16 %v481, %v478
    %v516 = vld [vmem:[#allocation2] sm:$0xff]
    %v517 = vld [vmem:[#allocation2 + $0x8] sm:$0xff]
    %v518 = vld [vmem:[#allocation2 + $0x10] sm:$0xff]
    %v519 = vld [vmem:[#allocation2 + $0x18] sm:$0xff]
    %v520 = vld [vmem:[#allocation2 + $0x20] sm:$0xff]
    %v521 = vld [vmem:[#allocation2 + $0x28] sm:$0xff]
    %v522 = vld [vmem:[#allocation2 + $0x30] sm:$0xff]
    %v523 = vld [vmem:[#allocation2 + $0x38] sm:$0xff]
    %528 = vrot.lane.b32.xlu0 %v508, 96
    %v529 = vpop.permute.xlu0 %528
    %530 = vrot.lane.b32.xlu0 %v509, 96
    %v531 = vpop.permute.xlu0 %530
    %532 = vrot.lane.b32.xlu0 %v510, 96
    %v533 = vpop.permute.xlu0 %532
    %534 = vrot.lane.b32.xlu0 %v511, 96
    %v535 = vpop.permute.xlu0 %534
    %vm536 = vcmask 64512
    %v538 = vsel %vm536, %v500, 0
    %v541 = vsel %vm536, %v501, 0
    %v544 = vsel %vm536, %v502, 0
    %v547 = vsel %vm536, %v503, 0
    %v550 = vsel %vm536, %v529, 0
    %v553 = vsel %vm536, %v531, 0
    %v556 = vsel %vm536, %v533, 0
    %v559 = vsel %vm536, %v535, 0
    %561 = vmatprep.subr.bf16.mxu0 0
    %562 = vmatpush1.bf16.xpose.msra.mxu0 0
    %563 = vmatprep.subr.bf16.mxu0 0
    %564 = vmatpush1.bf16.xpose.msra.mxu0 0
    %565 = vmatprep.subr.bf16.mxu0 0
    %566 = vmatpush1.bf16.xpose.msra.mxu0 0
    %567 = vmatprep.subr.bf16.mxu0 0
    %568 = vmatpush1.bf16.xpose.msra.mxu0 0
    %569 = vmatprep.subr.bf16.mxu0 0
    %570 = vmatpush1.bf16.xpose.msra.mxu0 %v559
    %571 = vmatprep.subr.bf16.mxu0 0
    %572 = vmatpush1.bf16.xpose.msra.mxu0 %v556
    %573 = vmatprep.subr.bf16.mxu0 0
    %574 = vmatpush1.bf16.xpose.msra.mxu0 %v553
    %575 = vmatprep.subr.bf16.mxu0 0
    %576 = vmatpush1.bf16.xpose.msra.mxu0 %v550
    %577 = vmatprep.subr.bf16.mxu0 0
    %578 = vmatpush2.bf16.xpose.msra.mxu0 0
    %579 = vmatprep.subr.bf16.mxu0 0
    %580 = vmatpush2.bf16.xpose.msra.mxu0 0
    %581 = vmatprep.subr.bf16.mxu0 0
    %582 = vmatpush2.bf16.xpose.msra.mxu0 0
    %583 = vmatprep.subr.bf16.mxu0 0
    %584 = vmatpush2.bf16.xpose.msra.mxu0 0
    %585 = vmatprep.subr.bf16.mxu0 0
    %586 = vmatpush2.bf16.xpose.msra.mxu0 0
    %587 = vmatprep.subr.bf16.mxu0 0
    %588 = vmatpush2.bf16.xpose.msra.mxu0 0
    %589 = vmatprep.subr.bf16.mxu0 0
    %590 = vmatpush2.bf16.xpose.msra.mxu0 0
    %591 = vmatprep.subr.bf16.mxu0 0
    %592 = vmatpush2.bf16.xpose.msra.mxu0 0
    %593 = vmatprep.mubr.bf16.mxu0 0
    %594 = vmatmul.mubr.bf16.gmra.mxu0 %v538
    %v595 = vpop.f32.mrf.mxu0
    %v596 = vadd.f32 %v516, %v595
    %v597 = vpop.f32.mrf.mxu0
    %v598 = vpop.f32.mrf.mxu0
    %v599 = vadd.f32 %v517, %v598
    %v600 = vpop.f32.mrf.mxu0
    %601 = vmatprep.mubr.bf16.mxu0 0
    %602 = vmatmul.mubr.bf16.gmra.mxu0 %v541
    %v603 = vpop.f32.mrf.mxu0
    %v604 = vadd.f32 %v518, %v603
    %v605 = vpop.f32.mrf.mxu0
    %v606 = vpop.f32.mrf.mxu0
    %v607 = vadd.f32 %v519, %v606
    %v608 = vpop.f32.mrf.mxu0
    %609 = vmatprep.mubr.bf16.mxu0 0
    %610 = vmatmul.mubr.bf16.gmra.mxu0 %v544
    %v611 = vpop.f32.mrf.mxu0
    %v612 = vadd.f32 %v520, %v611
    %v613 = vpop.f32.mrf.mxu0
    %v614 = vpop.f32.mrf.mxu0
    %v615 = vadd.f32 %v521, %v614
    %v616 = vpop.f32.mrf.mxu0
    %617 = vmatprep.mubr.bf16.mxu0 0
    %618 = vmatmul.mubr.bf16.gmra.mxu0 %v547
    %v619 = vpop.f32.mrf.mxu0
    %v620 = vadd.f32 %v522, %v619
    %v621 = vpop.f32.mrf.mxu0
    %v622 = vpop.f32.mrf.mxu0
    %v623 = vadd.f32 %v523, %v622
    %v624 = vpop.f32.mrf.mxu0
    %625 = vdwg.mxu0
    %630 = vrot.lane.b32.xlu0 %v512, 96
    %v631 = vpop.permute.xlu0 %630
    %632 = vrot.lane.b32.xlu0 %v513, 96
    %v633 = vpop.permute.xlu0 %632
    %634 = vrot.lane.b32.xlu0 %v514, 96
    %v635 = vpop.permute.xlu0 %634
    %636 = vrot.lane.b32.xlu0 %v515, 96
    %v637 = vpop.permute.xlu0 %636
    %v639 = vsel %vm536, %v504, 0
    %v642 = vsel %vm536, %v505, 0
    %v645 = vsel %vm536, %v506, 0
    %v648 = vsel %vm536, %v507, 0
    %v651 = vsel %vm536, %v631, 0
    %v654 = vsel %vm536, %v633, 0
    %v657 = vsel %vm536, %v635, 0
    %v660 = vsel %vm536, %v637, 0
    %662 = vmatprep.subr.bf16.mxu0 0
    %663 = vmatpush1.bf16.xpose.msra.mxu0 0
    %664 = vmatprep.subr.bf16.mxu0 0
    %665 = vmatpush1.bf16.xpose.msra.mxu0 0
    %666 = vmatprep.subr.bf16.mxu0 0
    %667 = vmatpush1.bf16.xpose.msra.mxu0 0
    %668 = vmatprep.subr.bf16.mxu0 0
    %669 = vmatpush1.bf16.xpose.msra.mxu0 0
    %670 = vmatprep.subr.bf16.mxu0 0
    %671 = vmatpush1.bf16.xpose.msra.mxu0 %v660
    %672 = vmatprep.subr.bf16.mxu0 0
    %673 = vmatpush1.bf16.xpose.msra.mxu0 %v657
    %674 = vmatprep.subr.bf16.mxu0 0
    %675 = vmatpush1.bf16.xpose.msra.mxu0 %v654
    %676 = vmatprep.subr.bf16.mxu0 0
    %677 = vmatpush1.bf16.xpose.msra.mxu0 %v651
    %678 = vmatprep.subr.bf16.mxu0 0
    %679 = vmatpush2.bf16.xpose.msra.mxu0 0
    %680 = vmatprep.subr.bf16.mxu0 0
    %681 = vmatpush2.bf16.xpose.msra.mxu0 0
    %682 = vmatprep.subr.bf16.mxu0 0
    %683 = vmatpush2.bf16.xpose.msra.mxu0 0
    %684 = vmatprep.subr.bf16.mxu0 0
    %685 = vmatpush2.bf16.xpose.msra.mxu0 0
    %686 = vmatprep.subr.bf16.mxu0 0
    %687 = vmatpush2.bf16.xpose.msra.mxu0 0
    %688 = vmatprep.subr.bf16.mxu0 0
    %689 = vmatpush2.bf16.xpose.msra.mxu0 0
    %690 = vmatprep.subr.bf16.mxu0 0
    %691 = vmatpush2.bf16.xpose.msra.mxu0 0
    %692 = vmatprep.subr.bf16.mxu0 0
    %693 = vmatpush2.bf16.xpose.msra.mxu0 0
    %694 = vmatprep.mubr.bf16.mxu0 0
    %695 = vmatmul.mubr.bf16.gmra.mxu0 %v639
    %v696 = vpop.f32.mrf.mxu0
    %v697 = vadd.f32 %v516, %v696
    %v698 = vpop.f32.mrf.mxu0
    %v699 = vpop.f32.mrf.mxu0
    %v700 = vadd.f32 %v517, %v699
    %v701 = vpop.f32.mrf.mxu0
    %702 = vmatprep.mubr.bf16.mxu0 0
    %703 = vmatmul.mubr.bf16.gmra.mxu0 %v642
    %v704 = vpop.f32.mrf.mxu0
    %v705 = vadd.f32 %v518, %v704
    %v706 = vpop.f32.mrf.mxu0
    %v707 = vpop.f32.mrf.mxu0
    %v708 = vadd.f32 %v519, %v707
    %v709 = vpop.f32.mrf.mxu0
    %710 = vmatprep.mubr.bf16.mxu0 0
    %711 = vmatmul.mubr.bf16.gmra.mxu0 %v645
    %v712 = vpop.f32.mrf.mxu0
    %v713 = vadd.f32 %v520, %v712
    %v714 = vpop.f32.mrf.mxu0
    %v715 = vpop.f32.mrf.mxu0
    %v716 = vadd.f32 %v521, %v715
    %v717 = vpop.f32.mrf.mxu0
    %718 = vmatprep.mubr.bf16.mxu0 0
    %719 = vmatmul.mubr.bf16.gmra.mxu0 %v648
    %v720 = vpop.f32.mrf.mxu0
    %v721 = vadd.f32 %v522, %v720
    %v722 = vpop.f32.mrf.mxu0
    %v723 = vpop.f32.mrf.mxu0
    %v724 = vadd.f32 %v523, %v723
    %v725 = vpop.f32.mrf.mxu0
    %726 = vdwg.mxu0
    %vm727 = vcmask 523264
    %v728 = vsel %vm727, %v596, -inf
    %729 = vmax.xlane.f32.xlu0 %v728
    %v730 = vpop.xlane.xlu0 %729
    %v731 = vsel %vm727, %v599, -inf
    %732 = vmax.xlane.f32.xlu0 %v731
    %v733 = vpop.xlane.xlu0 %732
    %v734 = vsel %vm727, %v604, -inf
    %735 = vmax.xlane.f32.xlu0 %v734
    %v736 = vpop.xlane.xlu0 %735
    %v737 = vsel %vm727, %v607, -inf
    %738 = vmax.xlane.f32.xlu0 %v737
    %v739 = vpop.xlane.xlu0 %738
    %v740 = vsel %vm727, %v612, -inf
    %741 = vmax.xlane.f32.xlu0 %v740
    %v742 = vpop.xlane.xlu0 %741
    %v743 = vsel %vm727, %v615, -inf
    %744 = vmax.xlane.f32.xlu0 %v743
    %v745 = vpop.xlane.xlu0 %744
    %v746 = vsel %vm727, %v620, -inf
    %747 = vmax.xlane.f32.xlu0 %v746
    %v748 = vpop.xlane.xlu0 %747
    %v749 = vsel %vm727, %v623, -inf
    %750 = vmax.xlane.f32.xlu0 %v749
    %v751 = vpop.xlane.xlu0 %750
    %v752 = vsel %vm727, %v697, -inf
    %753 = vmax.xlane.f32.xlu0 %v752
    %v754 = vpop.xlane.xlu0 %753
    %v755 = vsel %vm727, %v700, -inf
    %756 = vmax.xlane.f32.xlu0 %v755
    %v757 = vpop.xlane.xlu0 %756
    %v758 = vsel %vm727, %v705, -inf
    %759 = vmax.xlane.f32.xlu0 %v758
    %v760 = vpop.xlane.xlu0 %759
    %v761 = vsel %vm727, %v708, -inf
    %762 = vmax.xlane.f32.xlu0 %v761
    %v763 = vpop.xlane.xlu0 %762
    %v764 = vsel %vm727, %v713, -inf
    %765 = vmax.xlane.f32.xlu0 %v764
    %v766 = vpop.xlane.xlu0 %765
    %v767 = vsel %vm727, %v716, -inf
    %768 = vmax.xlane.f32.xlu0 %v767
    %v769 = vpop.xlane.xlu0 %768
    %v770 = vsel %vm727, %v721, -inf
    %771 = vmax.xlane.f32.xlu0 %v770
    %v772 = vpop.xlane.xlu0 %771
    %v773 = vsel %vm727, %v724, -inf
    %774 = vmax.xlane.f32.xlu0 %v773
    %v775 = vpop.xlane.xlu0 %774
    %v776 = vsub.f32 %v596, %v730
    %v777 = vsub.f32 %v599, %v733
    %v778 = vsub.f32 %v604, %v736
    %v779 = vsub.f32 %v607, %v739
    %v780 = vsub.f32 %v612, %v742
    %v781 = vsub.f32 %v615, %v745
    %v782 = vsub.f32 %v620, %v748
    %v783 = vsub.f32 %v623, %v751
    %v784 = vsub.f32 %v697, %v754
    %v785 = vsub.f32 %v700, %v757
    %v786 = vsub.f32 %v705, %v760
    %v787 = vsub.f32 %v708, %v763
    %v788 = vsub.f32 %v713, %v766
    %v789 = vsub.f32 %v716, %v769
    %v790 = vsub.f32 %v721, %v772
    %v791 = vsub.f32 %v724, %v775
    %v792 = vmul.f32 %v776, 1.442695
    %v793 = vpow.pop %v792
    %v794 = vmul.f32 %v777, 1.442695
    %v795 = vpow.pop %v794
    %v796 = vmul.f32 %v778, 1.442695
    %v797 = vpow.pop %v796
    %v798 = vmul.f32 %v779, 1.442695
    %v799 = vpow.pop %v798
    %v800 = vmul.f32 %v780, 1.442695
    %v801 = vpow.pop %v800
    %v802 = vmul.f32 %v781, 1.442695
    %v803 = vpow.pop %v802
    %v804 = vmul.f32 %v782, 1.442695
    %v805 = vpow.pop %v804
    %v806 = vmul.f32 %v783, 1.442695
    %v807 = vpow.pop %v806
    %v808 = vmul.f32 %v784, 1.442695
    %v809 = vpow.pop %v808
    %v810 = vmul.f32 %v785, 1.442695
    %v811 = vpow.pop %v810
    %v812 = vmul.f32 %v786, 1.442695
    %v813 = vpow.pop %v812
    %v814 = vmul.f32 %v787, 1.442695
    %v815 = vpow.pop %v814
    %v816 = vmul.f32 %v788, 1.442695
    %v817 = vpow.pop %v816
    %v818 = vmul.f32 %v789, 1.442695
    %v819 = vpow.pop %v818
    %v820 = vmul.f32 %v790, 1.442695
    %v821 = vpow.pop %v820
    %v822 = vmul.f32 %v791, 1.442695
    %v823 = vpow.pop %v822
    %v824 = vsel %vm727, %v793, 0.0
    %825 = vadd.xlane.f32.xlu0 %v824
    %v826 = vpop.xlane.xlu0 %825
    %v827 = vsel %vm727, %v795, 0.0
    %828 = vadd.xlane.f32.xlu0 %v827
    %v829 = vpop.xlane.xlu0 %828
    %v830 = vsel %vm727, %v797, 0.0
    %831 = vadd.xlane.f32.xlu0 %v830
    %v832 = vpop.xlane.xlu0 %831
    %v833 = vsel %vm727, %v799, 0.0
    %834 = vadd.xlane.f32.xlu0 %v833
    %v835 = vpop.xlane.xlu0 %834
    %v836 = vsel %vm727, %v801, 0.0
    %837 = vadd.xlane.f32.xlu0 %v836
    %v838 = vpop.xlane.xlu0 %837
    %v839 = vsel %vm727, %v803, 0.0
    %840 = vadd.xlane.f32.xlu0 %v839
    %v841 = vpop.xlane.xlu0 %840
    %v842 = vsel %vm727, %v805, 0.0
    %843 = vadd.xlane.f32.xlu0 %v842
    %v844 = vpop.xlane.xlu0 %843
    %v845 = vsel %vm727, %v807, 0.0
    %846 = vadd.xlane.f32.xlu0 %v845
    %v847 = vpop.xlane.xlu0 %846
    %v848 = vsel %vm727, %v809, 0.0
    %849 = vadd.xlane.f32.xlu0 %v848
    %v850 = vpop.xlane.xlu0 %849
    %v851 = vsel %vm727, %v811, 0.0
    %852 = vadd.xlane.f32.xlu0 %v851
    %v853 = vpop.xlane.xlu0 %852
    %v854 = vsel %vm727, %v813, 0.0
    %855 = vadd.xlane.f32.xlu0 %v854
    %v856 = vpop.xlane.xlu0 %855
    %v857 = vsel %vm727, %v815, 0.0
    %858 = vadd.xlane.f32.xlu0 %v857
    %v859 = vpop.xlane.xlu0 %858
    %v860 = vsel %vm727, %v817, 0.0
    %861 = vadd.xlane.f32.xlu0 %v860
    %v862 = vpop.xlane.xlu0 %861
    %v863 = vsel %vm727, %v819, 0.0
    %864 = vadd.xlane.f32.xlu0 %v863
    %v865 = vpop.xlane.xlu0 %864
    %v866 = vsel %vm727, %v821, 0.0
    %867 = vadd.xlane.f32.xlu0 %v866
    %v868 = vpop.xlane.xlu0 %867
    %v869 = vsel %vm727, %v823, 0.0
    %870 = vadd.xlane.f32.xlu0 %v869
    %v871 = vpop.xlane.xlu0 %870
    %v872 = vrcp.pop %v826
    %v873 = vrcp.pop %v829
    %v874 = vrcp.pop %v832
    %v875 = vrcp.pop %v835
    %v876 = vrcp.pop %v838
    %v877 = vrcp.pop %v841
    %v878 = vrcp.pop %v844
    %v879 = vrcp.pop %v847
    %v880 = vrcp.pop %v850
    %v881 = vrcp.pop %v853
    %v882 = vrcp.pop %v856
    %v883 = vrcp.pop %v859
    %v884 = vrcp.pop %v862
    %v885 = vrcp.pop %v865
    %v886 = vrcp.pop %v868
    %v887 = vrcp.pop %v871
    %v888 = vmul.f32 %v793, %v872
    %v889 = vmul.f32 %v795, %v873
    %v890 = vmul.f32 %v797, %v874
    %v891 = vmul.f32 %v799, %v875
    %v892 = vmul.f32 %v801, %v876
    %v893 = vmul.f32 %v803, %v877
    %v894 = vmul.f32 %v805, %v878
    %v895 = vmul.f32 %v807, %v879
    %v896 = vmul.f32 %v809, %v880
    %v897 = vmul.f32 %v811, %v881
    %v898 = vmul.f32 %v813, %v882
    %v899 = vmul.f32 %v815, %v883
    %v900 = vmul.f32 %v817, %v884
    %v901 = vmul.f32 %v819, %v885
    %v902 = vmul.f32 %v821, %v886
    %v903 = vmul.f32 %v823, %v887
    %v904 = vpack.c.bf16 %v889, %v888
    %v905 = vpack.c.bf16 %v891, %v890
    %v906 = vpack.c.bf16 %v893, %v892
    %v907 = vpack.c.bf16 %v895, %v894
    %v908 = vpack.c.bf16 %v897, %v896
    %v909 = vpack.c.bf16 %v899, %v898
    %v910 = vpack.c.bf16 %v901, %v900
    %v911 = vpack.c.bf16 %v903, %v902
    %912 = vrot.lane.b32.xlu0 %v508, 64
    %v913 = vpop.permute.xlu0 %912
    %914 = vrot.lane.b32.xlu0 %v509, 64
    %v915 = vpop.permute.xlu0 %914
    %916 = vrot.lane.b32.xlu0 %v510, 64
    %v917 = vpop.permute.xlu0 %916
    %918 = vrot.lane.b32.xlu0 %v511, 64
    %v919 = vpop.permute.xlu0 %918
    %v925 = vsel %vm727, %v904, 0
    %v928 = vsel %vm727, %v905, 0
    %v931 = vsel %vm727, %v906, 0
    %v934 = vsel %vm727, %v907, 0
    %936 = vmatprep.subr.bf16.mxu0 0
    %937 = vmatpush1.bf16.msra.mxu0 0
    %938 = vmatprep.subr.bf16.mxu0 0
    %939 = vmatpush1.bf16.msra.mxu0 0
    %940 = vmatprep.subr.bf16.mxu0 0
    %941 = vmatpush1.bf16.msra.mxu0 0
    %942 = vmatprep.subr.bf16.mxu0 0
    %943 = vmatpush1.bf16.msra.mxu0 0
    %944 = vmatprep.subr.bf16.mxu0 0
    %945 = vmatpush1.bf16.msra.mxu0 %v919
    %946 = vmatprep.subr.bf16.mxu0 0
    %947 = vmatpush1.bf16.msra.mxu0 %v917
    %948 = vmatprep.subr.bf16.mxu0 0
    %949 = vmatpush1.bf16.msra.mxu0 %v915
    %950 = vmatprep.subr.bf16.mxu0 0
    %951 = vmatpush1.bf16.msra.mxu0 %v913
    %952 = vmatprep.subr.bf16.mxu0 0
    %953 = vmatpush2.bf16.msra.mxu0 0
    %954 = vmatprep.subr.bf16.mxu0 0
    %955 = vmatpush2.bf16.msra.mxu0 0
    %956 = vmatprep.subr.bf16.mxu0 0
    %957 = vmatpush2.bf16.msra.mxu0 0
    %958 = vmatprep.subr.bf16.mxu0 0
    %959 = vmatpush2.bf16.msra.mxu0 0
    %960 = vmatprep.subr.bf16.mxu0 0
    %961 = vmatpush2.bf16.msra.mxu0 0
    %962 = vmatprep.subr.bf16.mxu0 0
    %963 = vmatpush2.bf16.msra.mxu0 0
    %964 = vmatprep.subr.bf16.mxu0 0
    %965 = vmatpush2.bf16.msra.mxu0 0
    %966 = vmatprep.subr.bf16.mxu0 0
    %967 = vmatpush2.bf16.msra.mxu0 0
    %968 = vmatprep.mubr.bf16.mxu0 0
    %969 = vmatmul.mubr.bf16.gmra.mxu0 %v925
    %v970 = vpop.f32.mrf.mxu0
    %v971 = vadd.f32 0.0, %v970
    %v972 = vpop.f32.mrf.mxu0
    %v973 = vpop.f32.mrf.mxu0
    %v974 = vadd.f32 0.0, %v973
    %v975 = vpop.f32.mrf.mxu0
    %976 = vmatprep.mubr.bf16.mxu0 0
    %977 = vmatmul.mubr.bf16.gmra.mxu0 %v928
    %v978 = vpop.f32.mrf.mxu0
    %v979 = vadd.f32 0.0, %v978
    %v980 = vpop.f32.mrf.mxu0
    %v981 = vpop.f32.mrf.mxu0
    %v982 = vadd.f32 0.0, %v981
    %v983 = vpop.f32.mrf.mxu0
    %984 = vmatprep.mubr.bf16.mxu0 0
    %985 = vmatmul.mubr.bf16.gmra.mxu0 %v931
    %v986 = vpop.f32.mrf.mxu0
    %v987 = vadd.f32 0.0, %v986
    %v988 = vpop.f32.mrf.mxu0
    %v989 = vpop.f32.mrf.mxu0
    %v990 = vadd.f32 0.0, %v989
    %v991 = vpop.f32.mrf.mxu0
    %992 = vmatprep.mubr.bf16.mxu0 0
    %993 = vmatmul.mubr.bf16.gmra.mxu0 %v934
    %v994 = vpop.f32.mrf.mxu0
    %v995 = vadd.f32 0.0, %v994
    %v996 = vpop.f32.mrf.mxu0
    %v997 = vpop.f32.mrf.mxu0
    %v998 = vadd.f32 0.0, %v997
    %v999 = vpop.f32.mrf.mxu0
    %1000 = vdwg.mxu0
    %1001 = vrot.lane.b32.xlu0 %v512, 64
    %v1002 = vpop.permute.xlu0 %1001
    %1003 = vrot.lane.b32.xlu0 %v513, 64
    %v1004 = vpop.permute.xlu0 %1003
    %1005 = vrot.lane.b32.xlu0 %v514, 64
    %v1006 = vpop.permute.xlu0 %1005
    %1007 = vrot.lane.b32.xlu0 %v515, 64
    %v1008 = vpop.permute.xlu0 %1007
    %v1014 = vsel %vm727, %v908, 0
    %v1017 = vsel %vm727, %v909, 0
    %v1020 = vsel %vm727, %v910, 0
    %v1023 = vsel %vm727, %v911, 0
    %1025 = vmatprep.subr.bf16.mxu0 0
    %1026 = vmatpush1.bf16.msra.mxu0 0
    %1027 = vmatprep.subr.bf16.mxu0 0
    %1028 = vmatpush1.bf16.msra.mxu0 0
    %1029 = vmatprep.subr.bf16.mxu0 0
    %1030 = vmatpush1.bf16.msra.mxu0 0
    %1031 = vmatprep.subr.bf16.mxu0 0
    %1032 = vmatpush1.bf16.msra.mxu0 0
    %1033 = vmatprep.subr.bf16.mxu0 0
    %1034 = vmatpush1.bf16.msra.mxu0 %v1008
    %1035 = vmatprep.subr.bf16.mxu0 0
    %1036 = vmatpush1.bf16.msra.mxu0 %v1006
    %1037 = vmatprep.subr.bf16.mxu0 0
    %1038 = vmatpush1.bf16.msra.mxu0 %v1004
    %1039 = vmatprep.subr.bf16.mxu0 0
    %1040 = vmatpush1.bf16.msra.mxu0 %v1002
    %1041 = vmatprep.subr.bf16.mxu0 0
    %1042 = vmatpush2.bf16.msra.mxu0 0
    %1043 = vmatprep.subr.bf16.mxu0 0
    %1044 = vmatpush2.bf16.msra.mxu0 0
    %1045 = vmatprep.subr.bf16.mxu0 0
    %1046 = vmatpush2.bf16.msra.mxu0 0
    %1047 = vmatprep.subr.bf16.mxu0 0
    %1048 = vmatpush2.bf16.msra.mxu0 0
    %1049 = vmatprep.subr.bf16.mxu0 0
    %1050 = vmatpush2.bf16.msra.mxu0 0
    %1051 = vmatprep.subr.bf16.mxu0 0
    %1052 = vmatpush2.bf16.msra.mxu0 0
    %1053 = vmatprep.subr.bf16.mxu0 0
    %1054 = vmatpush2.bf16.msra.mxu0 0
    %1055 = vmatprep.subr.bf16.mxu0 0
    %1056 = vmatpush2.bf16.msra.mxu0 0
    %1057 = vmatprep.mubr.bf16.mxu0 0
    %1058 = vmatmul.mubr.bf16.gmra.mxu0 %v1014
    %v1059 = vpop.f32.mrf.mxu0
    %v1060 = vadd.f32 0.0, %v1059
    %v1061 = vpop.f32.mrf.mxu0
    %v1062 = vpop.f32.mrf.mxu0
    %v1063 = vadd.f32 0.0, %v1062
    %v1064 = vpop.f32.mrf.mxu0
    %1065 = vmatprep.mubr.bf16.mxu0 0
    %1066 = vmatmul.mubr.bf16.gmra.mxu0 %v1017
    %v1067 = vpop.f32.mrf.mxu0
    %v1068 = vadd.f32 0.0, %v1067
    %v1069 = vpop.f32.mrf.mxu0
    %v1070 = vpop.f32.mrf.mxu0
    %v1071 = vadd.f32 0.0, %v1070
    %v1072 = vpop.f32.mrf.mxu0
    %1073 = vmatprep.mubr.bf16.mxu0 0
    %1074 = vmatmul.mubr.bf16.gmra.mxu0 %v1020
    %v1075 = vpop.f32.mrf.mxu0
    %v1076 = vadd.f32 0.0, %v1075
    %v1077 = vpop.f32.mrf.mxu0
    %v1078 = vpop.f32.mrf.mxu0
    %v1079 = vadd.f32 0.0, %v1078
    %v1080 = vpop.f32.mrf.mxu0
    %1081 = vmatprep.mubr.bf16.mxu0 0
    %1082 = vmatmul.mubr.bf16.gmra.mxu0 %v1023
    %v1083 = vpop.f32.mrf.mxu0
    %v1084 = vadd.f32 0.0, %v1083
    %v1085 = vpop.f32.mrf.mxu0
    %v1086 = vpop.f32.mrf.mxu0
    %v1087 = vadd.f32 0.0, %v1086
    %v1088 = vpop.f32.mrf.mxu0
    %1089 = vdwg.mxu0
    %v1090 = vpack.c.bf16 %v974, %v971
    %v1091 = vpack.c.bf16 %v982, %v979
    %v1092 = vpack.c.bf16 %v990, %v987
    %v1093 = vpack.c.bf16 %v998, %v995
    %v1094 = vpack.c.bf16 %v1063, %v1060
    %v1095 = vpack.c.bf16 %v1071, %v1068
    %v1096 = vpack.c.bf16 %v1079, %v1076
    %v1097 = vpack.c.bf16 %v1087, %v1084
    %v1098 = vld [vmem:[%s3] sm:$0xf]
    %s1099 = scalar_lea.vmem [#allocation2], 64
    %v1100 = vld [vmem:[%s1099] sm:$0xff]
    %v1101 = vld [vmem:[%s1099 + $0x8] sm:$0xff]
    %v1102 = vld [vmem:[%s1099 + $0x10] sm:$0xff]
    %v1103 = vld [vmem:[%s1099 + $0x18] sm:$0xff]
    %v1104 = vld [vmem:[%s1099 + $0x20] sm:$0xff]
    %v1105 = vld [vmem:[%s1099 + $0x28] sm:$0xff]
    %v1106 = vld [vmem:[%s1099 + $0x30] sm:$0xff]
    %v1107 = vld [vmem:[%s1099 + $0x38] sm:$0xff]
    %1112 = vrot.lane.b32.xlu0 %v500, 120
    %v1113 = vpop.permute.xlu0 %1112
    %1114 = vrot.lane.b32.xlu0 %v501, 120
    %v1115 = vpop.permute.xlu0 %1114
    %1116 = vrot.lane.b32.xlu0 %v502, 120
    %v1117 = vpop.permute.xlu0 %1116
    %1118 = vrot.lane.b32.xlu0 %v503, 120
    %v1119 = vpop.permute.xlu0 %1118
    %1120 = vrot.lane.b32.xlu0 %v508, 88
    %v1121 = vpop.permute.xlu0 %1120
    %1122 = vrot.lane.b32.xlu0 %v509, 88
    %v1123 = vpop.permute.xlu0 %1122
    %1124 = vrot.lane.b32.xlu0 %v510, 88
    %v1125 = vpop.permute.xlu0 %1124
    %1126 = vrot.lane.b32.xlu0 %v511, 88
    %v1127 = vpop.permute.xlu0 %1126
    %v1129 = vsel %vm536, %v1113, 0
    %v1132 = vsel %vm536, %v1115, 0
    %v1135 = vsel %vm536, %v1117, 0
    %v1138 = vsel %vm536, %v1119, 0
    %v1141 = vsel %vm536, %v1121, 0
    %v1144 = vsel %vm536, %v1123, 0
    %v1147 = vsel %vm536, %v1125, 0
    %v1150 = vsel %vm536, %v1127, 0
    %1152 = vmatprep.subr.bf16.mxu0 0
    %1153 = vmatpush1.bf16.xpose.msra.mxu0 0
    %1154 = vmatprep.subr.bf16.mxu0 0
    %1155 = vmatpush1.bf16.xpose.msra.mxu0 0
    %1156 = vmatprep.subr.bf16.mxu0 0
    %1157 = vmatpush1.bf16.xpose.msra.mxu0 0
    %1158 = vmatprep.subr.bf16.mxu0 0
    %1159 = vmatpush1.bf16.xpose.msra.mxu0 0
    %1160 = vmatprep.subr.bf16.mxu0 0
    %1161 = vmatpush1.bf16.xpose.msra.mxu0 %v1150
    %1162 = vmatprep.subr.bf16.mxu0 0
    %1163 = vmatpush1.bf16.xpose.msra.mxu0 %v1147
    %1164 = vmatprep.subr.bf16.mxu0 0
    %1165 = vmatpush1.bf16.xpose.msra.mxu0 %v1144
    %1166 = vmatprep.subr.bf16.mxu0 0
    %1167 = vmatpush1.bf16.xpose.msra.mxu0 %v1141
    %1168 = vmatprep.subr.bf16.mxu0 0
    %1169 = vmatpush2.bf16.xpose.msra.mxu0 0
    %1170 = vmatprep.subr.bf16.mxu0 0
    %1171 = vmatpush2.bf16.xpose.msra.mxu0 0
    %1172 = vmatprep.subr.bf16.mxu0 0
    %1173 = vmatpush2.bf16.xpose.msra.mxu0 0
    %1174 = vmatprep.subr.bf16.mxu0 0
    %1175 = vmatpush2.bf16.xpose.msra.mxu0 0
    %1176 = vmatprep.subr.bf16.mxu0 0
    %1177 = vmatpush2.bf16.xpose.msra.mxu0 0
    %1178 = vmatprep.subr.bf16.mxu0 0
    %1179 = vmatpush2.bf16.xpose.msra.mxu0 0
    %1180 = vmatprep.subr.bf16.mxu0 0
    %1181 = vmatpush2.bf16.xpose.msra.mxu0 0
    %1182 = vmatprep.subr.bf16.mxu0 0
    %1183 = vmatpush2.bf16.xpose.msra.mxu0 0
    %1184 = vmatprep.mubr.bf16.mxu0 0
    %1185 = vmatmul.mubr.bf16.gmra.mxu0 %v1129
    %v1186 = vpop.f32.mrf.mxu0
    %v1187 = vadd.f32 %v1100, %v1186
    %v1188 = vpop.f32.mrf.mxu0
    %v1189 = vpop.f32.mrf.mxu0
    %v1190 = vadd.f32 %v1101, %v1189
    %v1191 = vpop.f32.mrf.mxu0
    %1192 = vmatprep.mubr.bf16.mxu0 0
    %1193 = vmatmul.mubr.bf16.gmra.mxu0 %v1132
    %v1194 = vpop.f32.mrf.mxu0
    %v1195 = vadd.f32 %v1102, %v1194
    %v1196 = vpop.f32.mrf.mxu0
    %v1197 = vpop.f32.mrf.mxu0
    %v1198 = vadd.f32 %v1103, %v1197
    %v1199 = vpop.f32.mrf.mxu0
    %1200 = vmatprep.mubr.bf16.mxu0 0
    %1201 = vmatmul.mubr.bf16.gmra.mxu0 %v1135
    %v1202 = vpop.f32.mrf.mxu0
    %v1203 = vadd.f32 %v1104, %v1202
    %v1204 = vpop.f32.mrf.mxu0
    %v1205 = vpop.f32.mrf.mxu0
    %v1206 = vadd.f32 %v1105, %v1205
    %v1207 = vpop.f32.mrf.mxu0
    %1208 = vmatprep.mubr.bf16.mxu0 0
    %1209 = vmatmul.mubr.bf16.gmra.mxu0 %v1138
    %v1210 = vpop.f32.mrf.mxu0
    %v1211 = vadd.f32 %v1106, %v1210
    %v1212 = vpop.f32.mrf.mxu0
    %v1213 = vpop.f32.mrf.mxu0
    %v1214 = vadd.f32 %v1107, %v1213
    %v1215 = vpop.f32.mrf.mxu0
    %1216 = vdwg.mxu0
    %1221 = vrot.lane.b32.xlu0 %v504, 120
    %v1222 = vpop.permute.xlu0 %1221
    %1223 = vrot.lane.b32.xlu0 %v505, 120
    %v1224 = vpop.permute.xlu0 %1223
    %1225 = vrot.lane.b32.xlu0 %v506, 120
    %v1226 = vpop.permute.xlu0 %1225
    %1227 = vrot.lane.b32.xlu0 %v507, 120
    %v1228 = vpop.permute.xlu0 %1227
    %1229 = vrot.lane.b32.xlu0 %v512, 88
    %v1230 = vpop.permute.xlu0 %1229
    %1231 = vrot.lane.b32.xlu0 %v513, 88
    %v1232 = vpop.permute.xlu0 %1231
    %1233 = vrot.lane.b32.xlu0 %v514, 88
    %v1234 = vpop.permute.xlu0 %1233
    %1235 = vrot.lane.b32.xlu0 %v515, 88
    %v1236 = vpop.permute.xlu0 %1235
    %v1238 = vsel %vm536, %v1222, 0
    %v1241 = vsel %vm536, %v1224, 0
    %v1244 = vsel %vm536, %v1226, 0
    %v1247 = vsel %vm536, %v1228, 0
    %v1250 = vsel %vm536, %v1230, 0
    %v1253 = vsel %vm536, %v1232, 0
    %v1256 = vsel %vm536, %v1234, 0
    %v1259 = vsel %vm536, %v1236, 0
    %1261 = vmatprep.subr.bf16.mxu0 0
    %1262 = vmatpush1.bf16.xpose.msra.mxu0 0
    %1263 = vmatprep.subr.bf16.mxu0 0
    %1264 = vmatpush1.bf16.xpose.msra.mxu0 0
    %1265 = vmatprep.subr.bf16.mxu0 0
    %1266 = vmatpush1.bf16.xpose.msra.mxu0 0
    %1267 = vmatprep.subr.bf16.mxu0 0
    %1268 = vmatpush1.bf16.xpose.msra.mxu0 0
    %1269 = vmatprep.subr.bf16.mxu0 0
    %1270 = vmatpush1.bf16.xpose.msra.mxu0 %v1259
    %1271 = vmatprep.subr.bf16.mxu0 0
    %1272 = vmatpush1.bf16.xpose.msra.mxu0 %v1256
    %1273 = vmatprep.subr.bf16.mxu0 0
    %1274 = vmatpush1.bf16.xpose.msra.mxu0 %v1253
    %1275 = vmatprep.subr.bf16.mxu0 0
    %1276 = vmatpush1.bf16.xpose.msra.mxu0 %v1250
    %1277 = vmatprep.subr.bf16.mxu0 0
    %1278 = vmatpush2.bf16.xpose.msra.mxu0 0
    %1279 = vmatprep.subr.bf16.mxu0 0
    %1280 = vmatpush2.bf16.xpose.msra.mxu0 0
    %1281 = vmatprep.subr.bf16.mxu0 0
    %1282 = vmatpush2.bf16.xpose.msra.mxu0 0
    %1283 = vmatprep.subr.bf16.mxu0 0
    %1284 = vmatpush2.bf16.xpose.msra.mxu0 0
    %1285 = vmatprep.subr.bf16.mxu0 0
    %1286 = vmatpush2.bf16.xpose.msra.mxu0 0
    %1287 = vmatprep.subr.bf16.mxu0 0
    %1288 = vmatpush2.bf16.xpose.msra.mxu0 0
    %1289 = vmatprep.subr.bf16.mxu0 0
    %1290 = vmatpush2.bf16.xpose.msra.mxu0 0
    %1291 = vmatprep.subr.bf16.mxu0 0
    %1292 = vmatpush2.bf16.xpose.msra.mxu0 0
    %1293 = vmatprep.mubr.bf16.mxu0 0
    %1294 = vmatmul.mubr.bf16.gmra.mxu0 %v1238
    %v1295 = vpop.f32.mrf.mxu0
    %v1296 = vadd.f32 %v1100, %v1295
    %v1297 = vpop.f32.mrf.mxu0
    %v1298 = vpop.f32.mrf.mxu0
    %v1299 = vadd.f32 %v1101, %v1298
    %v1300 = vpop.f32.mrf.mxu0
    %1301 = vmatprep.mubr.bf16.mxu0 0
    %1302 = vmatmul.mubr.bf16.gmra.mxu0 %v1241
    %v1303 = vpop.f32.mrf.mxu0
    %v1304 = vadd.f32 %v1102, %v1303
    %v1305 = vpop.f32.mrf.mxu0
    %v1306 = vpop.f32.mrf.mxu0
    %v1307 = vadd.f32 %v1103, %v1306
    %v1308 = vpop.f32.mrf.mxu0
    %1309 = vmatprep.mubr.bf16.mxu0 0
    %1310 = vmatmul.mubr.bf16.gmra.mxu0 %v1244
    %v1311 = vpop.f32.mrf.mxu0
    %v1312 = vadd.f32 %v1104, %v1311
    %v1313 = vpop.f32.mrf.mxu0
    %v1314 = vpop.f32.mrf.mxu0
    %v1315 = vadd.f32 %v1105, %v1314
    %v1316 = vpop.f32.mrf.mxu0
    %1317 = vmatprep.mubr.bf16.mxu0 0
    %1318 = vmatmul.mubr.bf16.gmra.mxu0 %v1247
    %v1319 = vpop.f32.mrf.mxu0
    %v1320 = vadd.f32 %v1106, %v1319
    %v1321 = vpop.f32.mrf.mxu0
    %v1322 = vpop.f32.mrf.mxu0
    %v1323 = vadd.f32 %v1107, %v1322
    %v1324 = vpop.f32.mrf.mxu0
    %1325 = vdwg.mxu0
    %v1326 = vsel %vm727, %v1187, -inf
    %1327 = vmax.xlane.f32.xlu0 %v1326
    %v1328 = vpop.xlane.xlu0 %1327
    %v1329 = vsel %vm727, %v1190, -inf
    %1330 = vmax.xlane.f32.xlu0 %v1329
    %v1331 = vpop.xlane.xlu0 %1330
    %v1332 = vsel %vm727, %v1195, -inf
    %1333 = vmax.xlane.f32.xlu0 %v1332
    %v1334 = vpop.xlane.xlu0 %1333
    %v1335 = vsel %vm727, %v1198, -inf
    %1336 = vmax.xlane.f32.xlu0 %v1335
    %v1337 = vpop.xlane.xlu0 %1336
    %v1338 = vsel %vm727, %v1203, -inf
    %1339 = vmax.xlane.f32.xlu0 %v1338
    %v1340 = vpop.xlane.xlu0 %1339
    %v1341 = vsel %vm727, %v1206, -inf
    %1342 = vmax.xlane.f32.xlu0 %v1341
    %v1343 = vpop.xlane.xlu0 %1342
    %v1344 = vsel %vm727, %v1211, -inf
    %1345 = vmax.xlane.f32.xlu0 %v1344
    %v1346 = vpop.xlane.xlu0 %1345
    %v1347 = vsel %vm727, %v1214, -inf
    %1348 = vmax.xlane.f32.xlu0 %v1347
    %v1349 = vpop.xlane.xlu0 %1348
    %v1350 = vsel %vm727, %v1296, -inf
    %1351 = vmax.xlane.f32.xlu0 %v1350
    %v1352 = vpop.xlane.xlu0 %1351
    %v1353 = vsel %vm727, %v1299, -inf
    %1354 = vmax.xlane.f32.xlu0 %v1353
    %v1355 = vpop.xlane.xlu0 %1354
    %v1356 = vsel %vm727, %v1304, -inf
    %1357 = vmax.xlane.f32.xlu0 %v1356
    %v1358 = vpop.xlane.xlu0 %1357
    %v1359 = vsel %vm727, %v1307, -inf
    %1360 = vmax.xlane.f32.xlu0 %v1359
    %v1361 = vpop.xlane.xlu0 %1360
    %v1362 = vsel %vm727, %v1312, -inf
    %1363 = vmax.xlane.f32.xlu0 %v1362
    %v1364 = vpop.xlane.xlu0 %1363
    %v1365 = vsel %vm727, %v1315, -inf
    %1366 = vmax.xlane.f32.xlu0 %v1365
    %v1367 = vpop.xlane.xlu0 %1366
    %v1368 = vsel %vm727, %v1320, -inf
    %1369 = vmax.xlane.f32.xlu0 %v1368
    %v1370 = vpop.xlane.xlu0 %1369
    %v1371 = vsel %vm727, %v1323, -inf
    %1372 = vmax.xlane.f32.xlu0 %v1371
    %v1373 = vpop.xlane.xlu0 %1372
    %v1374 = vsub.f32 %v1187, %v1328
    %v1375 = vsub.f32 %v1190, %v1331
    %v1376 = vsub.f32 %v1195, %v1334
    %v1377 = vsub.f32 %v1198, %v1337
    %v1378 = vsub.f32 %v1203, %v1340
    %v1379 = vsub.f32 %v1206, %v1343
    %v1380 = vsub.f32 %v1211, %v1346
    %v1381 = vsub.f32 %v1214, %v1349
    %v1382 = vsub.f32 %v1296, %v1352
    %v1383 = vsub.f32 %v1299, %v1355
    %v1384 = vsub.f32 %v1304, %v1358
    %v1385 = vsub.f32 %v1307, %v1361
    %v1386 = vsub.f32 %v1312, %v1364
    %v1387 = vsub.f32 %v1315, %v1367
    %v1388 = vsub.f32 %v1320, %v1370
    %v1389 = vsub.f32 %v1323, %v1373
    %v1390 = vmul.f32 %v1374, 1.442695
    %v1391 = vpow.pop %v1390
    %v1392 = vmul.f32 %v1375, 1.442695
    %v1393 = vpow.pop %v1392
    %v1394 = vmul.f32 %v1376, 1.442695
    %v1395 = vpow.pop %v1394
    %v1396 = vmul.f32 %v1377, 1.442695
    %v1397 = vpow.pop %v1396
    %v1398 = vmul.f32 %v1378, 1.442695
    %v1399 = vpow.pop %v1398
    %v1400 = vmul.f32 %v1379, 1.442695
    %v1401 = vpow.pop %v1400
    %v1402 = vmul.f32 %v1380, 1.442695
    %v1403 = vpow.pop %v1402
    %v1404 = vmul.f32 %v1381, 1.442695
    %v1405 = vpow.pop %v1404
    %v1406 = vmul.f32 %v1382, 1.442695
    %v1407 = vpow.pop %v1406
    %v1408 = vmul.f32 %v1383, 1.442695
    %v1409 = vpow.pop %v1408
    %v1410 = vmul.f32 %v1384, 1.442695
    %v1411 = vpow.pop %v1410
    %v1412 = vmul.f32 %v1385, 1.442695
    %v1413 = vpow.pop %v1412
    %v1414 = vmul.f32 %v1386, 1.442695
    %v1415 = vpow.pop %v1414
    %v1416 = vmul.f32 %v1387, 1.442695
    %v1417 = vpow.pop %v1416
    %v1418 = vmul.f32 %v1388, 1.442695
    %v1419 = vpow.pop %v1418
    %v1420 = vmul.f32 %v1389, 1.442695
    %v1421 = vpow.pop %v1420
    %v1422 = vsel %vm727, %v1391, 0.0
    %1423 = vadd.xlane.f32.xlu0 %v1422
    %v1424 = vpop.xlane.xlu0 %1423
    %v1425 = vsel %vm727, %v1393, 0.0
    %1426 = vadd.xlane.f32.xlu0 %v1425
    %v1427 = vpop.xlane.xlu0 %1426
    %v1428 = vsel %vm727, %v1395, 0.0
    %1429 = vadd.xlane.f32.xlu0 %v1428
    %v1430 = vpop.xlane.xlu0 %1429
    %v1431 = vsel %vm727, %v1397, 0.0
    %1432 = vadd.xlane.f32.xlu0 %v1431
    %v1433 = vpop.xlane.xlu0 %1432
    %v1434 = vsel %vm727, %v1399, 0.0
    %1435 = vadd.xlane.f32.xlu0 %v1434
    %v1436 = vpop.xlane.xlu0 %1435
    %v1437 = vsel %vm727, %v1401, 0.0
    %1438 = vadd.xlane.f32.xlu0 %v1437
    %v1439 = vpop.xlane.xlu0 %1438
    %v1440 = vsel %vm727, %v1403, 0.0
    %1441 = vadd.xlane.f32.xlu0 %v1440
    %v1442 = vpop.xlane.xlu0 %1441
    %v1443 = vsel %vm727, %v1405, 0.0
    %1444 = vadd.xlane.f32.xlu0 %v1443
    %v1445 = vpop.xlane.xlu0 %1444
    %v1446 = vsel %vm727, %v1407, 0.0
    %1447 = vadd.xlane.f32.xlu0 %v1446
    %v1448 = vpop.xlane.xlu0 %1447
    %v1449 = vsel %vm727, %v1409, 0.0
    %1450 = vadd.xlane.f32.xlu0 %v1449
    %v1451 = vpop.xlane.xlu0 %1450
    %v1452 = vsel %vm727, %v1411, 0.0
    %1453 = vadd.xlane.f32.xlu0 %v1452
    %v1454 = vpop.xlane.xlu0 %1453
    %v1455 = vsel %vm727, %v1413, 0.0
    %1456 = vadd.xlane.f32.xlu0 %v1455
    %v1457 = vpop.xlane.xlu0 %1456
    %v1458 = vsel %vm727, %v1415, 0.0
    %1459 = vadd.xlane.f32.xlu0 %v1458
    %v1460 = vpop.xlane.xlu0 %1459
    %v1461 = vsel %vm727, %v1417, 0.0
    %1462 = vadd.xlane.f32.xlu0 %v1461
    %v1463 = vpop.xlane.xlu0 %1462
    %v1464 = vsel %vm727, %v1419, 0.0
    %1465 = vadd.xlane.f32.xlu0 %v1464
    %v1466 = vpop.xlane.xlu0 %1465
    %v1467 = vsel %vm727, %v1421, 0.0
    %1468 = vadd.xlane.f32.xlu0 %v1467
    %v1469 = vpop.xlane.xlu0 %1468
    %v1470 = vrcp.pop %v1424
    %v1471 = vrcp.pop %v1427
    %v1472 = vrcp.pop %v1430
    %v1473 = vrcp.pop %v1433
    %v1474 = vrcp.pop %v1436
    %v1475 = vrcp.pop %v1439
    %v1476 = vrcp.pop %v1442
    %v1477 = vrcp.pop %v1445
    %v1478 = vrcp.pop %v1448
    %v1479 = vrcp.pop %v1451
    %v1480 = vrcp.pop %v1454
    %v1481 = vrcp.pop %v1457
    %v1482 = vrcp.pop %v1460
    %v1483 = vrcp.pop %v1463
    %v1484 = vrcp.pop %v1466
    %v1485 = vrcp.pop %v1469
    %v1486 = vmul.f32 %v1391, %v1470
    %v1487 = vmul.f32 %v1393, %v1471
    %v1488 = vmul.f32 %v1395, %v1472
    %v1489 = vmul.f32 %v1397, %v1473
    %v1490 = vmul.f32 %v1399, %v1474
    %v1491 = vmul.f32 %v1401, %v1475
    %v1492 = vmul.f32 %v1403, %v1476
    %v1493 = vmul.f32 %v1405, %v1477
    %v1494 = vmul.f32 %v1407, %v1478
    %v1495 = vmul.f32 %v1409, %v1479
    %v1496 = vmul.f32 %v1411, %v1480
    %v1497 = vmul.f32 %v1413, %v1481
    %v1498 = vmul.f32 %v1415, %v1482
    %v1499 = vmul.f32 %v1417, %v1483
    %v1500 = vmul.f32 %v1419, %v1484
    %v1501 = vmul.f32 %v1421, %v1485
    %v1502 = vpack.c.bf16 %v1487, %v1486
    %v1503 = vpack.c.bf16 %v1489, %v1488
    %v1504 = vpack.c.bf16 %v1491, %v1490
    %v1505 = vpack.c.bf16 %v1493, %v1492
    %v1506 = vpack.c.bf16 %v1495, %v1494
    %v1507 = vpack.c.bf16 %v1497, %v1496
    %v1508 = vpack.c.bf16 %v1499, %v1498
    %v1509 = vpack.c.bf16 %v1501, %v1500
    %1510 = vrot.lane.b32.xlu0 %v508, 56
    %v1511 = vpop.permute.xlu0 %1510
    %1512 = vrot.lane.b32.xlu0 %v509, 56
    %v1513 = vpop.permute.xlu0 %1512
    %1514 = vrot.lane.b32.xlu0 %v510, 56
    %v1515 = vpop.permute.xlu0 %1514
    %1516 = vrot.lane.b32.xlu0 %v511, 56
    %v1517 = vpop.permute.xlu0 %1516
    %v1523 = vsel %vm727, %v1502, 0
    %v1526 = vsel %vm727, %v1503, 0
    %v1529 = vsel %vm727, %v1504, 0
    %v1532 = vsel %vm727, %v1505, 0
    %1534 = vmatprep.subr.bf16.mxu0 0
    %1535 = vmatpush1.bf16.msra.mxu0 0
    %1536 = vmatprep.subr.bf16.mxu0 0
    %1537 = vmatpush1.bf16.msra.mxu0 0
    %1538 = vmatprep.subr.bf16.mxu0 0
    %1539 = vmatpush1.bf16.msra.mxu0 0
    %1540 = vmatprep.subr.bf16.mxu0 0
    %1541 = vmatpush1.bf16.msra.mxu0 0
    %1542 = vmatprep.subr.bf16.mxu0 0
    %1543 = vmatpush1.bf16.msra.mxu0 %v1517
    %1544 = vmatprep.subr.bf16.mxu0 0
    %1545 = vmatpush1.bf16.msra.mxu0 %v1515
    %1546 = vmatprep.subr.bf16.mxu0 0
    %1547 = vmatpush1.bf16.msra.mxu0 %v1513
    %1548 = vmatprep.subr.bf16.mxu0 0
    %1549 = vmatpush1.bf16.msra.mxu0 %v1511
    %1550 = vmatprep.subr.bf16.mxu0 0
    %1551 = vmatpush2.bf16.msra.mxu0 0
    %1552 = vmatprep.subr.bf16.mxu0 0
    %1553 = vmatpush2.bf16.msra.mxu0 0
    %1554 = vmatprep.subr.bf16.mxu0 0
    %1555 = vmatpush2.bf16.msra.mxu0 0
    %1556 = vmatprep.subr.bf16.mxu0 0
    %1557 = vmatpush2.bf16.msra.mxu0 0
    %1558 = vmatprep.subr.bf16.mxu0 0
    %1559 = vmatpush2.bf16.msra.mxu0 0
    %1560 = vmatprep.subr.bf16.mxu0 0
    %1561 = vmatpush2.bf16.msra.mxu0 0
    %1562 = vmatprep.subr.bf16.mxu0 0
    %1563 = vmatpush2.bf16.msra.mxu0 0
    %1564 = vmatprep.subr.bf16.mxu0 0
    %1565 = vmatpush2.bf16.msra.mxu0 0
    %1566 = vmatprep.mubr.bf16.mxu0 0
    %1567 = vmatmul.mubr.bf16.gmra.mxu0 %v1523
    %v1568 = vpop.f32.mrf.mxu0
    %v1569 = vadd.f32 0.0, %v1568
    %v1570 = vpop.f32.mrf.mxu0
    %v1571 = vpop.f32.mrf.mxu0
    %v1572 = vadd.f32 0.0, %v1571
    %v1573 = vpop.f32.mrf.mxu0
    %1574 = vmatprep.mubr.bf16.mxu0 0
    %1575 = vmatmul.mubr.bf16.gmra.mxu0 %v1526
    %v1576 = vpop.f32.mrf.mxu0
    %v1577 = vadd.f32 0.0, %v1576
    %v1578 = vpop.f32.mrf.mxu0
    %v1579 = vpop.f32.mrf.mxu0
    %v1580 = vadd.f32 0.0, %v1579
    %v1581 = vpop.f32.mrf.mxu0
    %1582 = vmatprep.mubr.bf16.mxu0 0
    %1583 = vmatmul.mubr.bf16.gmra.mxu0 %v1529
    %v1584 = vpop.f32.mrf.mxu0
    %v1585 = vadd.f32 0.0, %v1584
    %v1586 = vpop.f32.mrf.mxu0
    %v1587 = vpop.f32.mrf.mxu0
    %v1588 = vadd.f32 0.0, %v1587
    %v1589 = vpop.f32.mrf.mxu0
    %1590 = vmatprep.mubr.bf16.mxu0 0
    %1591 = vmatmul.mubr.bf16.gmra.mxu0 %v1532
    %v1592 = vpop.f32.mrf.mxu0
    %v1593 = vadd.f32 0.0, %v1592
    %v1594 = vpop.f32.mrf.mxu0
    %v1595 = vpop.f32.mrf.mxu0
    %v1596 = vadd.f32 0.0, %v1595
    %v1597 = vpop.f32.mrf.mxu0
    %1598 = vdwg.mxu0
    %1599 = vrot.lane.b32.xlu0 %v512, 56
    %v1600 = vpop.permute.xlu0 %1599
    %1601 = vrot.lane.b32.xlu0 %v513, 56
    %v1602 = vpop.permute.xlu0 %1601
    %1603 = vrot.lane.b32.xlu0 %v514, 56
    %v1604 = vpop.permute.xlu0 %1603
    %1605 = vrot.lane.b32.xlu0 %v515, 56
    %v1606 = vpop.permute.xlu0 %1605
    %v1612 = vsel %vm727, %v1506, 0
    %v1615 = vsel %vm727, %v1507, 0
    %v1618 = vsel %vm727, %v1508, 0
    %v1621 = vsel %vm727, %v1509, 0
    %1623 = vmatprep.subr.bf16.mxu0 0
    %1624 = vmatpush1.bf16.msra.mxu0 0
    %1625 = vmatprep.subr.bf16.mxu0 0
    %1626 = vmatpush1.bf16.msra.mxu0 0
    %1627 = vmatprep.subr.bf16.mxu0 0
    %1628 = vmatpush1.bf16.msra.mxu0 0
    %1629 = vmatprep.subr.bf16.mxu0 0
    %1630 = vmatpush1.bf16.msra.mxu0 0
    %1631 = vmatprep.subr.bf16.mxu0 0
    %1632 = vmatpush1.bf16.msra.mxu0 %v1606
    %1633 = vmatprep.subr.bf16.mxu0 0
    %1634 = vmatpush1.bf16.msra.mxu0 %v1604
    %1635 = vmatprep.subr.bf16.mxu0 0
    %1636 = vmatpush1.bf16.msra.mxu0 %v1602
    %1637 = vmatprep.subr.bf16.mxu0 0
    %1638 = vmatpush1.bf16.msra.mxu0 %v1600
    %1639 = vmatprep.subr.bf16.mxu0 0
    %1640 = vmatpush2.bf16.msra.mxu0 0
    %1641 = vmatprep.subr.bf16.mxu0 0
    %1642 = vmatpush2.bf16.msra.mxu0 0
    %1643 = vmatprep.subr.bf16.mxu0 0
    %1644 = vmatpush2.bf16.msra.mxu0 0
    %1645 = vmatprep.subr.bf16.mxu0 0
    %1646 = vmatpush2.bf16.msra.mxu0 0
    %1647 = vmatprep.subr.bf16.mxu0 0
    %1648 = vmatpush2.bf16.msra.mxu0 0
    %1649 = vmatprep.subr.bf16.mxu0 0
    %1650 = vmatpush2.bf16.msra.mxu0 0
    %1651 = vmatprep.subr.bf16.mxu0 0
    %1652 = vmatpush2.bf16.msra.mxu0 0
    %1653 = vmatprep.subr.bf16.mxu0 0
    %1654 = vmatpush2.bf16.msra.mxu0 0
    %1655 = vmatprep.mubr.bf16.mxu0 0
    %1656 = vmatmul.mubr.bf16.gmra.mxu0 %v1612
    %v1657 = vpop.f32.mrf.mxu0
    %v1658 = vadd.f32 0.0, %v1657
    %v1659 = vpop.f32.mrf.mxu0
    %v1660 = vpop.f32.mrf.mxu0
    %v1661 = vadd.f32 0.0, %v1660
    %v1662 = vpop.f32.mrf.mxu0
    %1663 = vmatprep.mubr.bf16.mxu0 0
    %1664 = vmatmul.mubr.bf16.gmra.mxu0 %v1615
    %v1665 = vpop.f32.mrf.mxu0
    %v1666 = vadd.f32 0.0, %v1665
    %v1667 = vpop.f32.mrf.mxu0
    %v1668 = vpop.f32.mrf.mxu0
    %v1669 = vadd.f32 0.0, %v1668
    %v1670 = vpop.f32.mrf.mxu0
    %1671 = vmatprep.mubr.bf16.mxu0 0
    %1672 = vmatmul.mubr.bf16.gmra.mxu0 %v1618
    %v1673 = vpop.f32.mrf.mxu0
    %v1674 = vadd.f32 0.0, %v1673
    %v1675 = vpop.f32.mrf.mxu0
    %v1676 = vpop.f32.mrf.mxu0
    %v1677 = vadd.f32 0.0, %v1676
    %v1678 = vpop.f32.mrf.mxu0
    %1679 = vmatprep.mubr.bf16.mxu0 0
    %1680 = vmatmul.mubr.bf16.gmra.mxu0 %v1621
    %v1681 = vpop.f32.mrf.mxu0
    %v1682 = vadd.f32 0.0, %v1681
    %v1683 = vpop.f32.mrf.mxu0
    %v1684 = vpop.f32.mrf.mxu0
    %v1685 = vadd.f32 0.0, %v1684
    %v1686 = vpop.f32.mrf.mxu0
    %1687 = vdwg.mxu0
    %v1688 = vpack.c.bf16 %v1572, %v1569
    %v1689 = vpack.c.bf16 %v1580, %v1577
    %v1690 = vpack.c.bf16 %v1588, %v1585
    %v1691 = vpack.c.bf16 %v1596, %v1593
    %v1692 = vpack.c.bf16 %v1661, %v1658
    %v1693 = vpack.c.bf16 %v1669, %v1666
    %v1694 = vpack.c.bf16 %v1677, %v1674
    %v1695 = vpack.c.bf16 %v1685, %v1682
    %s1696 = scalar_lea.vmem %s3, 4
    %v1697 = vld [vmem:[%s1696] sm:$0xf]
    %v1699 = vsel %vm536, %v1688, 0
    %v1702 = vsel %vm536, %v1689, 0
    %v1705 = vsel %vm536, %v1690, 0
    %v1708 = vsel %vm536, %v1691, 0
    %v1711 = vsel %vm536, %v1692, 0
    %v1714 = vsel %vm536, %v1693, 0
    %v1717 = vsel %vm536, %v1694, 0
    %v1720 = vsel %vm536, %v1695, 0
    %vm1722 = vcmask 1043456
    %v1724 = vsel %vm1722, %v1697, 0
    %1726 = vmatprep.subr.bf16.mxu0 0
    %1727 = vmatpush1.bf16.msra.mxu0 0
    %1728 = vmatprep.subr.bf16.mxu0 0
    %1729 = vmatpush1.bf16.msra.mxu0 0
    %1730 = vmatprep.subr.bf16.mxu0 0
    %1731 = vmatpush1.bf16.msra.mxu0 0
    %1732 = vmatprep.subr.bf16.mxu0 0
    %1733 = vmatpush1.bf16.msra.mxu0 0
    %1734 = vmatprep.subr.bf16.mxu0 0
    %1735 = vmatpush1.bf16.msra.mxu0 0
    %1736 = vmatprep.subr.bf16.mxu0 0
    %1737 = vmatpush1.bf16.msra.mxu0 0
    %1738 = vmatprep.subr.bf16.mxu0 0
    %1739 = vmatpush1.bf16.msra.mxu0 0
    %1740 = vmatprep.subr.bf16.mxu0 0
    %1741 = vmatpush1.bf16.msra.mxu0 %v1724
    %1742 = vmatprep.subr.bf16.mxu0 0
    %1743 = vmatpush2.bf16.msra.mxu0 0
    %1744 = vmatprep.subr.bf16.mxu0 0
    %1745 = vmatpush2.bf16.msra.mxu0 0
    %1746 = vmatprep.subr.bf16.mxu0 0
    %1747 = vmatpush2.bf16.msra.mxu0 0
    %1748 = vmatprep.subr.bf16.mxu0 0
    %1749 = vmatpush2.bf16.msra.mxu0 0
    %1750 = vmatprep.subr.bf16.mxu0 0
    %1751 = vmatpush2.bf16.msra.mxu0 0
    %1752 = vmatprep.subr.bf16.mxu0 0
    %1753 = vmatpush2.bf16.msra.mxu0 0
    %1754 = vmatprep.subr.bf16.mxu0 0
    %1755 = vmatpush2.bf16.msra.mxu0 0
    %1756 = vmatprep.subr.bf16.mxu0 0
    %1757 = vmatpush2.bf16.msra.mxu0 0
    %1758 = vmatprep.mubr.bf16.mxu0 0
    %1759 = vmatmul.mubr.bf16.gmra.mxu0 %v1699
    %v1760 = vpop.f32.mrf.mxu0
    %v1761 = vadd.f32 0.0, %v1760
    %v1762 = vpop.f32.mrf.mxu0
    %v1763 = vpop.f32.mrf.mxu0
    %v1764 = vadd.f32 0.0, %v1763
    %v1765 = vpop.f32.mrf.mxu0
    %1766 = vmatprep.mubr.bf16.mxu0 0
    %1767 = vmatmul.mubr.bf16.gmra.mxu0 %v1702
    %v1768 = vpop.f32.mrf.mxu0
    %v1769 = vadd.f32 0.0, %v1768
    %v1770 = vpop.f32.mrf.mxu0
    %v1771 = vpop.f32.mrf.mxu0
    %v1772 = vadd.f32 0.0, %v1771
    %v1773 = vpop.f32.mrf.mxu0
    %1774 = vmatprep.mubr.bf16.mxu0 0
    %1775 = vmatmul.mubr.bf16.gmra.mxu0 %v1705
    %v1776 = vpop.f32.mrf.mxu0
    %v1777 = vadd.f32 0.0, %v1776
    %v1778 = vpop.f32.mrf.mxu0
    %v1779 = vpop.f32.mrf.mxu0
    %v1780 = vadd.f32 0.0, %v1779
    %v1781 = vpop.f32.mrf.mxu0
    %1782 = vmatprep.mubr.bf16.mxu0 0
    %1783 = vmatmul.mubr.bf16.gmra.mxu0 %v1708
    %v1784 = vpop.f32.mrf.mxu0
    %v1785 = vadd.f32 0.0, %v1784
    %v1786 = vpop.f32.mrf.mxu0
    %v1787 = vpop.f32.mrf.mxu0
    %v1788 = vadd.f32 0.0, %v1787
    %v1789 = vpop.f32.mrf.mxu0
    %1790 = vmatprep.mubr.bf16.mxu0 0
    %1791 = vmatmul.mubr.bf16.gmra.mxu0 %v1711
    %v1792 = vpop.f32.mrf.mxu0
    %v1793 = vadd.f32 0.0, %v1792
    %v1794 = vpop.f32.mrf.mxu0
    %v1795 = vpop.f32.mrf.mxu0
    %v1796 = vadd.f32 0.0, %v1795
    %v1797 = vpop.f32.mrf.mxu0
    %1798 = vmatprep.mubr.bf16.mxu0 0
    %1799 = vmatmul.mubr.bf16.gmra.mxu0 %v1714
    %v1800 = vpop.f32.mrf.mxu0
    %v1801 = vadd.f32 0.0, %v1800
    %v1802 = vpop.f32.mrf.mxu0
    %v1803 = vpop.f32.mrf.mxu0
    %v1804 = vadd.f32 0.0, %v1803
    %v1805 = vpop.f32.mrf.mxu0
    %1806 = vmatprep.mubr.bf16.mxu0 0
    %1807 = vmatmul.mubr.bf16.gmra.mxu0 %v1717
    %v1808 = vpop.f32.mrf.mxu0
    %v1809 = vadd.f32 0.0, %v1808
    %v1810 = vpop.f32.mrf.mxu0
    %v1811 = vpop.f32.mrf.mxu0
    %v1812 = vadd.f32 0.0, %v1811
    %v1813 = vpop.f32.mrf.mxu0
    %1814 = vmatprep.mubr.bf16.mxu0 0
    %1815 = vmatmul.mubr.bf16.gmra.mxu0 %v1720
    %v1816 = vpop.f32.mrf.mxu0
    %v1817 = vadd.f32 0.0, %v1816
    %v1818 = vpop.f32.mrf.mxu0
    %v1819 = vpop.f32.mrf.mxu0
    %v1820 = vadd.f32 0.0, %v1819
    %v1821 = vpop.f32.mrf.mxu0
    %1822 = vdwg.mxu0
    %v1824 = vsel %vm536, %v1090, 0
    %v1827 = vsel %vm536, %v1091, 0
    %v1830 = vsel %vm536, %v1092, 0
    %v1833 = vsel %vm536, %v1093, 0
    %v1836 = vsel %vm536, %v1094, 0
    %v1839 = vsel %vm536, %v1095, 0
    %v1842 = vsel %vm536, %v1096, 0
    %v1845 = vsel %vm536, %v1097, 0
    %v1848 = vsel %vm1722, %v1098, 0
    %1850 = vmatprep.subr.bf16.mxu0 0
    %1851 = vmatpush1.bf16.msra.mxu0 0
    %1852 = vmatprep.subr.bf16.mxu0 0
    %1853 = vmatpush1.bf16.msra.mxu0 0
    %1854 = vmatprep.subr.bf16.mxu0 0
    %1855 = vmatpush1.bf16.msra.mxu0 0
    %1856 = vmatprep.subr.bf16.mxu0 0
    %1857 = vmatpush1.bf16.msra.mxu0 0
    %1858 = vmatprep.subr.bf16.mxu0 0
    %1859 = vmatpush1.bf16.msra.mxu0 0
    %1860 = vmatprep.subr.bf16.mxu0 0
    %1861 = vmatpush1.bf16.msra.mxu0 0
    %1862 = vmatprep.subr.bf16.mxu0 0
    %1863 = vmatpush1.bf16.msra.mxu0 0
    %1864 = vmatprep.subr.bf16.mxu0 0
    %1865 = vmatpush1.bf16.msra.mxu0 %v1848
    %1866 = vmatprep.subr.bf16.mxu0 0
    %1867 = vmatpush2.bf16.msra.mxu0 0
    %1868 = vmatprep.subr.bf16.mxu0 0
    %1869 = vmatpush2.bf16.msra.mxu0 0
    %1870 = vmatprep.subr.bf16.mxu0 0
    %1871 = vmatpush2.bf16.msra.mxu0 0
    %1872 = vmatprep.subr.bf16.mxu0 0
    %1873 = vmatpush2.bf16.msra.mxu0 0
    %1874 = vmatprep.subr.bf16.mxu0 0
    %1875 = vmatpush2.bf16.msra.mxu0 0
    %1876 = vmatprep.subr.bf16.mxu0 0
    %1877 = vmatpush2.bf16.msra.mxu0 0
    %1878 = vmatprep.subr.bf16.mxu0 0
    %1879 = vmatpush2.bf16.msra.mxu0 0
    %1880 = vmatprep.subr.bf16.mxu0 0
    %1881 = vmatpush2.bf16.msra.mxu0 0
    %1882 = vmatprep.mubr.bf16.mxu0 0
    %1883 = vmatmul.mubr.bf16.gmra.mxu0 %v1824
    %v1884 = vpop.f32.mrf.mxu0
    %v1885 = vadd.f32 %v1761, %v1884
    %v1886 = vpop.f32.mrf.mxu0
    %v1887 = vpop.f32.mrf.mxu0
    %v1888 = vadd.f32 %v1764, %v1887
    %v1889 = vpop.f32.mrf.mxu0
    %1890 = vmatprep.mubr.bf16.mxu0 0
    %1891 = vmatmul.mubr.bf16.gmra.mxu0 %v1827
    %v1892 = vpop.f32.mrf.mxu0
    %v1893 = vadd.f32 %v1769, %v1892
    %v1894 = vpop.f32.mrf.mxu0
    %v1895 = vpop.f32.mrf.mxu0
    %v1896 = vadd.f32 %v1772, %v1895
    %v1897 = vpop.f32.mrf.mxu0
    %1898 = vmatprep.mubr.bf16.mxu0 0
    %1899 = vmatmul.mubr.bf16.gmra.mxu0 %v1830
    %v1900 = vpop.f32.mrf.mxu0
    %v1901 = vadd.f32 %v1777, %v1900
    %v1902 = vpop.f32.mrf.mxu0
    %v1903 = vpop.f32.mrf.mxu0
    %v1904 = vadd.f32 %v1780, %v1903
    %v1905 = vpop.f32.mrf.mxu0
    %1906 = vmatprep.mubr.bf16.mxu0 0
    %1907 = vmatmul.mubr.bf16.gmra.mxu0 %v1833
    %v1908 = vpop.f32.mrf.mxu0
    %v1909 = vadd.f32 %v1785, %v1908
    %v1910 = vpop.f32.mrf.mxu0
    %v1911 = vpop.f32.mrf.mxu0
    %v1912 = vadd.f32 %v1788, %v1911
    %v1913 = vpop.f32.mrf.mxu0
    %1914 = vmatprep.mubr.bf16.mxu0 0
    %1915 = vmatmul.mubr.bf16.gmra.mxu0 %v1836
    %v1916 = vpop.f32.mrf.mxu0
    %v1917 = vadd.f32 %v1793, %v1916
    %v1918 = vpop.f32.mrf.mxu0
    %v1919 = vpop.f32.mrf.mxu0
    %v1920 = vadd.f32 %v1796, %v1919
    %v1921 = vpop.f32.mrf.mxu0
    %1922 = vmatprep.mubr.bf16.mxu0 0
    %1923 = vmatmul.mubr.bf16.gmra.mxu0 %v1839
    %v1924 = vpop.f32.mrf.mxu0
    %v1925 = vadd.f32 %v1801, %v1924
    %v1926 = vpop.f32.mrf.mxu0
    %v1927 = vpop.f32.mrf.mxu0
    %v1928 = vadd.f32 %v1804, %v1927
    %v1929 = vpop.f32.mrf.mxu0
    %1930 = vmatprep.mubr.bf16.mxu0 0
    %1931 = vmatmul.mubr.bf16.gmra.mxu0 %v1842
    %v1932 = vpop.f32.mrf.mxu0
    %v1933 = vadd.f32 %v1809, %v1932
    %v1934 = vpop.f32.mrf.mxu0
    %v1935 = vpop.f32.mrf.mxu0
    %v1936 = vadd.f32 %v1812, %v1935
    %v1937 = vpop.f32.mrf.mxu0
    %1938 = vmatprep.mubr.bf16.mxu0 0
    %1939 = vmatmul.mubr.bf16.gmra.mxu0 %v1845
    %v1940 = vpop.f32.mrf.mxu0
    %v1941 = vadd.f32 %v1817, %v1940
    %v1942 = vpop.f32.mrf.mxu0
    %v1943 = vpop.f32.mrf.mxu0
    %v1944 = vadd.f32 %v1820, %v1943
    %v1945 = vpop.f32.mrf.mxu0
    %1946 = vdwg.mxu0
    %s1947 = scalar_lea.vmem [#allocation2], 128
    %v1948 = vld [vmem:[%s1947] sm:$0xff]
    %v1949 = vld [vmem:[%s1947 + $0x8] sm:$0xff]
    %v1950 = vld [vmem:[%s1947 + $0x10] sm:$0xff]
    %v1951 = vld [vmem:[%s1947 + $0x18] sm:$0xff]
    %v1952 = vld [vmem:[%s1947 + $0x20] sm:$0xff]
    %v1953 = vld [vmem:[%s1947 + $0x28] sm:$0xff]
    %v1954 = vld [vmem:[%s1947 + $0x30] sm:$0xff]
    %v1955 = vld [vmem:[%s1947 + $0x38] sm:$0xff]
    %1956 = vrot.lane.b32.xlu0 %v500, 112
    %v1957 = vpop.permute.xlu0 %1956
    %1958 = vrot.lane.b32.xlu0 %v501, 112
    %v1959 = vpop.permute.xlu0 %1958
    %1960 = vrot.lane.b32.xlu0 %v502, 112
    %v1961 = vpop.permute.xlu0 %1960
    %1962 = vrot.lane.b32.xlu0 %v503, 112
    %v1963 = vpop.permute.xlu0 %1962
    %1964 = vrot.lane.b32.xlu0 %v508, 80
    %v1965 = vpop.permute.xlu0 %1964
    %1966 = vrot.lane.b32.xlu0 %v509, 80
    %v1967 = vpop.permute.xlu0 %1966
    %1968 = vrot.lane.b32.xlu0 %v510, 80
    %v1969 = vpop.permute.xlu0 %1968
    %1970 = vrot.lane.b32.xlu0 %v511, 80
    %v1971 = vpop.permute.xlu0 %1970
    %v1973 = vsel %vm536, %v1957, 0
    %v1976 = vsel %vm536, %v1959, 0
    %v1979 = vsel %vm536, %v1961, 0
    %v1982 = vsel %vm536, %v1963, 0
    %v1985 = vsel %vm536, %v1965, 0
    %v1988 = vsel %vm536, %v1967, 0
    %v1991 = vsel %vm536, %v1969, 0
    %v1994 = vsel %vm536, %v1971, 0
    %1996 = vmatprep.subr.bf16.mxu0 0
    %1997 = vmatpush1.bf16.xpose.msra.mxu0 0
    %1998 = vmatprep.subr.bf16.mxu0 0
    %1999 = vmatpush1.bf16.xpose.msra.mxu0 0
    %2000 = vmatprep.subr.bf16.mxu0 0
    %2001 = vmatpush1.bf16.xpose.msra.mxu0 0
    %2002 = vmatprep.subr.bf16.mxu0 0
    %2003 = vmatpush1.bf16.xpose.msra.mxu0 0
    %2004 = vmatprep.subr.bf16.mxu0 0
    %2005 = vmatpush1.bf16.xpose.msra.mxu0 %v1994
    %2006 = vmatprep.subr.bf16.mxu0 0
    %2007 = vmatpush1.bf16.xpose.msra.mxu0 %v1991
    %2008 = vmatprep.subr.bf16.mxu0 0
    %2009 = vmatpush1.bf16.xpose.msra.mxu0 %v1988
    %2010 = vmatprep.subr.bf16.mxu0 0
    %2011 = vmatpush1.bf16.xpose.msra.mxu0 %v1985
    %2012 = vmatprep.subr.bf16.mxu0 0
    %2013 = vmatpush2.bf16.xpose.msra.mxu0 0
    %2014 = vmatprep.subr.bf16.mxu0 0
    %2015 = vmatpush2.bf16.xpose.msra.mxu0 0
    %2016 = vmatprep.subr.bf16.mxu0 0
    %2017 = vmatpush2.bf16.xpose.msra.mxu0 0
    %2018 = vmatprep.subr.bf16.mxu0 0
    %2019 = vmatpush2.bf16.xpose.msra.mxu0 0
    %2020 = vmatprep.subr.bf16.mxu0 0
    %2021 = vmatpush2.bf16.xpose.msra.mxu0 0
    %2022 = vmatprep.subr.bf16.mxu0 0
    %2023 = vmatpush2.bf16.xpose.msra.mxu0 0
    %2024 = vmatprep.subr.bf16.mxu0 0
    %2025 = vmatpush2.bf16.xpose.msra.mxu0 0
    %2026 = vmatprep.subr.bf16.mxu0 0
    %2027 = vmatpush2.bf16.xpose.msra.mxu0 0
    %2028 = vmatprep.mubr.bf16.mxu0 0
    %2029 = vmatmul.mubr.bf16.gmra.mxu0 %v1973
    %v2030 = vpop.f32.mrf.mxu0
    %v2031 = vadd.f32 %v1948, %v2030
    %v2032 = vpop.f32.mrf.mxu0
    %v2033 = vpop.f32.mrf.mxu0
    %v2034 = vadd.f32 %v1949, %v2033
    %v2035 = vpop.f32.mrf.mxu0
    %2036 = vmatprep.mubr.bf16.mxu0 0
    %2037 = vmatmul.mubr.bf16.gmra.mxu0 %v1976
    %v2038 = vpop.f32.mrf.mxu0
    %v2039 = vadd.f32 %v1950, %v2038
    %v2040 = vpop.f32.mrf.mxu0
    %v2041 = vpop.f32.mrf.mxu0
    %v2042 = vadd.f32 %v1951, %v2041
    %v2043 = vpop.f32.mrf.mxu0
    %2044 = vmatprep.mubr.bf16.mxu0 0
    %2045 = vmatmul.mubr.bf16.gmra.mxu0 %v1979
    %v2046 = vpop.f32.mrf.mxu0
    %v2047 = vadd.f32 %v1952, %v2046
    %v2048 = vpop.f32.mrf.mxu0
    %v2049 = vpop.f32.mrf.mxu0
    %v2050 = vadd.f32 %v1953, %v2049
    %v2051 = vpop.f32.mrf.mxu0
    %2052 = vmatprep.mubr.bf16.mxu0 0
    %2053 = vmatmul.mubr.bf16.gmra.mxu0 %v1982
    %v2054 = vpop.f32.mrf.mxu0
    %v2055 = vadd.f32 %v1954, %v2054
    %v2056 = vpop.f32.mrf.mxu0
    %v2057 = vpop.f32.mrf.mxu0
    %v2058 = vadd.f32 %v1955, %v2057
    %v2059 = vpop.f32.mrf.mxu0
    %2060 = vdwg.mxu0
    %2061 = vrot.lane.b32.xlu0 %v504, 112
    %v2062 = vpop.permute.xlu0 %2061
    %2063 = vrot.lane.b32.xlu0 %v505, 112
    %v2064 = vpop.permute.xlu0 %2063
    %2065 = vrot.lane.b32.xlu0 %v506, 112
    %v2066 = vpop.permute.xlu0 %2065
    %2067 = vrot.lane.b32.xlu0 %v507, 112
    %v2068 = vpop.permute.xlu0 %2067
    %2069 = vrot.lane.b32.xlu0 %v512, 80
    %v2070 = vpop.permute.xlu0 %2069
    %2071 = vrot.lane.b32.xlu0 %v513, 80
    %v2072 = vpop.permute.xlu0 %2071
    %2073 = vrot.lane.b32.xlu0 %v514, 80
    %v2074 = vpop.permute.xlu0 %2073
    %2075 = vrot.lane.b32.xlu0 %v515, 80
    %v2076 = vpop.permute.xlu0 %2075
    %v2078 = vsel %vm536, %v2062, 0
    %v2081 = vsel %vm536, %v2064, 0
    %v2084 = vsel %vm536, %v2066, 0
    %v2087 = vsel %vm536, %v2068, 0
    %v2090 = vsel %vm536, %v2070, 0
    %v2093 = vsel %vm536, %v2072, 0
    %v2096 = vsel %vm536, %v2074, 0
    %v2099 = vsel %vm536, %v2076, 0
    %2101 = vmatprep.subr.bf16.mxu0 0
    %2102 = vmatpush1.bf16.xpose.msra.mxu0 0
    %2103 = vmatprep.subr.bf16.mxu0 0
    %2104 = vmatpush1.bf16.xpose.msra.mxu0 0
    %2105 = vmatprep.subr.bf16.mxu0 0
    %2106 = vmatpush1.bf16.xpose.msra.mxu0 0
    %2107 = vmatprep.subr.bf16.mxu0 0
    %2108 = vmatpush1.bf16.xpose.msra.mxu0 0
    %2109 = vmatprep.subr.bf16.mxu0 0
    %2110 = vmatpush1.bf16.xpose.msra.mxu0 %v2099
    %2111 = vmatprep.subr.bf16.mxu0 0
    %2112 = vmatpush1.bf16.xpose.msra.mxu0 %v2096
    %2113 = vmatprep.subr.bf16.mxu0 0
    %2114 = vmatpush1.bf16.xpose.msra.mxu0 %v2093
    %2115 = vmatprep.subr.bf16.mxu0 0
    %2116 = vmatpush1.bf16.xpose.msra.mxu0 %v2090
    %2117 = vmatprep.subr.bf16.mxu0 0
    %2118 = vmatpush2.bf16.xpose.msra.mxu0 0
    %2119 = vmatprep.subr.bf16.mxu0 0
    %2120 = vmatpush2.bf16.xpose.msra.mxu0 0
    %2121 = vmatprep.subr.bf16.mxu0 0
    %2122 = vmatpush2.bf16.xpose.msra.mxu0 0
    %2123 = vmatprep.subr.bf16.mxu0 0
    %2124 = vmatpush2.bf16.xpose.msra.mxu0 0
    %2125 = vmatprep.subr.bf16.mxu0 0
    %2126 = vmatpush2.bf16.xpose.msra.mxu0 0
    %2127 = vmatprep.subr.bf16.mxu0 0
    %2128 = vmatpush2.bf16.xpose.msra.mxu0 0
    %2129 = vmatprep.subr.bf16.mxu0 0
    %2130 = vmatpush2.bf16.xpose.msra.mxu0 0
    %2131 = vmatprep.subr.bf16.mxu0 0
    %2132 = vmatpush2.bf16.xpose.msra.mxu0 0
    %2133 = vmatprep.mubr.bf16.mxu0 0
    %2134 = vmatmul.mubr.bf16.gmra.mxu0 %v2078
    %v2135 = vpop.f32.mrf.mxu0
    %v2136 = vadd.f32 %v1948, %v2135
    %v2137 = vpop.f32.mrf.mxu0
    %v2138 = vpop.f32.mrf.mxu0
    %v2139 = vadd.f32 %v1949, %v2138
    %v2140 = vpop.f32.mrf.mxu0
    %2141 = vmatprep.mubr.bf16.mxu0 0
    %2142 = vmatmul.mubr.bf16.gmra.mxu0 %v2081
    %v2143 = vpop.f32.mrf.mxu0
    %v2144 = vadd.f32 %v1950, %v2143
    %v2145 = vpop.f32.mrf.mxu0
    %v2146 = vpop.f32.mrf.mxu0
    %v2147 = vadd.f32 %v1951, %v2146
    %v2148 = vpop.f32.mrf.mxu0
    %2149 = vmatprep.mubr.bf16.mxu0 0
    %2150 = vmatmul.mubr.bf16.gmra.mxu0 %v2084
    %v2151 = vpop.f32.mrf.mxu0
    %v2152 = vadd.f32 %v1952, %v2151
    %v2153 = vpop.f32.mrf.mxu0
    %v2154 = vpop.f32.mrf.mxu0
    %v2155 = vadd.f32 %v1953, %v2154
    %v2156 = vpop.f32.mrf.mxu0
    %2157 = vmatprep.mubr.bf16.mxu0 0
    %2158 = vmatmul.mubr.bf16.gmra.mxu0 %v2087
    %v2159 = vpop.f32.mrf.mxu0
    %v2160 = vadd.f32 %v1954, %v2159
    %v2161 = vpop.f32.mrf.mxu0
    %v2162 = vpop.f32.mrf.mxu0
    %v2163 = vadd.f32 %v1955, %v2162
    %v2164 = vpop.f32.mrf.mxu0
    %2165 = vdwg.mxu0
    %v2166 = vsel %vm727, %v2031, -inf
    %2167 = vmax.xlane.f32.xlu0 %v2166
    %v2168 = vpop.xlane.xlu0 %2167
    %v2169 = vsel %vm727, %v2034, -inf
    %2170 = vmax.xlane.f32.xlu0 %v2169
    %v2171 = vpop.xlane.xlu0 %2170
    %v2172 = vsel %vm727, %v2039, -inf
    %2173 = vmax.xlane.f32.xlu0 %v2172
    %v2174 = vpop.xlane.xlu0 %2173
    %v2175 = vsel %vm727, %v2042, -inf
    %2176 = vmax.xlane.f32.xlu0 %v2175
    %v2177 = vpop.xlane.xlu0 %2176
    %v2178 = vsel %vm727, %v2047, -inf
    %2179 = vmax.xlane.f32.xlu0 %v2178
    %v2180 = vpop.xlane.xlu0 %2179
    %v2181 = vsel %vm727, %v2050, -inf
    %2182 = vmax.xlane.f32.xlu0 %v2181
    %v2183 = vpop.xlane.xlu0 %2182
    %v2184 = vsel %vm727, %v2055, -inf
    %2185 = vmax.xlane.f32.xlu0 %v2184
    %v2186 = vpop.xlane.xlu0 %2185
    %v2187 = vsel %vm727, %v2058, -inf
    %2188 = vmax.xlane.f32.xlu0 %v2187
    %v2189 = vpop.xlane.xlu0 %2188
    %v2190 = vsel %vm727, %v2136, -inf
    %2191 = vmax.xlane.f32.xlu0 %v2190
    %v2192 = vpop.xlane.xlu0 %2191
    %v2193 = vsel %vm727, %v2139, -inf
    %2194 = vmax.xlane.f32.xlu0 %v2193
    %v2195 = vpop.xlane.xlu0 %2194
    %v2196 = vsel %vm727, %v2144, -inf
    %2197 = vmax.xlane.f32.xlu0 %v2196
    %v2198 = vpop.xlane.xlu0 %2197
    %v2199 = vsel %vm727, %v2147, -inf
    %2200 = vmax.xlane.f32.xlu0 %v2199
    %v2201 = vpop.xlane.xlu0 %2200
    %v2202 = vsel %vm727, %v2152, -inf
    %2203 = vmax.xlane.f32.xlu0 %v2202
    %v2204 = vpop.xlane.xlu0 %2203
    %v2205 = vsel %vm727, %v2155, -inf
    %2206 = vmax.xlane.f32.xlu0 %v2205
    %v2207 = vpop.xlane.xlu0 %2206
    %v2208 = vsel %vm727, %v2160, -inf
    %2209 = vmax.xlane.f32.xlu0 %v2208
    %v2210 = vpop.xlane.xlu0 %2209
    %v2211 = vsel %vm727, %v2163, -inf
    %2212 = vmax.xlane.f32.xlu0 %v2211
    %v2213 = vpop.xlane.xlu0 %2212
    %v2214 = vsub.f32 %v2031, %v2168
    %v2215 = vsub.f32 %v2034, %v2171
    %v2216 = vsub.f32 %v2039, %v2174
    %v2217 = vsub.f32 %v2042, %v2177
    %v2218 = vsub.f32 %v2047, %v2180
    %v2219 = vsub.f32 %v2050, %v2183
    %v2220 = vsub.f32 %v2055, %v2186
    %v2221 = vsub.f32 %v2058, %v2189
    %v2222 = vsub.f32 %v2136, %v2192
    %v2223 = vsub.f32 %v2139, %v2195
    %v2224 = vsub.f32 %v2144, %v2198
    %v2225 = vsub.f32 %v2147, %v2201
    %v2226 = vsub.f32 %v2152, %v2204
    %v2227 = vsub.f32 %v2155, %v2207
    %v2228 = vsub.f32 %v2160, %v2210
    %v2229 = vsub.f32 %v2163, %v2213
    %v2230 = vmul.f32 %v2214, 1.442695
    %v2231 = vpow.pop %v2230
    %v2232 = vmul.f32 %v2215, 1.442695
    %v2233 = vpow.pop %v2232
    %v2234 = vmul.f32 %v2216, 1.442695
    %v2235 = vpow.pop %v2234
    %v2236 = vmul.f32 %v2217, 1.442695
    %v2237 = vpow.pop %v2236
    %v2238 = vmul.f32 %v2218, 1.442695
    %v2239 = vpow.pop %v2238
    %v2240 = vmul.f32 %v2219, 1.442695
    %v2241 = vpow.pop %v2240
    %v2242 = vmul.f32 %v2220, 1.442695
    %v2243 = vpow.pop %v2242
    %v2244 = vmul.f32 %v2221, 1.442695
    %v2245 = vpow.pop %v2244
    %v2246 = vmul.f32 %v2222, 1.442695
    %v2247 = vpow.pop %v2246
    %v2248 = vmul.f32 %v2223, 1.442695
    %v2249 = vpow.pop %v2248
    %v2250 = vmul.f32 %v2224, 1.442695
    %v2251 = vpow.pop %v2250
    %v2252 = vmul.f32 %v2225, 1.442695
    %v2253 = vpow.pop %v2252
    %v2254 = vmul.f32 %v2226, 1.442695
    %v2255 = vpow.pop %v2254
    %v2256 = vmul.f32 %v2227, 1.442695
    %v2257 = vpow.pop %v2256
    %v2258 = vmul.f32 %v2228, 1.442695
    %v2259 = vpow.pop %v2258
    %v2260 = vmul.f32 %v2229, 1.442695
    %v2261 = vpow.pop %v2260
    %v2262 = vsel %vm727, %v2231, 0.0
    %2263 = vadd.xlane.f32.xlu0 %v2262
    %v2264 = vpop.xlane.xlu0 %2263
    %v2265 = vsel %vm727, %v2233, 0.0
    %2266 = vadd.xlane.f32.xlu0 %v2265
    %v2267 = vpop.xlane.xlu0 %2266
    %v2268 = vsel %vm727, %v2235, 0.0
    %2269 = vadd.xlane.f32.xlu0 %v2268
    %v2270 = vpop.xlane.xlu0 %2269
    %v2271 = vsel %vm727, %v2237, 0.0
    %2272 = vadd.xlane.f32.xlu0 %v2271
    %v2273 = vpop.xlane.xlu0 %2272
    %v2274 = vsel %vm727, %v2239, 0.0
    %2275 = vadd.xlane.f32.xlu0 %v2274
    %v2276 = vpop.xlane.xlu0 %2275
    %v2277 = vsel %vm727, %v2241, 0.0
    %2278 = vadd.xlane.f32.xlu0 %v2277
    %v2279 = vpop.xlane.xlu0 %2278
    %v2280 = vsel %vm727, %v2243, 0.0
    %2281 = vadd.xlane.f32.xlu0 %v2280
    %v2282 = vpop.xlane.xlu0 %2281
    %v2283 = vsel %vm727, %v2245, 0.0
    %2284 = vadd.xlane.f32.xlu0 %v2283
    %v2285 = vpop.xlane.xlu0 %2284
    %v2286 = vsel %vm727, %v2247, 0.0
    %2287 = vadd.xlane.f32.xlu0 %v2286
    %v2288 = vpop.xlane.xlu0 %2287
    %v2289 = vsel %vm727, %v2249, 0.0
    %2290 = vadd.xlane.f32.xlu0 %v2289
    %v2291 = vpop.xlane.xlu0 %2290
    %v2292 = vsel %vm727, %v2251, 0.0
    %2293 = vadd.xlane.f32.xlu0 %v2292
    %v2294 = vpop.xlane.xlu0 %2293
    %v2295 = vsel %vm727, %v2253, 0.0
    %2296 = vadd.xlane.f32.xlu0 %v2295
    %v2297 = vpop.xlane.xlu0 %2296
    %v2298 = vsel %vm727, %v2255, 0.0
    %2299 = vadd.xlane.f32.xlu0 %v2298
    %v2300 = vpop.xlane.xlu0 %2299
    %v2301 = vsel %vm727, %v2257, 0.0
    %2302 = vadd.xlane.f32.xlu0 %v2301
    %v2303 = vpop.xlane.xlu0 %2302
    %v2304 = vsel %vm727, %v2259, 0.0
    %2305 = vadd.xlane.f32.xlu0 %v2304
    %v2306 = vpop.xlane.xlu0 %2305
    %v2307 = vsel %vm727, %v2261, 0.0
    %2308 = vadd.xlane.f32.xlu0 %v2307
    %v2309 = vpop.xlane.xlu0 %2308
    %v2310 = vrcp.pop %v2264
    %v2311 = vrcp.pop %v2267
    %v2312 = vrcp.pop %v2270
    %v2313 = vrcp.pop %v2273
    %v2314 = vrcp.pop %v2276
    %v2315 = vrcp.pop %v2279
    %v2316 = vrcp.pop %v2282
    %v2317 = vrcp.pop %v2285
    %v2318 = vrcp.pop %v2288
    %v2319 = vrcp.pop %v2291
    %v2320 = vrcp.pop %v2294
    %v2321 = vrcp.pop %v2297
    %v2322 = vrcp.pop %v2300
    %v2323 = vrcp.pop %v2303
    %v2324 = vrcp.pop %v2306
    %v2325 = vrcp.pop %v2309
    %v2326 = vmul.f32 %v2231, %v2310
    %v2327 = vmul.f32 %v2233, %v2311
    %v2328 = vmul.f32 %v2235, %v2312
    %v2329 = vmul.f32 %v2237, %v2313
    %v2330 = vmul.f32 %v2239, %v2314
    %v2331 = vmul.f32 %v2241, %v2315
    %v2332 = vmul.f32 %v2243, %v2316
    %v2333 = vmul.f32 %v2245, %v2317
    %v2334 = vmul.f32 %v2247, %v2318
    %v2335 = vmul.f32 %v2249, %v2319
    %v2336 = vmul.f32 %v2251, %v2320
    %v2337 = vmul.f32 %v2253, %v2321
    %v2338 = vmul.f32 %v2255, %v2322
    %v2339 = vmul.f32 %v2257, %v2323
    %v2340 = vmul.f32 %v2259, %v2324
    %v2341 = vmul.f32 %v2261, %v2325
    %v2342 = vpack.c.bf16 %v2327, %v2326
    %v2343 = vpack.c.bf16 %v2329, %v2328
    %v2344 = vpack.c.bf16 %v2331, %v2330
    %v2345 = vpack.c.bf16 %v2333, %v2332
    %v2346 = vpack.c.bf16 %v2335, %v2334
    %v2347 = vpack.c.bf16 %v2337, %v2336
    %v2348 = vpack.c.bf16 %v2339, %v2338
    %v2349 = vpack.c.bf16 %v2341, %v2340
    %2350 = vrot.lane.b32.xlu0 %v508, 48
    %v2351 = vpop.permute.xlu0 %2350
    %2352 = vrot.lane.b32.xlu0 %v509, 48
    %v2353 = vpop.permute.xlu0 %2352
    %2354 = vrot.lane.b32.xlu0 %v510, 48
    %v2355 = vpop.permute.xlu0 %2354
    %2356 = vrot.lane.b32.xlu0 %v511, 48
    %v2357 = vpop.permute.xlu0 %2356
    %v2363 = vsel %vm727, %v2342, 0
    %v2366 = vsel %vm727, %v2343, 0
    %v2369 = vsel %vm727, %v2344, 0
    %v2372 = vsel %vm727, %v2345, 0
    %2374 = vmatprep.subr.bf16.mxu0 0
    %2375 = vmatpush1.bf16.msra.mxu0 0
    %2376 = vmatprep.subr.bf16.mxu0 0
    %2377 = vmatpush1.bf16.msra.mxu0 0
    %2378 = vmatprep.subr.bf16.mxu0 0
    %2379 = vmatpush1.bf16.msra.mxu0 0
    %2380 = vmatprep.subr.bf16.mxu0 0
    %2381 = vmatpush1.bf16.msra.mxu0 0
    %2382 = vmatprep.subr.bf16.mxu0 0
    %2383 = vmatpush1.bf16.msra.mxu0 %v2357
    %2384 = vmatprep.subr.bf16.mxu0 0
    %2385 = vmatpush1.bf16.msra.mxu0 %v2355
    %2386 = vmatprep.subr.bf16.mxu0 0
    %2387 = vmatpush1.bf16.msra.mxu0 %v2353
    %2388 = vmatprep.subr.bf16.mxu0 0
    %2389 = vmatpush1.bf16.msra.mxu0 %v2351
    %2390 = vmatprep.subr.bf16.mxu0 0
    %2391 = vmatpush2.bf16.msra.mxu0 0
    %2392 = vmatprep.subr.bf16.mxu0 0
    %2393 = vmatpush2.bf16.msra.mxu0 0
    %2394 = vmatprep.subr.bf16.mxu0 0
    %2395 = vmatpush2.bf16.msra.mxu0 0
    %2396 = vmatprep.subr.bf16.mxu0 0
    %2397 = vmatpush2.bf16.msra.mxu0 0
    %2398 = vmatprep.subr.bf16.mxu0 0
    %2399 = vmatpush2.bf16.msra.mxu0 0
    %2400 = vmatprep.subr.bf16.mxu0 0
    %2401 = vmatpush2.bf16.msra.mxu0 0
    %2402 = vmatprep.subr.bf16.mxu0 0
    %2403 = vmatpush2.bf16.msra.mxu0 0
    %2404 = vmatprep.subr.bf16.mxu0 0
    %2405 = vmatpush2.bf16.msra.mxu0 0
    %2406 = vmatprep.mubr.bf16.mxu0 0
    %2407 = vmatmul.mubr.bf16.gmra.mxu0 %v2363
    %v2408 = vpop.f32.mrf.mxu0
    %v2409 = vadd.f32 0.0, %v2408
    %v2410 = vpop.f32.mrf.mxu0
    %v2411 = vpop.f32.mrf.mxu0
    %v2412 = vadd.f32 0.0, %v2411
    %v2413 = vpop.f32.mrf.mxu0
    %2414 = vmatprep.mubr.bf16.mxu0 0
    %2415 = vmatmul.mubr.bf16.gmra.mxu0 %v2366
    %v2416 = vpop.f32.mrf.mxu0
    %v2417 = vadd.f32 0.0, %v2416
    %v2418 = vpop.f32.mrf.mxu0
    %v2419 = vpop.f32.mrf.mxu0
    %v2420 = vadd.f32 0.0, %v2419
    %v2421 = vpop.f32.mrf.mxu0
    %2422 = vmatprep.mubr.bf16.mxu0 0
    %2423 = vmatmul.mubr.bf16.gmra.mxu0 %v2369
    %v2424 = vpop.f32.mrf.mxu0
    %v2425 = vadd.f32 0.0, %v2424
    %v2426 = vpop.f32.mrf.mxu0
    %v2427 = vpop.f32.mrf.mxu0
    %v2428 = vadd.f32 0.0, %v2427
    %v2429 = vpop.f32.mrf.mxu0
    %2430 = vmatprep.mubr.bf16.mxu0 0
    %2431 = vmatmul.mubr.bf16.gmra.mxu0 %v2372
    %v2432 = vpop.f32.mrf.mxu0
    %v2433 = vadd.f32 0.0, %v2432
    %v2434 = vpop.f32.mrf.mxu0
    %v2435 = vpop.f32.mrf.mxu0
    %v2436 = vadd.f32 0.0, %v2435
    %v2437 = vpop.f32.mrf.mxu0
    %2438 = vdwg.mxu0
    %2439 = vrot.lane.b32.xlu0 %v512, 48
    %v2440 = vpop.permute.xlu0 %2439
    %2441 = vrot.lane.b32.xlu0 %v513, 48
    %v2442 = vpop.permute.xlu0 %2441
    %2443 = vrot.lane.b32.xlu0 %v514, 48
    %v2444 = vpop.permute.xlu0 %2443
    %2445 = vrot.lane.b32.xlu0 %v515, 48
    %v2446 = vpop.permute.xlu0 %2445
    %v2452 = vsel %vm727, %v2346, 0
    %v2455 = vsel %vm727, %v2347, 0
    %v2458 = vsel %vm727, %v2348, 0
    %v2461 = vsel %vm727, %v2349, 0
    %2463 = vmatprep.subr.bf16.mxu0 0
    %2464 = vmatpush1.bf16.msra.mxu0 0
    %2465 = vmatprep.subr.bf16.mxu0 0
    %2466 = vmatpush1.bf16.msra.mxu0 0
    %2467 = vmatprep.subr.bf16.mxu0 0
    %2468 = vmatpush1.bf16.msra.mxu0 0
    %2469 = vmatprep.subr.bf16.mxu0 0
    %2470 = vmatpush1.bf16.msra.mxu0 0
    %2471 = vmatprep.subr.bf16.mxu0 0
    %2472 = vmatpush1.bf16.msra.mxu0 %v2446
    %2473 = vmatprep.subr.bf16.mxu0 0
    %2474 = vmatpush1.bf16.msra.mxu0 %v2444
    %2475 = vmatprep.subr.bf16.mxu0 0
    %2476 = vmatpush1.bf16.msra.mxu0 %v2442
    %2477 = vmatprep.subr.bf16.mxu0 0
    %2478 = vmatpush1.bf16.msra.mxu0 %v2440
    %2479 = vmatprep.subr.bf16.mxu0 0
    %2480 = vmatpush2.bf16.msra.mxu0 0
    %2481 = vmatprep.subr.bf16.mxu0 0
    %2482 = vmatpush2.bf16.msra.mxu0 0
    %2483 = vmatprep.subr.bf16.mxu0 0
    %2484 = vmatpush2.bf16.msra.mxu0 0
    %2485 = vmatprep.subr.bf16.mxu0 0
    %2486 = vmatpush2.bf16.msra.mxu0 0
    %2487 = vmatprep.subr.bf16.mxu0 0
    %2488 = vmatpush2.bf16.msra.mxu0 0
    %2489 = vmatprep.subr.bf16.mxu0 0
    %2490 = vmatpush2.bf16.msra.mxu0 0
    %2491 = vmatprep.subr.bf16.mxu0 0
    %2492 = vmatpush2.bf16.msra.mxu0 0
    %2493 = vmatprep.subr.bf16.mxu0 0
    %2494 = vmatpush2.bf16.msra.mxu0 0
    %2495 = vmatprep.mubr.bf16.mxu0 0
    %2496 = vmatmul.mubr.bf16.gmra.mxu0 %v2452
    %v2497 = vpop.f32.mrf.mxu0
    %v2498 = vadd.f32 0.0, %v2497
    %v2499 = vpop.f32.mrf.mxu0
    %v2500 = vpop.f32.mrf.mxu0
    %v2501 = vadd.f32 0.0, %v2500
    %v2502 = vpop.f32.mrf.mxu0
    %2503 = vmatprep.mubr.bf16.mxu0 0
    %2504 = vmatmul.mubr.bf16.gmra.mxu0 %v2455
    %v2505 = vpop.f32.mrf.mxu0
    %v2506 = vadd.f32 0.0, %v2505
    %v2507 = vpop.f32.mrf.mxu0
    %v2508 = vpop.f32.mrf.mxu0
    %v2509 = vadd.f32 0.0, %v2508
    %v2510 = vpop.f32.mrf.mxu0
    %2511 = vmatprep.mubr.bf16.mxu0 0
    %2512 = vmatmul.mubr.bf16.gmra.mxu0 %v2458
    %v2513 = vpop.f32.mrf.mxu0
    %v2514 = vadd.f32 0.0, %v2513
    %v2515 = vpop.f32.mrf.mxu0
    %v2516 = vpop.f32.mrf.mxu0
    %v2517 = vadd.f32 0.0, %v2516
    %v2518 = vpop.f32.mrf.mxu0
    %2519 = vmatprep.mubr.bf16.mxu0 0
    %2520 = vmatmul.mubr.bf16.gmra.mxu0 %v2461
    %v2521 = vpop.f32.mrf.mxu0
    %v2522 = vadd.f32 0.0, %v2521
    %v2523 = vpop.f32.mrf.mxu0
    %v2524 = vpop.f32.mrf.mxu0
    %v2525 = vadd.f32 0.0, %v2524
    %v2526 = vpop.f32.mrf.mxu0
    %2527 = vdwg.mxu0
    %v2528 = vpack.c.bf16 %v2412, %v2409
    %v2529 = vpack.c.bf16 %v2420, %v2417
    %v2530 = vpack.c.bf16 %v2428, %v2425
    %v2531 = vpack.c.bf16 %v2436, %v2433
    %v2532 = vpack.c.bf16 %v2501, %v2498
    %v2533 = vpack.c.bf16 %v2509, %v2506
    %v2534 = vpack.c.bf16 %v2517, %v2514
    %v2535 = vpack.c.bf16 %v2525, %v2522
    %s2536 = scalar_lea.vmem %s3, 8
    %v2537 = vld [vmem:[%s2536] sm:$0xf]
    %v2539 = vsel %vm536, %v2528, 0
    %v2542 = vsel %vm536, %v2529, 0
    %v2545 = vsel %vm536, %v2530, 0
    %v2548 = vsel %vm536, %v2531, 0
    %v2551 = vsel %vm536, %v2532, 0
    %v2554 = vsel %vm536, %v2533, 0
    %v2557 = vsel %vm536, %v2534, 0
    %v2560 = vsel %vm536, %v2535, 0
    %v2563 = vsel %vm1722, %v2537, 0
    %2565 = vmatprep.subr.bf16.mxu0 0
    %2566 = vmatpush1.bf16.msra.mxu0 0
    %2567 = vmatprep.subr.bf16.mxu0 0
    %2568 = vmatpush1.bf16.msra.mxu0 0
    %2569 = vmatprep.subr.bf16.mxu0 0
    %2570 = vmatpush1.bf16.msra.mxu0 0
    %2571 = vmatprep.subr.bf16.mxu0 0
    %2572 = vmatpush1.bf16.msra.mxu0 0
    %2573 = vmatprep.subr.bf16.mxu0 0
    %2574 = vmatpush1.bf16.msra.mxu0 0
    %2575 = vmatprep.subr.bf16.mxu0 0
    %2576 = vmatpush1.bf16.msra.mxu0 0
    %2577 = vmatprep.subr.bf16.mxu0 0
    %2578 = vmatpush1.bf16.msra.mxu0 0
    %2579 = vmatprep.subr.bf16.mxu0 0
    %2580 = vmatpush1.bf16.msra.mxu0 %v2563
    %2581 = vmatprep.subr.bf16.mxu0 0
    %2582 = vmatpush2.bf16.msra.mxu0 0
    %2583 = vmatprep.subr.bf16.mxu0 0
    %2584 = vmatpush2.bf16.msra.mxu0 0
    %2585 = vmatprep.subr.bf16.mxu0 0
    %2586 = vmatpush2.bf16.msra.mxu0 0
    %2587 = vmatprep.subr.bf16.mxu0 0
    %2588 = vmatpush2.bf16.msra.mxu0 0
    %2589 = vmatprep.subr.bf16.mxu0 0
    %2590 = vmatpush2.bf16.msra.mxu0 0
    %2591 = vmatprep.subr.bf16.mxu0 0
    %2592 = vmatpush2.bf16.msra.mxu0 0
    %2593 = vmatprep.subr.bf16.mxu0 0
    %2594 = vmatpush2.bf16.msra.mxu0 0
    %2595 = vmatprep.subr.bf16.mxu0 0
    %2596 = vmatpush2.bf16.msra.mxu0 0
    %2597 = vmatprep.mubr.bf16.mxu0 0
    %2598 = vmatmul.mubr.bf16.gmra.mxu0 %v2539
    %v2599 = vpop.f32.mrf.mxu0
    %v2600 = vadd.f32 0.0, %v2599
    %v2601 = vpop.f32.mrf.mxu0
    %v2602 = vpop.f32.mrf.mxu0
    %v2603 = vadd.f32 0.0, %v2602
    %v2604 = vpop.f32.mrf.mxu0
    %2605 = vmatprep.mubr.bf16.mxu0 0
    %2606 = vmatmul.mubr.bf16.gmra.mxu0 %v2542
    %v2607 = vpop.f32.mrf.mxu0
    %v2608 = vadd.f32 0.0, %v2607
    %v2609 = vpop.f32.mrf.mxu0
    %v2610 = vpop.f32.mrf.mxu0
    %v2611 = vadd.f32 0.0, %v2610
    %v2612 = vpop.f32.mrf.mxu0
    %2613 = vmatprep.mubr.bf16.mxu0 0
    %2614 = vmatmul.mubr.bf16.gmra.mxu0 %v2545
    %v2615 = vpop.f32.mrf.mxu0
    %v2616 = vadd.f32 0.0, %v2615
    %v2617 = vpop.f32.mrf.mxu0
    %v2618 = vpop.f32.mrf.mxu0
    %v2619 = vadd.f32 0.0, %v2618
    %v2620 = vpop.f32.mrf.mxu0
    %2621 = vmatprep.mubr.bf16.mxu0 0
    %2622 = vmatmul.mubr.bf16.gmra.mxu0 %v2548
    %v2623 = vpop.f32.mrf.mxu0
    %v2624 = vadd.f32 0.0, %v2623
    %v2625 = vpop.f32.mrf.mxu0
    %v2626 = vpop.f32.mrf.mxu0
    %v2627 = vadd.f32 0.0, %v2626
    %v2628 = vpop.f32.mrf.mxu0
    %2629 = vmatprep.mubr.bf16.mxu0 0
    %2630 = vmatmul.mubr.bf16.gmra.mxu0 %v2551
    %v2631 = vpop.f32.mrf.mxu0
    %v2632 = vadd.f32 0.0, %v2631
    %v2633 = vpop.f32.mrf.mxu0
    %v2634 = vpop.f32.mrf.mxu0
    %v2635 = vadd.f32 0.0, %v2634
    %v2636 = vpop.f32.mrf.mxu0
    %2637 = vmatprep.mubr.bf16.mxu0 0
    %2638 = vmatmul.mubr.bf16.gmra.mxu0 %v2554
    %v2639 = vpop.f32.mrf.mxu0
    %v2640 = vadd.f32 0.0, %v2639
    %v2641 = vpop.f32.mrf.mxu0
    %v2642 = vpop.f32.mrf.mxu0
    %v2643 = vadd.f32 0.0, %v2642
    %v2644 = vpop.f32.mrf.mxu0
    %2645 = vmatprep.mubr.bf16.mxu0 0
    %2646 = vmatmul.mubr.bf16.gmra.mxu0 %v2557
    %v2647 = vpop.f32.mrf.mxu0
    %v2648 = vadd.f32 0.0, %v2647
    %v2649 = vpop.f32.mrf.mxu0
    %v2650 = vpop.f32.mrf.mxu0
    %v2651 = vadd.f32 0.0, %v2650
    %v2652 = vpop.f32.mrf.mxu0
    %2653 = vmatprep.mubr.bf16.mxu0 0
    %2654 = vmatmul.mubr.bf16.gmra.mxu0 %v2560
    %v2655 = vpop.f32.mrf.mxu0
    %v2656 = vadd.f32 0.0, %v2655
    %v2657 = vpop.f32.mrf.mxu0
    %v2658 = vpop.f32.mrf.mxu0
    %v2659 = vadd.f32 0.0, %v2658
    %v2660 = vpop.f32.mrf.mxu0
    %2661 = vdwg.mxu0
    %v2662 = vadd.f32 %v1885, %v2600
    %v2663 = vadd.f32 %v1888, %v2603
    %v2664 = vadd.f32 %v1893, %v2608
    %v2665 = vadd.f32 %v1896, %v2611
    %v2666 = vadd.f32 %v1901, %v2616
    %v2667 = vadd.f32 %v1904, %v2619
    %v2668 = vadd.f32 %v1909, %v2624
    %v2669 = vadd.f32 %v1912, %v2627
    %v2670 = vadd.f32 %v1917, %v2632
    %v2671 = vadd.f32 %v1920, %v2635
    %v2672 = vadd.f32 %v1925, %v2640
    %v2673 = vadd.f32 %v1928, %v2643
    %v2674 = vadd.f32 %v1933, %v2648
    %v2675 = vadd.f32 %v1936, %v2651
    %v2676 = vadd.f32 %v1941, %v2656
    %v2677 = vadd.f32 %v1944, %v2659
    %s2678 = scalar_lea.vmem [#allocation2], 192
    %v2679 = vld [vmem:[%s2678] sm:$0xff]
    %v2680 = vld [vmem:[%s2678 + $0x8] sm:$0xff]
    %v2681 = vld [vmem:[%s2678 + $0x10] sm:$0xff]
    %v2682 = vld [vmem:[%s2678 + $0x18] sm:$0xff]
    %v2683 = vld [vmem:[%s2678 + $0x20] sm:$0xff]
    %v2684 = vld [vmem:[%s2678 + $0x28] sm:$0xff]
    %v2685 = vld [vmem:[%s2678 + $0x30] sm:$0xff]
    %v2686 = vld [vmem:[%s2678 + $0x38] sm:$0xff]
    %2687 = vrot.lane.b32.xlu0 %v500, 104
    %v2688 = vpop.permute.xlu0 %2687
    %2689 = vrot.lane.b32.xlu0 %v501, 104
    %v2690 = vpop.permute.xlu0 %2689
    %2691 = vrot.lane.b32.xlu0 %v502, 104
    %v2692 = vpop.permute.xlu0 %2691
    %2693 = vrot.lane.b32.xlu0 %v503, 104
    %v2694 = vpop.permute.xlu0 %2693
    %2695 = vrot.lane.b32.xlu0 %v508, 72
    %v2696 = vpop.permute.xlu0 %2695
    %2697 = vrot.lane.b32.xlu0 %v509, 72
    %v2698 = vpop.permute.xlu0 %2697
    %2699 = vrot.lane.b32.xlu0 %v510, 72
    %v2700 = vpop.permute.xlu0 %2699
    %2701 = vrot.lane.b32.xlu0 %v511, 72
    %v2702 = vpop.permute.xlu0 %2701
    %v2704 = vsel %vm536, %v2688, 0
    %v2707 = vsel %vm536, %v2690, 0
    %v2710 = vsel %vm536, %v2692, 0
    %v2713 = vsel %vm536, %v2694, 0
    %v2716 = vsel %vm536, %v2696, 0
    %v2719 = vsel %vm536, %v2698, 0
    %v2722 = vsel %vm536, %v2700, 0
    %v2725 = vsel %vm536, %v2702, 0
    %2727 = vmatprep.subr.bf16.mxu0 0
    %2728 = vmatpush1.bf16.xpose.msra.mxu0 0
    %2729 = vmatprep.subr.bf16.mxu0 0
    %2730 = vmatpush1.bf16.xpose.msra.mxu0 0
    %2731 = vmatprep.subr.bf16.mxu0 0
    %2732 = vmatpush1.bf16.xpose.msra.mxu0 0
    %2733 = vmatprep.subr.bf16.mxu0 0
    %2734 = vmatpush1.bf16.xpose.msra.mxu0 0
    %2735 = vmatprep.subr.bf16.mxu0 0
    %2736 = vmatpush1.bf16.xpose.msra.mxu0 %v2725
    %2737 = vmatprep.subr.bf16.mxu0 0
    %2738 = vmatpush1.bf16.xpose.msra.mxu0 %v2722
    %2739 = vmatprep.subr.bf16.mxu0 0
    %2740 = vmatpush1.bf16.xpose.msra.mxu0 %v2719
    %2741 = vmatprep.subr.bf16.mxu0 0
    %2742 = vmatpush1.bf16.xpose.msra.mxu0 %v2716
    %2743 = vmatprep.subr.bf16.mxu0 0
    %2744 = vmatpush2.bf16.xpose.msra.mxu0 0
    %2745 = vmatprep.subr.bf16.mxu0 0
    %2746 = vmatpush2.bf16.xpose.msra.mxu0 0
    %2747 = vmatprep.subr.bf16.mxu0 0
    %2748 = vmatpush2.bf16.xpose.msra.mxu0 0
    %2749 = vmatprep.subr.bf16.mxu0 0
    %2750 = vmatpush2.bf16.xpose.msra.mxu0 0
    %2751 = vmatprep.subr.bf16.mxu0 0
    %2752 = vmatpush2.bf16.xpose.msra.mxu0 0
    %2753 = vmatprep.subr.bf16.mxu0 0
    %2754 = vmatpush2.bf16.xpose.msra.mxu0 0
    %2755 = vmatprep.subr.bf16.mxu0 0
    %2756 = vmatpush2.bf16.xpose.msra.mxu0 0
    %2757 = vmatprep.subr.bf16.mxu0 0
    %2758 = vmatpush2.bf16.xpose.msra.mxu0 0
    %2759 = vmatprep.mubr.bf16.mxu0 0
    %2760 = vmatmul.mubr.bf16.gmra.mxu0 %v2704
    %v2761 = vpop.f32.mrf.mxu0
    %v2762 = vadd.f32 %v2679, %v2761
    %v2763 = vpop.f32.mrf.mxu0
    %v2764 = vpop.f32.mrf.mxu0
    %v2765 = vadd.f32 %v2680, %v2764
    %v2766 = vpop.f32.mrf.mxu0
    %2767 = vmatprep.mubr.bf16.mxu0 0
    %2768 = vmatmul.mubr.bf16.gmra.mxu0 %v2707
    %v2769 = vpop.f32.mrf.mxu0
    %v2770 = vadd.f32 %v2681, %v2769
    %v2771 = vpop.f32.mrf.mxu0
    %v2772 = vpop.f32.mrf.mxu0
    %v2773 = vadd.f32 %v2682, %v2772
    %v2774 = vpop.f32.mrf.mxu0
    %2775 = vmatprep.mubr.bf16.mxu0 0
    %2776 = vmatmul.mubr.bf16.gmra.mxu0 %v2710
    %v2777 = vpop.f32.mrf.mxu0
    %v2778 = vadd.f32 %v2683, %v2777
    %v2779 = vpop.f32.mrf.mxu0
    %v2780 = vpop.f32.mrf.mxu0
    %v2781 = vadd.f32 %v2684, %v2780
    %v2782 = vpop.f32.mrf.mxu0
    %2783 = vmatprep.mubr.bf16.mxu0 0
    %2784 = vmatmul.mubr.bf16.gmra.mxu0 %v2713
    %v2785 = vpop.f32.mrf.mxu0
    %v2786 = vadd.f32 %v2685, %v2785
    %v2787 = vpop.f32.mrf.mxu0
    %v2788 = vpop.f32.mrf.mxu0
    %v2789 = vadd.f32 %v2686, %v2788
    %v2790 = vpop.f32.mrf.mxu0
    %2791 = vdwg.mxu0
    %2792 = vrot.lane.b32.xlu0 %v504, 104
    %v2793 = vpop.permute.xlu0 %2792
    %2794 = vrot.lane.b32.xlu0 %v505, 104
    %v2795 = vpop.permute.xlu0 %2794
    %2796 = vrot.lane.b32.xlu0 %v506, 104
    %v2797 = vpop.permute.xlu0 %2796
    %2798 = vrot.lane.b32.xlu0 %v507, 104
    %v2799 = vpop.permute.xlu0 %2798
    %2800 = vrot.lane.b32.xlu0 %v512, 72
    %v2801 = vpop.permute.xlu0 %2800
    %2802 = vrot.lane.b32.xlu0 %v513, 72
    %v2803 = vpop.permute.xlu0 %2802
    %2804 = vrot.lane.b32.xlu0 %v514, 72
    %v2805 = vpop.permute.xlu0 %2804
    %2806 = vrot.lane.b32.xlu0 %v515, 72
    %v2807 = vpop.permute.xlu0 %2806
    %v2809 = vsel %vm536, %v2793, 0
    %v2812 = vsel %vm536, %v2795, 0
    %v2815 = vsel %vm536, %v2797, 0
    %v2818 = vsel %vm536, %v2799, 0
    %v2821 = vsel %vm536, %v2801, 0
    %v2824 = vsel %vm536, %v2803, 0
    %v2827 = vsel %vm536, %v2805, 0
    %v2830 = vsel %vm536, %v2807, 0
    %2832 = vmatprep.subr.bf16.mxu0 0
    %2833 = vmatpush1.bf16.xpose.msra.mxu0 0
    %2834 = vmatprep.subr.bf16.mxu0 0
    %2835 = vmatpush1.bf16.xpose.msra.mxu0 0
    %2836 = vmatprep.subr.bf16.mxu0 0
    %2837 = vmatpush1.bf16.xpose.msra.mxu0 0
    %2838 = vmatprep.subr.bf16.mxu0 0
    %2839 = vmatpush1.bf16.xpose.msra.mxu0 0
    %2840 = vmatprep.subr.bf16.mxu0 0
    %2841 = vmatpush1.bf16.xpose.msra.mxu0 %v2830
    %2842 = vmatprep.subr.bf16.mxu0 0
    %2843 = vmatpush1.bf16.xpose.msra.mxu0 %v2827
    %2844 = vmatprep.subr.bf16.mxu0 0
    %2845 = vmatpush1.bf16.xpose.msra.mxu0 %v2824
    %2846 = vmatprep.subr.bf16.mxu0 0
    %2847 = vmatpush1.bf16.xpose.msra.mxu0 %v2821
    %2848 = vmatprep.subr.bf16.mxu0 0
    %2849 = vmatpush2.bf16.xpose.msra.mxu0 0
    %2850 = vmatprep.subr.bf16.mxu0 0
    %2851 = vmatpush2.bf16.xpose.msra.mxu0 0
    %2852 = vmatprep.subr.bf16.mxu0 0
    %2853 = vmatpush2.bf16.xpose.msra.mxu0 0
    %2854 = vmatprep.subr.bf16.mxu0 0
    %2855 = vmatpush2.bf16.xpose.msra.mxu0 0
    %2856 = vmatprep.subr.bf16.mxu0 0
    %2857 = vmatpush2.bf16.xpose.msra.mxu0 0
    %2858 = vmatprep.subr.bf16.mxu0 0
    %2859 = vmatpush2.bf16.xpose.msra.mxu0 0
    %2860 = vmatprep.subr.bf16.mxu0 0
    %2861 = vmatpush2.bf16.xpose.msra.mxu0 0
    %2862 = vmatprep.subr.bf16.mxu0 0
    %2863 = vmatpush2.bf16.xpose.msra.mxu0 0
    %2864 = vmatprep.mubr.bf16.mxu0 0
    %2865 = vmatmul.mubr.bf16.gmra.mxu0 %v2809
    %v2866 = vpop.f32.mrf.mxu0
    %v2867 = vadd.f32 %v2679, %v2866
    %v2868 = vpop.f32.mrf.mxu0
    %v2869 = vpop.f32.mrf.mxu0
    %v2870 = vadd.f32 %v2680, %v2869
    %v2871 = vpop.f32.mrf.mxu0
    %2872 = vmatprep.mubr.bf16.mxu0 0
    %2873 = vmatmul.mubr.bf16.gmra.mxu0 %v2812
    %v2874 = vpop.f32.mrf.mxu0
    %v2875 = vadd.f32 %v2681, %v2874
    %v2876 = vpop.f32.mrf.mxu0
    %v2877 = vpop.f32.mrf.mxu0
    %v2878 = vadd.f32 %v2682, %v2877
    %v2879 = vpop.f32.mrf.mxu0
    %2880 = vmatprep.mubr.bf16.mxu0 0
    %2881 = vmatmul.mubr.bf16.gmra.mxu0 %v2815
    %v2882 = vpop.f32.mrf.mxu0
    %v2883 = vadd.f32 %v2683, %v2882
    %v2884 = vpop.f32.mrf.mxu0
    %v2885 = vpop.f32.mrf.mxu0
    %v2886 = vadd.f32 %v2684, %v2885
    %v2887 = vpop.f32.mrf.mxu0
    %2888 = vmatprep.mubr.bf16.mxu0 0
    %2889 = vmatmul.mubr.bf16.gmra.mxu0 %v2818
    %v2890 = vpop.f32.mrf.mxu0
    %v2891 = vadd.f32 %v2685, %v2890
    %v2892 = vpop.f32.mrf.mxu0
    %v2893 = vpop.f32.mrf.mxu0
    %v2894 = vadd.f32 %v2686, %v2893
    %v2895 = vpop.f32.mrf.mxu0
    %2896 = vdwg.mxu0
    %v2897 = vsel %vm727, %v2762, -inf
    %2898 = vmax.xlane.f32.xlu0 %v2897
    %v2899 = vpop.xlane.xlu0 %2898
    %v2900 = vsel %vm727, %v2765, -inf
    %2901 = vmax.xlane.f32.xlu0 %v2900
    %v2902 = vpop.xlane.xlu0 %2901
    %v2903 = vsel %vm727, %v2770, -inf
    %2904 = vmax.xlane.f32.xlu0 %v2903
    %v2905 = vpop.xlane.xlu0 %2904
    %v2906 = vsel %vm727, %v2773, -inf
    %2907 = vmax.xlane.f32.xlu0 %v2906
    %v2908 = vpop.xlane.xlu0 %2907
    %v2909 = vsel %vm727, %v2778, -inf
    %2910 = vmax.xlane.f32.xlu0 %v2909
    %v2911 = vpop.xlane.xlu0 %2910
    %v2912 = vsel %vm727, %v2781, -inf
    %2913 = vmax.xlane.f32.xlu0 %v2912
    %v2914 = vpop.xlane.xlu0 %2913
    %v2915 = vsel %vm727, %v2786, -inf
    %2916 = vmax.xlane.f32.xlu0 %v2915
    %v2917 = vpop.xlane.xlu0 %2916
    %v2918 = vsel %vm727, %v2789, -inf
    %2919 = vmax.xlane.f32.xlu0 %v2918
    %v2920 = vpop.xlane.xlu0 %2919
    %v2921 = vsel %vm727, %v2867, -inf
    %2922 = vmax.xlane.f32.xlu0 %v2921
    %v2923 = vpop.xlane.xlu0 %2922
    %v2924 = vsel %vm727, %v2870, -inf
    %2925 = vmax.xlane.f32.xlu0 %v2924
    %v2926 = vpop.xlane.xlu0 %2925
    %v2927 = vsel %vm727, %v2875, -inf
    %2928 = vmax.xlane.f32.xlu0 %v2927
    %v2929 = vpop.xlane.xlu0 %2928
    %v2930 = vsel %vm727, %v2878, -inf
    %2931 = vmax.xlane.f32.xlu0 %v2930
    %v2932 = vpop.xlane.xlu0 %2931
    %v2933 = vsel %vm727, %v2883, -inf
    %2934 = vmax.xlane.f32.xlu0 %v2933
    %v2935 = vpop.xlane.xlu0 %2934
    %v2936 = vsel %vm727, %v2886, -inf
    %2937 = vmax.xlane.f32.xlu0 %v2936
    %v2938 = vpop.xlane.xlu0 %2937
    %v2939 = vsel %vm727, %v2891, -inf
    %2940 = vmax.xlane.f32.xlu0 %v2939
    %v2941 = vpop.xlane.xlu0 %2940
    %v2942 = vsel %vm727, %v2894, -inf
    %2943 = vmax.xlane.f32.xlu0 %v2942
    %v2944 = vpop.xlane.xlu0 %2943
    %v2945 = vsub.f32 %v2762, %v2899
    %v2946 = vsub.f32 %v2765, %v2902
    %v2947 = vsub.f32 %v2770, %v2905
    %v2948 = vsub.f32 %v2773, %v2908
    %v2949 = vsub.f32 %v2778, %v2911
    %v2950 = vsub.f32 %v2781, %v2914
    %v2951 = vsub.f32 %v2786, %v2917
    %v2952 = vsub.f32 %v2789, %v2920
    %v2953 = vsub.f32 %v2867, %v2923
    %v2954 = vsub.f32 %v2870, %v2926
    %v2955 = vsub.f32 %v2875, %v2929
    %v2956 = vsub.f32 %v2878, %v2932
    %v2957 = vsub.f32 %v2883, %v2935
    %v2958 = vsub.f32 %v2886, %v2938
    %v2959 = vsub.f32 %v2891, %v2941
    %v2960 = vsub.f32 %v2894, %v2944
    %v2961 = vmul.f32 %v2945, 1.442695
    %v2962 = vpow.pop %v2961
    %v2963 = vmul.f32 %v2946, 1.442695
    %v2964 = vpow.pop %v2963
    %v2965 = vmul.f32 %v2947, 1.442695
    %v2966 = vpow.pop %v2965
    %v2967 = vmul.f32 %v2948, 1.442695
    %v2968 = vpow.pop %v2967
    %v2969 = vmul.f32 %v2949, 1.442695
    %v2970 = vpow.pop %v2969
    %v2971 = vmul.f32 %v2950, 1.442695
    %v2972 = vpow.pop %v2971
    %v2973 = vmul.f32 %v2951, 1.442695
    %v2974 = vpow.pop %v2973
    %v2975 = vmul.f32 %v2952, 1.442695
    %v2976 = vpow.pop %v2975
    %v2977 = vmul.f32 %v2953, 1.442695
    %v2978 = vpow.pop %v2977
    %v2979 = vmul.f32 %v2954, 1.442695
    %v2980 = vpow.pop %v2979
    %v2981 = vmul.f32 %v2955, 1.442695
    %v2982 = vpow.pop %v2981
    %v2983 = vmul.f32 %v2956, 1.442695
    %v2984 = vpow.pop %v2983
    %v2985 = vmul.f32 %v2957, 1.442695
    %v2986 = vpow.pop %v2985
    %v2987 = vmul.f32 %v2958, 1.442695
    %v2988 = vpow.pop %v2987
    %v2989 = vmul.f32 %v2959, 1.442695
    %v2990 = vpow.pop %v2989
    %v2991 = vmul.f32 %v2960, 1.442695
    %v2992 = vpow.pop %v2991
    %v2993 = vsel %vm727, %v2962, 0.0
    %2994 = vadd.xlane.f32.xlu0 %v2993
    %v2995 = vpop.xlane.xlu0 %2994
    %v2996 = vsel %vm727, %v2964, 0.0
    %2997 = vadd.xlane.f32.xlu0 %v2996
    %v2998 = vpop.xlane.xlu0 %2997
    %v2999 = vsel %vm727, %v2966, 0.0
    %3000 = vadd.xlane.f32.xlu0 %v2999
    %v3001 = vpop.xlane.xlu0 %3000
    %v3002 = vsel %vm727, %v2968, 0.0
    %3003 = vadd.xlane.f32.xlu0 %v3002
    %v3004 = vpop.xlane.xlu0 %3003
    %v3005 = vsel %vm727, %v2970, 0.0
    %3006 = vadd.xlane.f32.xlu0 %v3005
    %v3007 = vpop.xlane.xlu0 %3006
    %v3008 = vsel %vm727, %v2972, 0.0
    %3009 = vadd.xlane.f32.xlu0 %v3008
    %v3010 = vpop.xlane.xlu0 %3009
    %v3011 = vsel %vm727, %v2974, 0.0
    %3012 = vadd.xlane.f32.xlu0 %v3011
    %v3013 = vpop.xlane.xlu0 %3012
    %v3014 = vsel %vm727, %v2976, 0.0
    %3015 = vadd.xlane.f32.xlu0 %v3014
    %v3016 = vpop.xlane.xlu0 %3015
    %v3017 = vsel %vm727, %v2978, 0.0
    %3018 = vadd.xlane.f32.xlu0 %v3017
    %v3019 = vpop.xlane.xlu0 %3018
    %v3020 = vsel %vm727, %v2980, 0.0
    %3021 = vadd.xlane.f32.xlu0 %v3020
    %v3022 = vpop.xlane.xlu0 %3021
    %v3023 = vsel %vm727, %v2982, 0.0
    %3024 = vadd.xlane.f32.xlu0 %v3023
    %v3025 = vpop.xlane.xlu0 %3024
    %v3026 = vsel %vm727, %v2984, 0.0
    %3027 = vadd.xlane.f32.xlu0 %v3026
    %v3028 = vpop.xlane.xlu0 %3027
    %v3029 = vsel %vm727, %v2986, 0.0
    %3030 = vadd.xlane.f32.xlu0 %v3029
    %v3031 = vpop.xlane.xlu0 %3030
    %v3032 = vsel %vm727, %v2988, 0.0
    %3033 = vadd.xlane.f32.xlu0 %v3032
    %v3034 = vpop.xlane.xlu0 %3033
    %v3035 = vsel %vm727, %v2990, 0.0
    %3036 = vadd.xlane.f32.xlu0 %v3035
    %v3037 = vpop.xlane.xlu0 %3036
    %v3038 = vsel %vm727, %v2992, 0.0
    %3039 = vadd.xlane.f32.xlu0 %v3038
    %v3040 = vpop.xlane.xlu0 %3039
    %v3041 = vrcp.pop %v2995
    %v3042 = vrcp.pop %v2998
    %v3043 = vrcp.pop %v3001
    %v3044 = vrcp.pop %v3004
    %v3045 = vrcp.pop %v3007
    %v3046 = vrcp.pop %v3010
    %v3047 = vrcp.pop %v3013
    %v3048 = vrcp.pop %v3016
    %v3049 = vrcp.pop %v3019
    %v3050 = vrcp.pop %v3022
    %v3051 = vrcp.pop %v3025
    %v3052 = vrcp.pop %v3028
    %v3053 = vrcp.pop %v3031
    %v3054 = vrcp.pop %v3034
    %v3055 = vrcp.pop %v3037
    %v3056 = vrcp.pop %v3040
    %v3057 = vmul.f32 %v2962, %v3041
    %v3058 = vmul.f32 %v2964, %v3042
    %v3059 = vmul.f32 %v2966, %v3043
    %v3060 = vmul.f32 %v2968, %v3044
    %v3061 = vmul.f32 %v2970, %v3045
    %v3062 = vmul.f32 %v2972, %v3046
    %v3063 = vmul.f32 %v2974, %v3047
    %v3064 = vmul.f32 %v2976, %v3048
    %v3065 = vmul.f32 %v2978, %v3049
    %v3066 = vmul.f32 %v2980, %v3050
    %v3067 = vmul.f32 %v2982, %v3051
    %v3068 = vmul.f32 %v2984, %v3052
    %v3069 = vmul.f32 %v2986, %v3053
    %v3070 = vmul.f32 %v2988, %v3054
    %v3071 = vmul.f32 %v2990, %v3055
    %v3072 = vmul.f32 %v2992, %v3056
    %v3073 = vpack.c.bf16 %v3058, %v3057
    %v3074 = vpack.c.bf16 %v3060, %v3059
    %v3075 = vpack.c.bf16 %v3062, %v3061
    %v3076 = vpack.c.bf16 %v3064, %v3063
    %v3077 = vpack.c.bf16 %v3066, %v3065
    %v3078 = vpack.c.bf16 %v3068, %v3067
    %v3079 = vpack.c.bf16 %v3070, %v3069
    %v3080 = vpack.c.bf16 %v3072, %v3071
    %3081 = vrot.lane.b32.xlu0 %v508, 40
    %v3082 = vpop.permute.xlu0 %3081
    %3083 = vrot.lane.b32.xlu0 %v509, 40
    %v3084 = vpop.permute.xlu0 %3083
    %3085 = vrot.lane.b32.xlu0 %v510, 40
    %v3086 = vpop.permute.xlu0 %3085
    %3087 = vrot.lane.b32.xlu0 %v511, 40
    %v3088 = vpop.permute.xlu0 %3087
    %v3094 = vsel %vm727, %v3073, 0
    %v3097 = vsel %vm727, %v3074, 0
    %v3100 = vsel %vm727, %v3075, 0
    %v3103 = vsel %vm727, %v3076, 0
    %3105 = vmatprep.subr.bf16.mxu0 0
    %3106 = vmatpush1.bf16.msra.mxu0 0
    %3107 = vmatprep.subr.bf16.mxu0 0
    %3108 = vmatpush1.bf16.msra.mxu0 0
    %3109 = vmatprep.subr.bf16.mxu0 0
    %3110 = vmatpush1.bf16.msra.mxu0 0
    %3111 = vmatprep.subr.bf16.mxu0 0
    %3112 = vmatpush1.bf16.msra.mxu0 0
    %3113 = vmatprep.subr.bf16.mxu0 0
    %3114 = vmatpush1.bf16.msra.mxu0 %v3088
    %3115 = vmatprep.subr.bf16.mxu0 0
    %3116 = vmatpush1.bf16.msra.mxu0 %v3086
    %3117 = vmatprep.subr.bf16.mxu0 0
    %3118 = vmatpush1.bf16.msra.mxu0 %v3084
    %3119 = vmatprep.subr.bf16.mxu0 0
    %3120 = vmatpush1.bf16.msra.mxu0 %v3082
    %3121 = vmatprep.subr.bf16.mxu0 0
    %3122 = vmatpush2.bf16.msra.mxu0 0
    %3123 = vmatprep.subr.bf16.mxu0 0
    %3124 = vmatpush2.bf16.msra.mxu0 0
    %3125 = vmatprep.subr.bf16.mxu0 0
    %3126 = vmatpush2.bf16.msra.mxu0 0
    %3127 = vmatprep.subr.bf16.mxu0 0
    %3128 = vmatpush2.bf16.msra.mxu0 0
    %3129 = vmatprep.subr.bf16.mxu0 0
    %3130 = vmatpush2.bf16.msra.mxu0 0
    %3131 = vmatprep.subr.bf16.mxu0 0
    %3132 = vmatpush2.bf16.msra.mxu0 0
    %3133 = vmatprep.subr.bf16.mxu0 0
    %3134 = vmatpush2.bf16.msra.mxu0 0
    %3135 = vmatprep.subr.bf16.mxu0 0
    %3136 = vmatpush2.bf16.msra.mxu0 0
    %3137 = vmatprep.mubr.bf16.mxu0 0
    %3138 = vmatmul.mubr.bf16.gmra.mxu0 %v3094
    %v3139 = vpop.f32.mrf.mxu0
    %v3140 = vadd.f32 0.0, %v3139
    %v3141 = vpop.f32.mrf.mxu0
    %v3142 = vpop.f32.mrf.mxu0
    %v3143 = vadd.f32 0.0, %v3142
    %v3144 = vpop.f32.mrf.mxu0
    %3145 = vmatprep.mubr.bf16.mxu0 0
    %3146 = vmatmul.mubr.bf16.gmra.mxu0 %v3097
    %v3147 = vpop.f32.mrf.mxu0
    %v3148 = vadd.f32 0.0, %v3147
    %v3149 = vpop.f32.mrf.mxu0
    %v3150 = vpop.f32.mrf.mxu0
    %v3151 = vadd.f32 0.0, %v3150
    %v3152 = vpop.f32.mrf.mxu0
    %3153 = vmatprep.mubr.bf16.mxu0 0
    %3154 = vmatmul.mubr.bf16.gmra.mxu0 %v3100
    %v3155 = vpop.f32.mrf.mxu0
    %v3156 = vadd.f32 0.0, %v3155
    %v3157 = vpop.f32.mrf.mxu0
    %v3158 = vpop.f32.mrf.mxu0
    %v3159 = vadd.f32 0.0, %v3158
    %v3160 = vpop.f32.mrf.mxu0
    %3161 = vmatprep.mubr.bf16.mxu0 0
    %3162 = vmatmul.mubr.bf16.gmra.mxu0 %v3103
    %v3163 = vpop.f32.mrf.mxu0
    %v3164 = vadd.f32 0.0, %v3163
    %v3165 = vpop.f32.mrf.mxu0
    %v3166 = vpop.f32.mrf.mxu0
    %v3167 = vadd.f32 0.0, %v3166
    %v3168 = vpop.f32.mrf.mxu0
    %3169 = vdwg.mxu0
    %3170 = vrot.lane.b32.xlu0 %v512, 40
    %v3171 = vpop.permute.xlu0 %3170
    %3172 = vrot.lane.b32.xlu0 %v513, 40
    %v3173 = vpop.permute.xlu0 %3172
    %3174 = vrot.lane.b32.xlu0 %v514, 40
    %v3175 = vpop.permute.xlu0 %3174
    %3176 = vrot.lane.b32.xlu0 %v515, 40
    %v3177 = vpop.permute.xlu0 %3176
    %v3183 = vsel %vm727, %v3077, 0
    %v3186 = vsel %vm727, %v3078, 0
    %v3189 = vsel %vm727, %v3079, 0
    %v3192 = vsel %vm727, %v3080, 0
    %3194 = vmatprep.subr.bf16.mxu0 0
    %3195 = vmatpush1.bf16.msra.mxu0 0
    %3196 = vmatprep.subr.bf16.mxu0 0
    %3197 = vmatpush1.bf16.msra.mxu0 0
    %3198 = vmatprep.subr.bf16.mxu0 0
    %3199 = vmatpush1.bf16.msra.mxu0 0
    %3200 = vmatprep.subr.bf16.mxu0 0
    %3201 = vmatpush1.bf16.msra.mxu0 0
    %3202 = vmatprep.subr.bf16.mxu0 0
    %3203 = vmatpush1.bf16.msra.mxu0 %v3177
    %3204 = vmatprep.subr.bf16.mxu0 0
    %3205 = vmatpush1.bf16.msra.mxu0 %v3175
    %3206 = vmatprep.subr.bf16.mxu0 0
    %3207 = vmatpush1.bf16.msra.mxu0 %v3173
    %3208 = vmatprep.subr.bf16.mxu0 0
    %3209 = vmatpush1.bf16.msra.mxu0 %v3171
    %3210 = vmatprep.subr.bf16.mxu0 0
    %3211 = vmatpush2.bf16.msra.mxu0 0
    %3212 = vmatprep.subr.bf16.mxu0 0
    %3213 = vmatpush2.bf16.msra.mxu0 0
    %3214 = vmatprep.subr.bf16.mxu0 0
    %3215 = vmatpush2.bf16.msra.mxu0 0
    %3216 = vmatprep.subr.bf16.mxu0 0
    %3217 = vmatpush2.bf16.msra.mxu0 0
    %3218 = vmatprep.subr.bf16.mxu0 0
    %3219 = vmatpush2.bf16.msra.mxu0 0
    %3220 = vmatprep.subr.bf16.mxu0 0
    %3221 = vmatpush2.bf16.msra.mxu0 0
    %3222 = vmatprep.subr.bf16.mxu0 0
    %3223 = vmatpush2.bf16.msra.mxu0 0
    %3224 = vmatprep.subr.bf16.mxu0 0
    %3225 = vmatpush2.bf16.msra.mxu0 0
    %3226 = vmatprep.mubr.bf16.mxu0 0
    %3227 = vmatmul.mubr.bf16.gmra.mxu0 %v3183
    %v3228 = vpop.f32.mrf.mxu0
    %v3229 = vadd.f32 0.0, %v3228
    %v3230 = vpop.f32.mrf.mxu0
    %v3231 = vpop.f32.mrf.mxu0
    %v3232 = vadd.f32 0.0, %v3231
    %v3233 = vpop.f32.mrf.mxu0
    %3234 = vmatprep.mubr.bf16.mxu0 0
    %3235 = vmatmul.mubr.bf16.gmra.mxu0 %v3186
    %v3236 = vpop.f32.mrf.mxu0
    %v3237 = vadd.f32 0.0, %v3236
    %v3238 = vpop.f32.mrf.mxu0
    %v3239 = vpop.f32.mrf.mxu0
    %v3240 = vadd.f32 0.0, %v3239
    %v3241 = vpop.f32.mrf.mxu0
    %3242 = vmatprep.mubr.bf16.mxu0 0
    %3243 = vmatmul.mubr.bf16.gmra.mxu0 %v3189
    %v3244 = vpop.f32.mrf.mxu0
    %v3245 = vadd.f32 0.0, %v3244
    %v3246 = vpop.f32.mrf.mxu0
    %v3247 = vpop.f32.mrf.mxu0
    %v3248 = vadd.f32 0.0, %v3247
    %v3249 = vpop.f32.mrf.mxu0
    %3250 = vmatprep.mubr.bf16.mxu0 0
    %3251 = vmatmul.mubr.bf16.gmra.mxu0 %v3192
    %v3252 = vpop.f32.mrf.mxu0
    %v3253 = vadd.f32 0.0, %v3252
    %v3254 = vpop.f32.mrf.mxu0
    %v3255 = vpop.f32.mrf.mxu0
    %v3256 = vadd.f32 0.0, %v3255
    %v3257 = vpop.f32.mrf.mxu0
    %3258 = vdwg.mxu0
    %v3259 = vpack.c.bf16 %v3143, %v3140
    %v3260 = vpack.c.bf16 %v3151, %v3148
    %v3261 = vpack.c.bf16 %v3159, %v3156
    %v3262 = vpack.c.bf16 %v3167, %v3164
    %v3263 = vpack.c.bf16 %v3232, %v3229
    %v3264 = vpack.c.bf16 %v3240, %v3237
    %v3265 = vpack.c.bf16 %v3248, %v3245
    %v3266 = vpack.c.bf16 %v3256, %v3253
    %s3267 = scalar_lea.vmem %s3, 12
    %v3268 = vld [vmem:[%s3267] sm:$0xf]
    %v3270 = vsel %vm536, %v3259, 0
    %v3273 = vsel %vm536, %v3260, 0
    %v3276 = vsel %vm536, %v3261, 0
    %v3279 = vsel %vm536, %v3262, 0
    %v3282 = vsel %vm536, %v3263, 0
    %v3285 = vsel %vm536, %v3264, 0
    %v3288 = vsel %vm536, %v3265, 0
    %v3291 = vsel %vm536, %v3266, 0
    %v3294 = vsel %vm1722, %v3268, 0
    %3296 = vmatprep.subr.bf16.mxu0 0
    %3297 = vmatpush1.bf16.msra.mxu0 0
    %3298 = vmatprep.subr.bf16.mxu0 0
    %3299 = vmatpush1.bf16.msra.mxu0 0
    %3300 = vmatprep.subr.bf16.mxu0 0
    %3301 = vmatpush1.bf16.msra.mxu0 0
    %3302 = vmatprep.subr.bf16.mxu0 0
    %3303 = vmatpush1.bf16.msra.mxu0 0
    %3304 = vmatprep.subr.bf16.mxu0 0
    %3305 = vmatpush1.bf16.msra.mxu0 0
    %3306 = vmatprep.subr.bf16.mxu0 0
    %3307 = vmatpush1.bf16.msra.mxu0 0
    %3308 = vmatprep.subr.bf16.mxu0 0
    %3309 = vmatpush1.bf16.msra.mxu0 0
    %3310 = vmatprep.subr.bf16.mxu0 0
    %3311 = vmatpush1.bf16.msra.mxu0 %v3294
    %3312 = vmatprep.subr.bf16.mxu0 0
    %3313 = vmatpush2.bf16.msra.mxu0 0
    %3314 = vmatprep.subr.bf16.mxu0 0
    %3315 = vmatpush2.bf16.msra.mxu0 0
    %3316 = vmatprep.subr.bf16.mxu0 0
    %3317 = vmatpush2.bf16.msra.mxu0 0
    %3318 = vmatprep.subr.bf16.mxu0 0
    %3319 = vmatpush2.bf16.msra.mxu0 0
    %3320 = vmatprep.subr.bf16.mxu0 0
    %3321 = vmatpush2.bf16.msra.mxu0 0
    %3322 = vmatprep.subr.bf16.mxu0 0
    %3323 = vmatpush2.bf16.msra.mxu0 0
    %3324 = vmatprep.subr.bf16.mxu0 0
    %3325 = vmatpush2.bf16.msra.mxu0 0
    %3326 = vmatprep.subr.bf16.mxu0 0
    %3327 = vmatpush2.bf16.msra.mxu0 0
    %3328 = vmatprep.mubr.bf16.mxu0 0
    %3329 = vmatmul.mubr.bf16.gmra.mxu0 %v3270
    %v3330 = vpop.f32.mrf.mxu0
    %v3331 = vadd.f32 0.0, %v3330
    %v3332 = vpop.f32.mrf.mxu0
    %v3333 = vpop.f32.mrf.mxu0
    %v3334 = vadd.f32 0.0, %v3333
    %v3335 = vpop.f32.mrf.mxu0
    %3336 = vmatprep.mubr.bf16.mxu0 0
    %3337 = vmatmul.mubr.bf16.gmra.mxu0 %v3273
    %v3338 = vpop.f32.mrf.mxu0
    %v3339 = vadd.f32 0.0, %v3338
    %v3340 = vpop.f32.mrf.mxu0
    %v3341 = vpop.f32.mrf.mxu0
    %v3342 = vadd.f32 0.0, %v3341
    %v3343 = vpop.f32.mrf.mxu0
    %3344 = vmatprep.mubr.bf16.mxu0 0
    %3345 = vmatmul.mubr.bf16.gmra.mxu0 %v3276
    %v3346 = vpop.f32.mrf.mxu0
    %v3347 = vadd.f32 0.0, %v3346
    %v3348 = vpop.f32.mrf.mxu0
    %v3349 = vpop.f32.mrf.mxu0
    %v3350 = vadd.f32 0.0, %v3349
    %v3351 = vpop.f32.mrf.mxu0
    %3352 = vmatprep.mubr.bf16.mxu0 0
    %3353 = vmatmul.mubr.bf16.gmra.mxu0 %v3279
    %v3354 = vpop.f32.mrf.mxu0
    %v3355 = vadd.f32 0.0, %v3354
    %v3356 = vpop.f32.mrf.mxu0
    %v3357 = vpop.f32.mrf.mxu0
    %v3358 = vadd.f32 0.0, %v3357
    %v3359 = vpop.f32.mrf.mxu0
    %3360 = vmatprep.mubr.bf16.mxu0 0
    %3361 = vmatmul.mubr.bf16.gmra.mxu0 %v3282
    %v3362 = vpop.f32.mrf.mxu0
    %v3363 = vadd.f32 0.0, %v3362
    %v3364 = vpop.f32.mrf.mxu0
    %v3365 = vpop.f32.mrf.mxu0
    %v3366 = vadd.f32 0.0, %v3365
    %v3367 = vpop.f32.mrf.mxu0
    %3368 = vmatprep.mubr.bf16.mxu0 0
    %3369 = vmatmul.mubr.bf16.gmra.mxu0 %v3285
    %v3370 = vpop.f32.mrf.mxu0
    %v3371 = vadd.f32 0.0, %v3370
    %v3372 = vpop.f32.mrf.mxu0
    %v3373 = vpop.f32.mrf.mxu0
    %v3374 = vadd.f32 0.0, %v3373
    %v3375 = vpop.f32.mrf.mxu0
    %3376 = vmatprep.mubr.bf16.mxu0 0
    %3377 = vmatmul.mubr.bf16.gmra.mxu0 %v3288
    %v3378 = vpop.f32.mrf.mxu0
    %v3379 = vadd.f32 0.0, %v3378
    %v3380 = vpop.f32.mrf.mxu0
    %v3381 = vpop.f32.mrf.mxu0
    %v3382 = vadd.f32 0.0, %v3381
    %v3383 = vpop.f32.mrf.mxu0
    %3384 = vmatprep.mubr.bf16.mxu0 0
    %3385 = vmatmul.mubr.bf16.gmra.mxu0 %v3291
    %v3386 = vpop.f32.mrf.mxu0
    %v3387 = vadd.f32 0.0, %v3386
    %v3388 = vpop.f32.mrf.mxu0
    %v3389 = vpop.f32.mrf.mxu0
    %v3390 = vadd.f32 0.0, %v3389
    %v3391 = vpop.f32.mrf.mxu0
    %3392 = vdwg.mxu0
    %v3393 = vadd.f32 %v2662, %v3331
    %v3394 = vadd.f32 %v2663, %v3334
    %v3395 = vadd.f32 %v2664, %v3339
    %v3396 = vadd.f32 %v2665, %v3342
    %v3397 = vadd.f32 %v2666, %v3347
    %v3398 = vadd.f32 %v2667, %v3350
    %v3399 = vadd.f32 %v2668, %v3355
    %v3400 = vadd.f32 %v2669, %v3358
    %v3401 = vadd.f32 %v2670, %v3363
    %v3402 = vadd.f32 %v2671, %v3366
    %v3403 = vadd.f32 %v2672, %v3371
    %v3404 = vadd.f32 %v2673, %v3374
    %v3405 = vadd.f32 %v2674, %v3379
    %v3406 = vadd.f32 %v2675, %v3382
    %v3407 = vadd.f32 %v2676, %v3387
    %v3408 = vadd.f32 %v2677, %v3390
    %v3409 = vadd.f32 %v68, %v3393
    %v3410 = vadd.f32 %v69, %v3394
    %v3411 = vadd.f32 %v70, %v3395
    %v3412 = vadd.f32 %v71, %v3396
    %v3413 = vadd.f32 %v72, %v3397
    %v3414 = vadd.f32 %v73, %v3398
    %v3415 = vadd.f32 %v74, %v3399
    %v3416 = vadd.f32 %v75, %v3400
    %v3417 = vadd.f32 %v76, %v3401
    %v3418 = vadd.f32 %v77, %v3402
    %v3419 = vadd.f32 %v78, %v3403
    %v3420 = vadd.f32 %v79, %v3404
    %v3421 = vadd.f32 %v80, %v3405
    %v3422 = vadd.f32 %v81, %v3406
    %v3423 = vadd.f32 %v82, %v3407
    %v3424 = vadd.f32 %v83, %v3408
    %v3425 = vlaneseq
    %v3426 = vshrl.u32 %v3425, 7
    %v3427 = vsub.s32 5, %v3426
    %v3428 = vrot.slane %v84, %v3427
    %v3429 = vadd.f32 %v3409, %v3428
    %v3430 = vadd.f32 %v3410, %v3428
    %v3431 = vadd.f32 %v3411, %v3428
    %v3432 = vadd.f32 %v3412, %v3428
    %v3433 = vadd.f32 %v3413, %v3428
    %v3434 = vadd.f32 %v3414, %v3428
    %v3435 = vadd.f32 %v3415, %v3428
    %v3436 = vadd.f32 %v3416, %v3428
    %v3437 = vadd.f32 %v3417, %v3428
    %v3438 = vadd.f32 %v3418, %v3428
    %v3439 = vadd.f32 %v3419, %v3428
    %v3440 = vadd.f32 %v3420, %v3428
    %v3441 = vadd.f32 %v3421, %v3428
    %v3442 = vadd.f32 %v3422, %v3428
    %v3443 = vadd.f32 %v3423, %v3428
    %v3444 = vadd.f32 %v3424, %v3428
    %v3445 = vsel %vm85, %v3429, 0.0
    %3446 = vadd.xlane.f32.xlu0 %v3445
    %v3447 = vpop.xlane.xlu0 %3446
    %v3448 = vsel %vm85, %v3430, 0.0
    %3449 = vadd.xlane.f32.xlu0 %v3448
    %v3450 = vpop.xlane.xlu0 %3449
    %v3451 = vsel %vm85, %v3431, 0.0
    %3452 = vadd.xlane.f32.xlu0 %v3451
    %v3453 = vpop.xlane.xlu0 %3452
    %v3454 = vsel %vm85, %v3432, 0.0
    %3455 = vadd.xlane.f32.xlu0 %v3454
    %v3456 = vpop.xlane.xlu0 %3455
    %v3457 = vsel %vm85, %v3433, 0.0
    %3458 = vadd.xlane.f32.xlu0 %v3457
    %v3459 = vpop.xlane.xlu0 %3458
    %v3460 = vsel %vm85, %v3434, 0.0
    %3461 = vadd.xlane.f32.xlu0 %v3460
    %v3462 = vpop.xlane.xlu0 %3461
    %v3463 = vsel %vm85, %v3435, 0.0
    %3464 = vadd.xlane.f32.xlu0 %v3463
    %v3465 = vpop.xlane.xlu0 %3464
    %v3466 = vsel %vm85, %v3436, 0.0
    %3467 = vadd.xlane.f32.xlu0 %v3466
    %v3468 = vpop.xlane.xlu0 %3467
    %v3469 = vsel %vm85, %v3437, 0.0
    %3470 = vadd.xlane.f32.xlu0 %v3469
    %v3471 = vpop.xlane.xlu0 %3470
    %v3472 = vsel %vm85, %v3438, 0.0
    %3473 = vadd.xlane.f32.xlu0 %v3472
    %v3474 = vpop.xlane.xlu0 %3473
    %v3475 = vsel %vm85, %v3439, 0.0
    %3476 = vadd.xlane.f32.xlu0 %v3475
    %v3477 = vpop.xlane.xlu0 %3476
    %v3478 = vsel %vm85, %v3440, 0.0
    %3479 = vadd.xlane.f32.xlu0 %v3478
    %v3480 = vpop.xlane.xlu0 %3479
    %v3481 = vsel %vm85, %v3441, 0.0
    %3482 = vadd.xlane.f32.xlu0 %v3481
    %v3483 = vpop.xlane.xlu0 %3482
    %v3484 = vsel %vm85, %v3442, 0.0
    %3485 = vadd.xlane.f32.xlu0 %v3484
    %v3486 = vpop.xlane.xlu0 %3485
    %v3487 = vsel %vm85, %v3443, 0.0
    %3488 = vadd.xlane.f32.xlu0 %v3487
    %v3489 = vpop.xlane.xlu0 %3488
    %v3490 = vsel %vm85, %v3444, 0.0
    %3491 = vadd.xlane.f32.xlu0 %v3490
    %v3492 = vpop.xlane.xlu0 %3491
    %v3493 = vmul.f32 %v3447, %v134
    %v3494 = vmul.f32 %v3450, %v134
    %v3495 = vmul.f32 %v3453, %v134
    %v3496 = vmul.f32 %v3456, %v134
    %v3497 = vmul.f32 %v3459, %v134
    %v3498 = vmul.f32 %v3462, %v134
    %v3499 = vmul.f32 %v3465, %v134
    %v3500 = vmul.f32 %v3468, %v134
    %v3501 = vmul.f32 %v3471, %v134
    %v3502 = vmul.f32 %v3474, %v134
    %v3503 = vmul.f32 %v3477, %v134
    %v3504 = vmul.f32 %v3480, %v134
    %v3505 = vmul.f32 %v3483, %v134
    %v3506 = vmul.f32 %v3486, %v134
    %v3507 = vmul.f32 %v3489, %v134
    %v3508 = vmul.f32 %v3492, %v134
    %v3509 = vsub.f32 %v3429, %v3493
    %v3510 = vsub.f32 %v3430, %v3494
    %v3511 = vsub.f32 %v3431, %v3495
    %v3512 = vsub.f32 %v3432, %v3496
    %v3513 = vsub.f32 %v3433, %v3497
    %v3514 = vsub.f32 %v3434, %v3498
    %v3515 = vsub.f32 %v3435, %v3499
    %v3516 = vsub.f32 %v3436, %v3500
    %v3517 = vsub.f32 %v3437, %v3501
    %v3518 = vsub.f32 %v3438, %v3502
    %v3519 = vsub.f32 %v3439, %v3503
    %v3520 = vsub.f32 %v3440, %v3504
    %v3521 = vsub.f32 %v3441, %v3505
    %v3522 = vsub.f32 %v3442, %v3506
    %v3523 = vsub.f32 %v3443, %v3507
    %v3524 = vsub.f32 %v3444, %v3508
    %v3525 = vmul.f32 %v3509, %v3509
    %v3526 = vmul.f32 %v3510, %v3510
    %v3527 = vmul.f32 %v3511, %v3511
    %v3528 = vmul.f32 %v3512, %v3512
    %v3529 = vmul.f32 %v3513, %v3513
    %v3530 = vmul.f32 %v3514, %v3514
    %v3531 = vmul.f32 %v3515, %v3515
    %v3532 = vmul.f32 %v3516, %v3516
    %v3533 = vmul.f32 %v3517, %v3517
    %v3534 = vmul.f32 %v3518, %v3518
    %v3535 = vmul.f32 %v3519, %v3519
    %v3536 = vmul.f32 %v3520, %v3520
    %v3537 = vmul.f32 %v3521, %v3521
    %v3538 = vmul.f32 %v3522, %v3522
    %v3539 = vmul.f32 %v3523, %v3523
    %v3540 = vmul.f32 %v3524, %v3524
    %v3541 = vsel %vm85, %v3525, 0.0
    %3542 = vadd.xlane.f32.xlu0 %v3541
    %v3543 = vpop.xlane.xlu0 %3542
    %v3544 = vsel %vm85, %v3526, 0.0
    %3545 = vadd.xlane.f32.xlu0 %v3544
    %v3546 = vpop.xlane.xlu0 %3545
    %v3547 = vsel %vm85, %v3527, 0.0
    %3548 = vadd.xlane.f32.xlu0 %v3547
    %v3549 = vpop.xlane.xlu0 %3548
    %v3550 = vsel %vm85, %v3528, 0.0
    %3551 = vadd.xlane.f32.xlu0 %v3550
    %v3552 = vpop.xlane.xlu0 %3551
    %v3553 = vsel %vm85, %v3529, 0.0
    %3554 = vadd.xlane.f32.xlu0 %v3553
    %v3555 = vpop.xlane.xlu0 %3554
    %v3556 = vsel %vm85, %v3530, 0.0
    %3557 = vadd.xlane.f32.xlu0 %v3556
    %v3558 = vpop.xlane.xlu0 %3557
    %v3559 = vsel %vm85, %v3531, 0.0
    %3560 = vadd.xlane.f32.xlu0 %v3559
    %v3561 = vpop.xlane.xlu0 %3560
    %v3562 = vsel %vm85, %v3532, 0.0
    %3563 = vadd.xlane.f32.xlu0 %v3562
    %v3564 = vpop.xlane.xlu0 %3563
    %v3565 = vsel %vm85, %v3533, 0.0
    %3566 = vadd.xlane.f32.xlu0 %v3565
    %v3567 = vpop.xlane.xlu0 %3566
    %v3568 = vsel %vm85, %v3534, 0.0
    %3569 = vadd.xlane.f32.xlu0 %v3568
    %v3570 = vpop.xlane.xlu0 %3569
    %v3571 = vsel %vm85, %v3535, 0.0
    %3572 = vadd.xlane.f32.xlu0 %v3571
    %v3573 = vpop.xlane.xlu0 %3572
    %v3574 = vsel %vm85, %v3536, 0.0
    %3575 = vadd.xlane.f32.xlu0 %v3574
    %v3576 = vpop.xlane.xlu0 %3575
    %v3577 = vsel %vm85, %v3537, 0.0
    %3578 = vadd.xlane.f32.xlu0 %v3577
    %v3579 = vpop.xlane.xlu0 %3578
    %v3580 = vsel %vm85, %v3538, 0.0
    %3581 = vadd.xlane.f32.xlu0 %v3580
    %v3582 = vpop.xlane.xlu0 %3581
    %v3583 = vsel %vm85, %v3539, 0.0
    %3584 = vadd.xlane.f32.xlu0 %v3583
    %v3585 = vpop.xlane.xlu0 %3584
    %v3586 = vsel %vm85, %v3540, 0.0
    %3587 = vadd.xlane.f32.xlu0 %v3586
    %v3588 = vpop.xlane.xlu0 %3587
    %v3589 = vmul.f32 %v3543, %v134
    %v3590 = vmul.f32 %v3546, %v134
    %v3591 = vmul.f32 %v3549, %v134
    %v3592 = vmul.f32 %v3552, %v134
    %v3593 = vmul.f32 %v3555, %v134
    %v3594 = vmul.f32 %v3558, %v134
    %v3595 = vmul.f32 %v3561, %v134
    %v3596 = vmul.f32 %v3564, %v134
    %v3597 = vmul.f32 %v3567, %v134
    %v3598 = vmul.f32 %v3570, %v134
    %v3599 = vmul.f32 %v3573, %v134
    %v3600 = vmul.f32 %v3576, %v134
    %v3601 = vmul.f32 %v3579, %v134
    %v3602 = vmul.f32 %v3582, %v134
    %v3603 = vmul.f32 %v3585, %v134
    %v3604 = vmul.f32 %v3588, %v134
    %v3605 = vadd.f32 %v3589, 1e-05
    %v3606 = vadd.f32 %v3590, 1e-05
    %v3607 = vadd.f32 %v3591, 1e-05
    %v3608 = vadd.f32 %v3592, 1e-05
    %v3609 = vadd.f32 %v3593, 1e-05
    %v3610 = vadd.f32 %v3594, 1e-05
    %v3611 = vadd.f32 %v3595, 1e-05
    %v3612 = vadd.f32 %v3596, 1e-05
    %v3613 = vadd.f32 %v3597, 1e-05
    %v3614 = vadd.f32 %v3598, 1e-05
    %v3615 = vadd.f32 %v3599, 1e-05
    %v3616 = vadd.f32 %v3600, 1e-05
    %v3617 = vadd.f32 %v3601, 1e-05
    %v3618 = vadd.f32 %v3602, 1e-05
    %v3619 = vadd.f32 %v3603, 1e-05
    %v3620 = vadd.f32 %v3604, 1e-05
    %v3621 = vrsqrt.pop %v3605
    %v3622 = vrsqrt.pop %v3606
    %v3623 = vrsqrt.pop %v3607
    %v3624 = vrsqrt.pop %v3608
    %v3625 = vrsqrt.pop %v3609
    %v3626 = vrsqrt.pop %v3610
    %v3627 = vrsqrt.pop %v3611
    %v3628 = vrsqrt.pop %v3612
    %v3629 = vrsqrt.pop %v3613
    %v3630 = vrsqrt.pop %v3614
    %v3631 = vrsqrt.pop %v3615
    %v3632 = vrsqrt.pop %v3616
    %v3633 = vrsqrt.pop %v3617
    %v3634 = vrsqrt.pop %v3618
    %v3635 = vrsqrt.pop %v3619
    %v3636 = vrsqrt.pop %v3620
    %v3637 = vmul.f32 %v3509, %v3621
    %v3638 = vmul.f32 %v3510, %v3622
    %v3639 = vmul.f32 %v3511, %v3623
    %v3640 = vmul.f32 %v3512, %v3624
    %v3641 = vmul.f32 %v3513, %v3625
    %v3642 = vmul.f32 %v3514, %v3626
    %v3643 = vmul.f32 %v3515, %v3627
    %v3644 = vmul.f32 %v3516, %v3628
    %v3645 = vmul.f32 %v3517, %v3629
    %v3646 = vmul.f32 %v3518, %v3630
    %v3647 = vmul.f32 %v3519, %v3631
    %v3648 = vmul.f32 %v3520, %v3632
    %v3649 = vmul.f32 %v3521, %v3633
    %v3650 = vmul.f32 %v3522, %v3634
    %v3651 = vmul.f32 %v3523, %v3635
    %v3652 = vmul.f32 %v3524, %v3636
    %v3653 = vlaneseq
    %v3654 = vshrl.u32 %v3653, 7
    %v3655 = vsub.s32 2, %v3654
    %v3656 = vrot.slane %v84, %v3655
    %v3657 = vmul.f32 %v3637, %v3656
    %v3658 = vmul.f32 %v3638, %v3656
    %v3659 = vmul.f32 %v3639, %v3656
    %v3660 = vmul.f32 %v3640, %v3656
    %v3661 = vmul.f32 %v3641, %v3656
    %v3662 = vmul.f32 %v3642, %v3656
    %v3663 = vmul.f32 %v3643, %v3656
    %v3664 = vmul.f32 %v3644, %v3656
    %v3665 = vmul.f32 %v3645, %v3656
    %v3666 = vmul.f32 %v3646, %v3656
    %v3667 = vmul.f32 %v3647, %v3656
    %v3668 = vmul.f32 %v3648, %v3656
    %v3669 = vmul.f32 %v3649, %v3656
    %v3670 = vmul.f32 %v3650, %v3656
    %v3671 = vmul.f32 %v3651, %v3656
    %v3672 = vmul.f32 %v3652, %v3656
    %v3673 = vlaneseq
    %v3674 = vshrl.u32 %v3673, 7
    %v3675 = vsub.s32 3, %v3674
    %v3676 = vrot.slane %v84, %v3675
    %v3677 = vadd.f32 %v3657, %v3676
    %v3678 = vadd.f32 %v3658, %v3676
    %v3679 = vadd.f32 %v3659, %v3676
    %v3680 = vadd.f32 %v3660, %v3676
    %v3681 = vadd.f32 %v3661, %v3676
    %v3682 = vadd.f32 %v3662, %v3676
    %v3683 = vadd.f32 %v3663, %v3676
    %v3684 = vadd.f32 %v3664, %v3676
    %v3685 = vadd.f32 %v3665, %v3676
    %v3686 = vadd.f32 %v3666, %v3676
    %v3687 = vadd.f32 %v3667, %v3676
    %v3688 = vadd.f32 %v3668, %v3676
    %v3689 = vadd.f32 %v3669, %v3676
    %v3690 = vadd.f32 %v3670, %v3676
    %v3691 = vadd.f32 %v3671, %v3676
    %v3692 = vadd.f32 %v3672, %v3676
    %v3693 = vpack.c.bf16 %v3678, %v3677
    %v3694 = vpack.c.bf16 %v3680, %v3679
    %v3695 = vpack.c.bf16 %v3682, %v3681
    %v3696 = vpack.c.bf16 %v3684, %v3683
    %v3697 = vpack.c.bf16 %v3686, %v3685
    %v3698 = vpack.c.bf16 %v3688, %v3687
    %v3699 = vpack.c.bf16 %v3690, %v3689
    %v3700 = vpack.c.bf16 %v3692, %v3691
    %v3701 = vld [vmem:[%s4] sm:$0xf]
    %v3702 = vld [vmem:[%s4 + $0x4] sm:$0xf]
    %v3703 = vld [vmem:[%s4 + $0x8] sm:$0xf]
    %v3704 = vld [vmem:[%s4 + $0xc] sm:$0xf]
    %v3705 = vlaneseq
    %v3706 = vshrl.u32 %v3705, 7
    %v3707 = vsub.s32 6, %v3706
    %v3708 = vrot.slane %v84, %v3707
    %v3713 = vunpack.c.l.b16 %v3701
    %v3714 = vunpack.c.l.b16 %v3702
    %v3715 = vunpack.c.l.b16 %v3703
    %v3716 = vunpack.c.l.b16 %v3704
    %v3717 = vpack.c.b16 %v3714, %v3713
    %v3718 = vpack.c.b16 %v3716, %v3715
    %v3722 = vsel %vm85, %v3693, 0
    %v3725 = vsel %vm85, %v3694, 0
    %v3728 = vsel %vm85, %v3695, 0
    %v3731 = vsel %vm85, %v3696, 0
    %v3734 = vsel %vm85, %v3697, 0
    %v3737 = vsel %vm85, %v3698, 0
    %v3740 = vsel %vm85, %v3699, 0
    %v3743 = vsel %vm85, %v3700, 0
    %3745 = vmatprep.subr.bf16.mxu0 0
    %3746 = vmatpush1.bf16.msra.mxu0 0
    %3747 = vmatprep.subr.bf16.mxu0 0
    %3748 = vmatpush1.bf16.msra.mxu0 0
    %3749 = vmatprep.subr.bf16.mxu0 0
    %3750 = vmatpush1.bf16.msra.mxu0 0
    %3751 = vmatprep.subr.bf16.mxu0 0
    %3752 = vmatpush1.bf16.msra.mxu0 0
    %3753 = vmatprep.subr.bf16.mxu0 0
    %3754 = vmatpush1.bf16.msra.mxu0 0
    %3755 = vmatprep.subr.bf16.mxu0 0
    %3756 = vmatpush1.bf16.msra.mxu0 0
    %3757 = vmatprep.subr.bf16.mxu0 0
    %3758 = vmatpush1.bf16.msra.mxu0 %v3718
    %3759 = vmatprep.subr.bf16.mxu0 0
    %3760 = vmatpush1.bf16.msra.mxu0 %v3717
    %3761 = vmatprep.subr.bf16.mxu0 0
    %3762 = vmatpush2.bf16.msra.mxu0 0
    %3763 = vmatprep.subr.bf16.mxu0 0
    %3764 = vmatpush2.bf16.msra.mxu0 0
    %3765 = vmatprep.subr.bf16.mxu0 0
    %3766 = vmatpush2.bf16.msra.mxu0 0
    %3767 = vmatprep.subr.bf16.mxu0 0
    %3768 = vmatpush2.bf16.msra.mxu0 0
    %3769 = vmatprep.subr.bf16.mxu0 0
    %3770 = vmatpush2.bf16.msra.mxu0 0
    %3771 = vmatprep.subr.bf16.mxu0 0
    %3772 = vmatpush2.bf16.msra.mxu0 0
    %3773 = vmatprep.subr.bf16.mxu0 0
    %3774 = vmatpush2.bf16.msra.mxu0 0
    %3775 = vmatprep.subr.bf16.mxu0 0
    %3776 = vmatpush2.bf16.msra.mxu0 0
    %3777 = vmatprep.mubr.bf16.mxu0 0
    %3778 = vmatmul.mubr.bf16.gmra.mxu0 %v3722
    %v3779 = vpop.f32.mrf.mxu0
    %v3780 = vadd.f32 %v3708, %v3779
    %v3781 = vpop.f32.mrf.mxu0
    %v3782 = vpop.f32.mrf.mxu0
    %v3783 = vadd.f32 %v3708, %v3782
    %v3784 = vpop.f32.mrf.mxu0
    %3785 = vmatprep.mubr.bf16.mxu0 0
    %3786 = vmatmul.mubr.bf16.gmra.mxu0 %v3725
    %v3787 = vpop.f32.mrf.mxu0
    %v3788 = vadd.f32 %v3708, %v3787
    %v3789 = vpop.f32.mrf.mxu0
    %v3790 = vpop.f32.mrf.mxu0
    %v3791 = vadd.f32 %v3708, %v3790
    %v3792 = vpop.f32.mrf.mxu0
    %3793 = vmatprep.mubr.bf16.mxu0 0
    %3794 = vmatmul.mubr.bf16.gmra.mxu0 %v3728
    %v3795 = vpop.f32.mrf.mxu0
    %v3796 = vadd.f32 %v3708, %v3795
    %v3797 = vpop.f32.mrf.mxu0
    %v3798 = vpop.f32.mrf.mxu0
    %v3799 = vadd.f32 %v3708, %v3798
    %v3800 = vpop.f32.mrf.mxu0
    %3801 = vmatprep.mubr.bf16.mxu0 0
    %3802 = vmatmul.mubr.bf16.gmra.mxu0 %v3731
    %v3803 = vpop.f32.mrf.mxu0
    %v3804 = vadd.f32 %v3708, %v3803
    %v3805 = vpop.f32.mrf.mxu0
    %v3806 = vpop.f32.mrf.mxu0
    %v3807 = vadd.f32 %v3708, %v3806
    %v3808 = vpop.f32.mrf.mxu0
    %3809 = vmatprep.mubr.bf16.mxu0 0
    %3810 = vmatmul.mubr.bf16.gmra.mxu0 %v3734
    %v3811 = vpop.f32.mrf.mxu0
    %v3812 = vadd.f32 %v3708, %v3811
    %v3813 = vpop.f32.mrf.mxu0
    %v3814 = vpop.f32.mrf.mxu0
    %v3815 = vadd.f32 %v3708, %v3814
    %v3816 = vpop.f32.mrf.mxu0
    %3817 = vmatprep.mubr.bf16.mxu0 0
    %3818 = vmatmul.mubr.bf16.gmra.mxu0 %v3737
    %v3819 = vpop.f32.mrf.mxu0
    %v3820 = vadd.f32 %v3708, %v3819
    %v3821 = vpop.f32.mrf.mxu0
    %v3822 = vpop.f32.mrf.mxu0
    %v3823 = vadd.f32 %v3708, %v3822
    %v3824 = vpop.f32.mrf.mxu0
    %3825 = vmatprep.mubr.bf16.mxu0 0
    %3826 = vmatmul.mubr.bf16.gmra.mxu0 %v3740
    %v3827 = vpop.f32.mrf.mxu0
    %v3828 = vadd.f32 %v3708, %v3827
    %v3829 = vpop.f32.mrf.mxu0
    %v3830 = vpop.f32.mrf.mxu0
    %v3831 = vadd.f32 %v3708, %v3830
    %v3832 = vpop.f32.mrf.mxu0
    %3833 = vmatprep.mubr.bf16.mxu0 0
    %3834 = vmatmul.mubr.bf16.gmra.mxu0 %v3743
    %v3835 = vpop.f32.mrf.mxu0
    %v3836 = vadd.f32 %v3708, %v3835
    %v3837 = vpop.f32.mrf.mxu0
    %v3838 = vpop.f32.mrf.mxu0
    %v3839 = vadd.f32 %v3708, %v3838
    %v3840 = vpop.f32.mrf.mxu0
    %3841 = vdwg.mxu0
    %v3842 = vmul.f32 %v3780, %v3780
    %v3843 = vmul.f32 %v3783, %v3783
    %v3844 = vmul.f32 %v3788, %v3788
    %v3845 = vmul.f32 %v3791, %v3791
    %v3846 = vmul.f32 %v3796, %v3796
    %v3847 = vmul.f32 %v3799, %v3799
    %v3848 = vmul.f32 %v3804, %v3804
    %v3849 = vmul.f32 %v3807, %v3807
    %v3850 = vmul.f32 %v3812, %v3812
    %v3851 = vmul.f32 %v3815, %v3815
    %v3852 = vmul.f32 %v3820, %v3820
    %v3853 = vmul.f32 %v3823, %v3823
    %v3854 = vmul.f32 %v3828, %v3828
    %v3855 = vmul.f32 %v3831, %v3831
    %v3856 = vmul.f32 %v3836, %v3836
    %v3857 = vmul.f32 %v3839, %v3839
    %v3858 = vmul.f32 %v3780, %v3842
    %v3859 = vmul.f32 %v3783, %v3843
    %v3860 = vmul.f32 %v3788, %v3844
    %v3861 = vmul.f32 %v3791, %v3845
    %v3862 = vmul.f32 %v3796, %v3846
    %v3863 = vmul.f32 %v3799, %v3847
    %v3864 = vmul.f32 %v3804, %v3848
    %v3865 = vmul.f32 %v3807, %v3849
    %v3866 = vmul.f32 %v3812, %v3850
    %v3867 = vmul.f32 %v3815, %v3851
    %v3868 = vmul.f32 %v3820, %v3852
    %v3869 = vmul.f32 %v3823, %v3853
    %v3870 = vmul.f32 %v3828, %v3854
    %v3871 = vmul.f32 %v3831, %v3855
    %v3872 = vmul.f32 %v3836, %v3856
    %v3873 = vmul.f32 %v3839, %v3857
    %v3874 = vmul.f32 %v3858, 0.044715
    %v3875 = vmul.f32 %v3859, 0.044715
    %v3876 = vmul.f32 %v3860, 0.044715
    %v3877 = vmul.f32 %v3861, 0.044715
    %v3878 = vmul.f32 %v3862, 0.044715
    %v3879 = vmul.f32 %v3863, 0.044715
    %v3880 = vmul.f32 %v3864, 0.044715
    %v3881 = vmul.f32 %v3865, 0.044715
    %v3882 = vmul.f32 %v3866, 0.044715
    %v3883 = vmul.f32 %v3867, 0.044715
    %v3884 = vmul.f32 %v3868, 0.044715
    %v3885 = vmul.f32 %v3869, 0.044715
    %v3886 = vmul.f32 %v3870, 0.044715
    %v3887 = vmul.f32 %v3871, 0.044715
    %v3888 = vmul.f32 %v3872, 0.044715
    %v3889 = vmul.f32 %v3873, 0.044715
    %v3890 = vadd.f32 %v3780, %v3874
    %v3891 = vadd.f32 %v3783, %v3875
    %v3892 = vadd.f32 %v3788, %v3876
    %v3893 = vadd.f32 %v3791, %v3877
    %v3894 = vadd.f32 %v3796, %v3878
    %v3895 = vadd.f32 %v3799, %v3879
    %v3896 = vadd.f32 %v3804, %v3880
    %v3897 = vadd.f32 %v3807, %v3881
    %v3898 = vadd.f32 %v3812, %v3882
    %v3899 = vadd.f32 %v3815, %v3883
    %v3900 = vadd.f32 %v3820, %v3884
    %v3901 = vadd.f32 %v3823, %v3885
    %v3902 = vadd.f32 %v3828, %v3886
    %v3903 = vadd.f32 %v3831, %v3887
    %v3904 = vadd.f32 %v3836, %v3888
    %v3905 = vadd.f32 %v3839, %v3889
    %v3906 = vmul.f32 %v3890, 0.7978846
    %v3907 = vmul.f32 %v3891, 0.7978846
    %v3908 = vmul.f32 %v3892, 0.7978846
    %v3909 = vmul.f32 %v3893, 0.7978846
    %v3910 = vmul.f32 %v3894, 0.7978846
    %v3911 = vmul.f32 %v3895, 0.7978846
    %v3912 = vmul.f32 %v3896, 0.7978846
    %v3913 = vmul.f32 %v3897, 0.7978846
    %v3914 = vmul.f32 %v3898, 0.7978846
    %v3915 = vmul.f32 %v3899, 0.7978846
    %v3916 = vmul.f32 %v3900, 0.7978846
    %v3917 = vmul.f32 %v3901, 0.7978846
    %v3918 = vmul.f32 %v3902, 0.7978846
    %v3919 = vmul.f32 %v3903, 0.7978846
    %v3920 = vmul.f32 %v3904, 0.7978846
    %v3921 = vmul.f32 %v3905, 0.7978846
    %v3922 = vtanh.pop %v3906
    %v3923 = vtanh.pop %v3907
    %v3924 = vtanh.pop %v3908
    %v3925 = vtanh.pop %v3909
    %v3926 = vtanh.pop %v3910
    %v3927 = vtanh.pop %v3911
    %v3928 = vtanh.pop %v3912
    %v3929 = vtanh.pop %v3913
    %v3930 = vtanh.pop %v3914
    %v3931 = vtanh.pop %v3915
    %v3932 = vtanh.pop %v3916
    %v3933 = vtanh.pop %v3917
    %v3934 = vtanh.pop %v3918
    %v3935 = vtanh.pop %v3919
    %v3936 = vtanh.pop %v3920
    %v3937 = vtanh.pop %v3921
    %v3938 = vadd.f32 %v3922, 1.0
    %v3939 = vadd.f32 %v3923, 1.0
    %v3940 = vadd.f32 %v3924, 1.0
    %v3941 = vadd.f32 %v3925, 1.0
    %v3942 = vadd.f32 %v3926, 1.0
    %v3943 = vadd.f32 %v3927, 1.0
    %v3944 = vadd.f32 %v3928, 1.0
    %v3945 = vadd.f32 %v3929, 1.0
    %v3946 = vadd.f32 %v3930, 1.0
    %v3947 = vadd.f32 %v3931, 1.0
    %v3948 = vadd.f32 %v3932, 1.0
    %v3949 = vadd.f32 %v3933, 1.0
    %v3950 = vadd.f32 %v3934, 1.0
    %v3951 = vadd.f32 %v3935, 1.0
    %v3952 = vadd.f32 %v3936, 1.0
    %v3953 = vadd.f32 %v3937, 1.0
    %v3954 = vmul.f32 %v3938, 0.5
    %v3955 = vmul.f32 %v3939, 0.5
    %v3956 = vmul.f32 %v3940, 0.5
    %v3957 = vmul.f32 %v3941, 0.5
    %v3958 = vmul.f32 %v3942, 0.5
    %v3959 = vmul.f32 %v3943, 0.5
    %v3960 = vmul.f32 %v3944, 0.5
    %v3961 = vmul.f32 %v3945, 0.5
    %v3962 = vmul.f32 %v3946, 0.5
    %v3963 = vmul.f32 %v3947, 0.5
    %v3964 = vmul.f32 %v3948, 0.5
    %v3965 = vmul.f32 %v3949, 0.5
    %v3966 = vmul.f32 %v3950, 0.5
    %v3967 = vmul.f32 %v3951, 0.5
    %v3968 = vmul.f32 %v3952, 0.5
    %v3969 = vmul.f32 %v3953, 0.5
    %v3970 = vmul.f32 %v3780, %v3954
    %v3971 = vmul.f32 %v3783, %v3955
    %v3972 = vmul.f32 %v3788, %v3956
    %v3973 = vmul.f32 %v3791, %v3957
    %v3974 = vmul.f32 %v3796, %v3958
    %v3975 = vmul.f32 %v3799, %v3959
    %v3976 = vmul.f32 %v3804, %v3960
    %v3977 = vmul.f32 %v3807, %v3961
    %v3978 = vmul.f32 %v3812, %v3962
    %v3979 = vmul.f32 %v3815, %v3963
    %v3980 = vmul.f32 %v3820, %v3964
    %v3981 = vmul.f32 %v3823, %v3965
    %v3982 = vmul.f32 %v3828, %v3966
    %v3983 = vmul.f32 %v3831, %v3967
    %v3984 = vmul.f32 %v3836, %v3968
    %v3985 = vmul.f32 %v3839, %v3969
    %v3986 = vpack.c.bf16 %v3971, %v3970
    %v3987 = vpack.c.bf16 %v3973, %v3972
    %v3988 = vpack.c.bf16 %v3975, %v3974
    %v3989 = vpack.c.bf16 %v3977, %v3976
    %v3990 = vpack.c.bf16 %v3979, %v3978
    %v3991 = vpack.c.bf16 %v3981, %v3980
    %v3992 = vpack.c.bf16 %v3983, %v3982
    %v3993 = vpack.c.bf16 %v3985, %v3984
    %v3994 = vld [vmem:[%s5] sm:$0xf]
    %v3995 = vld [vmem:[%s5 + $0x4] sm:$0xf]
    %v3996 = vld [vmem:[%s5 + $0x8] sm:$0xf]
    %v3997 = vld [vmem:[%s5 + $0xc] sm:$0xf]
    %v3998 = vld [vmem:[%s5 + $0x10] sm:$0xf]
    %v3999 = vld [vmem:[%s5 + $0x14] sm:$0xf]
    %v4000 = vld [vmem:[%s5 + $0x18] sm:$0xf]
    %v4001 = vld [vmem:[%s5 + $0x1c] sm:$0xf]
    %v4002 = vld [vmem:[%s5 + $0x20] sm:$0xf]
    %v4003 = vld [vmem:[%s5 + $0x24] sm:$0xf]
    %v4004 = vld [vmem:[%s5 + $0x28] sm:$0xf]
    %v4005 = vld [vmem:[%s5 + $0x2c] sm:$0xf]
    %v4006 = vld [vmem:[%s5 + $0x30] sm:$0xf]
    %v4007 = vld [vmem:[%s5 + $0x34] sm:$0xf]
    %v4008 = vld [vmem:[%s5 + $0x38] sm:$0xf]
    %v4009 = vld [vmem:[%s5 + $0x3c] sm:$0xf]
    %v4010 = vlaneseq
    %v4011 = vshrl.u32 %v4010, 7
    %v4012 = vsub.s32 7, %v4011
    %v4013 = vrot.slane %v84, %v4012
    %v4030 = vunpack.c.l.b16 %v3994
    %v4031 = vunpack.c.l.b16 %v3995
    %v4032 = vunpack.c.l.b16 %v3996
    %v4033 = vunpack.c.l.b16 %v3997
    %v4034 = vunpack.c.l.b16 %v3998
    %v4035 = vunpack.c.l.b16 %v3999
    %v4036 = vunpack.c.l.b16 %v4000
    %v4037 = vunpack.c.l.b16 %v4001
    %v4038 = vunpack.c.l.b16 %v4002
    %v4039 = vunpack.c.l.b16 %v4003
    %v4040 = vunpack.c.l.b16 %v4004
    %v4041 = vunpack.c.l.b16 %v4005
    %v4042 = vunpack.c.l.b16 %v4006
    %v4043 = vunpack.c.l.b16 %v4007
    %v4044 = vunpack.c.l.b16 %v4008
    %v4045 = vunpack.c.l.b16 %v4009
    %v4046 = vpack.c.b16 %v4031, %v4030
    %v4047 = vpack.c.b16 %v4033, %v4032
    %v4048 = vpack.c.b16 %v4035, %v4034
    %v4049 = vpack.c.b16 %v4037, %v4036
    %v4050 = vpack.c.b16 %v4039, %v4038
    %v4051 = vpack.c.b16 %v4041, %v4040
    %v4052 = vpack.c.b16 %v4043, %v4042
    %v4053 = vpack.c.b16 %v4045, %v4044
    %4062 = vmatprep.subr.bf16.mxu0 0
    %4063 = vmatpush1.bf16.msra.mxu0 %v4053
    %4064 = vmatprep.subr.bf16.mxu0 0
    %4065 = vmatpush1.bf16.msra.mxu0 %v4052
    %4066 = vmatprep.subr.bf16.mxu0 0
    %4067 = vmatpush1.bf16.msra.mxu0 %v4051
    %4068 = vmatprep.subr.bf16.mxu0 0
    %4069 = vmatpush1.bf16.msra.mxu0 %v4050
    %4070 = vmatprep.subr.bf16.mxu0 0
    %4071 = vmatpush1.bf16.msra.mxu0 %v4049
    %4072 = vmatprep.subr.bf16.mxu0 0
    %4073 = vmatpush1.bf16.msra.mxu0 %v4048
    %4074 = vmatprep.subr.bf16.mxu0 0
    %4075 = vmatpush1.bf16.msra.mxu0 %v4047
    %4076 = vmatprep.subr.bf16.mxu0 0
    %4077 = vmatpush1.bf16.msra.mxu0 %v4046
    %4078 = vmatprep.subr.bf16.mxu0 0
    %4079 = vmatpush2.bf16.msra.mxu0 0
    %4080 = vmatprep.subr.bf16.mxu0 0
    %4081 = vmatpush2.bf16.msra.mxu0 0
    %4082 = vmatprep.subr.bf16.mxu0 0
    %4083 = vmatpush2.bf16.msra.mxu0 0
    %4084 = vmatprep.subr.bf16.mxu0 0
    %4085 = vmatpush2.bf16.msra.mxu0 0
    %4086 = vmatprep.subr.bf16.mxu0 0
    %4087 = vmatpush2.bf16.msra.mxu0 0
    %4088 = vmatprep.subr.bf16.mxu0 0
    %4089 = vmatpush2.bf16.msra.mxu0 0
    %4090 = vmatprep.subr.bf16.mxu0 0
    %4091 = vmatpush2.bf16.msra.mxu0 0
    %4092 = vmatprep.subr.bf16.mxu0 0
    %4093 = vmatpush2.bf16.msra.mxu0 0
    %4094 = vmatprep.mubr.bf16.mxu0 0
    %4095 = vmatmul.mubr.bf16.gmra.mxu0 %v3986
    %v4096 = vpop.f32.mrf.mxu0
    %v4097 = vadd.f32 %v4013, %v4096
    %v4098 = vpop.f32.mrf.mxu0
    %v4099 = vpop.f32.mrf.mxu0
    %v4100 = vadd.f32 %v4013, %v4099
    %v4101 = vpop.f32.mrf.mxu0
    %4102 = vmatprep.mubr.bf16.mxu0 0
    %4103 = vmatmul.mubr.bf16.gmra.mxu0 %v3987
    %v4104 = vpop.f32.mrf.mxu0
    %v4105 = vadd.f32 %v4013, %v4104
    %v4106 = vpop.f32.mrf.mxu0
    %v4107 = vpop.f32.mrf.mxu0
    %v4108 = vadd.f32 %v4013, %v4107
    %v4109 = vpop.f32.mrf.mxu0
    %4110 = vmatprep.mubr.bf16.mxu0 0
    %4111 = vmatmul.mubr.bf16.gmra.mxu0 %v3988
    %v4112 = vpop.f32.mrf.mxu0
    %v4113 = vadd.f32 %v4013, %v4112
    %v4114 = vpop.f32.mrf.mxu0
    %v4115 = vpop.f32.mrf.mxu0
    %v4116 = vadd.f32 %v4013, %v4115
    %v4117 = vpop.f32.mrf.mxu0
    %4118 = vmatprep.mubr.bf16.mxu0 0
    %4119 = vmatmul.mubr.bf16.gmra.mxu0 %v3989
    %v4120 = vpop.f32.mrf.mxu0
    %v4121 = vadd.f32 %v4013, %v4120
    %v4122 = vpop.f32.mrf.mxu0
    %v4123 = vpop.f32.mrf.mxu0
    %v4124 = vadd.f32 %v4013, %v4123
    %v4125 = vpop.f32.mrf.mxu0
    %4126 = vmatprep.mubr.bf16.mxu0 0
    %4127 = vmatmul.mubr.bf16.gmra.mxu0 %v3990
    %v4128 = vpop.f32.mrf.mxu0
    %v4129 = vadd.f32 %v4013, %v4128
    %v4130 = vpop.f32.mrf.mxu0
    %v4131 = vpop.f32.mrf.mxu0
    %v4132 = vadd.f32 %v4013, %v4131
    %v4133 = vpop.f32.mrf.mxu0
    %4134 = vmatprep.mubr.bf16.mxu0 0
    %4135 = vmatmul.mubr.bf16.gmra.mxu0 %v3991
    %v4136 = vpop.f32.mrf.mxu0
    %v4137 = vadd.f32 %v4013, %v4136
    %v4138 = vpop.f32.mrf.mxu0
    %v4139 = vpop.f32.mrf.mxu0
    %v4140 = vadd.f32 %v4013, %v4139
    %v4141 = vpop.f32.mrf.mxu0
    %4142 = vmatprep.mubr.bf16.mxu0 0
    %4143 = vmatmul.mubr.bf16.gmra.mxu0 %v3992
    %v4144 = vpop.f32.mrf.mxu0
    %v4145 = vadd.f32 %v4013, %v4144
    %v4146 = vpop.f32.mrf.mxu0
    %v4147 = vpop.f32.mrf.mxu0
    %v4148 = vadd.f32 %v4013, %v4147
    %v4149 = vpop.f32.mrf.mxu0
    %4150 = vmatprep.mubr.bf16.mxu0 0
    %4151 = vmatmul.mubr.bf16.gmra.mxu0 %v3993
    %v4152 = vpop.f32.mrf.mxu0
    %v4153 = vadd.f32 %v4013, %v4152
    %v4154 = vpop.f32.mrf.mxu0
    %v4155 = vpop.f32.mrf.mxu0
    %v4156 = vadd.f32 %v4013, %v4155
    %v4157 = vpop.f32.mrf.mxu0
    %4158 = vdwg.mxu0
    %v4159 = vadd.f32 %v3429, %v4097
    %v4160 = vadd.f32 %v3430, %v4100
    %v4161 = vadd.f32 %v3431, %v4105
    %v4162 = vadd.f32 %v3432, %v4108
    %v4163 = vadd.f32 %v3433, %v4113
    %v4164 = vadd.f32 %v3434, %v4116
    %v4165 = vadd.f32 %v3435, %v4121
    %v4166 = vadd.f32 %v3436, %v4124
    %v4167 = vadd.f32 %v3437, %v4129
    %v4168 = vadd.f32 %v3438, %v4132
    %v4169 = vadd.f32 %v3439, %v4137
    %v4170 = vadd.f32 %v3440, %v4140
    %v4171 = vadd.f32 %v3441, %v4145
    %v4172 = vadd.f32 %v3442, %v4148
    %v4173 = vadd.f32 %v3443, %v4153
    %v4174 = vadd.f32 %v3444, %v4156
    %s4175 = scalar_lea.vmem [#allocation6], 8
    %v4176 = vld [vmem:[%s4175] sm:$0xff]
    %v4177 = vsel %vm85, %v4159, 0.0
    %4178 = vadd.xlane.f32.xlu0 %v4177
    %v4179 = vpop.xlane.xlu0 %4178
    %v4180 = vsel %vm85, %v4160, 0.0
    %4181 = vadd.xlane.f32.xlu0 %v4180
    %v4182 = vpop.xlane.xlu0 %4181
    %v4183 = vsel %vm85, %v4161, 0.0
    %4184 = vadd.xlane.f32.xlu0 %v4183
    %v4185 = vpop.xlane.xlu0 %4184
    %v4186 = vsel %vm85, %v4162, 0.0
    %4187 = vadd.xlane.f32.xlu0 %v4186
    %v4188 = vpop.xlane.xlu0 %4187
    %v4189 = vsel %vm85, %v4163, 0.0
    %4190 = vadd.xlane.f32.xlu0 %v4189
    %v4191 = vpop.xlane.xlu0 %4190
    %v4192 = vsel %vm85, %v4164, 0.0
    %4193 = vadd.xlane.f32.xlu0 %v4192
    %v4194 = vpop.xlane.xlu0 %4193
    %v4195 = vsel %vm85, %v4165, 0.0
    %4196 = vadd.xlane.f32.xlu0 %v4195
    %v4197 = vpop.xlane.xlu0 %4196
    %v4198 = vsel %vm85, %v4166, 0.0
    %4199 = vadd.xlane.f32.xlu0 %v4198
    %v4200 = vpop.xlane.xlu0 %4199
    %v4201 = vsel %vm85, %v4167, 0.0
    %4202 = vadd.xlane.f32.xlu0 %v4201
    %v4203 = vpop.xlane.xlu0 %4202
    %v4204 = vsel %vm85, %v4168, 0.0
    %4205 = vadd.xlane.f32.xlu0 %v4204
    %v4206 = vpop.xlane.xlu0 %4205
    %v4207 = vsel %vm85, %v4169, 0.0
    %4208 = vadd.xlane.f32.xlu0 %v4207
    %v4209 = vpop.xlane.xlu0 %4208
    %v4210 = vsel %vm85, %v4170, 0.0
    %4211 = vadd.xlane.f32.xlu0 %v4210
    %v4212 = vpop.xlane.xlu0 %4211
    %v4213 = vsel %vm85, %v4171, 0.0
    %4214 = vadd.xlane.f32.xlu0 %v4213
    %v4215 = vpop.xlane.xlu0 %4214
    %v4216 = vsel %vm85, %v4172, 0.0
    %4217 = vadd.xlane.f32.xlu0 %v4216
    %v4218 = vpop.xlane.xlu0 %4217
    %v4219 = vsel %vm85, %v4173, 0.0
    %4220 = vadd.xlane.f32.xlu0 %v4219
    %v4221 = vpop.xlane.xlu0 %4220
    %v4222 = vsel %vm85, %v4174, 0.0
    %4223 = vadd.xlane.f32.xlu0 %v4222
    %v4224 = vpop.xlane.xlu0 %4223
    %v4225 = vmul.f32 %v4179, %v134
    %v4226 = vmul.f32 %v4182, %v134
    %v4227 = vmul.f32 %v4185, %v134
    %v4228 = vmul.f32 %v4188, %v134
    %v4229 = vmul.f32 %v4191, %v134
    %v4230 = vmul.f32 %v4194, %v134
    %v4231 = vmul.f32 %v4197, %v134
    %v4232 = vmul.f32 %v4200, %v134
    %v4233 = vmul.f32 %v4203, %v134
    %v4234 = vmul.f32 %v4206, %v134
    %v4235 = vmul.f32 %v4209, %v134
    %v4236 = vmul.f32 %v4212, %v134
    %v4237 = vmul.f32 %v4215, %v134
    %v4238 = vmul.f32 %v4218, %v134
    %v4239 = vmul.f32 %v4221, %v134
    %v4240 = vmul.f32 %v4224, %v134
    %v4241 = vsub.f32 %v4159, %v4225
    %v4242 = vsub.f32 %v4160, %v4226
    %v4243 = vsub.f32 %v4161, %v4227
    %v4244 = vsub.f32 %v4162, %v4228
    %v4245 = vsub.f32 %v4163, %v4229
    %v4246 = vsub.f32 %v4164, %v4230
    %v4247 = vsub.f32 %v4165, %v4231
    %v4248 = vsub.f32 %v4166, %v4232
    %v4249 = vsub.f32 %v4167, %v4233
    %v4250 = vsub.f32 %v4168, %v4234
    %v4251 = vsub.f32 %v4169, %v4235
    %v4252 = vsub.f32 %v4170, %v4236
    %v4253 = vsub.f32 %v4171, %v4237
    %v4254 = vsub.f32 %v4172, %v4238
    %v4255 = vsub.f32 %v4173, %v4239
    %v4256 = vsub.f32 %v4174, %v4240
    %v4257 = vmul.f32 %v4241, %v4241
    %v4258 = vmul.f32 %v4242, %v4242
    %v4259 = vmul.f32 %v4243, %v4243
    %v4260 = vmul.f32 %v4244, %v4244
    %v4261 = vmul.f32 %v4245, %v4245
    %v4262 = vmul.f32 %v4246, %v4246
    %v4263 = vmul.f32 %v4247, %v4247
    %v4264 = vmul.f32 %v4248, %v4248
    %v4265 = vmul.f32 %v4249, %v4249
    %v4266 = vmul.f32 %v4250, %v4250
    %v4267 = vmul.f32 %v4251, %v4251
    %v4268 = vmul.f32 %v4252, %v4252
    %v4269 = vmul.f32 %v4253, %v4253
    %v4270 = vmul.f32 %v4254, %v4254
    %v4271 = vmul.f32 %v4255, %v4255
    %v4272 = vmul.f32 %v4256, %v4256
    %v4273 = vsel %vm85, %v4257, 0.0
    %4274 = vadd.xlane.f32.xlu0 %v4273
    %v4275 = vpop.xlane.xlu0 %4274
    %v4276 = vsel %vm85, %v4258, 0.0
    %4277 = vadd.xlane.f32.xlu0 %v4276
    %v4278 = vpop.xlane.xlu0 %4277
    %v4279 = vsel %vm85, %v4259, 0.0
    %4280 = vadd.xlane.f32.xlu0 %v4279
    %v4281 = vpop.xlane.xlu0 %4280
    %v4282 = vsel %vm85, %v4260, 0.0
    %4283 = vadd.xlane.f32.xlu0 %v4282
    %v4284 = vpop.xlane.xlu0 %4283
    %v4285 = vsel %vm85, %v4261, 0.0
    %4286 = vadd.xlane.f32.xlu0 %v4285
    %v4287 = vpop.xlane.xlu0 %4286
    %v4288 = vsel %vm85, %v4262, 0.0
    %4289 = vadd.xlane.f32.xlu0 %v4288
    %v4290 = vpop.xlane.xlu0 %4289
    %v4291 = vsel %vm85, %v4263, 0.0
    %4292 = vadd.xlane.f32.xlu0 %v4291
    %v4293 = vpop.xlane.xlu0 %4292
    %v4294 = vsel %vm85, %v4264, 0.0
    %4295 = vadd.xlane.f32.xlu0 %v4294
    %v4296 = vpop.xlane.xlu0 %4295
    %v4297 = vsel %vm85, %v4265, 0.0
    %4298 = vadd.xlane.f32.xlu0 %v4297
    %v4299 = vpop.xlane.xlu0 %4298
    %v4300 = vsel %vm85, %v4266, 0.0
    %4301 = vadd.xlane.f32.xlu0 %v4300
    %v4302 = vpop.xlane.xlu0 %4301
    %v4303 = vsel %vm85, %v4267, 0.0
    %4304 = vadd.xlane.f32.xlu0 %v4303
    %v4305 = vpop.xlane.xlu0 %4304
    %v4306 = vsel %vm85, %v4268, 0.0
    %4307 = vadd.xlane.f32.xlu0 %v4306
    %v4308 = vpop.xlane.xlu0 %4307
    %v4309 = vsel %vm85, %v4269, 0.0
    %4310 = vadd.xlane.f32.xlu0 %v4309
    %v4311 = vpop.xlane.xlu0 %4310
    %v4312 = vsel %vm85, %v4270, 0.0
    %4313 = vadd.xlane.f32.xlu0 %v4312
    %v4314 = vpop.xlane.xlu0 %4313
    %v4315 = vsel %vm85, %v4271, 0.0
    %4316 = vadd.xlane.f32.xlu0 %v4315
    %v4317 = vpop.xlane.xlu0 %4316
    %v4318 = vsel %vm85, %v4272, 0.0
    %4319 = vadd.xlane.f32.xlu0 %v4318
    %v4320 = vpop.xlane.xlu0 %4319
    %v4321 = vmul.f32 %v4275, %v134
    %v4322 = vmul.f32 %v4278, %v134
    %v4323 = vmul.f32 %v4281, %v134
    %v4324 = vmul.f32 %v4284, %v134
    %v4325 = vmul.f32 %v4287, %v134
    %v4326 = vmul.f32 %v4290, %v134
    %v4327 = vmul.f32 %v4293, %v134
    %v4328 = vmul.f32 %v4296, %v134
    %v4329 = vmul.f32 %v4299, %v134
    %v4330 = vmul.f32 %v4302, %v134
    %v4331 = vmul.f32 %v4305, %v134
    %v4332 = vmul.f32 %v4308, %v134
    %v4333 = vmul.f32 %v4311, %v134
    %v4334 = vmul.f32 %v4314, %v134
    %v4335 = vmul.f32 %v4317, %v134
    %v4336 = vmul.f32 %v4320, %v134
    %v4337 = vadd.f32 %v4321, 1e-05
    %v4338 = vadd.f32 %v4322, 1e-05
    %v4339 = vadd.f32 %v4323, 1e-05
    %v4340 = vadd.f32 %v4324, 1e-05
    %v4341 = vadd.f32 %v4325, 1e-05
    %v4342 = vadd.f32 %v4326, 1e-05
    %v4343 = vadd.f32 %v4327, 1e-05
    %v4344 = vadd.f32 %v4328, 1e-05
    %v4345 = vadd.f32 %v4329, 1e-05
    %v4346 = vadd.f32 %v4330, 1e-05
    %v4347 = vadd.f32 %v4331, 1e-05
    %v4348 = vadd.f32 %v4332, 1e-05
    %v4349 = vadd.f32 %v4333, 1e-05
    %v4350 = vadd.f32 %v4334, 1e-05
    %v4351 = vadd.f32 %v4335, 1e-05
    %v4352 = vadd.f32 %v4336, 1e-05
    %v4353 = vrsqrt.pop %v4337
    %v4354 = vrsqrt.pop %v4338
    %v4355 = vrsqrt.pop %v4339
    %v4356 = vrsqrt.pop %v4340
    %v4357 = vrsqrt.pop %v4341
    %v4358 = vrsqrt.pop %v4342
    %v4359 = vrsqrt.pop %v4343
    %v4360 = vrsqrt.pop %v4344
    %v4361 = vrsqrt.pop %v4345
    %v4362 = vrsqrt.pop %v4346
    %v4363 = vrsqrt.pop %v4347
    %v4364 = vrsqrt.pop %v4348
    %v4365 = vrsqrt.pop %v4349
    %v4366 = vrsqrt.pop %v4350
    %v4367 = vrsqrt.pop %v4351
    %v4368 = vrsqrt.pop %v4352
    %v4369 = vmul.f32 %v4241, %v4353
    %v4370 = vmul.f32 %v4242, %v4354
    %v4371 = vmul.f32 %v4243, %v4355
    %v4372 = vmul.f32 %v4244, %v4356
    %v4373 = vmul.f32 %v4245, %v4357
    %v4374 = vmul.f32 %v4246, %v4358
    %v4375 = vmul.f32 %v4247, %v4359
    %v4376 = vmul.f32 %v4248, %v4360
    %v4377 = vmul.f32 %v4249, %v4361
    %v4378 = vmul.f32 %v4250, %v4362
    %v4379 = vmul.f32 %v4251, %v4363
    %v4380 = vmul.f32 %v4252, %v4364
    %v4381 = vmul.f32 %v4253, %v4365
    %v4382 = vmul.f32 %v4254, %v4366
    %v4383 = vmul.f32 %v4255, %v4367
    %v4384 = vmul.f32 %v4256, %v4368
    %v4385 = vlaneseq
    %v4386 = vshrl.u32 %v4385, 7
    %v4387 = vsub.s32 0, %v4386
    %v4388 = vrot.slane %v4176, %v4387
    %v4389 = vmul.f32 %v4369, %v4388
    %v4390 = vmul.f32 %v4370, %v4388
    %v4391 = vmul.f32 %v4371, %v4388
    %v4392 = vmul.f32 %v4372, %v4388
    %v4393 = vmul.f32 %v4373, %v4388
    %v4394 = vmul.f32 %v4374, %v4388
    %v4395 = vmul.f32 %v4375, %v4388
    %v4396 = vmul.f32 %v4376, %v4388
    %v4397 = vmul.f32 %v4377, %v4388
    %v4398 = vmul.f32 %v4378, %v4388
    %v4399 = vmul.f32 %v4379, %v4388
    %v4400 = vmul.f32 %v4380, %v4388
    %v4401 = vmul.f32 %v4381, %v4388
    %v4402 = vmul.f32 %v4382, %v4388
    %v4403 = vmul.f32 %v4383, %v4388
    %v4404 = vmul.f32 %v4384, %v4388
    %v4405 = vlaneseq
    %v4406 = vshrl.u32 %v4405, 7
    %v4407 = vsub.s32 1, %v4406
    %v4408 = vrot.slane %v4176, %v4407
    %v4409 = vadd.f32 %v4389, %v4408
    %v4410 = vadd.f32 %v4390, %v4408
    %v4411 = vadd.f32 %v4391, %v4408
    %v4412 = vadd.f32 %v4392, %v4408
    %v4413 = vadd.f32 %v4393, %v4408
    %v4414 = vadd.f32 %v4394, %v4408
    %v4415 = vadd.f32 %v4395, %v4408
    %v4416 = vadd.f32 %v4396, %v4408
    %v4417 = vadd.f32 %v4397, %v4408
    %v4418 = vadd.f32 %v4398, %v4408
    %v4419 = vadd.f32 %v4399, %v4408
    %v4420 = vadd.f32 %v4400, %v4408
    %v4421 = vadd.f32 %v4401, %v4408
    %v4422 = vadd.f32 %v4402, %v4408
    %v4423 = vadd.f32 %v4403, %v4408
    %v4424 = vadd.f32 %v4404, %v4408
    %v4425 = vpack.c.bf16 %v4410, %v4409
    %v4426 = vpack.c.bf16 %v4412, %v4411
    %v4427 = vpack.c.bf16 %v4414, %v4413
    %v4428 = vpack.c.bf16 %v4416, %v4415
    %v4429 = vpack.c.bf16 %v4418, %v4417
    %v4430 = vpack.c.bf16 %v4420, %v4419
    %v4431 = vpack.c.bf16 %v4422, %v4421
    %v4432 = vpack.c.bf16 %v4424, %v4423
    %s4433 = scalar_lea.vmem [#allocation4], 16
    %v4434 = vld [vmem:[%s4433] sm:$0xf]
    %v4435 = vld [vmem:[%s4433 + $0x4] sm:$0xf]
    %v4436 = vld [vmem:[%s4433 + $0x8] sm:$0xf]
    %v4437 = vld [vmem:[%s4433 + $0xc] sm:$0xf]
    %v4438 = vlaneseq
    %v4439 = vshrl.u32 %v4438, 7
    %v4440 = vsub.s32 4, %v4439
    %v4441 = vrot.slane %v4176, %v4440
    %v4446 = vunpack.c.l.b16 %v4434
    %v4447 = vunpack.c.l.b16 %v4435
    %v4448 = vunpack.c.l.b16 %v4436
    %v4449 = vunpack.c.l.b16 %v4437
    %v4450 = vpack.c.b16 %v4447, %v4446
    %v4451 = vpack.c.b16 %v4449, %v4448
    %v4455 = vsel %vm85, %v4425, 0
    %v4458 = vsel %vm85, %v4426, 0
    %v4461 = vsel %vm85, %v4427, 0
    %v4464 = vsel %vm85, %v4428, 0
    %v4467 = vsel %vm85, %v4429, 0
    %v4470 = vsel %vm85, %v4430, 0
    %v4473 = vsel %vm85, %v4431, 0
    %v4476 = vsel %vm85, %v4432, 0
    %4478 = vmatprep.subr.bf16.mxu0 0
    %4479 = vmatpush1.bf16.msra.mxu0 0
    %4480 = vmatprep.subr.bf16.mxu0 0
    %4481 = vmatpush1.bf16.msra.mxu0 0
    %4482 = vmatprep.subr.bf16.mxu0 0
    %4483 = vmatpush1.bf16.msra.mxu0 0
    %4484 = vmatprep.subr.bf16.mxu0 0
    %4485 = vmatpush1.bf16.msra.mxu0 0
    %4486 = vmatprep.subr.bf16.mxu0 0
    %4487 = vmatpush1.bf16.msra.mxu0 0
    %4488 = vmatprep.subr.bf16.mxu0 0
    %4489 = vmatpush1.bf16.msra.mxu0 0
    %4490 = vmatprep.subr.bf16.mxu0 0
    %4491 = vmatpush1.bf16.msra.mxu0 %v4451
    %4492 = vmatprep.subr.bf16.mxu0 0
    %4493 = vmatpush1.bf16.msra.mxu0 %v4450
    %4494 = vmatprep.subr.bf16.mxu0 0
    %4495 = vmatpush2.bf16.msra.mxu0 0
    %4496 = vmatprep.subr.bf16.mxu0 0
    %4497 = vmatpush2.bf16.msra.mxu0 0
    %4498 = vmatprep.subr.bf16.mxu0 0
    %4499 = vmatpush2.bf16.msra.mxu0 0
    %4500 = vmatprep.subr.bf16.mxu0 0
    %4501 = vmatpush2.bf16.msra.mxu0 0
    %4502 = vmatprep.subr.bf16.mxu0 0
    %4503 = vmatpush2.bf16.msra.mxu0 0
    %4504 = vmatprep.subr.bf16.mxu0 0
    %4505 = vmatpush2.bf16.msra.mxu0 0
    %4506 = vmatprep.subr.bf16.mxu0 0
    %4507 = vmatpush2.bf16.msra.mxu0 0
    %4508 = vmatprep.subr.bf16.mxu0 0
    %4509 = vmatpush2.bf16.msra.mxu0 0
    %4510 = vmatprep.mubr.bf16.mxu0 0
    %4511 = vmatmul.mubr.bf16.gmra.mxu0 %v4455
    %v4512 = vpop.f32.mrf.mxu0
    %v4513 = vadd.f32 %v4441, %v4512
    %v4514 = vpop.f32.mrf.mxu0
    %v4515 = vpop.f32.mrf.mxu0
    %v4516 = vadd.f32 %v4441, %v4515
    %v4517 = vpop.f32.mrf.mxu0
    %4518 = vmatprep.mubr.bf16.mxu0 0
    %4519 = vmatmul.mubr.bf16.gmra.mxu0 %v4458
    %v4520 = vpop.f32.mrf.mxu0
    %v4521 = vadd.f32 %v4441, %v4520
    %v4522 = vpop.f32.mrf.mxu0
    %v4523 = vpop.f32.mrf.mxu0
    %v4524 = vadd.f32 %v4441, %v4523
    %v4525 = vpop.f32.mrf.mxu0
    %4526 = vmatprep.mubr.bf16.mxu0 0
    %4527 = vmatmul.mubr.bf16.gmra.mxu0 %v4461
    %v4528 = vpop.f32.mrf.mxu0
    %v4529 = vadd.f32 %v4441, %v4528
    %v4530 = vpop.f32.mrf.mxu0
    %v4531 = vpop.f32.mrf.mxu0
    %v4532 = vadd.f32 %v4441, %v4531
    %v4533 = vpop.f32.mrf.mxu0
    %4534 = vmatprep.mubr.bf16.mxu0 0
    %4535 = vmatmul.mubr.bf16.gmra.mxu0 %v4464
    %v4536 = vpop.f32.mrf.mxu0
    %v4537 = vadd.f32 %v4441, %v4536
    %v4538 = vpop.f32.mrf.mxu0
    %v4539 = vpop.f32.mrf.mxu0
    %v4540 = vadd.f32 %v4441, %v4539
    %v4541 = vpop.f32.mrf.mxu0
    %4542 = vmatprep.mubr.bf16.mxu0 0
    %4543 = vmatmul.mubr.bf16.gmra.mxu0 %v4467
    %v4544 = vpop.f32.mrf.mxu0
    %v4545 = vadd.f32 %v4441, %v4544
    %v4546 = vpop.f32.mrf.mxu0
    %v4547 = vpop.f32.mrf.mxu0
    %v4548 = vadd.f32 %v4441, %v4547
    %v4549 = vpop.f32.mrf.mxu0
    %4550 = vmatprep.mubr.bf16.mxu0 0
    %4551 = vmatmul.mubr.bf16.gmra.mxu0 %v4470
    %v4552 = vpop.f32.mrf.mxu0
    %v4553 = vadd.f32 %v4441, %v4552
    %v4554 = vpop.f32.mrf.mxu0
    %v4555 = vpop.f32.mrf.mxu0
    %v4556 = vadd.f32 %v4441, %v4555
    %v4557 = vpop.f32.mrf.mxu0
    %4558 = vmatprep.mubr.bf16.mxu0 0
    %4559 = vmatmul.mubr.bf16.gmra.mxu0 %v4473
    %v4560 = vpop.f32.mrf.mxu0
    %v4561 = vadd.f32 %v4441, %v4560
    %v4562 = vpop.f32.mrf.mxu0
    %v4563 = vpop.f32.mrf.mxu0
    %v4564 = vadd.f32 %v4441, %v4563
    %v4565 = vpop.f32.mrf.mxu0
    %4566 = vmatprep.mubr.bf16.mxu0 0
    %4567 = vmatmul.mubr.bf16.gmra.mxu0 %v4476
    %v4568 = vpop.f32.mrf.mxu0
    %v4569 = vadd.f32 %v4441, %v4568
    %v4570 = vpop.f32.mrf.mxu0
    %v4571 = vpop.f32.mrf.mxu0
    %v4572 = vadd.f32 %v4441, %v4571
    %v4573 = vpop.f32.mrf.mxu0
    %4574 = vdwg.mxu0
    %v4575 = vmul.f32 %v4513, 0.35355338
    %v4576 = vmul.f32 %v4516, 0.35355338
    %v4577 = vmul.f32 %v4521, 0.35355338
    %v4578 = vmul.f32 %v4524, 0.35355338
    %v4579 = vmul.f32 %v4529, 0.35355338
    %v4580 = vmul.f32 %v4532, 0.35355338
    %v4581 = vmul.f32 %v4537, 0.35355338
    %v4582 = vmul.f32 %v4540, 0.35355338
    %v4583 = vmul.f32 %v4545, 0.35355338
    %v4584 = vmul.f32 %v4548, 0.35355338
    %v4585 = vmul.f32 %v4553, 0.35355338
    %v4586 = vmul.f32 %v4556, 0.35355338
    %v4587 = vmul.f32 %v4561, 0.35355338
    %v4588 = vmul.f32 %v4564, 0.35355338
    %v4589 = vmul.f32 %v4569, 0.35355338
    %v4590 = vmul.f32 %v4572, 0.35355338
    %v4591 = vpack.c.bf16 %v4576, %v4575
    %v4592 = vpack.c.bf16 %v4578, %v4577
    %v4593 = vpack.c.bf16 %v4580, %v4579
    %v4594 = vpack.c.bf16 %v4582, %v4581
    %v4595 = vpack.c.bf16 %v4584, %v4583
    %v4596 = vpack.c.bf16 %v4586, %v4585
    %v4597 = vpack.c.bf16 %v4588, %v4587
    %v4598 = vpack.c.bf16 %v4590, %v4589
    %v4599 = vpack.c.bf16 %v4516, %v4513
    %v4600 = vpack.c.bf16 %v4524, %v4521
    %v4601 = vpack.c.bf16 %v4532, %v4529
    %v4602 = vpack.c.bf16 %v4540, %v4537
    %v4603 = vpack.c.bf16 %v4548, %v4545
    %v4604 = vpack.c.bf16 %v4556, %v4553
    %v4605 = vpack.c.bf16 %v4564, %v4561
    %v4606 = vpack.c.bf16 %v4572, %v4569
    %s4607 = scalar_lea.vmem [#allocation2], 256
    %v4608 = vld [vmem:[%s4607] sm:$0xff]
    %v4609 = vld [vmem:[%s4607 + $0x8] sm:$0xff]
    %v4610 = vld [vmem:[%s4607 + $0x10] sm:$0xff]
    %v4611 = vld [vmem:[%s4607 + $0x18] sm:$0xff]
    %v4612 = vld [vmem:[%s4607 + $0x20] sm:$0xff]
    %v4613 = vld [vmem:[%s4607 + $0x28] sm:$0xff]
    %v4614 = vld [vmem:[%s4607 + $0x30] sm:$0xff]
    %v4615 = vld [vmem:[%s4607 + $0x38] sm:$0xff]
    %4620 = vrot.lane.b32.xlu0 %v4599, 96
    %v4621 = vpop.permute.xlu0 %4620
    %4622 = vrot.lane.b32.xlu0 %v4600, 96
    %v4623 = vpop.permute.xlu0 %4622
    %4624 = vrot.lane.b32.xlu0 %v4601, 96
    %v4625 = vpop.permute.xlu0 %4624
    %4626 = vrot.lane.b32.xlu0 %v4602, 96
    %v4627 = vpop.permute.xlu0 %4626
    %v4629 = vsel %vm536, %v4591, 0
    %v4632 = vsel %vm536, %v4592, 0
    %v4635 = vsel %vm536, %v4593, 0
    %v4638 = vsel %vm536, %v4594, 0
    %v4641 = vsel %vm536, %v4621, 0
    %v4644 = vsel %vm536, %v4623, 0
    %v4647 = vsel %vm536, %v4625, 0
    %v4650 = vsel %vm536, %v4627, 0
    %4652 = vmatprep.subr.bf16.mxu0 0
    %4653 = vmatpush1.bf16.xpose.msra.mxu0 0
    %4654 = vmatprep.subr.bf16.mxu0 0
    %4655 = vmatpush1.bf16.xpose.msra.mxu0 0
    %4656 = vmatprep.subr.bf16.mxu0 0
    %4657 = vmatpush1.bf16.xpose.msra.mxu0 0
    %4658 = vmatprep.subr.bf16.mxu0 0
    %4659 = vmatpush1.bf16.xpose.msra.mxu0 0
    %4660 = vmatprep.subr.bf16.mxu0 0
    %4661 = vmatpush1.bf16.xpose.msra.mxu0 %v4650
    %4662 = vmatprep.subr.bf16.mxu0 0
    %4663 = vmatpush1.bf16.xpose.msra.mxu0 %v4647
    %4664 = vmatprep.subr.bf16.mxu0 0
    %4665 = vmatpush1.bf16.xpose.msra.mxu0 %v4644
    %4666 = vmatprep.subr.bf16.mxu0 0
    %4667 = vmatpush1.bf16.xpose.msra.mxu0 %v4641
    %4668 = vmatprep.subr.bf16.mxu0 0
    %4669 = vmatpush2.bf16.xpose.msra.mxu0 0
    %4670 = vmatprep.subr.bf16.mxu0 0
    %4671 = vmatpush2.bf16.xpose.msra.mxu0 0
    %4672 = vmatprep.subr.bf16.mxu0 0
    %4673 = vmatpush2.bf16.xpose.msra.mxu0 0
    %4674 = vmatprep.subr.bf16.mxu0 0
    %4675 = vmatpush2.bf16.xpose.msra.mxu0 0
    %4676 = vmatprep.subr.bf16.mxu0 0
    %4677 = vmatpush2.bf16.xpose.msra.mxu0 0
    %4678 = vmatprep.subr.bf16.mxu0 0
    %4679 = vmatpush2.bf16.xpose.msra.mxu0 0
    %4680 = vmatprep.subr.bf16.mxu0 0
    %4681 = vmatpush2.bf16.xpose.msra.mxu0 0
    %4682 = vmatprep.subr.bf16.mxu0 0
    %4683 = vmatpush2.bf16.xpose.msra.mxu0 0
    %4684 = vmatprep.mubr.bf16.mxu0 0
    %4685 = vmatmul.mubr.bf16.gmra.mxu0 %v4629
    %v4686 = vpop.f32.mrf.mxu0
    %v4687 = vadd.f32 %v4608, %v4686
    %v4688 = vpop.f32.mrf.mxu0
    %v4689 = vpop.f32.mrf.mxu0
    %v4690 = vadd.f32 %v4609, %v4689
    %v4691 = vpop.f32.mrf.mxu0
    %4692 = vmatprep.mubr.bf16.mxu0 0
    %4693 = vmatmul.mubr.bf16.gmra.mxu0 %v4632
    %v4694 = vpop.f32.mrf.mxu0
    %v4695 = vadd.f32 %v4610, %v4694
    %v4696 = vpop.f32.mrf.mxu0
    %v4697 = vpop.f32.mrf.mxu0
    %v4698 = vadd.f32 %v4611, %v4697
    %v4699 = vpop.f32.mrf.mxu0
    %4700 = vmatprep.mubr.bf16.mxu0 0
    %4701 = vmatmul.mubr.bf16.gmra.mxu0 %v4635
    %v4702 = vpop.f32.mrf.mxu0
    %v4703 = vadd.f32 %v4612, %v4702
    %v4704 = vpop.f32.mrf.mxu0
    %v4705 = vpop.f32.mrf.mxu0
    %v4706 = vadd.f32 %v4613, %v4705
    %v4707 = vpop.f32.mrf.mxu0
    %4708 = vmatprep.mubr.bf16.mxu0 0
    %4709 = vmatmul.mubr.bf16.gmra.mxu0 %v4638
    %v4710 = vpop.f32.mrf.mxu0
    %v4711 = vadd.f32 %v4614, %v4710
    %v4712 = vpop.f32.mrf.mxu0
    %v4713 = vpop.f32.mrf.mxu0
    %v4714 = vadd.f32 %v4615, %v4713
    %v4715 = vpop.f32.mrf.mxu0
    %4716 = vdwg.mxu0
    %4721 = vrot.lane.b32.xlu0 %v4603, 96
    %v4722 = vpop.permute.xlu0 %4721
    %4723 = vrot.lane.b32.xlu0 %v4604, 96
    %v4724 = vpop.permute.xlu0 %4723
    %4725 = vrot.lane.b32.xlu0 %v4605, 96
    %v4726 = vpop.permute.xlu0 %4725
    %4727 = vrot.lane.b32.xlu0 %v4606, 96
    %v4728 = vpop.permute.xlu0 %4727
    %v4730 = vsel %vm536, %v4595, 0
    %v4733 = vsel %vm536, %v4596, 0
    %v4736 = vsel %vm536, %v4597, 0
    %v4739 = vsel %vm536, %v4598, 0
    %v4742 = vsel %vm536, %v4722, 0
    %v4745 = vsel %vm536, %v4724, 0
    %v4748 = vsel %vm536, %v4726, 0
    %v4751 = vsel %vm536, %v4728, 0
    %4753 = vmatprep.subr.bf16.mxu0 0
    %4754 = vmatpush1.bf16.xpose.msra.mxu0 0
    %4755 = vmatprep.subr.bf16.mxu0 0
    %4756 = vmatpush1.bf16.xpose.msra.mxu0 0
    %4757 = vmatprep.subr.bf16.mxu0 0
    %4758 = vmatpush1.bf16.xpose.msra.mxu0 0
    %4759 = vmatprep.subr.bf16.mxu0 0
    %4760 = vmatpush1.bf16.xpose.msra.mxu0 0
    %4761 = vmatprep.subr.bf16.mxu0 0
    %4762 = vmatpush1.bf16.xpose.msra.mxu0 %v4751
    %4763 = vmatprep.subr.bf16.mxu0 0
    %4764 = vmatpush1.bf16.xpose.msra.mxu0 %v4748
    %4765 = vmatprep.subr.bf16.mxu0 0
    %4766 = vmatpush1.bf16.xpose.msra.mxu0 %v4745
    %4767 = vmatprep.subr.bf16.mxu0 0
    %4768 = vmatpush1.bf16.xpose.msra.mxu0 %v4742
    %4769 = vmatprep.subr.bf16.mxu0 0
    %4770 = vmatpush2.bf16.xpose.msra.mxu0 0
    %4771 = vmatprep.subr.bf16.mxu0 0
    %4772 = vmatpush2.bf16.xpose.msra.mxu0 0
    %4773 = vmatprep.subr.bf16.mxu0 0
    %4774 = vmatpush2.bf16.xpose.msra.mxu0 0
    %4775 = vmatprep.subr.bf16.mxu0 0
    %4776 = vmatpush2.bf16.xpose.msra.mxu0 0
    %4777 = vmatprep.subr.bf16.mxu0 0
    %4778 = vmatpush2.bf16.xpose.msra.mxu0 0
    %4779 = vmatprep.subr.bf16.mxu0 0
    %4780 = vmatpush2.bf16.xpose.msra.mxu0 0
    %4781 = vmatprep.subr.bf16.mxu0 0
    %4782 = vmatpush2.bf16.xpose.msra.mxu0 0
    %4783 = vmatprep.subr.bf16.mxu0 0
    %4784 = vmatpush2.bf16.xpose.msra.mxu0 0
    %4785 = vmatprep.mubr.bf16.mxu0 0
    %4786 = vmatmul.mubr.bf16.gmra.mxu0 %v4730
    %v4787 = vpop.f32.mrf.mxu0
    %v4788 = vadd.f32 %v4608, %v4787
    %v4789 = vpop.f32.mrf.mxu0
    %v4790 = vpop.f32.mrf.mxu0
    %v4791 = vadd.f32 %v4609, %v4790
    %v4792 = vpop.f32.mrf.mxu0
    %4793 = vmatprep.mubr.bf16.mxu0 0
    %4794 = vmatmul.mubr.bf16.gmra.mxu0 %v4733
    %v4795 = vpop.f32.mrf.mxu0
    %v4796 = vadd.f32 %v4610, %v4795
    %v4797 = vpop.f32.mrf.mxu0
    %v4798 = vpop.f32.mrf.mxu0
    %v4799 = vadd.f32 %v4611, %v4798
    %v4800 = vpop.f32.mrf.mxu0
    %4801 = vmatprep.mubr.bf16.mxu0 0
    %4802 = vmatmul.mubr.bf16.gmra.mxu0 %v4736
    %v4803 = vpop.f32.mrf.mxu0
    %v4804 = vadd.f32 %v4612, %v4803
    %v4805 = vpop.f32.mrf.mxu0
    %v4806 = vpop.f32.mrf.mxu0
    %v4807 = vadd.f32 %v4613, %v4806
    %v4808 = vpop.f32.mrf.mxu0
    %4809 = vmatprep.mubr.bf16.mxu0 0
    %4810 = vmatmul.mubr.bf16.gmra.mxu0 %v4739
    %v4811 = vpop.f32.mrf.mxu0
    %v4812 = vadd.f32 %v4614, %v4811
    %v4813 = vpop.f32.mrf.mxu0
    %v4814 = vpop.f32.mrf.mxu0
    %v4815 = vadd.f32 %v4615, %v4814
    %v4816 = vpop.f32.mrf.mxu0
    %4817 = vdwg.mxu0
    %v4818 = vsel %vm727, %v4687, -inf
    %4819 = vmax.xlane.f32.xlu0 %v4818
    %v4820 = vpop.xlane.xlu0 %4819
    %v4821 = vsel %vm727, %v4690, -inf
    %4822 = vmax.xlane.f32.xlu0 %v4821
    %v4823 = vpop.xlane.xlu0 %4822
    %v4824 = vsel %vm727, %v4695, -inf
    %4825 = vmax.xlane.f32.xlu0 %v4824
    %v4826 = vpop.xlane.xlu0 %4825
    %v4827 = vsel %vm727, %v4698, -inf
    %4828 = vmax.xlane.f32.xlu0 %v4827
    %v4829 = vpop.xlane.xlu0 %4828
    %v4830 = vsel %vm727, %v4703, -inf
    %4831 = vmax.xlane.f32.xlu0 %v4830
    %v4832 = vpop.xlane.xlu0 %4831
    %v4833 = vsel %vm727, %v4706, -inf
    %4834 = vmax.xlane.f32.xlu0 %v4833
    %v4835 = vpop.xlane.xlu0 %4834
    %v4836 = vsel %vm727, %v4711, -inf
    %4837 = vmax.xlane.f32.xlu0 %v4836
    %v4838 = vpop.xlane.xlu0 %4837
    %v4839 = vsel %vm727, %v4714, -inf
    %4840 = vmax.xlane.f32.xlu0 %v4839
    %v4841 = vpop.xlane.xlu0 %4840
    %v4842 = vsel %vm727, %v4788, -inf
    %4843 = vmax.xlane.f32.xlu0 %v4842
    %v4844 = vpop.xlane.xlu0 %4843
    %v4845 = vsel %vm727, %v4791, -inf
    %4846 = vmax.xlane.f32.xlu0 %v4845
    %v4847 = vpop.xlane.xlu0 %4846
    %v4848 = vsel %vm727, %v4796, -inf
    %4849 = vmax.xlane.f32.xlu0 %v4848
    %v4850 = vpop.xlane.xlu0 %4849
    %v4851 = vsel %vm727, %v4799, -inf
    %4852 = vmax.xlane.f32.xlu0 %v4851
    %v4853 = vpop.xlane.xlu0 %4852
    %v4854 = vsel %vm727, %v4804, -inf
    %4855 = vmax.xlane.f32.xlu0 %v4854
    %v4856 = vpop.xlane.xlu0 %4855
    %v4857 = vsel %vm727, %v4807, -inf
    %4858 = vmax.xlane.f32.xlu0 %v4857
    %v4859 = vpop.xlane.xlu0 %4858
    %v4860 = vsel %vm727, %v4812, -inf
    %4861 = vmax.xlane.f32.xlu0 %v4860
    %v4862 = vpop.xlane.xlu0 %4861
    %v4863 = vsel %vm727, %v4815, -inf
    %4864 = vmax.xlane.f32.xlu0 %v4863
    %v4865 = vpop.xlane.xlu0 %4864
    %v4866 = vsub.f32 %v4687, %v4820
    %v4867 = vsub.f32 %v4690, %v4823
    %v4868 = vsub.f32 %v4695, %v4826
    %v4869 = vsub.f32 %v4698, %v4829
    %v4870 = vsub.f32 %v4703, %v4832
    %v4871 = vsub.f32 %v4706, %v4835
    %v4872 = vsub.f32 %v4711, %v4838
    %v4873 = vsub.f32 %v4714, %v4841
    %v4874 = vsub.f32 %v4788, %v4844
    %v4875 = vsub.f32 %v4791, %v4847
    %v4876 = vsub.f32 %v4796, %v4850
    %v4877 = vsub.f32 %v4799, %v4853
    %v4878 = vsub.f32 %v4804, %v4856
    %v4879 = vsub.f32 %v4807, %v4859
    %v4880 = vsub.f32 %v4812, %v4862
    %v4881 = vsub.f32 %v4815, %v4865
    %v4882 = vmul.f32 %v4866, 1.442695
    %v4883 = vpow.pop %v4882
    %v4884 = vmul.f32 %v4867, 1.442695
    %v4885 = vpow.pop %v4884
    %v4886 = vmul.f32 %v4868, 1.442695
    %v4887 = vpow.pop %v4886
    %v4888 = vmul.f32 %v4869, 1.442695
    %v4889 = vpow.pop %v4888
    %v4890 = vmul.f32 %v4870, 1.442695
    %v4891 = vpow.pop %v4890
    %v4892 = vmul.f32 %v4871, 1.442695
    %v4893 = vpow.pop %v4892
    %v4894 = vmul.f32 %v4872, 1.442695
    %v4895 = vpow.pop %v4894
    %v4896 = vmul.f32 %v4873, 1.442695
    %v4897 = vpow.pop %v4896
    %v4898 = vmul.f32 %v4874, 1.442695
    %v4899 = vpow.pop %v4898
    %v4900 = vmul.f32 %v4875, 1.442695
    %v4901 = vpow.pop %v4900
    %v4902 = vmul.f32 %v4876, 1.442695
    %v4903 = vpow.pop %v4902
    %v4904 = vmul.f32 %v4877, 1.442695
    %v4905 = vpow.pop %v4904
    %v4906 = vmul.f32 %v4878, 1.442695
    %v4907 = vpow.pop %v4906
    %v4908 = vmul.f32 %v4879, 1.442695
    %v4909 = vpow.pop %v4908
    %v4910 = vmul.f32 %v4880, 1.442695
    %v4911 = vpow.pop %v4910
    %v4912 = vmul.f32 %v4881, 1.442695
    %v4913 = vpow.pop %v4912
    %v4914 = vsel %vm727, %v4883, 0.0
    %4915 = vadd.xlane.f32.xlu0 %v4914
    %v4916 = vpop.xlane.xlu0 %4915
    %v4917 = vsel %vm727, %v4885, 0.0
    %4918 = vadd.xlane.f32.xlu0 %v4917
    %v4919 = vpop.xlane.xlu0 %4918
    %v4920 = vsel %vm727, %v4887, 0.0
    %4921 = vadd.xlane.f32.xlu0 %v4920
    %v4922 = vpop.xlane.xlu0 %4921
    %v4923 = vsel %vm727, %v4889, 0.0
    %4924 = vadd.xlane.f32.xlu0 %v4923
    %v4925 = vpop.xlane.xlu0 %4924
    %v4926 = vsel %vm727, %v4891, 0.0
    %4927 = vadd.xlane.f32.xlu0 %v4926
    %v4928 = vpop.xlane.xlu0 %4927
    %v4929 = vsel %vm727, %v4893, 0.0
    %4930 = vadd.xlane.f32.xlu0 %v4929
    %v4931 = vpop.xlane.xlu0 %4930
    %v4932 = vsel %vm727, %v4895, 0.0
    %4933 = vadd.xlane.f32.xlu0 %v4932
    %v4934 = vpop.xlane.xlu0 %4933
    %v4935 = vsel %vm727, %v4897, 0.0
    %4936 = vadd.xlane.f32.xlu0 %v4935
    %v4937 = vpop.xlane.xlu0 %4936
    %v4938 = vsel %vm727, %v4899, 0.0
    %4939 = vadd.xlane.f32.xlu0 %v4938
    %v4940 = vpop.xlane.xlu0 %4939
    %v4941 = vsel %vm727, %v4901, 0.0
    %4942 = vadd.xlane.f32.xlu0 %v4941
    %v4943 = vpop.xlane.xlu0 %4942
    %v4944 = vsel %vm727, %v4903, 0.0
    %4945 = vadd.xlane.f32.xlu0 %v4944
    %v4946 = vpop.xlane.xlu0 %4945
    %v4947 = vsel %vm727, %v4905, 0.0
    %4948 = vadd.xlane.f32.xlu0 %v4947
    %v4949 = vpop.xlane.xlu0 %4948
    %v4950 = vsel %vm727, %v4907, 0.0
    %4951 = vadd.xlane.f32.xlu0 %v4950
    %v4952 = vpop.xlane.xlu0 %4951
    %v4953 = vsel %vm727, %v4909, 0.0
    %4954 = vadd.xlane.f32.xlu0 %v4953
    %v4955 = vpop.xlane.xlu0 %4954
    %v4956 = vsel %vm727, %v4911, 0.0
    %4957 = vadd.xlane.f32.xlu0 %v4956
    %v4958 = vpop.xlane.xlu0 %4957
    %v4959 = vsel %vm727, %v4913, 0.0
    %4960 = vadd.xlane.f32.xlu0 %v4959
    %v4961 = vpop.xlane.xlu0 %4960
    %v4962 = vrcp.pop %v4916
    %v4963 = vrcp.pop %v4919
    %v4964 = vrcp.pop %v4922
    %v4965 = vrcp.pop %v4925
    %v4966 = vrcp.pop %v4928
    %v4967 = vrcp.pop %v4931
    %v4968 = vrcp.pop %v4934
    %v4969 = vrcp.pop %v4937
    %v4970 = vrcp.pop %v4940
    %v4971 = vrcp.pop %v4943
    %v4972 = vrcp.pop %v4946
    %v4973 = vrcp.pop %v4949
    %v4974 = vrcp.pop %v4952
    %v4975 = vrcp.pop %v4955
    %v4976 = vrcp.pop %v4958
    %v4977 = vrcp.pop %v4961
    %v4978 = vmul.f32 %v4883, %v4962
    %v4979 = vmul.f32 %v4885, %v4963
    %v4980 = vmul.f32 %v4887, %v4964
    %v4981 = vmul.f32 %v4889, %v4965
    %v4982 = vmul.f32 %v4891, %v4966
    %v4983 = vmul.f32 %v4893, %v4967
    %v4984 = vmul.f32 %v4895, %v4968
    %v4985 = vmul.f32 %v4897, %v4969
    %v4986 = vmul.f32 %v4899, %v4970
    %v4987 = vmul.f32 %v4901, %v4971
    %v4988 = vmul.f32 %v4903, %v4972
    %v4989 = vmul.f32 %v4905, %v4973
    %v4990 = vmul.f32 %v4907, %v4974
    %v4991 = vmul.f32 %v4909, %v4975
    %v4992 = vmul.f32 %v4911, %v4976
    %v4993 = vmul.f32 %v4913, %v4977
    %v4994 = vpack.c.bf16 %v4979, %v4978
    %v4995 = vpack.c.bf16 %v4981, %v4980
    %v4996 = vpack.c.bf16 %v4983, %v4982
    %v4997 = vpack.c.bf16 %v4985, %v4984
    %v4998 = vpack.c.bf16 %v4987, %v4986
    %v4999 = vpack.c.bf16 %v4989, %v4988
    %v5000 = vpack.c.bf16 %v4991, %v4990
    %v5001 = vpack.c.bf16 %v4993, %v4992
    %5002 = vrot.lane.b32.xlu0 %v4599, 64
    %v5003 = vpop.permute.xlu0 %5002
    %5004 = vrot.lane.b32.xlu0 %v4600, 64
    %v5005 = vpop.permute.xlu0 %5004
    %5006 = vrot.lane.b32.xlu0 %v4601, 64
    %v5007 = vpop.permute.xlu0 %5006
    %5008 = vrot.lane.b32.xlu0 %v4602, 64
    %v5009 = vpop.permute.xlu0 %5008
    %v5015 = vsel %vm727, %v4994, 0
    %v5018 = vsel %vm727, %v4995, 0
    %v5021 = vsel %vm727, %v4996, 0
    %v5024 = vsel %vm727, %v4997, 0
    %5026 = vmatprep.subr.bf16.mxu0 0
    %5027 = vmatpush1.bf16.msra.mxu0 0
    %5028 = vmatprep.subr.bf16.mxu0 0
    %5029 = vmatpush1.bf16.msra.mxu0 0
    %5030 = vmatprep.subr.bf16.mxu0 0
    %5031 = vmatpush1.bf16.msra.mxu0 0
    %5032 = vmatprep.subr.bf16.mxu0 0
    %5033 = vmatpush1.bf16.msra.mxu0 0
    %5034 = vmatprep.subr.bf16.mxu0 0
    %5035 = vmatpush1.bf16.msra.mxu0 %v5009
    %5036 = vmatprep.subr.bf16.mxu0 0
    %5037 = vmatpush1.bf16.msra.mxu0 %v5007
    %5038 = vmatprep.subr.bf16.mxu0 0
    %5039 = vmatpush1.bf16.msra.mxu0 %v5005
    %5040 = vmatprep.subr.bf16.mxu0 0
    %5041 = vmatpush1.bf16.msra.mxu0 %v5003
    %5042 = vmatprep.subr.bf16.mxu0 0
    %5043 = vmatpush2.bf16.msra.mxu0 0
    %5044 = vmatprep.subr.bf16.mxu0 0
    %5045 = vmatpush2.bf16.msra.mxu0 0
    %5046 = vmatprep.subr.bf16.mxu0 0
    %5047 = vmatpush2.bf16.msra.mxu0 0
    %5048 = vmatprep.subr.bf16.mxu0 0
    %5049 = vmatpush2.bf16.msra.mxu0 0
    %5050 = vmatprep.subr.bf16.mxu0 0
    %5051 = vmatpush2.bf16.msra.mxu0 0
    %5052 = vmatprep.subr.bf16.mxu0 0
    %5053 = vmatpush2.bf16.msra.mxu0 0
    %5054 = vmatprep.subr.bf16.mxu0 0
    %5055 = vmatpush2.bf16.msra.mxu0 0
    %5056 = vmatprep.subr.bf16.mxu0 0
    %5057 = vmatpush2.bf16.msra.mxu0 0
    %5058 = vmatprep.mubr.bf16.mxu0 0
    %5059 = vmatmul.mubr.bf16.gmra.mxu0 %v5015
    %v5060 = vpop.f32.mrf.mxu0
    %v5061 = vadd.f32 0.0, %v5060
    %v5062 = vpop.f32.mrf.mxu0
    %v5063 = vpop.f32.mrf.mxu0
    %v5064 = vadd.f32 0.0, %v5063
    %v5065 = vpop.f32.mrf.mxu0
    %5066 = vmatprep.mubr.bf16.mxu0 0
    %5067 = vmatmul.mubr.bf16.gmra.mxu0 %v5018
    %v5068 = vpop.f32.mrf.mxu0
    %v5069 = vadd.f32 0.0, %v5068
    %v5070 = vpop.f32.mrf.mxu0
    %v5071 = vpop.f32.mrf.mxu0
    %v5072 = vadd.f32 0.0, %v5071
    %v5073 = vpop.f32.mrf.mxu0
    %5074 = vmatprep.mubr.bf16.mxu0 0
    %5075 = vmatmul.mubr.bf16.gmra.mxu0 %v5021
    %v5076 = vpop.f32.mrf.mxu0
    %v5077 = vadd.f32 0.0, %v5076
    %v5078 = vpop.f32.mrf.mxu0
    %v5079 = vpop.f32.mrf.mxu0
    %v5080 = vadd.f32 0.0, %v5079
    %v5081 = vpop.f32.mrf.mxu0
    %5082 = vmatprep.mubr.bf16.mxu0 0
    %5083 = vmatmul.mubr.bf16.gmra.mxu0 %v5024
    %v5084 = vpop.f32.mrf.mxu0
    %v5085 = vadd.f32 0.0, %v5084
    %v5086 = vpop.f32.mrf.mxu0
    %v5087 = vpop.f32.mrf.mxu0
    %v5088 = vadd.f32 0.0, %v5087
    %v5089 = vpop.f32.mrf.mxu0
    %5090 = vdwg.mxu0
    %5091 = vrot.lane.b32.xlu0 %v4603, 64
    %v5092 = vpop.permute.xlu0 %5091
    %5093 = vrot.lane.b32.xlu0 %v4604, 64
    %v5094 = vpop.permute.xlu0 %5093
    %5095 = vrot.lane.b32.xlu0 %v4605, 64
    %v5096 = vpop.permute.xlu0 %5095
    %5097 = vrot.lane.b32.xlu0 %v4606, 64
    %v5098 = vpop.permute.xlu0 %5097
    %v5104 = vsel %vm727, %v4998, 0
    %v5107 = vsel %vm727, %v4999, 0
    %v5110 = vsel %vm727, %v5000, 0
    %v5113 = vsel %vm727, %v5001, 0
    %5115 = vmatprep.subr.bf16.mxu0 0
    %5116 = vmatpush1.bf16.msra.mxu0 0
    %5117 = vmatprep.subr.bf16.mxu0 0
    %5118 = vmatpush1.bf16.msra.mxu0 0
    %5119 = vmatprep.subr.bf16.mxu0 0
    %5120 = vmatpush1.bf16.msra.mxu0 0
    %5121 = vmatprep.subr.bf16.mxu0 0
    %5122 = vmatpush1.bf16.msra.mxu0 0
    %5123 = vmatprep.subr.bf16.mxu0 0
    %5124 = vmatpush1.bf16.msra.mxu0 %v5098
    %5125 = vmatprep.subr.bf16.mxu0 0
    %5126 = vmatpush1.bf16.msra.mxu0 %v5096
    %5127 = vmatprep.subr.bf16.mxu0 0
    %5128 = vmatpush1.bf16.msra.mxu0 %v5094
    %5129 = vmatprep.subr.bf16.mxu0 0
    %5130 = vmatpush1.bf16.msra.mxu0 %v5092
    %5131 = vmatprep.subr.bf16.mxu0 0
    %5132 = vmatpush2.bf16.msra.mxu0 0
    %5133 = vmatprep.subr.bf16.mxu0 0
    %5134 = vmatpush2.bf16.msra.mxu0 0
    %5135 = vmatprep.subr.bf16.mxu0 0
    %5136 = vmatpush2.bf16.msra.mxu0 0
    %5137 = vmatprep.subr.bf16.mxu0 0
    %5138 = vmatpush2.bf16.msra.mxu0 0
    %5139 = vmatprep.subr.bf16.mxu0 0
    %5140 = vmatpush2.bf16.msra.mxu0 0
    %5141 = vmatprep.subr.bf16.mxu0 0
    %5142 = vmatpush2.bf16.msra.mxu0 0
    %5143 = vmatprep.subr.bf16.mxu0 0
    %5144 = vmatpush2.bf16.msra.mxu0 0
    %5145 = vmatprep.subr.bf16.mxu0 0
    %5146 = vmatpush2.bf16.msra.mxu0 0
    %5147 = vmatprep.mubr.bf16.mxu0 0
    %5148 = vmatmul.mubr.bf16.gmra.mxu0 %v5104
    %v5149 = vpop.f32.mrf.mxu0
    %v5150 = vadd.f32 0.0, %v5149
    %v5151 = vpop.f32.mrf.mxu0
    %v5152 = vpop.f32.mrf.mxu0
    %v5153 = vadd.f32 0.0, %v5152
    %v5154 = vpop.f32.mrf.mxu0
    %5155 = vmatprep.mubr.bf16.mxu0 0
    %5156 = vmatmul.mubr.bf16.gmra.mxu0 %v5107
    %v5157 = vpop.f32.mrf.mxu0
    %v5158 = vadd.f32 0.0, %v5157
    %v5159 = vpop.f32.mrf.mxu0
    %v5160 = vpop.f32.mrf.mxu0
    %v5161 = vadd.f32 0.0, %v5160
    %v5162 = vpop.f32.mrf.mxu0
    %5163 = vmatprep.mubr.bf16.mxu0 0
    %5164 = vmatmul.mubr.bf16.gmra.mxu0 %v5110
    %v5165 = vpop.f32.mrf.mxu0
    %v5166 = vadd.f32 0.0, %v5165
    %v5167 = vpop.f32.mrf.mxu0
    %v5168 = vpop.f32.mrf.mxu0
    %v5169 = vadd.f32 0.0, %v5168
    %v5170 = vpop.f32.mrf.mxu0
    %5171 = vmatprep.mubr.bf16.mxu0 0
    %5172 = vmatmul.mubr.bf16.gmra.mxu0 %v5113
    %v5173 = vpop.f32.mrf.mxu0
    %v5174 = vadd.f32 0.0, %v5173
    %v5175 = vpop.f32.mrf.mxu0
    %v5176 = vpop.f32.mrf.mxu0
    %v5177 = vadd.f32 0.0, %v5176
    %v5178 = vpop.f32.mrf.mxu0
    %5179 = vdwg.mxu0
    %v5180 = vpack.c.bf16 %v5064, %v5061
    %v5181 = vpack.c.bf16 %v5072, %v5069
    %v5182 = vpack.c.bf16 %v5080, %v5077
    %v5183 = vpack.c.bf16 %v5088, %v5085
    %v5184 = vpack.c.bf16 %v5153, %v5150
    %v5185 = vpack.c.bf16 %v5161, %v5158
    %v5186 = vpack.c.bf16 %v5169, %v5166
    %v5187 = vpack.c.bf16 %v5177, %v5174
    %s5188 = scalar_lea.vmem %s3, 16
    %v5189 = vld [vmem:[%s5188] sm:$0xf]
    %s5190 = scalar_lea.vmem [#allocation2], 320
    %v5191 = vld [vmem:[%s5190] sm:$0xff]
    %v5192 = vld [vmem:[%s5190 + $0x8] sm:$0xff]
    %v5193 = vld [vmem:[%s5190 + $0x10] sm:$0xff]
    %v5194 = vld [vmem:[%s5190 + $0x18] sm:$0xff]
    %v5195 = vld [vmem:[%s5190 + $0x20] sm:$0xff]
    %v5196 = vld [vmem:[%s5190 + $0x28] sm:$0xff]
    %v5197 = vld [vmem:[%s5190 + $0x30] sm:$0xff]
    %v5198 = vld [vmem:[%s5190 + $0x38] sm:$0xff]
    %5203 = vrot.lane.b32.xlu0 %v4591, 120
    %v5204 = vpop.permute.xlu0 %5203
    %5205 = vrot.lane.b32.xlu0 %v4592, 120
    %v5206 = vpop.permute.xlu0 %5205
    %5207 = vrot.lane.b32.xlu0 %v4593, 120
    %v5208 = vpop.permute.xlu0 %5207
    %5209 = vrot.lane.b32.xlu0 %v4594, 120
    %v5210 = vpop.permute.xlu0 %5209
    %5211 = vrot.lane.b32.xlu0 %v4599, 88
    %v5212 = vpop.permute.xlu0 %5211
    %5213 = vrot.lane.b32.xlu0 %v4600, 88
    %v5214 = vpop.permute.xlu0 %5213
    %5215 = vrot.lane.b32.xlu0 %v4601, 88
    %v5216 = vpop.permute.xlu0 %5215
    %5217 = vrot.lane.b32.xlu0 %v4602, 88
    %v5218 = vpop.permute.xlu0 %5217
    %v5220 = vsel %vm536, %v5204, 0
    %v5223 = vsel %vm536, %v5206, 0
    %v5226 = vsel %vm536, %v5208, 0
    %v5229 = vsel %vm536, %v5210, 0
    %v5232 = vsel %vm536, %v5212, 0
    %v5235 = vsel %vm536, %v5214, 0
    %v5238 = vsel %vm536, %v5216, 0
    %v5241 = vsel %vm536, %v5218, 0
    %5243 = vmatprep.subr.bf16.mxu0 0
    %5244 = vmatpush1.bf16.xpose.msra.mxu0 0
    %5245 = vmatprep.subr.bf16.mxu0 0
    %5246 = vmatpush1.bf16.xpose.msra.mxu0 0
    %5247 = vmatprep.subr.bf16.mxu0 0
    %5248 = vmatpush1.bf16.xpose.msra.mxu0 0
    %5249 = vmatprep.subr.bf16.mxu0 0
    %5250 = vmatpush1.bf16.xpose.msra.mxu0 0
    %5251 = vmatprep.subr.bf16.mxu0 0
    %5252 = vmatpush1.bf16.xpose.msra.mxu0 %v5241
    %5253 = vmatprep.subr.bf16.mxu0 0
    %5254 = vmatpush1.bf16.xpose.msra.mxu0 %v5238
    %5255 = vmatprep.subr.bf16.mxu0 0
    %5256 = vmatpush1.bf16.xpose.msra.mxu0 %v5235
    %5257 = vmatprep.subr.bf16.mxu0 0
    %5258 = vmatpush1.bf16.xpose.msra.mxu0 %v5232
    %5259 = vmatprep.subr.bf16.mxu0 0
    %5260 = vmatpush2.bf16.xpose.msra.mxu0 0
    %5261 = vmatprep.subr.bf16.mxu0 0
    %5262 = vmatpush2.bf16.xpose.msra.mxu0 0
    %5263 = vmatprep.subr.bf16.mxu0 0
    %5264 = vmatpush2.bf16.xpose.msra.mxu0 0
    %5265 = vmatprep.subr.bf16.mxu0 0
    %5266 = vmatpush2.bf16.xpose.msra.mxu0 0
    %5267 = vmatprep.subr.bf16.mxu0 0
    %5268 = vmatpush2.bf16.xpose.msra.mxu0 0
    %5269 = vmatprep.subr.bf16.mxu0 0
    %5270 = vmatpush2.bf16.xpose.msra.mxu0 0
    %5271 = vmatprep.subr.bf16.mxu0 0
    %5272 = vmatpush2.bf16.xpose.msra.mxu0 0
    %5273 = vmatprep.subr.bf16.mxu0 0
    %5274 = vmatpush2.bf16.xpose.msra.mxu0 0
    %5275 = vmatprep.mubr.bf16.mxu0 0
    %5276 = vmatmul.mubr.bf16.gmra.mxu0 %v5220
    %v5277 = vpop.f32.mrf.mxu0
    %v5278 = vadd.f32 %v5191, %v5277
    %v5279 = vpop.f32.mrf.mxu0
    %v5280 = vpop.f32.mrf.mxu0
    %v5281 = vadd.f32 %v5192, %v5280
    %v5282 = vpop.f32.mrf.mxu0
    %5283 = vmatprep.mubr.bf16.mxu0 0
    %5284 = vmatmul.mubr.bf16.gmra.mxu0 %v5223
    %v5285 = vpop.f32.mrf.mxu0
    %v5286 = vadd.f32 %v5193, %v5285
    %v5287 = vpop.f32.mrf.mxu0
    %v5288 = vpop.f32.mrf.mxu0
    %v5289 = vadd.f32 %v5194, %v5288
    %v5290 = vpop.f32.mrf.mxu0
    %5291 = vmatprep.mubr.bf16.mxu0 0
    %5292 = vmatmul.mubr.bf16.gmra.mxu0 %v5226
    %v5293 = vpop.f32.mrf.mxu0
    %v5294 = vadd.f32 %v5195, %v5293
    %v5295 = vpop.f32.mrf.mxu0
    %v5296 = vpop.f32.mrf.mxu0
    %v5297 = vadd.f32 %v5196, %v5296
    %v5298 = vpop.f32.mrf.mxu0
    %5299 = vmatprep.mubr.bf16.mxu0 0
    %5300 = vmatmul.mubr.bf16.gmra.mxu0 %v5229
    %v5301 = vpop.f32.mrf.mxu0
    %v5302 = vadd.f32 %v5197, %v5301
    %v5303 = vpop.f32.mrf.mxu0
    %v5304 = vpop.f32.mrf.mxu0
    %v5305 = vadd.f32 %v5198, %v5304
    %v5306 = vpop.f32.mrf.mxu0
    %5307 = vdwg.mxu0
    %5312 = vrot.lane.b32.xlu0 %v4595, 120
    %v5313 = vpop.permute.xlu0 %5312
    %5314 = vrot.lane.b32.xlu0 %v4596, 120
    %v5315 = vpop.permute.xlu0 %5314
    %5316 = vrot.lane.b32.xlu0 %v4597, 120
    %v5317 = vpop.permute.xlu0 %5316
    %5318 = vrot.lane.b32.xlu0 %v4598, 120
    %v5319 = vpop.permute.xlu0 %5318
    %5320 = vrot.lane.b32.xlu0 %v4603, 88
    %v5321 = vpop.permute.xlu0 %5320
    %5322 = vrot.lane.b32.xlu0 %v4604, 88
    %v5323 = vpop.permute.xlu0 %5322
    %5324 = vrot.lane.b32.xlu0 %v4605, 88
    %v5325 = vpop.permute.xlu0 %5324
    %5326 = vrot.lane.b32.xlu0 %v4606, 88
    %v5327 = vpop.permute.xlu0 %5326
    %v5329 = vsel %vm536, %v5313, 0
    %v5332 = vsel %vm536, %v5315, 0
    %v5335 = vsel %vm536, %v5317, 0
    %v5338 = vsel %vm536, %v5319, 0
    %v5341 = vsel %vm536, %v5321, 0
    %v5344 = vsel %vm536, %v5323, 0
    %v5347 = vsel %vm536, %v5325, 0
    %v5350 = vsel %vm536, %v5327, 0
    %5352 = vmatprep.subr.bf16.mxu0 0
    %5353 = vmatpush1.bf16.xpose.msra.mxu0 0
    %5354 = vmatprep.subr.bf16.mxu0 0
    %5355 = vmatpush1.bf16.xpose.msra.mxu0 0
    %5356 = vmatprep.subr.bf16.mxu0 0
    %5357 = vmatpush1.bf16.xpose.msra.mxu0 0
    %5358 = vmatprep.subr.bf16.mxu0 0
    %5359 = vmatpush1.bf16.xpose.msra.mxu0 0
    %5360 = vmatprep.subr.bf16.mxu0 0
    %5361 = vmatpush1.bf16.xpose.msra.mxu0 %v5350
    %5362 = vmatprep.subr.bf16.mxu0 0
    %5363 = vmatpush1.bf16.xpose.msra.mxu0 %v5347
    %5364 = vmatprep.subr.bf16.mxu0 0
    %5365 = vmatpush1.bf16.xpose.msra.mxu0 %v5344
    %5366 = vmatprep.subr.bf16.mxu0 0
    %5367 = vmatpush1.bf16.xpose.msra.mxu0 %v5341
    %5368 = vmatprep.subr.bf16.mxu0 0
    %5369 = vmatpush2.bf16.xpose.msra.mxu0 0
    %5370 = vmatprep.subr.bf16.mxu0 0
    %5371 = vmatpush2.bf16.xpose.msra.mxu0 0
    %5372 = vmatprep.subr.bf16.mxu0 0
    %5373 = vmatpush2.bf16.xpose.msra.mxu0 0
    %5374 = vmatprep.subr.bf16.mxu0 0
    %5375 = vmatpush2.bf16.xpose.msra.mxu0 0
    %5376 = vmatprep.subr.bf16.mxu0 0
    %5377 = vmatpush2.bf16.xpose.msra.mxu0 0
    %5378 = vmatprep.subr.bf16.mxu0 0
    %5379 = vmatpush2.bf16.xpose.msra.mxu0 0
    %5380 = vmatprep.subr.bf16.mxu0 0
    %5381 = vmatpush2.bf16.xpose.msra.mxu0 0
    %5382 = vmatprep.subr.bf16.mxu0 0
    %5383 = vmatpush2.bf16.xpose.msra.mxu0 0
    %5384 = vmatprep.mubr.bf16.mxu0 0
    %5385 = vmatmul.mubr.bf16.gmra.mxu0 %v5329
    %v5386 = vpop.f32.mrf.mxu0
    %v5387 = vadd.f32 %v5191, %v5386
    %v5388 = vpop.f32.mrf.mxu0
    %v5389 = vpop.f32.mrf.mxu0
    %v5390 = vadd.f32 %v5192, %v5389
    %v5391 = vpop.f32.mrf.mxu0
    %5392 = vmatprep.mubr.bf16.mxu0 0
    %5393 = vmatmul.mubr.bf16.gmra.mxu0 %v5332
    %v5394 = vpop.f32.mrf.mxu0
    %v5395 = vadd.f32 %v5193, %v5394
    %v5396 = vpop.f32.mrf.mxu0
    %v5397 = vpop.f32.mrf.mxu0
    %v5398 = vadd.f32 %v5194, %v5397
    %v5399 = vpop.f32.mrf.mxu0
    %5400 = vmatprep.mubr.bf16.mxu0 0
    %5401 = vmatmul.mubr.bf16.gmra.mxu0 %v5335
    %v5402 = vpop.f32.mrf.mxu0
    %v5403 = vadd.f32 %v5195, %v5402
    %v5404 = vpop.f32.mrf.mxu0
    %v5405 = vpop.f32.mrf.mxu0
    %v5406 = vadd.f32 %v5196, %v5405
    %v5407 = vpop.f32.mrf.mxu0
    %5408 = vmatprep.mubr.bf16.mxu0 0
    %5409 = vmatmul.mubr.bf16.gmra.mxu0 %v5338
    %v5410 = vpop.f32.mrf.mxu0
    %v5411 = vadd.f32 %v5197, %v5410
    %v5412 = vpop.f32.mrf.mxu0
    %v5413 = vpop.f32.mrf.mxu0
    %v5414 = vadd.f32 %v5198, %v5413
    %v5415 = vpop.f32.mrf.mxu0
    %5416 = vdwg.mxu0
    %v5417 = vsel %vm727, %v5278, -inf
    %5418 = vmax.xlane.f32.xlu0 %v5417
    %v5419 = vpop.xlane.xlu0 %5418
    %v5420 = vsel %vm727, %v5281, -inf
    %5421 = vmax.xlane.f32.xlu0 %v5420
    %v5422 = vpop.xlane.xlu0 %5421
    %v5423 = vsel %vm727, %v5286, -inf
    %5424 = vmax.xlane.f32.xlu0 %v5423
    %v5425 = vpop.xlane.xlu0 %5424
    %v5426 = vsel %vm727, %v5289, -inf
    %5427 = vmax.xlane.f32.xlu0 %v5426
    %v5428 = vpop.xlane.xlu0 %5427
    %v5429 = vsel %vm727, %v5294, -inf
    %5430 = vmax.xlane.f32.xlu0 %v5429
    %v5431 = vpop.xlane.xlu0 %5430
    %v5432 = vsel %vm727, %v5297, -inf
    %5433 = vmax.xlane.f32.xlu0 %v5432
    %v5434 = vpop.xlane.xlu0 %5433
    %v5435 = vsel %vm727, %v5302, -inf
    %5436 = vmax.xlane.f32.xlu0 %v5435
    %v5437 = vpop.xlane.xlu0 %5436
    %v5438 = vsel %vm727, %v5305, -inf
    %5439 = vmax.xlane.f32.xlu0 %v5438
    %v5440 = vpop.xlane.xlu0 %5439
    %v5441 = vsel %vm727, %v5387, -inf
    %5442 = vmax.xlane.f32.xlu0 %v5441
    %v5443 = vpop.xlane.xlu0 %5442
    %v5444 = vsel %vm727, %v5390, -inf
    %5445 = vmax.xlane.f32.xlu0 %v5444
    %v5446 = vpop.xlane.xlu0 %5445
    %v5447 = vsel %vm727, %v5395, -inf
    %5448 = vmax.xlane.f32.xlu0 %v5447
    %v5449 = vpop.xlane.xlu0 %5448
    %v5450 = vsel %vm727, %v5398, -inf
    %5451 = vmax.xlane.f32.xlu0 %v5450
    %v5452 = vpop.xlane.xlu0 %5451
    %v5453 = vsel %vm727, %v5403, -inf
    %5454 = vmax.xlane.f32.xlu0 %v5453
    %v5455 = vpop.xlane.xlu0 %5454
    %v5456 = vsel %vm727, %v5406, -inf
    %5457 = vmax.xlane.f32.xlu0 %v5456
    %v5458 = vpop.xlane.xlu0 %5457
    %v5459 = vsel %vm727, %v5411, -inf
    %5460 = vmax.xlane.f32.xlu0 %v5459
    %v5461 = vpop.xlane.xlu0 %5460
    %v5462 = vsel %vm727, %v5414, -inf
    %5463 = vmax.xlane.f32.xlu0 %v5462
    %v5464 = vpop.xlane.xlu0 %5463
    %v5465 = vsub.f32 %v5278, %v5419
    %v5466 = vsub.f32 %v5281, %v5422
    %v5467 = vsub.f32 %v5286, %v5425
    %v5468 = vsub.f32 %v5289, %v5428
    %v5469 = vsub.f32 %v5294, %v5431
    %v5470 = vsub.f32 %v5297, %v5434
    %v5471 = vsub.f32 %v5302, %v5437
    %v5472 = vsub.f32 %v5305, %v5440
    %v5473 = vsub.f32 %v5387, %v5443
    %v5474 = vsub.f32 %v5390, %v5446
    %v5475 = vsub.f32 %v5395, %v5449
    %v5476 = vsub.f32 %v5398, %v5452
    %v5477 = vsub.f32 %v5403, %v5455
    %v5478 = vsub.f32 %v5406, %v5458
    %v5479 = vsub.f32 %v5411, %v5461
    %v5480 = vsub.f32 %v5414, %v5464
    %v5481 = vmul.f32 %v5465, 1.442695
    %v5482 = vpow.pop %v5481
    %v5483 = vmul.f32 %v5466, 1.442695
    %v5484 = vpow.pop %v5483
    %v5485 = vmul.f32 %v5467, 1.442695
    %v5486 = vpow.pop %v5485
    %v5487 = vmul.f32 %v5468, 1.442695
    %v5488 = vpow.pop %v5487
    %v5489 = vmul.f32 %v5469, 1.442695
    %v5490 = vpow.pop %v5489
    %v5491 = vmul.f32 %v5470, 1.442695
    %v5492 = vpow.pop %v5491
    %v5493 = vmul.f32 %v5471, 1.442695
    %v5494 = vpow.pop %v5493
    %v5495 = vmul.f32 %v5472, 1.442695
    %v5496 = vpow.pop %v5495
    %v5497 = vmul.f32 %v5473, 1.442695
    %v5498 = vpow.pop %v5497
    %v5499 = vmul.f32 %v5474, 1.442695
    %v5500 = vpow.pop %v5499
    %v5501 = vmul.f32 %v5475, 1.442695
    %v5502 = vpow.pop %v5501
    %v5503 = vmul.f32 %v5476, 1.442695
    %v5504 = vpow.pop %v5503
    %v5505 = vmul.f32 %v5477, 1.442695
    %v5506 = vpow.pop %v5505
    %v5507 = vmul.f32 %v5478, 1.442695
    %v5508 = vpow.pop %v5507
    %v5509 = vmul.f32 %v5479, 1.442695
    %v5510 = vpow.pop %v5509
    %v5511 = vmul.f32 %v5480, 1.442695
    %v5512 = vpow.pop %v5511
    %v5513 = vsel %vm727, %v5482, 0.0
    %5514 = vadd.xlane.f32.xlu0 %v5513
    %v5515 = vpop.xlane.xlu0 %5514
    %v5516 = vsel %vm727, %v5484, 0.0
    %5517 = vadd.xlane.f32.xlu0 %v5516
    %v5518 = vpop.xlane.xlu0 %5517
    %v5519 = vsel %vm727, %v5486, 0.0
    %5520 = vadd.xlane.f32.xlu0 %v5519
    %v5521 = vpop.xlane.xlu0 %5520
    %v5522 = vsel %vm727, %v5488, 0.0
    %5523 = vadd.xlane.f32.xlu0 %v5522
    %v5524 = vpop.xlane.xlu0 %5523
    %v5525 = vsel %vm727, %v5490, 0.0
    %5526 = vadd.xlane.f32.xlu0 %v5525
    %v5527 = vpop.xlane.xlu0 %5526
    %v5528 = vsel %vm727, %v5492, 0.0
    %5529 = vadd.xlane.f32.xlu0 %v5528
    %v5530 = vpop.xlane.xlu0 %5529
    %v5531 = vsel %vm727, %v5494, 0.0
    %5532 = vadd.xlane.f32.xlu0 %v5531
    %v5533 = vpop.xlane.xlu0 %5532
    %v5534 = vsel %vm727, %v5496, 0.0
    %5535 = vadd.xlane.f32.xlu0 %v5534
    %v5536 = vpop.xlane.xlu0 %5535
    %v5537 = vsel %vm727, %v5498, 0.0
    %5538 = vadd.xlane.f32.xlu0 %v5537
    %v5539 = vpop.xlane.xlu0 %5538
    %v5540 = vsel %vm727, %v5500, 0.0
    %5541 = vadd.xlane.f32.xlu0 %v5540
    %v5542 = vpop.xlane.xlu0 %5541
    %v5543 = vsel %vm727, %v5502, 0.0
    %5544 = vadd.xlane.f32.xlu0 %v5543
    %v5545 = vpop.xlane.xlu0 %5544
    %v5546 = vsel %vm727, %v5504, 0.0
    %5547 = vadd.xlane.f32.xlu0 %v5546
    %v5548 = vpop.xlane.xlu0 %5547
    %v5549 = vsel %vm727, %v5506, 0.0
    %5550 = vadd.xlane.f32.xlu0 %v5549
    %v5551 = vpop.xlane.xlu0 %5550
    %v5552 = vsel %vm727, %v5508, 0.0
    %5553 = vadd.xlane.f32.xlu0 %v5552
    %v5554 = vpop.xlane.xlu0 %5553
    %v5555 = vsel %vm727, %v5510, 0.0
    %5556 = vadd.xlane.f32.xlu0 %v5555
    %v5557 = vpop.xlane.xlu0 %5556
    %v5558 = vsel %vm727, %v5512, 0.0
    %5559 = vadd.xlane.f32.xlu0 %v5558
    %v5560 = vpop.xlane.xlu0 %5559
    %v5561 = vrcp.pop %v5515
    %v5562 = vrcp.pop %v5518
    %v5563 = vrcp.pop %v5521
    %v5564 = vrcp.pop %v5524
    %v5565 = vrcp.pop %v5527
    %v5566 = vrcp.pop %v5530
    %v5567 = vrcp.pop %v5533
    %v5568 = vrcp.pop %v5536
    %v5569 = vrcp.pop %v5539
    %v5570 = vrcp.pop %v5542
    %v5571 = vrcp.pop %v5545
    %v5572 = vrcp.pop %v5548
    %v5573 = vrcp.pop %v5551
    %v5574 = vrcp.pop %v5554
    %v5575 = vrcp.pop %v5557
    %v5576 = vrcp.pop %v5560
    %v5577 = vmul.f32 %v5482, %v5561
    %v5578 = vmul.f32 %v5484, %v5562
    %v5579 = vmul.f32 %v5486, %v5563
    %v5580 = vmul.f32 %v5488, %v5564
    %v5581 = vmul.f32 %v5490, %v5565
    %v5582 = vmul.f32 %v5492, %v5566
    %v5583 = vmul.f32 %v5494, %v5567
    %v5584 = vmul.f32 %v5496, %v5568
    %v5585 = vmul.f32 %v5498, %v5569
    %v5586 = vmul.f32 %v5500, %v5570
    %v5587 = vmul.f32 %v5502, %v5571
    %v5588 = vmul.f32 %v5504, %v5572
    %v5589 = vmul.f32 %v5506, %v5573
    %v5590 = vmul.f32 %v5508, %v5574
    %v5591 = vmul.f32 %v5510, %v5575
    %v5592 = vmul.f32 %v5512, %v5576
    %v5593 = vpack.c.bf16 %v5578, %v5577
    %v5594 = vpack.c.bf16 %v5580, %v5579
    %v5595 = vpack.c.bf16 %v5582, %v5581
    %v5596 = vpack.c.bf16 %v5584, %v5583
    %v5597 = vpack.c.bf16 %v5586, %v5585
    %v5598 = vpack.c.bf16 %v5588, %v5587
    %v5599 = vpack.c.bf16 %v5590, %v5589
    %v5600 = vpack.c.bf16 %v5592, %v5591
    %5601 = vrot.lane.b32.xlu0 %v4599, 56
    %v5602 = vpop.permute.xlu0 %5601
    %5603 = vrot.lane.b32.xlu0 %v4600, 56
    %v5604 = vpop.permute.xlu0 %5603
    %5605 = vrot.lane.b32.xlu0 %v4601, 56
    %v5606 = vpop.permute.xlu0 %5605
    %5607 = vrot.lane.b32.xlu0 %v4602, 56
    %v5608 = vpop.permute.xlu0 %5607
    %v5614 = vsel %vm727, %v5593, 0
    %v5617 = vsel %vm727, %v5594, 0
    %v5620 = vsel %vm727, %v5595, 0
    %v5623 = vsel %vm727, %v5596, 0
    %5625 = vmatprep.subr.bf16.mxu0 0
    %5626 = vmatpush1.bf16.msra.mxu0 0
    %5627 = vmatprep.subr.bf16.mxu0 0
    %5628 = vmatpush1.bf16.msra.mxu0 0
    %5629 = vmatprep.subr.bf16.mxu0 0
    %5630 = vmatpush1.bf16.msra.mxu0 0
    %5631 = vmatprep.subr.bf16.mxu0 0
    %5632 = vmatpush1.bf16.msra.mxu0 0
    %5633 = vmatprep.subr.bf16.mxu0 0
    %5634 = vmatpush1.bf16.msra.mxu0 %v5608
    %5635 = vmatprep.subr.bf16.mxu0 0
    %5636 = vmatpush1.bf16.msra.mxu0 %v5606
    %5637 = vmatprep.subr.bf16.mxu0 0
    %5638 = vmatpush1.bf16.msra.mxu0 %v5604
    %5639 = vmatprep.subr.bf16.mxu0 0
    %5640 = vmatpush1.bf16.msra.mxu0 %v5602
    %5641 = vmatprep.subr.bf16.mxu0 0
    %5642 = vmatpush2.bf16.msra.mxu0 0
    %5643 = vmatprep.subr.bf16.mxu0 0
    %5644 = vmatpush2.bf16.msra.mxu0 0
    %5645 = vmatprep.subr.bf16.mxu0 0
    %5646 = vmatpush2.bf16.msra.mxu0 0
    %5647 = vmatprep.subr.bf16.mxu0 0
    %5648 = vmatpush2.bf16.msra.mxu0 0
    %5649 = vmatprep.subr.bf16.mxu0 0
    %5650 = vmatpush2.bf16.msra.mxu0 0
    %5651 = vmatprep.subr.bf16.mxu0 0
    %5652 = vmatpush2.bf16.msra.mxu0 0
    %5653 = vmatprep.subr.bf16.mxu0 0
    %5654 = vmatpush2.bf16.msra.mxu0 0
    %5655 = vmatprep.subr.bf16.mxu0 0
    %5656 = vmatpush2.bf16.msra.mxu0 0
    %5657 = vmatprep.mubr.bf16.mxu0 0
    %5658 = vmatmul.mubr.bf16.gmra.mxu0 %v5614
    %v5659 = vpop.f32.mrf.mxu0
    %v5660 = vadd.f32 0.0, %v5659
    %v5661 = vpop.f32.mrf.mxu0
    %v5662 = vpop.f32.mrf.mxu0
    %v5663 = vadd.f32 0.0, %v5662
    %v5664 = vpop.f32.mrf.mxu0
    %5665 = vmatprep.mubr.bf16.mxu0 0
    %5666 = vmatmul.mubr.bf16.gmra.mxu0 %v5617
    %v5667 = vpop.f32.mrf.mxu0
    %v5668 = vadd.f32 0.0, %v5667
    %v5669 = vpop.f32.mrf.mxu0
    %v5670 = vpop.f32.mrf.mxu0
    %v5671 = vadd.f32 0.0, %v5670
    %v5672 = vpop.f32.mrf.mxu0
    %5673 = vmatprep.mubr.bf16.mxu0 0
    %5674 = vmatmul.mubr.bf16.gmra.mxu0 %v5620
    %v5675 = vpop.f32.mrf.mxu0
    %v5676 = vadd.f32 0.0, %v5675
    %v5677 = vpop.f32.mrf.mxu0
    %v5678 = vpop.f32.mrf.mxu0
    %v5679 = vadd.f32 0.0, %v5678
    %v5680 = vpop.f32.mrf.mxu0
    %5681 = vmatprep.mubr.bf16.mxu0 0
    %5682 = vmatmul.mubr.bf16.gmra.mxu0 %v5623
    %v5683 = vpop.f32.mrf.mxu0
    %v5684 = vadd.f32 0.0, %v5683
    %v5685 = vpop.f32.mrf.mxu0
    %v5686 = vpop.f32.mrf.mxu0
    %v5687 = vadd.f32 0.0, %v5686
    %v5688 = vpop.f32.mrf.mxu0
    %5689 = vdwg.mxu0
    %5690 = vrot.lane.b32.xlu0 %v4603, 56
    %v5691 = vpop.permute.xlu0 %5690
    %5692 = vrot.lane.b32.xlu0 %v4604, 56
    %v5693 = vpop.permute.xlu0 %5692
    %5694 = vrot.lane.b32.xlu0 %v4605, 56
    %v5695 = vpop.permute.xlu0 %5694
    %5696 = vrot.lane.b32.xlu0 %v4606, 56
    %v5697 = vpop.permute.xlu0 %5696
    %v5703 = vsel %vm727, %v5597, 0
    %v5706 = vsel %vm727, %v5598, 0
    %v5709 = vsel %vm727, %v5599, 0
    %v5712 = vsel %vm727, %v5600, 0
    %5714 = vmatprep.subr.bf16.mxu0 0
    %5715 = vmatpush1.bf16.msra.mxu0 0
    %5716 = vmatprep.subr.bf16.mxu0 0
    %5717 = vmatpush1.bf16.msra.mxu0 0
    %5718 = vmatprep.subr.bf16.mxu0 0
    %5719 = vmatpush1.bf16.msra.mxu0 0
    %5720 = vmatprep.subr.bf16.mxu0 0
    %5721 = vmatpush1.bf16.msra.mxu0 0
    %5722 = vmatprep.subr.bf16.mxu0 0
    %5723 = vmatpush1.bf16.msra.mxu0 %v5697
    %5724 = vmatprep.subr.bf16.mxu0 0
    %5725 = vmatpush1.bf16.msra.mxu0 %v5695
    %5726 = vmatprep.subr.bf16.mxu0 0
    %5727 = vmatpush1.bf16.msra.mxu0 %v5693
    %5728 = vmatprep.subr.bf16.mxu0 0
    %5729 = vmatpush1.bf16.msra.mxu0 %v5691
    %5730 = vmatprep.subr.bf16.mxu0 0
    %5731 = vmatpush2.bf16.msra.mxu0 0
    %5732 = vmatprep.subr.bf16.mxu0 0
    %5733 = vmatpush2.bf16.msra.mxu0 0
    %5734 = vmatprep.subr.bf16.mxu0 0
    %5735 = vmatpush2.bf16.msra.mxu0 0
    %5736 = vmatprep.subr.bf16.mxu0 0
    %5737 = vmatpush2.bf16.msra.mxu0 0
    %5738 = vmatprep.subr.bf16.mxu0 0
    %5739 = vmatpush2.bf16.msra.mxu0 0
    %5740 = vmatprep.subr.bf16.mxu0 0
    %5741 = vmatpush2.bf16.msra.mxu0 0
    %5742 = vmatprep.subr.bf16.mxu0 0
    %5743 = vmatpush2.bf16.msra.mxu0 0
    %5744 = vmatprep.subr.bf16.mxu0 0
    %5745 = vmatpush2.bf16.msra.mxu0 0
    %5746 = vmatprep.mubr.bf16.mxu0 0
    %5747 = vmatmul.mubr.bf16.gmra.mxu0 %v5703
    %v5748 = vpop.f32.mrf.mxu0
    %v5749 = vadd.f32 0.0, %v5748
    %v5750 = vpop.f32.mrf.mxu0
    %v5751 = vpop.f32.mrf.mxu0
    %v5752 = vadd.f32 0.0, %v5751
    %v5753 = vpop.f32.mrf.mxu0
    %5754 = vmatprep.mubr.bf16.mxu0 0
    %5755 = vmatmul.mubr.bf16.gmra.mxu0 %v5706
    %v5756 = vpop.f32.mrf.mxu0
    %v5757 = vadd.f32 0.0, %v5756
    %v5758 = vpop.f32.mrf.mxu0
    %v5759 = vpop.f32.mrf.mxu0
    %v5760 = vadd.f32 0.0, %v5759
    %v5761 = vpop.f32.mrf.mxu0
    %5762 = vmatprep.mubr.bf16.mxu0 0
    %5763 = vmatmul.mubr.bf16.gmra.mxu0 %v5709
    %v5764 = vpop.f32.mrf.mxu0
    %v5765 = vadd.f32 0.0, %v5764
    %v5766 = vpop.f32.mrf.mxu0
    %v5767 = vpop.f32.mrf.mxu0
    %v5768 = vadd.f32 0.0, %v5767
    %v5769 = vpop.f32.mrf.mxu0
    %5770 = vmatprep.mubr.bf16.mxu0 0
    %5771 = vmatmul.mubr.bf16.gmra.mxu0 %v5712
    %v5772 = vpop.f32.mrf.mxu0
    %v5773 = vadd.f32 0.0, %v5772
    %v5774 = vpop.f32.mrf.mxu0
    %v5775 = vpop.f32.mrf.mxu0
    %v5776 = vadd.f32 0.0, %v5775
    %v5777 = vpop.f32.mrf.mxu0
    %5778 = vdwg.mxu0
    %v5779 = vpack.c.bf16 %v5663, %v5660
    %v5780 = vpack.c.bf16 %v5671, %v5668
    %v5781 = vpack.c.bf16 %v5679, %v5676
    %v5782 = vpack.c.bf16 %v5687, %v5684
    %v5783 = vpack.c.bf16 %v5752, %v5749
    %v5784 = vpack.c.bf16 %v5760, %v5757
    %v5785 = vpack.c.bf16 %v5768, %v5765
    %v5786 = vpack.c.bf16 %v5776, %v5773
    %s5787 = scalar_lea.vmem %s3, 20
    %v5788 = vld [vmem:[%s5787] sm:$0xf]
    %v5790 = vsel %vm536, %v5779, 0
    %v5793 = vsel %vm536, %v5780, 0
    %v5796 = vsel %vm536, %v5781, 0
    %v5799 = vsel %vm536, %v5782, 0
    %v5802 = vsel %vm536, %v5783, 0
    %v5805 = vsel %vm536, %v5784, 0
    %v5808 = vsel %vm536, %v5785, 0
    %v5811 = vsel %vm536, %v5786, 0
    %v5814 = vsel %vm1722, %v5788, 0
    %5816 = vmatprep.subr.bf16.mxu0 0
    %5817 = vmatpush1.bf16.msra.mxu0 0
    %5818 = vmatprep.subr.bf16.mxu0 0
    %5819 = vmatpush1.bf16.msra.mxu0 0
    %5820 = vmatprep.subr.bf16.mxu0 0
    %5821 = vmatpush1.bf16.msra.mxu0 0
    %5822 = vmatprep.subr.bf16.mxu0 0
    %5823 = vmatpush1.bf16.msra.mxu0 0
    %5824 = vmatprep.subr.bf16.mxu0 0
    %5825 = vmatpush1.bf16.msra.mxu0 0
    %5826 = vmatprep.subr.bf16.mxu0 0
    %5827 = vmatpush1.bf16.msra.mxu0 0
    %5828 = vmatprep.subr.bf16.mxu0 0
    %5829 = vmatpush1.bf16.msra.mxu0 0
    %5830 = vmatprep.subr.bf16.mxu0 0
    %5831 = vmatpush1.bf16.msra.mxu0 %v5814
    %5832 = vmatprep.subr.bf16.mxu0 0
    %5833 = vmatpush2.bf16.msra.mxu0 0
    %5834 = vmatprep.subr.bf16.mxu0 0
    %5835 = vmatpush2.bf16.msra.mxu0 0
    %5836 = vmatprep.subr.bf16.mxu0 0
    %5837 = vmatpush2.bf16.msra.mxu0 0
    %5838 = vmatprep.subr.bf16.mxu0 0
    %5839 = vmatpush2.bf16.msra.mxu0 0
    %5840 = vmatprep.subr.bf16.mxu0 0
    %5841 = vmatpush2.bf16.msra.mxu0 0
    %5842 = vmatprep.subr.bf16.mxu0 0
    %5843 = vmatpush2.bf16.msra.mxu0 0
    %5844 = vmatprep.subr.bf16.mxu0 0
    %5845 = vmatpush2.bf16.msra.mxu0 0
    %5846 = vmatprep.subr.bf16.mxu0 0
    %5847 = vmatpush2.bf16.msra.mxu0 0
    %5848 = vmatprep.mubr.bf16.mxu0 0
    %5849 = vmatmul.mubr.bf16.gmra.mxu0 %v5790
    %v5850 = vpop.f32.mrf.mxu0
    %v5851 = vadd.f32 0.0, %v5850
    %v5852 = vpop.f32.mrf.mxu0
    %v5853 = vpop.f32.mrf.mxu0
    %v5854 = vadd.f32 0.0, %v5853
    %v5855 = vpop.f32.mrf.mxu0
    %5856 = vmatprep.mubr.bf16.mxu0 0
    %5857 = vmatmul.mubr.bf16.gmra.mxu0 %v5793
    %v5858 = vpop.f32.mrf.mxu0
    %v5859 = vadd.f32 0.0, %v5858
    %v5860 = vpop.f32.mrf.mxu0
    %v5861 = vpop.f32.mrf.mxu0
    %v5862 = vadd.f32 0.0, %v5861
    %v5863 = vpop.f32.mrf.mxu0
    %5864 = vmatprep.mubr.bf16.mxu0 0
    %5865 = vmatmul.mubr.bf16.gmra.mxu0 %v5796
    %v5866 = vpop.f32.mrf.mxu0
    %v5867 = vadd.f32 0.0, %v5866
    %v5868 = vpop.f32.mrf.mxu0
    %v5869 = vpop.f32.mrf.mxu0
    %v5870 = vadd.f32 0.0, %v5869
    %v5871 = vpop.f32.mrf.mxu0
    %5872 = vmatprep.mubr.bf16.mxu0 0
    %5873 = vmatmul.mubr.bf16.gmra.mxu0 %v5799
    %v5874 = vpop.f32.mrf.mxu0
    %v5875 = vadd.f32 0.0, %v5874
    %v5876 = vpop.f32.mrf.mxu0
    %v5877 = vpop.f32.mrf.mxu0
    %v5878 = vadd.f32 0.0, %v5877
    %v5879 = vpop.f32.mrf.mxu0
    %5880 = vmatprep.mubr.bf16.mxu0 0
    %5881 = vmatmul.mubr.bf16.gmra.mxu0 %v5802
    %v5882 = vpop.f32.mrf.mxu0
    %v5883 = vadd.f32 0.0, %v5882
    %v5884 = vpop.f32.mrf.mxu0
    %v5885 = vpop.f32.mrf.mxu0
    %v5886 = vadd.f32 0.0, %v5885
    %v5887 = vpop.f32.mrf.mxu0
    %5888 = vmatprep.mubr.bf16.mxu0 0
    %5889 = vmatmul.mubr.bf16.gmra.mxu0 %v5805
    %v5890 = vpop.f32.mrf.mxu0
    %v5891 = vadd.f32 0.0, %v5890
    %v5892 = vpop.f32.mrf.mxu0
    %v5893 = vpop.f32.mrf.mxu0
    %v5894 = vadd.f32 0.0, %v5893
    %v5895 = vpop.f32.mrf.mxu0
    %5896 = vmatprep.mubr.bf16.mxu0 0
    %5897 = vmatmul.mubr.bf16.gmra.mxu0 %v5808
    %v5898 = vpop.f32.mrf.mxu0
    %v5899 = vadd.f32 0.0, %v5898
    %v5900 = vpop.f32.mrf.mxu0
    %v5901 = vpop.f32.mrf.mxu0
    %v5902 = vadd.f32 0.0, %v5901
    %v5903 = vpop.f32.mrf.mxu0
    %5904 = vmatprep.mubr.bf16.mxu0 0
    %5905 = vmatmul.mubr.bf16.gmra.mxu0 %v5811
    %v5906 = vpop.f32.mrf.mxu0
    %v5907 = vadd.f32 0.0, %v5906
    %v5908 = vpop.f32.mrf.mxu0
    %v5909 = vpop.f32.mrf.mxu0
    %v5910 = vadd.f32 0.0, %v5909
    %v5911 = vpop.f32.mrf.mxu0
    %5912 = vdwg.mxu0
    %v5914 = vsel %vm536, %v5180, 0
    %v5917 = vsel %vm536, %v5181, 0
    %v5920 = vsel %vm536, %v5182, 0
    %v5923 = vsel %vm536, %v5183, 0
    %v5926 = vsel %vm536, %v5184, 0
    %v5929 = vsel %vm536, %v5185, 0
    %v5932 = vsel %vm536, %v5186, 0
    %v5935 = vsel %vm536, %v5187, 0
    %v5938 = vsel %vm1722, %v5189, 0
    %5940 = vmatprep.subr.bf16.mxu0 0
    %5941 = vmatpush1.bf16.msra.mxu0 0
    %5942 = vmatprep.subr.bf16.mxu0 0
    %5943 = vmatpush1.bf16.msra.mxu0 0
    %5944 = vmatprep.subr.bf16.mxu0 0
    %5945 = vmatpush1.bf16.msra.mxu0 0
    %5946 = vmatprep.subr.bf16.mxu0 0
    %5947 = vmatpush1.bf16.msra.mxu0 0
    %5948 = vmatprep.subr.bf16.mxu0 0
    %5949 = vmatpush1.bf16.msra.mxu0 0
    %5950 = vmatprep.subr.bf16.mxu0 0
    %5951 = vmatpush1.bf16.msra.mxu0 0
    %5952 = vmatprep.subr.bf16.mxu0 0
    %5953 = vmatpush1.bf16.msra.mxu0 0
    %5954 = vmatprep.subr.bf16.mxu0 0
    %5955 = vmatpush1.bf16.msra.mxu0 %v5938
    %5956 = vmatprep.subr.bf16.mxu0 0
    %5957 = vmatpush2.bf16.msra.mxu0 0
    %5958 = vmatprep.subr.bf16.mxu0 0
    %5959 = vmatpush2.bf16.msra.mxu0 0
    %5960 = vmatprep.subr.bf16.mxu0 0
    %5961 = vmatpush2.bf16.msra.mxu0 0
    %5962 = vmatprep.subr.bf16.mxu0 0
    %5963 = vmatpush2.bf16.msra.mxu0 0
    %5964 = vmatprep.subr.bf16.mxu0 0
    %5965 = vmatpush2.bf16.msra.mxu0 0
    %5966 = vmatprep.subr.bf16.mxu0 0
    %5967 = vmatpush2.bf16.msra.mxu0 0
    %5968 = vmatprep.subr.bf16.mxu0 0
    %5969 = vmatpush2.bf16.msra.mxu0 0
    %5970 = vmatprep.subr.bf16.mxu0 0
    %5971 = vmatpush2.bf16.msra.mxu0 0
    %5972 = vmatprep.mubr.bf16.mxu0 0
    %5973 = vmatmul.mubr.bf16.gmra.mxu0 %v5914
    %v5974 = vpop.f32.mrf.mxu0
    %v5975 = vadd.f32 %v5851, %v5974
    %v5976 = vpop.f32.mrf.mxu0
    %v5977 = vpop.f32.mrf.mxu0
    %v5978 = vadd.f32 %v5854, %v5977
    %v5979 = vpop.f32.mrf.mxu0
    %5980 = vmatprep.mubr.bf16.mxu0 0
    %5981 = vmatmul.mubr.bf16.gmra.mxu0 %v5917
    %v5982 = vpop.f32.mrf.mxu0
    %v5983 = vadd.f32 %v5859, %v5982
    %v5984 = vpop.f32.mrf.mxu0
    %v5985 = vpop.f32.mrf.mxu0
    %v5986 = vadd.f32 %v5862, %v5985
    %v5987 = vpop.f32.mrf.mxu0
    %5988 = vmatprep.mubr.bf16.mxu0 0
    %5989 = vmatmul.mubr.bf16.gmra.mxu0 %v5920
    %v5990 = vpop.f32.mrf.mxu0
    %v5991 = vadd.f32 %v5867, %v5990
    %v5992 = vpop.f32.mrf.mxu0
    %v5993 = vpop.f32.mrf.mxu0
    %v5994 = vadd.f32 %v5870, %v5993
    %v5995 = vpop.f32.mrf.mxu0
    %5996 = vmatprep.mubr.bf16.mxu0 0
    %5997 = vmatmul.mubr.bf16.gmra.mxu0 %v5923
    %v5998 = vpop.f32.mrf.mxu0
    %v5999 = vadd.f32 %v5875, %v5998
    %v6000 = vpop.f32.mrf.mxu0
    %v6001 = vpop.f32.mrf.mxu0
    %v6002 = vadd.f32 %v5878, %v6001
    %v6003 = vpop.f32.mrf.mxu0
    %6004 = vmatprep.mubr.bf16.mxu0 0
    %6005 = vmatmul.mubr.bf16.gmra.mxu0 %v5926
    %v6006 = vpop.f32.mrf.mxu0
    %v6007 = vadd.f32 %v5883, %v6006
    %v6008 = vpop.f32.mrf.mxu0
    %v6009 = vpop.f32.mrf.mxu0
    %v6010 = vadd.f32 %v5886, %v6009
    %v6011 = vpop.f32.mrf.mxu0
    %6012 = vmatprep.mubr.bf16.mxu0 0
    %6013 = vmatmul.mubr.bf16.gmra.mxu0 %v5929
    %v6014 = vpop.f32.mrf.mxu0
    %v6015 = vadd.f32 %v5891, %v6014
    %v6016 = vpop.f32.mrf.mxu0
    %v6017 = vpop.f32.mrf.mxu0
    %v6018 = vadd.f32 %v5894, %v6017
    %v6019 = vpop.f32.mrf.mxu0
    %6020 = vmatprep.mubr.bf16.mxu0 0
    %6021 = vmatmul.mubr.bf16.gmra.mxu0 %v5932
    %v6022 = vpop.f32.mrf.mxu0
    %v6023 = vadd.f32 %v5899, %v6022
    %v6024 = vpop.f32.mrf.mxu0
    %v6025 = vpop.f32.mrf.mxu0
    %v6026 = vadd.f32 %v5902, %v6025
    %v6027 = vpop.f32.mrf.mxu0
    %6028 = vmatprep.mubr.bf16.mxu0 0
    %6029 = vmatmul.mubr.bf16.gmra.mxu0 %v5935
    %v6030 = vpop.f32.mrf.mxu0
    %v6031 = vadd.f32 %v5907, %v6030
    %v6032 = vpop.f32.mrf.mxu0
    %v6033 = vpop.f32.mrf.mxu0
    %v6034 = vadd.f32 %v5910, %v6033
    %v6035 = vpop.f32.mrf.mxu0
    %6036 = vdwg.mxu0
    %s6037 = scalar_lea.vmem [#allocation2], 384
    %v6038 = vld [vmem:[%s6037] sm:$0xff]
    %v6039 = vld [vmem:[%s6037 + $0x8] sm:$0xff]
    %v6040 = vld [vmem:[%s6037 + $0x10] sm:$0xff]
    %v6041 = vld [vmem:[%s6037 + $0x18] sm:$0xff]
    %v6042 = vld [vmem:[%s6037 + $0x20] sm:$0xff]
    %v6043 = vld [vmem:[%s6037 + $0x28] sm:$0xff]
    %v6044 = vld [vmem:[%s6037 + $0x30] sm:$0xff]
    %v6045 = vld [vmem:[%s6037 + $0x38] sm:$0xff]
    %6046 = vrot.lane.b32.xlu0 %v4591, 112
    %v6047 = vpop.permute.xlu0 %6046
    %6048 = vrot.lane.b32.xlu0 %v4592, 112
    %v6049 = vpop.permute.xlu0 %6048
    %6050 = vrot.lane.b32.xlu0 %v4593, 112
    %v6051 = vpop.permute.xlu0 %6050
    %6052 = vrot.lane.b32.xlu0 %v4594, 112
    %v6053 = vpop.permute.xlu0 %6052
    %6054 = vrot.lane.b32.xlu0 %v4599, 80
    %v6055 = vpop.permute.xlu0 %6054
    %6056 = vrot.lane.b32.xlu0 %v4600, 80
    %v6057 = vpop.permute.xlu0 %6056
    %6058 = vrot.lane.b32.xlu0 %v4601, 80
    %v6059 = vpop.permute.xlu0 %6058
    %6060 = vrot.lane.b32.xlu0 %v4602, 80
    %v6061 = vpop.permute.xlu0 %6060
    %v6063 = vsel %vm536, %v6047, 0
    %v6066 = vsel %vm536, %v6049, 0
    %v6069 = vsel %vm536, %v6051, 0
    %v6072 = vsel %vm536, %v6053, 0
    %v6075 = vsel %vm536, %v6055, 0
    %v6078 = vsel %vm536, %v6057, 0
    %v6081 = vsel %vm536, %v6059, 0
    %v6084 = vsel %vm536, %v6061, 0
    %6086 = vmatprep.subr.bf16.mxu0 0
    %6087 = vmatpush1.bf16.xpose.msra.mxu0 0
    %6088 = vmatprep.subr.bf16.mxu0 0
    %6089 = vmatpush1.bf16.xpose.msra.mxu0 0
    %6090 = vmatprep.subr.bf16.mxu0 0
    %6091 = vmatpush1.bf16.xpose.msra.mxu0 0
    %6092 = vmatprep.subr.bf16.mxu0 0
    %6093 = vmatpush1.bf16.xpose.msra.mxu0 0
    %6094 = vmatprep.subr.bf16.mxu0 0
    %6095 = vmatpush1.bf16.xpose.msra.mxu0 %v6084
    %6096 = vmatprep.subr.bf16.mxu0 0
    %6097 = vmatpush1.bf16.xpose.msra.mxu0 %v6081
    %6098 = vmatprep.subr.bf16.mxu0 0
    %6099 = vmatpush1.bf16.xpose.msra.mxu0 %v6078
    %6100 = vmatprep.subr.bf16.mxu0 0
    %6101 = vmatpush1.bf16.xpose.msra.mxu0 %v6075
    %6102 = vmatprep.subr.bf16.mxu0 0
    %6103 = vmatpush2.bf16.xpose.msra.mxu0 0
    %6104 = vmatprep.subr.bf16.mxu0 0
    %6105 = vmatpush2.bf16.xpose.msra.mxu0 0
    %6106 = vmatprep.subr.bf16.mxu0 0
    %6107 = vmatpush2.bf16.xpose.msra.mxu0 0
    %6108 = vmatprep.subr.bf16.mxu0 0
    %6109 = vmatpush2.bf16.xpose.msra.mxu0 0
    %6110 = vmatprep.subr.bf16.mxu0 0
    %6111 = vmatpush2.bf16.xpose.msra.mxu0 0
    %6112 = vmatprep.subr.bf16.mxu0 0
    %6113 = vmatpush2.bf16.xpose.msra.mxu0 0
    %6114 = vmatprep.subr.bf16.mxu0 0
    %6115 = vmatpush2.bf16.xpose.msra.mxu0 0
    %6116 = vmatprep.subr.bf16.mxu0 0
    %6117 = vmatpush2.bf16.xpose.msra.mxu0 0
    %6118 = vmatprep.mubr.bf16.mxu0 0
    %6119 = vmatmul.mubr.bf16.gmra.mxu0 %v6063
    %v6120 = vpop.f32.mrf.mxu0
    %v6121 = vadd.f32 %v6038, %v6120
    %v6122 = vpop.f32.mrf.mxu0
    %v6123 = vpop.f32.mrf.mxu0
    %v6124 = vadd.f32 %v6039, %v6123
    %v6125 = vpop.f32.mrf.mxu0
    %6126 = vmatprep.mubr.bf16.mxu0 0
    %6127 = vmatmul.mubr.bf16.gmra.mxu0 %v6066
    %v6128 = vpop.f32.mrf.mxu0
    %v6129 = vadd.f32 %v6040, %v6128
    %v6130 = vpop.f32.mrf.mxu0
    %v6131 = vpop.f32.mrf.mxu0
    %v6132 = vadd.f32 %v6041, %v6131
    %v6133 = vpop.f32.mrf.mxu0
    %6134 = vmatprep.mubr.bf16.mxu0 0
    %6135 = vmatmul.mubr.bf16.gmra.mxu0 %v6069
    %v6136 = vpop.f32.mrf.mxu0
    %v6137 = vadd.f32 %v6042, %v6136
    %v6138 = vpop.f32.mrf.mxu0
    %v6139 = vpop.f32.mrf.mxu0
    %v6140 = vadd.f32 %v6043, %v6139
    %v6141 = vpop.f32.mrf.mxu0
    %6142 = vmatprep.mubr.bf16.mxu0 0
    %6143 = vmatmul.mubr.bf16.gmra.mxu0 %v6072
    %v6144 = vpop.f32.mrf.mxu0
    %v6145 = vadd.f32 %v6044, %v6144
    %v6146 = vpop.f32.mrf.mxu0
    %v6147 = vpop.f32.mrf.mxu0
    %v6148 = vadd.f32 %v6045, %v6147
    %v6149 = vpop.f32.mrf.mxu0
    %6150 = vdwg.mxu0
    %6151 = vrot.lane.b32.xlu0 %v4595, 112
    %v6152 = vpop.permute.xlu0 %6151
    %6153 = vrot.lane.b32.xlu0 %v4596, 112
    %v6154 = vpop.permute.xlu0 %6153
    %6155 = vrot.lane.b32.xlu0 %v4597, 112
    %v6156 = vpop.permute.xlu0 %6155
    %6157 = vrot.lane.b32.xlu0 %v4598, 112
    %v6158 = vpop.permute.xlu0 %6157
    %6159 = vrot.lane.b32.xlu0 %v4603, 80
    %v6160 = vpop.permute.xlu0 %6159
    %6161 = vrot.lane.b32.xlu0 %v4604, 80
    %v6162 = vpop.permute.xlu0 %6161
    %6163 = vrot.lane.b32.xlu0 %v4605, 80
    %v6164 = vpop.permute.xlu0 %6163
    %6165 = vrot.lane.b32.xlu0 %v4606, 80
    %v6166 = vpop.permute.xlu0 %6165
    %v6168 = vsel %vm536, %v6152, 0
    %v6171 = vsel %vm536, %v6154, 0
    %v6174 = vsel %vm536, %v6156, 0
    %v6177 = vsel %vm536, %v6158, 0
    %v6180 = vsel %vm536, %v6160, 0
    %v6183 = vsel %vm536, %v6162, 0
    %v6186 = vsel %vm536, %v6164, 0
    %v6189 = vsel %vm536, %v6166, 0
    %6191 = vmatprep.subr.bf16.mxu0 0
    %6192 = vmatpush1.bf16.xpose.msra.mxu0 0
    %6193 = vmatprep.subr.bf16.mxu0 0
    %6194 = vmatpush1.bf16.xpose.msra.mxu0 0
    %6195 = vmatprep.subr.bf16.mxu0 0
    %6196 = vmatpush1.bf16.xpose.msra.mxu0 0
    %6197 = vmatprep.subr.bf16.mxu0 0
    %6198 = vmatpush1.bf16.xpose.msra.mxu0 0
    %6199 = vmatprep.subr.bf16.mxu0 0
    %6200 = vmatpush1.bf16.xpose.msra.mxu0 %v6189
    %6201 = vmatprep.subr.bf16.mxu0 0
    %6202 = vmatpush1.bf16.xpose.msra.mxu0 %v6186
    %6203 = vmatprep.subr.bf16.mxu0 0
    %6204 = vmatpush1.bf16.xpose.msra.mxu0 %v6183
    %6205 = vmatprep.subr.bf16.mxu0 0
    %6206 = vmatpush1.bf16.xpose.msra.mxu0 %v6180
    %6207 = vmatprep.subr.bf16.mxu0 0
    %6208 = vmatpush2.bf16.xpose.msra.mxu0 0
    %6209 = vmatprep.subr.bf16.mxu0 0
    %6210 = vmatpush2.bf16.xpose.msra.mxu0 0
    %6211 = vmatprep.subr.bf16.mxu0 0
    %6212 = vmatpush2.bf16.xpose.msra.mxu0 0
    %6213 = vmatprep.subr.bf16.mxu0 0
    %6214 = vmatpush2.bf16.xpose.msra.mxu0 0
    %6215 = vmatprep.subr.bf16.mxu0 0
    %6216 = vmatpush2.bf16.xpose.msra.mxu0 0
    %6217 = vmatprep.subr.bf16.mxu0 0
    %6218 = vmatpush2.bf16.xpose.msra.mxu0 0
    %6219 = vmatprep.subr.bf16.mxu0 0
    %6220 = vmatpush2.bf16.xpose.msra.mxu0 0
    %6221 = vmatprep.subr.bf16.mxu0 0
    %6222 = vmatpush2.bf16.xpose.msra.mxu0 0
    %6223 = vmatprep.mubr.bf16.mxu0 0
    %6224 = vmatmul.mubr.bf16.gmra.mxu0 %v6168
    %v6225 = vpop.f32.mrf.mxu0
    %v6226 = vadd.f32 %v6038, %v6225
    %v6227 = vpop.f32.mrf.mxu0
    %v6228 = vpop.f32.mrf.mxu0
    %v6229 = vadd.f32 %v6039, %v6228
    %v6230 = vpop.f32.mrf.mxu0
    %6231 = vmatprep.mubr.bf16.mxu0 0
    %6232 = vmatmul.mubr.bf16.gmra.mxu0 %v6171
    %v6233 = vpop.f32.mrf.mxu0
    %v6234 = vadd.f32 %v6040, %v6233
    %v6235 = vpop.f32.mrf.mxu0
    %v6236 = vpop.f32.mrf.mxu0
    %v6237 = vadd.f32 %v6041, %v6236
    %v6238 = vpop.f32.mrf.mxu0
    %6239 = vmatprep.mubr.bf16.mxu0 0
    %6240 = vmatmul.mubr.bf16.gmra.mxu0 %v6174
    %v6241 = vpop.f32.mrf.mxu0
    %v6242 = vadd.f32 %v6042, %v6241
    %v6243 = vpop.f32.mrf.mxu0
    %v6244 = vpop.f32.mrf.mxu0
    %v6245 = vadd.f32 %v6043, %v6244
    %v6246 = vpop.f32.mrf.mxu0
    %6247 = vmatprep.mubr.bf16.mxu0 0
    %6248 = vmatmul.mubr.bf16.gmra.mxu0 %v6177
    %v6249 = vpop.f32.mrf.mxu0
    %v6250 = vadd.f32 %v6044, %v6249
    %v6251 = vpop.f32.mrf.mxu0
    %v6252 = vpop.f32.mrf.mxu0
    %v6253 = vadd.f32 %v6045, %v6252
    %v6254 = vpop.f32.mrf.mxu0
    %6255 = vdwg.mxu0
    %v6256 = vsel %vm727, %v6121, -inf
    %6257 = vmax.xlane.f32.xlu0 %v6256
    %v6258 = vpop.xlane.xlu0 %6257
    %v6259 = vsel %vm727, %v6124, -inf
    %6260 = vmax.xlane.f32.xlu0 %v6259
    %v6261 = vpop.xlane.xlu0 %6260
    %v6262 = vsel %vm727, %v6129, -inf
    %6263 = vmax.xlane.f32.xlu0 %v6262
    %v6264 = vpop.xlane.xlu0 %6263
    %v6265 = vsel %vm727, %v6132, -inf
    %6266 = vmax.xlane.f32.xlu0 %v6265
    %v6267 = vpop.xlane.xlu0 %6266
    %v6268 = vsel %vm727, %v6137, -inf
    %6269 = vmax.xlane.f32.xlu0 %v6268
    %v6270 = vpop.xlane.xlu0 %6269
    %v6271 = vsel %vm727, %v6140, -inf
    %6272 = vmax.xlane.f32.xlu0 %v6271
    %v6273 = vpop.xlane.xlu0 %6272
    %v6274 = vsel %vm727, %v6145, -inf
    %6275 = vmax.xlane.f32.xlu0 %v6274
    %v6276 = vpop.xlane.xlu0 %6275
    %v6277 = vsel %vm727, %v6148, -inf
    %6278 = vmax.xlane.f32.xlu0 %v6277
    %v6279 = vpop.xlane.xlu0 %6278
    %v6280 = vsel %vm727, %v6226, -inf
    %6281 = vmax.xlane.f32.xlu0 %v6280
    %v6282 = vpop.xlane.xlu0 %6281
    %v6283 = vsel %vm727, %v6229, -inf
    %6284 = vmax.xlane.f32.xlu0 %v6283
    %v6285 = vpop.xlane.xlu0 %6284
    %v6286 = vsel %vm727, %v6234, -inf
    %6287 = vmax.xlane.f32.xlu0 %v6286
    %v6288 = vpop.xlane.xlu0 %6287
    %v6289 = vsel %vm727, %v6237, -inf
    %6290 = vmax.xlane.f32.xlu0 %v6289
    %v6291 = vpop.xlane.xlu0 %6290
    %v6292 = vsel %vm727, %v6242, -inf
    %6293 = vmax.xlane.f32.xlu0 %v6292
    %v6294 = vpop.xlane.xlu0 %6293
    %v6295 = vsel %vm727, %v6245, -inf
    %6296 = vmax.xlane.f32.xlu0 %v6295
    %v6297 = vpop.xlane.xlu0 %6296
    %v6298 = vsel %vm727, %v6250, -inf
    %6299 = vmax.xlane.f32.xlu0 %v6298
    %v6300 = vpop.xlane.xlu0 %6299
    %v6301 = vsel %vm727, %v6253, -inf
    %6302 = vmax.xlane.f32.xlu0 %v6301
    %v6303 = vpop.xlane.xlu0 %6302
    %v6304 = vsub.f32 %v6121, %v6258
    %v6305 = vsub.f32 %v6124, %v6261
    %v6306 = vsub.f32 %v6129, %v6264
    %v6307 = vsub.f32 %v6132, %v6267
    %v6308 = vsub.f32 %v6137, %v6270
    %v6309 = vsub.f32 %v6140, %v6273
    %v6310 = vsub.f32 %v6145, %v6276
    %v6311 = vsub.f32 %v6148, %v6279
    %v6312 = vsub.f32 %v6226, %v6282
    %v6313 = vsub.f32 %v6229, %v6285
    %v6314 = vsub.f32 %v6234, %v6288
    %v6315 = vsub.f32 %v6237, %v6291
    %v6316 = vsub.f32 %v6242, %v6294
    %v6317 = vsub.f32 %v6245, %v6297
    %v6318 = vsub.f32 %v6250, %v6300
    %v6319 = vsub.f32 %v6253, %v6303
    %v6320 = vmul.f32 %v6304, 1.442695
    %v6321 = vpow.pop %v6320
    %v6322 = vmul.f32 %v6305, 1.442695
    %v6323 = vpow.pop %v6322
    %v6324 = vmul.f32 %v6306, 1.442695
    %v6325 = vpow.pop %v6324
    %v6326 = vmul.f32 %v6307, 1.442695
    %v6327 = vpow.pop %v6326
    %v6328 = vmul.f32 %v6308, 1.442695
    %v6329 = vpow.pop %v6328
    %v6330 = vmul.f32 %v6309, 1.442695
    %v6331 = vpow.pop %v6330
    %v6332 = vmul.f32 %v6310, 1.442695
    %v6333 = vpow.pop %v6332
    %v6334 = vmul.f32 %v6311, 1.442695
    %v6335 = vpow.pop %v6334
    %v6336 = vmul.f32 %v6312, 1.442695
    %v6337 = vpow.pop %v6336
    %v6338 = vmul.f32 %v6313, 1.442695
    %v6339 = vpow.pop %v6338
    %v6340 = vmul.f32 %v6314, 1.442695
    %v6341 = vpow.pop %v6340
    %v6342 = vmul.f32 %v6315, 1.442695
    %v6343 = vpow.pop %v6342
    %v6344 = vmul.f32 %v6316, 1.442695
    %v6345 = vpow.pop %v6344
    %v6346 = vmul.f32 %v6317, 1.442695
    %v6347 = vpow.pop %v6346
    %v6348 = vmul.f32 %v6318, 1.442695
    %v6349 = vpow.pop %v6348
    %v6350 = vmul.f32 %v6319, 1.442695
    %v6351 = vpow.pop %v6350
    %v6352 = vsel %vm727, %v6321, 0.0
    %6353 = vadd.xlane.f32.xlu0 %v6352
    %v6354 = vpop.xlane.xlu0 %6353
    %v6355 = vsel %vm727, %v6323, 0.0
    %6356 = vadd.xlane.f32.xlu0 %v6355
    %v6357 = vpop.xlane.xlu0 %6356
    %v6358 = vsel %vm727, %v6325, 0.0
    %6359 = vadd.xlane.f32.xlu0 %v6358
    %v6360 = vpop.xlane.xlu0 %6359
    %v6361 = vsel %vm727, %v6327, 0.0
    %6362 = vadd.xlane.f32.xlu0 %v6361
    %v6363 = vpop.xlane.xlu0 %6362
    %v6364 = vsel %vm727, %v6329, 0.0
    %6365 = vadd.xlane.f32.xlu0 %v6364
    %v6366 = vpop.xlane.xlu0 %6365
    %v6367 = vsel %vm727, %v6331, 0.0
    %6368 = vadd.xlane.f32.xlu0 %v6367
    %v6369 = vpop.xlane.xlu0 %6368
    %v6370 = vsel %vm727, %v6333, 0.0
    %6371 = vadd.xlane.f32.xlu0 %v6370
    %v6372 = vpop.xlane.xlu0 %6371
    %v6373 = vsel %vm727, %v6335, 0.0
    %6374 = vadd.xlane.f32.xlu0 %v6373
    %v6375 = vpop.xlane.xlu0 %6374
    %v6376 = vsel %vm727, %v6337, 0.0
    %6377 = vadd.xlane.f32.xlu0 %v6376
    %v6378 = vpop.xlane.xlu0 %6377
    %v6379 = vsel %vm727, %v6339, 0.0
    %6380 = vadd.xlane.f32.xlu0 %v6379
    %v6381 = vpop.xlane.xlu0 %6380
    %v6382 = vsel %vm727, %v6341, 0.0
    %6383 = vadd.xlane.f32.xlu0 %v6382
    %v6384 = vpop.xlane.xlu0 %6383
    %v6385 = vsel %vm727, %v6343, 0.0
    %6386 = vadd.xlane.f32.xlu0 %v6385
    %v6387 = vpop.xlane.xlu0 %6386
    %v6388 = vsel %vm727, %v6345, 0.0
    %6389 = vadd.xlane.f32.xlu0 %v6388
    %v6390 = vpop.xlane.xlu0 %6389
    %v6391 = vsel %vm727, %v6347, 0.0
    %6392 = vadd.xlane.f32.xlu0 %v6391
    %v6393 = vpop.xlane.xlu0 %6392
    %v6394 = vsel %vm727, %v6349, 0.0
    %6395 = vadd.xlane.f32.xlu0 %v6394
    %v6396 = vpop.xlane.xlu0 %6395
    %v6397 = vsel %vm727, %v6351, 0.0
    %6398 = vadd.xlane.f32.xlu0 %v6397
    %v6399 = vpop.xlane.xlu0 %6398
    %v6400 = vrcp.pop %v6354
    %v6401 = vrcp.pop %v6357
    %v6402 = vrcp.pop %v6360
    %v6403 = vrcp.pop %v6363
    %v6404 = vrcp.pop %v6366
    %v6405 = vrcp.pop %v6369
    %v6406 = vrcp.pop %v6372
    %v6407 = vrcp.pop %v6375
    %v6408 = vrcp.pop %v6378
    %v6409 = vrcp.pop %v6381
    %v6410 = vrcp.pop %v6384
    %v6411 = vrcp.pop %v6387
    %v6412 = vrcp.pop %v6390
    %v6413 = vrcp.pop %v6393
    %v6414 = vrcp.pop %v6396
    %v6415 = vrcp.pop %v6399
    %v6416 = vmul.f32 %v6321, %v6400
    %v6417 = vmul.f32 %v6323, %v6401
    %v6418 = vmul.f32 %v6325, %v6402
    %v6419 = vmul.f32 %v6327, %v6403
    %v6420 = vmul.f32 %v6329, %v6404
    %v6421 = vmul.f32 %v6331, %v6405
    %v6422 = vmul.f32 %v6333, %v6406
    %v6423 = vmul.f32 %v6335, %v6407
    %v6424 = vmul.f32 %v6337, %v6408
    %v6425 = vmul.f32 %v6339, %v6409
    %v6426 = vmul.f32 %v6341, %v6410
    %v6427 = vmul.f32 %v6343, %v6411
    %v6428 = vmul.f32 %v6345, %v6412
    %v6429 = vmul.f32 %v6347, %v6413
    %v6430 = vmul.f32 %v6349, %v6414
    %v6431 = vmul.f32 %v6351, %v6415
    %v6432 = vpack.c.bf16 %v6417, %v6416
    %v6433 = vpack.c.bf16 %v6419, %v6418
    %v6434 = vpack.c.bf16 %v6421, %v6420
    %v6435 = vpack.c.bf16 %v6423, %v6422
    %v6436 = vpack.c.bf16 %v6425, %v6424
    %v6437 = vpack.c.bf16 %v6427, %v6426
    %v6438 = vpack.c.bf16 %v6429, %v6428
    %v6439 = vpack.c.bf16 %v6431, %v6430
    %6440 = vrot.lane.b32.xlu0 %v4599, 48
    %v6441 = vpop.permute.xlu0 %6440
    %6442 = vrot.lane.b32.xlu0 %v4600, 48
    %v6443 = vpop.permute.xlu0 %6442
    %6444 = vrot.lane.b32.xlu0 %v4601, 48
    %v6445 = vpop.permute.xlu0 %6444
    %6446 = vrot.lane.b32.xlu0 %v4602, 48
    %v6447 = vpop.permute.xlu0 %6446
    %v6453 = vsel %vm727, %v6432, 0
    %v6456 = vsel %vm727, %v6433, 0
    %v6459 = vsel %vm727, %v6434, 0
    %v6462 = vsel %vm727, %v6435, 0
    %6464 = vmatprep.subr.bf16.mxu0 0
    %6465 = vmatpush1.bf16.msra.mxu0 0
    %6466 = vmatprep.subr.bf16.mxu0 0
    %6467 = vmatpush1.bf16.msra.mxu0 0
    %6468 = vmatprep.subr.bf16.mxu0 0
    %6469 = vmatpush1.bf16.msra.mxu0 0
    %6470 = vmatprep.subr.bf16.mxu0 0
    %6471 = vmatpush1.bf16.msra.mxu0 0
    %6472 = vmatprep.subr.bf16.mxu0 0
    %6473 = vmatpush1.bf16.msra.mxu0 %v6447
    %6474 = vmatprep.subr.bf16.mxu0 0
    %6475 = vmatpush1.bf16.msra.mxu0 %v6445
    %6476 = vmatprep.subr.bf16.mxu0 0
    %6477 = vmatpush1.bf16.msra.mxu0 %v6443
    %6478 = vmatprep.subr.bf16.mxu0 0
    %6479 = vmatpush1.bf16.msra.mxu0 %v6441
    %6480 = vmatprep.subr.bf16.mxu0 0
    %6481 = vmatpush2.bf16.msra.mxu0 0
    %6482 = vmatprep.subr.bf16.mxu0 0
    %6483 = vmatpush2.bf16.msra.mxu0 0
    %6484 = vmatprep.subr.bf16.mxu0 0
    %6485 = vmatpush2.bf16.msra.mxu0 0
    %6486 = vmatprep.subr.bf16.mxu0 0
    %6487 = vmatpush2.bf16.msra.mxu0 0
    %6488 = vmatprep.subr.bf16.mxu0 0
    %6489 = vmatpush2.bf16.msra.mxu0 0
    %6490 = vmatprep.subr.bf16.mxu0 0
    %6491 = vmatpush2.bf16.msra.mxu0 0
    %6492 = vmatprep.subr.bf16.mxu0 0
    %6493 = vmatpush2.bf16.msra.mxu0 0
    %6494 = vmatprep.subr.bf16.mxu0 0
    %6495 = vmatpush2.bf16.msra.mxu0 0
    %6496 = vmatprep.mubr.bf16.mxu0 0
    %6497 = vmatmul.mubr.bf16.gmra.mxu0 %v6453
    %v6498 = vpop.f32.mrf.mxu0
    %v6499 = vadd.f32 0.0, %v6498
    %v6500 = vpop.f32.mrf.mxu0
    %v6501 = vpop.f32.mrf.mxu0
    %v6502 = vadd.f32 0.0, %v6501
    %v6503 = vpop.f32.mrf.mxu0
    %6504 = vmatprep.mubr.bf16.mxu0 0
    %6505 = vmatmul.mubr.bf16.gmra.mxu0 %v6456
    %v6506 = vpop.f32.mrf.mxu0
    %v6507 = vadd.f32 0.0, %v6506
    %v6508 = vpop.f32.mrf.mxu0
    %v6509 = vpop.f32.mrf.mxu0
    %v6510 = vadd.f32 0.0, %v6509
    %v6511 = vpop.f32.mrf.mxu0
    %6512 = vmatprep.mubr.bf16.mxu0 0
    %6513 = vmatmul.mubr.bf16.gmra.mxu0 %v6459
    %v6514 = vpop.f32.mrf.mxu0
    %v6515 = vadd.f32 0.0, %v6514
    %v6516 = vpop.f32.mrf.mxu0
    %v6517 = vpop.f32.mrf.mxu0
    %v6518 = vadd.f32 0.0, %v6517
    %v6519 = vpop.f32.mrf.mxu0
    %6520 = vmatprep.mubr.bf16.mxu0 0
    %6521 = vmatmul.mubr.bf16.gmra.mxu0 %v6462
    %v6522 = vpop.f32.mrf.mxu0
    %v6523 = vadd.f32 0.0, %v6522
    %v6524 = vpop.f32.mrf.mxu0
    %v6525 = vpop.f32.mrf.mxu0
    %v6526 = vadd.f32 0.0, %v6525
    %v6527 = vpop.f32.mrf.mxu0
    %6528 = vdwg.mxu0
    %6529 = vrot.lane.b32.xlu0 %v4603, 48
    %v6530 = vpop.permute.xlu0 %6529
    %6531 = vrot.lane.b32.xlu0 %v4604, 48
    %v6532 = vpop.permute.xlu0 %6531
    %6533 = vrot.lane.b32.xlu0 %v4605, 48
    %v6534 = vpop.permute.xlu0 %6533
    %6535 = vrot.lane.b32.xlu0 %v4606, 48
    %v6536 = vpop.permute.xlu0 %6535
    %v6542 = vsel %vm727, %v6436, 0
    %v6545 = vsel %vm727, %v6437, 0
    %v6548 = vsel %vm727, %v6438, 0
    %v6551 = vsel %vm727, %v6439, 0
    %6553 = vmatprep.subr.bf16.mxu0 0
    %6554 = vmatpush1.bf16.msra.mxu0 0
    %6555 = vmatprep.subr.bf16.mxu0 0
    %6556 = vmatpush1.bf16.msra.mxu0 0
    %6557 = vmatprep.subr.bf16.mxu0 0
    %6558 = vmatpush1.bf16.msra.mxu0 0
    %6559 = vmatprep.subr.bf16.mxu0 0
    %6560 = vmatpush1.bf16.msra.mxu0 0
    %6561 = vmatprep.subr.bf16.mxu0 0
    %6562 = vmatpush1.bf16.msra.mxu0 %v6536
    %6563 = vmatprep.subr.bf16.mxu0 0
    %6564 = vmatpush1.bf16.msra.mxu0 %v6534
    %6565 = vmatprep.subr.bf16.mxu0 0
    %6566 = vmatpush1.bf16.msra.mxu0 %v6532
    %6567 = vmatprep.subr.bf16.mxu0 0
    %6568 = vmatpush1.bf16.msra.mxu0 %v6530
    %6569 = vmatprep.subr.bf16.mxu0 0
    %6570 = vmatpush2.bf16.msra.mxu0 0
    %6571 = vmatprep.subr.bf16.mxu0 0
    %6572 = vmatpush2.bf16.msra.mxu0 0
    %6573 = vmatprep.subr.bf16.mxu0 0
    %6574 = vmatpush2.bf16.msra.mxu0 0
    %6575 = vmatprep.subr.bf16.mxu0 0
    %6576 = vmatpush2.bf16.msra.mxu0 0
    %6577 = vmatprep.subr.bf16.mxu0 0
    %6578 = vmatpush2.bf16.msra.mxu0 0
    %6579 = vmatprep.subr.bf16.mxu0 0
    %6580 = vmatpush2.bf16.msra.mxu0 0
    %6581 = vmatprep.subr.bf16.mxu0 0
    %6582 = vmatpush2.bf16.msra.mxu0 0
    %6583 = vmatprep.subr.bf16.mxu0 0
    %6584 = vmatpush2.bf16.msra.mxu0 0
    %6585 = vmatprep.mubr.bf16.mxu0 0
    %6586 = vmatmul.mubr.bf16.gmra.mxu0 %v6542
    %v6587 = vpop.f32.mrf.mxu0
    %v6588 = vadd.f32 0.0, %v6587
    %v6589 = vpop.f32.mrf.mxu0
    %v6590 = vpop.f32.mrf.mxu0
    %v6591 = vadd.f32 0.0, %v6590
    %v6592 = vpop.f32.mrf.mxu0
    %6593 = vmatprep.mubr.bf16.mxu0 0
    %6594 = vmatmul.mubr.bf16.gmra.mxu0 %v6545
    %v6595 = vpop.f32.mrf.mxu0
    %v6596 = vadd.f32 0.0, %v6595
    %v6597 = vpop.f32.mrf.mxu0
    %v6598 = vpop.f32.mrf.mxu0
    %v6599 = vadd.f32 0.0, %v6598
    %v6600 = vpop.f32.mrf.mxu0
    %6601 = vmatprep.mubr.bf16.mxu0 0
    %6602 = vmatmul.mubr.bf16.gmra.mxu0 %v6548
    %v6603 = vpop.f32.mrf.mxu0
    %v6604 = vadd.f32 0.0, %v6603
    %v6605 = vpop.f32.mrf.mxu0
    %v6606 = vpop.f32.mrf.mxu0
    %v6607 = vadd.f32 0.0, %v6606
    %v6608 = vpop.f32.mrf.mxu0
    %6609 = vmatprep.mubr.bf16.mxu0 0
    %6610 = vmatmul.mubr.bf16.gmra.mxu0 %v6551
    %v6611 = vpop.f32.mrf.mxu0
    %v6612 = vadd.f32 0.0, %v6611
    %v6613 = vpop.f32.mrf.mxu0
    %v6614 = vpop.f32.mrf.mxu0
    %v6615 = vadd.f32 0.0, %v6614
    %v6616 = vpop.f32.mrf.mxu0
    %6617 = vdwg.mxu0
    %v6618 = vpack.c.bf16 %v6502, %v6499
    %v6619 = vpack.c.bf16 %v6510, %v6507
    %v6620 = vpack.c.bf16 %v6518, %v6515
    %v6621 = vpack.c.bf16 %v6526, %v6523
    %v6622 = vpack.c.bf16 %v6591, %v6588
    %v6623 = vpack.c.bf16 %v6599, %v6596
    %v6624 = vpack.c.bf16 %v6607, %v6604
    %v6625 = vpack.c.bf16 %v6615, %v6612
    %s6626 = scalar_lea.vmem %s3, 24
    %v6627 = vld [vmem:[%s6626] sm:$0xf]
    %v6629 = vsel %vm536, %v6618, 0
    %v6632 = vsel %vm536, %v6619, 0
    %v6635 = vsel %vm536, %v6620, 0
    %v6638 = vsel %vm536, %v6621, 0
    %v6641 = vsel %vm536, %v6622, 0
    %v6644 = vsel %vm536, %v6623, 0
    %v6647 = vsel %vm536, %v6624, 0
    %v6650 = vsel %vm536, %v6625, 0
    %v6653 = vsel %vm1722, %v6627, 0
    %6655 = vmatprep.subr.bf16.mxu0 0
    %6656 = vmatpush1.bf16.msra.mxu0 0
    %6657 = vmatprep.subr.bf16.mxu0 0
    %6658 = vmatpush1.bf16.msra.mxu0 0
    %6659 = vmatprep.subr.bf16.mxu0 0
    %6660 = vmatpush1.bf16.msra.mxu0 0
    %6661 = vmatprep.subr.bf16.mxu0 0
    %6662 = vmatpush1.bf16.msra.mxu0 0
    %6663 = vmatprep.subr.bf16.mxu0 0
    %6664 = vmatpush1.bf16.msra.mxu0 0
    %6665 = vmatprep.subr.bf16.mxu0 0
    %6666 = vmatpush1.bf16.msra.mxu0 0
    %6667 = vmatprep.subr.bf16.mxu0 0
    %6668 = vmatpush1.bf16.msra.mxu0 0
    %6669 = vmatprep.subr.bf16.mxu0 0
    %6670 = vmatpush1.bf16.msra.mxu0 %v6653
    %6671 = vmatprep.subr.bf16.mxu0 0
    %6672 = vmatpush2.bf16.msra.mxu0 0
    %6673 = vmatprep.subr.bf16.mxu0 0
    %6674 = vmatpush2.bf16.msra.mxu0 0
    %6675 = vmatprep.subr.bf16.mxu0 0
    %6676 = vmatpush2.bf16.msra.mxu0 0
    %6677 = vmatprep.subr.bf16.mxu0 0
    %6678 = vmatpush2.bf16.msra.mxu0 0
    %6679 = vmatprep.subr.bf16.mxu0 0
    %6680 = vmatpush2.bf16.msra.mxu0 0
    %6681 = vmatprep.subr.bf16.mxu0 0
    %6682 = vmatpush2.bf16.msra.mxu0 0
    %6683 = vmatprep.subr.bf16.mxu0 0
    %6684 = vmatpush2.bf16.msra.mxu0 0
    %6685 = vmatprep.subr.bf16.mxu0 0
    %6686 = vmatpush2.bf16.msra.mxu0 0
    %6687 = vmatprep.mubr.bf16.mxu0 0
    %6688 = vmatmul.mubr.bf16.gmra.mxu0 %v6629
    %v6689 = vpop.f32.mrf.mxu0
    %v6690 = vadd.f32 0.0, %v6689
    %v6691 = vpop.f32.mrf.mxu0
    %v6692 = vpop.f32.mrf.mxu0
    %v6693 = vadd.f32 0.0, %v6692
    %v6694 = vpop.f32.mrf.mxu0
    %6695 = vmatprep.mubr.bf16.mxu0 0
    %6696 = vmatmul.mubr.bf16.gmra.mxu0 %v6632
    %v6697 = vpop.f32.mrf.mxu0
    %v6698 = vadd.f32 0.0, %v6697
    %v6699 = vpop.f32.mrf.mxu0
    %v6700 = vpop.f32.mrf.mxu0
    %v6701 = vadd.f32 0.0, %v6700
    %v6702 = vpop.f32.mrf.mxu0
    %6703 = vmatprep.mubr.bf16.mxu0 0
    %6704 = vmatmul.mubr.bf16.gmra.mxu0 %v6635
    %v6705 = vpop.f32.mrf.mxu0
    %v6706 = vadd.f32 0.0, %v6705
    %v6707 = vpop.f32.mrf.mxu0
    %v6708 = vpop.f32.mrf.mxu0
    %v6709 = vadd.f32 0.0, %v6708
    %v6710 = vpop.f32.mrf.mxu0
    %6711 = vmatprep.mubr.bf16.mxu0 0
    %6712 = vmatmul.mubr.bf16.gmra.mxu0 %v6638
    %v6713 = vpop.f32.mrf.mxu0
    %v6714 = vadd.f32 0.0, %v6713
    %v6715 = vpop.f32.mrf.mxu0
    %v6716 = vpop.f32.mrf.mxu0
    %v6717 = vadd.f32 0.0, %v6716
    %v6718 = vpop.f32.mrf.mxu0
    %6719 = vmatprep.mubr.bf16.mxu0 0
    %6720 = vmatmul.mubr.bf16.gmra.mxu0 %v6641
    %v6721 = vpop.f32.mrf.mxu0
    %v6722 = vadd.f32 0.0, %v6721
    %v6723 = vpop.f32.mrf.mxu0
    %v6724 = vpop.f32.mrf.mxu0
    %v6725 = vadd.f32 0.0, %v6724
    %v6726 = vpop.f32.mrf.mxu0
    %6727 = vmatprep.mubr.bf16.mxu0 0
    %6728 = vmatmul.mubr.bf16.gmra.mxu0 %v6644
    %v6729 = vpop.f32.mrf.mxu0
    %v6730 = vadd.f32 0.0, %v6729
    %v6731 = vpop.f32.mrf.mxu0
    %v6732 = vpop.f32.mrf.mxu0
    %v6733 = vadd.f32 0.0, %v6732
    %v6734 = vpop.f32.mrf.mxu0
    %6735 = vmatprep.mubr.bf16.mxu0 0
    %6736 = vmatmul.mubr.bf16.gmra.mxu0 %v6647
    %v6737 = vpop.f32.mrf.mxu0
    %v6738 = vadd.f32 0.0, %v6737
    %v6739 = vpop.f32.mrf.mxu0
    %v6740 = vpop.f32.mrf.mxu0
    %v6741 = vadd.f32 0.0, %v6740
    %v6742 = vpop.f32.mrf.mxu0
    %6743 = vmatprep.mubr.bf16.mxu0 0
    %6744 = vmatmul.mubr.bf16.gmra.mxu0 %v6650
    %v6745 = vpop.f32.mrf.mxu0
    %v6746 = vadd.f32 0.0, %v6745
    %v6747 = vpop.f32.mrf.mxu0
    %v6748 = vpop.f32.mrf.mxu0
    %v6749 = vadd.f32 0.0, %v6748
    %v6750 = vpop.f32.mrf.mxu0
    %6751 = vdwg.mxu0
    %v6752 = vadd.f32 %v5975, %v6690
    %v6753 = vadd.f32 %v5978, %v6693
    %v6754 = vadd.f32 %v5983, %v6698
    %v6755 = vadd.f32 %v5986, %v6701
    %v6756 = vadd.f32 %v5991, %v6706
    %v6757 = vadd.f32 %v5994, %v6709
    %v6758 = vadd.f32 %v5999, %v6714
    %v6759 = vadd.f32 %v6002, %v6717
    %v6760 = vadd.f32 %v6007, %v6722
    %v6761 = vadd.f32 %v6010, %v6725
    %v6762 = vadd.f32 %v6015, %v6730
    %v6763 = vadd.f32 %v6018, %v6733
    %v6764 = vadd.f32 %v6023, %v6738
    %v6765 = vadd.f32 %v6026, %v6741
    %v6766 = vadd.f32 %v6031, %v6746
    %v6767 = vadd.f32 %v6034, %v6749
    %s6768 = scalar_lea.vmem [#allocation2], 448
    %v6769 = vld [vmem:[%s6768] sm:$0xff]
    %v6770 = vld [vmem:[%s6768 + $0x8] sm:$0xff]
    %v6771 = vld [vmem:[%s6768 + $0x10] sm:$0xff]
    %v6772 = vld [vmem:[%s6768 + $0x18] sm:$0xff]
    %v6773 = vld [vmem:[%s6768 + $0x20] sm:$0xff]
    %v6774 = vld [vmem:[%s6768 + $0x28] sm:$0xff]
    %v6775 = vld [vmem:[%s6768 + $0x30] sm:$0xff]
    %v6776 = vld [vmem:[%s6768 + $0x38] sm:$0xff]
    %6777 = vrot.lane.b32.xlu0 %v4591, 104
    %v6778 = vpop.permute.xlu0 %6777
    %6779 = vrot.lane.b32.xlu0 %v4592, 104
    %v6780 = vpop.permute.xlu0 %6779
    %6781 = vrot.lane.b32.xlu0 %v4593, 104
    %v6782 = vpop.permute.xlu0 %6781
    %6783 = vrot.lane.b32.xlu0 %v4594, 104
    %v6784 = vpop.permute.xlu0 %6783
    %6785 = vrot.lane.b32.xlu0 %v4599, 72
    %v6786 = vpop.permute.xlu0 %6785
    %6787 = vrot.lane.b32.xlu0 %v4600, 72
    %v6788 = vpop.permute.xlu0 %6787
    %6789 = vrot.lane.b32.xlu0 %v4601, 72
    %v6790 = vpop.permute.xlu0 %6789
    %6791 = vrot.lane.b32.xlu0 %v4602, 72
    %v6792 = vpop.permute.xlu0 %6791
    %v6794 = vsel %vm536, %v6778, 0
    %v6797 = vsel %vm536, %v6780, 0
    %v6800 = vsel %vm536, %v6782, 0
    %v6803 = vsel %vm536, %v6784, 0
    %v6806 = vsel %vm536, %v6786, 0
    %v6809 = vsel %vm536, %v6788, 0
    %v6812 = vsel %vm536, %v6790, 0
    %v6815 = vsel %vm536, %v6792, 0
    %6817 = vmatprep.subr.bf16.mxu0 0
    %6818 = vmatpush1.bf16.xpose.msra.mxu0 0
    %6819 = vmatprep.subr.bf16.mxu0 0
    %6820 = vmatpush1.bf16.xpose.msra.mxu0 0
    %6821 = vmatprep.subr.bf16.mxu0 0
    %6822 = vmatpush1.bf16.xpose.msra.mxu0 0
    %6823 = vmatprep.subr.bf16.mxu0 0
    %6824 = vmatpush1.bf16.xpose.msra.mxu0 0
    %6825 = vmatprep.subr.bf16.mxu0 0
    %6826 = vmatpush1.bf16.xpose.msra.mxu0 %v6815
    %6827 = vmatprep.subr.bf16.mxu0 0
    %6828 = vmatpush1.bf16.xpose.msra.mxu0 %v6812
    %6829 = vmatprep.subr.bf16.mxu0 0
    %6830 = vmatpush1.bf16.xpose.msra.mxu0 %v6809
    %6831 = vmatprep.subr.bf16.mxu0 0
    %6832 = vmatpush1.bf16.xpose.msra.mxu0 %v6806
    %6833 = vmatprep.subr.bf16.mxu0 0
    %6834 = vmatpush2.bf16.xpose.msra.mxu0 0
    %6835 = vmatprep.subr.bf16.mxu0 0
    %6836 = vmatpush2.bf16.xpose.msra.mxu0 0
    %6837 = vmatprep.subr.bf16.mxu0 0
    %6838 = vmatpush2.bf16.xpose.msra.mxu0 0
    %6839 = vmatprep.subr.bf16.mxu0 0
    %6840 = vmatpush2.bf16.xpose.msra.mxu0 0
    %6841 = vmatprep.subr.bf16.mxu0 0
    %6842 = vmatpush2.bf16.xpose.msra.mxu0 0
    %6843 = vmatprep.subr.bf16.mxu0 0
    %6844 = vmatpush2.bf16.xpose.msra.mxu0 0
    %6845 = vmatprep.subr.bf16.mxu0 0
    %6846 = vmatpush2.bf16.xpose.msra.mxu0 0
    %6847 = vmatprep.subr.bf16.mxu0 0
    %6848 = vmatpush2.bf16.xpose.msra.mxu0 0
    %6849 = vmatprep.mubr.bf16.mxu0 0
    %6850 = vmatmul.mubr.bf16.gmra.mxu0 %v6794
    %v6851 = vpop.f32.mrf.mxu0
    %v6852 = vadd.f32 %v6769, %v6851
    %v6853 = vpop.f32.mrf.mxu0
    %v6854 = vpop.f32.mrf.mxu0
    %v6855 = vadd.f32 %v6770, %v6854
    %v6856 = vpop.f32.mrf.mxu0
    %6857 = vmatprep.mubr.bf16.mxu0 0
    %6858 = vmatmul.mubr.bf16.gmra.mxu0 %v6797
    %v6859 = vpop.f32.mrf.mxu0
    %v6860 = vadd.f32 %v6771, %v6859
    %v6861 = vpop.f32.mrf.mxu0
    %v6862 = vpop.f32.mrf.mxu0
    %v6863 = vadd.f32 %v6772, %v6862
    %v6864 = vpop.f32.mrf.mxu0
    %6865 = vmatprep.mubr.bf16.mxu0 0
    %6866 = vmatmul.mubr.bf16.gmra.mxu0 %v6800
    %v6867 = vpop.f32.mrf.mxu0
    %v6868 = vadd.f32 %v6773, %v6867
    %v6869 = vpop.f32.mrf.mxu0
    %v6870 = vpop.f32.mrf.mxu0
    %v6871 = vadd.f32 %v6774, %v6870
    %v6872 = vpop.f32.mrf.mxu0
    %6873 = vmatprep.mubr.bf16.mxu0 0
    %6874 = vmatmul.mubr.bf16.gmra.mxu0 %v6803
    %v6875 = vpop.f32.mrf.mxu0
    %v6876 = vadd.f32 %v6775, %v6875
    %v6877 = vpop.f32.mrf.mxu0
    %v6878 = vpop.f32.mrf.mxu0
    %v6879 = vadd.f32 %v6776, %v6878
    %v6880 = vpop.f32.mrf.mxu0
    %6881 = vdwg.mxu0
    %6882 = vrot.lane.b32.xlu0 %v4595, 104
    %v6883 = vpop.permute.xlu0 %6882
    %6884 = vrot.lane.b32.xlu0 %v4596, 104
    %v6885 = vpop.permute.xlu0 %6884
    %6886 = vrot.lane.b32.xlu0 %v4597, 104
    %v6887 = vpop.permute.xlu0 %6886
    %6888 = vrot.lane.b32.xlu0 %v4598, 104
    %v6889 = vpop.permute.xlu0 %6888
    %6890 = vrot.lane.b32.xlu0 %v4603, 72
    %v6891 = vpop.permute.xlu0 %6890
    %6892 = vrot.lane.b32.xlu0 %v4604, 72
    %v6893 = vpop.permute.xlu0 %6892
    %6894 = vrot.lane.b32.xlu0 %v4605, 72
    %v6895 = vpop.permute.xlu0 %6894
    %6896 = vrot.lane.b32.xlu0 %v4606, 72
    %v6897 = vpop.permute.xlu0 %6896
    %v6899 = vsel %vm536, %v6883, 0
    %v6902 = vsel %vm536, %v6885, 0
    %v6905 = vsel %vm536, %v6887, 0
    %v6908 = vsel %vm536, %v6889, 0
    %v6911 = vsel %vm536, %v6891, 0
    %v6914 = vsel %vm536, %v6893, 0
    %v6917 = vsel %vm536, %v6895, 0
    %v6920 = vsel %vm536, %v6897, 0
    %6922 = vmatprep.subr.bf16.mxu0 0
    %6923 = vmatpush1.bf16.xpose.msra.mxu0 0
    %6924 = vmatprep.subr.bf16.mxu0 0
    %6925 = vmatpush1.bf16.xpose.msra.mxu0 0
    %6926 = vmatprep.subr.bf16.mxu0 0
    %6927 = vmatpush1.bf16.xpose.msra.mxu0 0
    %6928 = vmatprep.subr.bf16.mxu0 0
    %6929 = vmatpush1.bf16.xpose.msra.mxu0 0
    %6930 = vmatprep.subr.bf16.mxu0 0
    %6931 = vmatpush1.bf16.xpose.msra.mxu0 %v6920
    %6932 = vmatprep.subr.bf16.mxu0 0
    %6933 = vmatpush1.bf16.xpose.msra.mxu0 %v6917
    %6934 = vmatprep.subr.bf16.mxu0 0
    %6935 = vmatpush1.bf16.xpose.msra.mxu0 %v6914
    %6936 = vmatprep.subr.bf16.mxu0 0
    %6937 = vmatpush1.bf16.xpose.msra.mxu0 %v6911
    %6938 = vmatprep.subr.bf16.mxu0 0
    %6939 = vmatpush2.bf16.xpose.msra.mxu0 0
    %6940 = vmatprep.subr.bf16.mxu0 0
    %6941 = vmatpush2.bf16.xpose.msra.mxu0 0
    %6942 = vmatprep.subr.bf16.mxu0 0
    %6943 = vmatpush2.bf16.xpose.msra.mxu0 0
    %6944 = vmatprep.subr.bf16.mxu0 0
    %6945 = vmatpush2.bf16.xpose.msra.mxu0 0
    %6946 = vmatprep.subr.bf16.mxu0 0
    %6947 = vmatpush2.bf16.xpose.msra.mxu0 0
    %6948 = vmatprep.subr.bf16.mxu0 0
    %6949 = vmatpush2.bf16.xpose.msra.mxu0 0
    %6950 = vmatprep.subr.bf16.mxu0 0
    %6951 = vmatpush2.bf16.xpose.msra.mxu0 0
    %6952 = vmatprep.subr.bf16.mxu0 0
    %6953 = vmatpush2.bf16.xpose.msra.mxu0 0
    %6954 = vmatprep.mubr.bf16.mxu0 0
    %6955 = vmatmul.mubr.bf16.gmra.mxu0 %v6899
    %v6956 = vpop.f32.mrf.mxu0
    %v6957 = vadd.f32 %v6769, %v6956
    %v6958 = vpop.f32.mrf.mxu0
    %v6959 = vpop.f32.mrf.mxu0
    %v6960 = vadd.f32 %v6770, %v6959
    %v6961 = vpop.f32.mrf.mxu0
    %6962 = vmatprep.mubr.bf16.mxu0 0
    %6963 = vmatmul.mubr.bf16.gmra.mxu0 %v6902
    %v6964 = vpop.f32.mrf.mxu0
    %v6965 = vadd.f32 %v6771, %v6964
    %v6966 = vpop.f32.mrf.mxu0
    %v6967 = vpop.f32.mrf.mxu0
    %v6968 = vadd.f32 %v6772, %v6967
    %v6969 = vpop.f32.mrf.mxu0
    %6970 = vmatprep.mubr.bf16.mxu0 0
    %6971 = vmatmul.mubr.bf16.gmra.mxu0 %v6905
    %v6972 = vpop.f32.mrf.mxu0
    %v6973 = vadd.f32 %v6773, %v6972
    %v6974 = vpop.f32.mrf.mxu0
    %v6975 = vpop.f32.mrf.mxu0
    %v6976 = vadd.f32 %v6774, %v6975
    %v6977 = vpop.f32.mrf.mxu0
    %6978 = vmatprep.mubr.bf16.mxu0 0
    %6979 = vmatmul.mubr.bf16.gmra.mxu0 %v6908
    %v6980 = vpop.f32.mrf.mxu0
    %v6981 = vadd.f32 %v6775, %v6980
    %v6982 = vpop.f32.mrf.mxu0
    %v6983 = vpop.f32.mrf.mxu0
    %v6984 = vadd.f32 %v6776, %v6983
    %v6985 = vpop.f32.mrf.mxu0
    %6986 = vdwg.mxu0
    %v6987 = vsel %vm727, %v6852, -inf
    %6988 = vmax.xlane.f32.xlu0 %v6987
    %v6989 = vpop.xlane.xlu0 %6988
    %v6990 = vsel %vm727, %v6855, -inf
    %6991 = vmax.xlane.f32.xlu0 %v6990
    %v6992 = vpop.xlane.xlu0 %6991
    %v6993 = vsel %vm727, %v6860, -inf
    %6994 = vmax.xlane.f32.xlu0 %v6993
    %v6995 = vpop.xlane.xlu0 %6994
    %v6996 = vsel %vm727, %v6863, -inf
    %6997 = vmax.xlane.f32.xlu0 %v6996
    %v6998 = vpop.xlane.xlu0 %6997
    %v6999 = vsel %vm727, %v6868, -inf
    %7000 = vmax.xlane.f32.xlu0 %v6999
    %v7001 = vpop.xlane.xlu0 %7000
    %v7002 = vsel %vm727, %v6871, -inf
    %7003 = vmax.xlane.f32.xlu0 %v7002
    %v7004 = vpop.xlane.xlu0 %7003
    %v7005 = vsel %vm727, %v6876, -inf
    %7006 = vmax.xlane.f32.xlu0 %v7005
    %v7007 = vpop.xlane.xlu0 %7006
    %v7008 = vsel %vm727, %v6879, -inf
    %7009 = vmax.xlane.f32.xlu0 %v7008
    %v7010 = vpop.xlane.xlu0 %7009
    %v7011 = vsel %vm727, %v6957, -inf
    %7012 = vmax.xlane.f32.xlu0 %v7011
    %v7013 = vpop.xlane.xlu0 %7012
    %v7014 = vsel %vm727, %v6960, -inf
    %7015 = vmax.xlane.f32.xlu0 %v7014
    %v7016 = vpop.xlane.xlu0 %7015
    %v7017 = vsel %vm727, %v6965, -inf
    %7018 = vmax.xlane.f32.xlu0 %v7017
    %v7019 = vpop.xlane.xlu0 %7018
    %v7020 = vsel %vm727, %v6968, -inf
    %7021 = vmax.xlane.f32.xlu0 %v7020
    %v7022 = vpop.xlane.xlu0 %7021
    %v7023 = vsel %vm727, %v6973, -inf
    %7024 = vmax.xlane.f32.xlu0 %v7023
    %v7025 = vpop.xlane.xlu0 %7024
    %v7026 = vsel %vm727, %v6976, -inf
    %7027 = vmax.xlane.f32.xlu0 %v7026
    %v7028 = vpop.xlane.xlu0 %7027
    %v7029 = vsel %vm727, %v6981, -inf
    %7030 = vmax.xlane.f32.xlu0 %v7029
    %v7031 = vpop.xlane.xlu0 %7030
    %v7032 = vsel %vm727, %v6984, -inf
    %7033 = vmax.xlane.f32.xlu0 %v7032
    %v7034 = vpop.xlane.xlu0 %7033
    %v7035 = vsub.f32 %v6852, %v6989
    %v7036 = vsub.f32 %v6855, %v6992
    %v7037 = vsub.f32 %v6860, %v6995
    %v7038 = vsub.f32 %v6863, %v6998
    %v7039 = vsub.f32 %v6868, %v7001
    %v7040 = vsub.f32 %v6871, %v7004
    %v7041 = vsub.f32 %v6876, %v7007
    %v7042 = vsub.f32 %v6879, %v7010
    %v7043 = vsub.f32 %v6957, %v7013
    %v7044 = vsub.f32 %v6960, %v7016
    %v7045 = vsub.f32 %v6965, %v7019
    %v7046 = vsub.f32 %v6968, %v7022
    %v7047 = vsub.f32 %v6973, %v7025
    %v7048 = vsub.f32 %v6976, %v7028
    %v7049 = vsub.f32 %v6981, %v7031
    %v7050 = vsub.f32 %v6984, %v7034
    %v7051 = vmul.f32 %v7035, 1.442695
    %v7052 = vpow.pop %v7051
    %v7053 = vmul.f32 %v7036, 1.442695
    %v7054 = vpow.pop %v7053
    %v7055 = vmul.f32 %v7037, 1.442695
    %v7056 = vpow.pop %v7055
    %v7057 = vmul.f32 %v7038, 1.442695
    %v7058 = vpow.pop %v7057
    %v7059 = vmul.f32 %v7039, 1.442695
    %v7060 = vpow.pop %v7059
    %v7061 = vmul.f32 %v7040, 1.442695
    %v7062 = vpow.pop %v7061
    %v7063 = vmul.f32 %v7041, 1.442695
    %v7064 = vpow.pop %v7063
    %v7065 = vmul.f32 %v7042, 1.442695
    %v7066 = vpow.pop %v7065
    %v7067 = vmul.f32 %v7043, 1.442695
    %v7068 = vpow.pop %v7067
    %v7069 = vmul.f32 %v7044, 1.442695
    %v7070 = vpow.pop %v7069
    %v7071 = vmul.f32 %v7045, 1.442695
    %v7072 = vpow.pop %v7071
    %v7073 = vmul.f32 %v7046, 1.442695
    %v7074 = vpow.pop %v7073
    %v7075 = vmul.f32 %v7047, 1.442695
    %v7076 = vpow.pop %v7075
    %v7077 = vmul.f32 %v7048, 1.442695
    %v7078 = vpow.pop %v7077
    %v7079 = vmul.f32 %v7049, 1.442695
    %v7080 = vpow.pop %v7079
    %v7081 = vmul.f32 %v7050, 1.442695
    %v7082 = vpow.pop %v7081
    %v7083 = vsel %vm727, %v7052, 0.0
    %7084 = vadd.xlane.f32.xlu0 %v7083
    %v7085 = vpop.xlane.xlu0 %7084
    %v7086 = vsel %vm727, %v7054, 0.0
    %7087 = vadd.xlane.f32.xlu0 %v7086
    %v7088 = vpop.xlane.xlu0 %7087
    %v7089 = vsel %vm727, %v7056, 0.0
    %7090 = vadd.xlane.f32.xlu0 %v7089
    %v7091 = vpop.xlane.xlu0 %7090
    %v7092 = vsel %vm727, %v7058, 0.0
    %7093 = vadd.xlane.f32.xlu0 %v7092
    %v7094 = vpop.xlane.xlu0 %7093
    %v7095 = vsel %vm727, %v7060, 0.0
    %7096 = vadd.xlane.f32.xlu0 %v7095
    %v7097 = vpop.xlane.xlu0 %7096
    %v7098 = vsel %vm727, %v7062, 0.0
    %7099 = vadd.xlane.f32.xlu0 %v7098
    %v7100 = vpop.xlane.xlu0 %7099
    %v7101 = vsel %vm727, %v7064, 0.0
    %7102 = vadd.xlane.f32.xlu0 %v7101
    %v7103 = vpop.xlane.xlu0 %7102
    %v7104 = vsel %vm727, %v7066, 0.0
    %7105 = vadd.xlane.f32.xlu0 %v7104
    %v7106 = vpop.xlane.xlu0 %7105
    %v7107 = vsel %vm727, %v7068, 0.0
    %7108 = vadd.xlane.f32.xlu0 %v7107
    %v7109 = vpop.xlane.xlu0 %7108
    %v7110 = vsel %vm727, %v7070, 0.0
    %7111 = vadd.xlane.f32.xlu0 %v7110
    %v7112 = vpop.xlane.xlu0 %7111
    %v7113 = vsel %vm727, %v7072, 0.0
    %7114 = vadd.xlane.f32.xlu0 %v7113
    %v7115 = vpop.xlane.xlu0 %7114
    %v7116 = vsel %vm727, %v7074, 0.0
    %7117 = vadd.xlane.f32.xlu0 %v7116
    %v7118 = vpop.xlane.xlu0 %7117
    %v7119 = vsel %vm727, %v7076, 0.0
    %7120 = vadd.xlane.f32.xlu0 %v7119
    %v7121 = vpop.xlane.xlu0 %7120
    %v7122 = vsel %vm727, %v7078, 0.0
    %7123 = vadd.xlane.f32.xlu0 %v7122
    %v7124 = vpop.xlane.xlu0 %7123
    %v7125 = vsel %vm727, %v7080, 0.0
    %7126 = vadd.xlane.f32.xlu0 %v7125
    %v7127 = vpop.xlane.xlu0 %7126
    %v7128 = vsel %vm727, %v7082, 0.0
    %7129 = vadd.xlane.f32.xlu0 %v7128
    %v7130 = vpop.xlane.xlu0 %7129
    %v7131 = vrcp.pop %v7085
    %v7132 = vrcp.pop %v7088
    %v7133 = vrcp.pop %v7091
    %v7134 = vrcp.pop %v7094
    %v7135 = vrcp.pop %v7097
    %v7136 = vrcp.pop %v7100
    %v7137 = vrcp.pop %v7103
    %v7138 = vrcp.pop %v7106
    %v7139 = vrcp.pop %v7109
    %v7140 = vrcp.pop %v7112
    %v7141 = vrcp.pop %v7115
    %v7142 = vrcp.pop %v7118
    %v7143 = vrcp.pop %v7121
    %v7144 = vrcp.pop %v7124
    %v7145 = vrcp.pop %v7127
    %v7146 = vrcp.pop %v7130
    %v7147 = vmul.f32 %v7052, %v7131
    %v7148 = vmul.f32 %v7054, %v7132
    %v7149 = vmul.f32 %v7056, %v7133
    %v7150 = vmul.f32 %v7058, %v7134
    %v7151 = vmul.f32 %v7060, %v7135
    %v7152 = vmul.f32 %v7062, %v7136
    %v7153 = vmul.f32 %v7064, %v7137
    %v7154 = vmul.f32 %v7066, %v7138
    %v7155 = vmul.f32 %v7068, %v7139
    %v7156 = vmul.f32 %v7070, %v7140
    %v7157 = vmul.f32 %v7072, %v7141
    %v7158 = vmul.f32 %v7074, %v7142
    %v7159 = vmul.f32 %v7076, %v7143
    %v7160 = vmul.f32 %v7078, %v7144
    %v7161 = vmul.f32 %v7080, %v7145
    %v7162 = vmul.f32 %v7082, %v7146
    %v7163 = vpack.c.bf16 %v7148, %v7147
    %v7164 = vpack.c.bf16 %v7150, %v7149
    %v7165 = vpack.c.bf16 %v7152, %v7151
    %v7166 = vpack.c.bf16 %v7154, %v7153
    %v7167 = vpack.c.bf16 %v7156, %v7155
    %v7168 = vpack.c.bf16 %v7158, %v7157
    %v7169 = vpack.c.bf16 %v7160, %v7159
    %v7170 = vpack.c.bf16 %v7162, %v7161
    %7171 = vrot.lane.b32.xlu0 %v4599, 40
    %v7172 = vpop.permute.xlu0 %7171
    %7173 = vrot.lane.b32.xlu0 %v4600, 40
    %v7174 = vpop.permute.xlu0 %7173
    %7175 = vrot.lane.b32.xlu0 %v4601, 40
    %v7176 = vpop.permute.xlu0 %7175
    %7177 = vrot.lane.b32.xlu0 %v4602, 40
    %v7178 = vpop.permute.xlu0 %7177
    %v7184 = vsel %vm727, %v7163, 0
    %v7187 = vsel %vm727, %v7164, 0
    %v7190 = vsel %vm727, %v7165, 0
    %v7193 = vsel %vm727, %v7166, 0
    %7195 = vmatprep.subr.bf16.mxu0 0
    %7196 = vmatpush1.bf16.msra.mxu0 0
    %7197 = vmatprep.subr.bf16.mxu0 0
    %7198 = vmatpush1.bf16.msra.mxu0 0
    %7199 = vmatprep.subr.bf16.mxu0 0
    %7200 = vmatpush1.bf16.msra.mxu0 0
    %7201 = vmatprep.subr.bf16.mxu0 0
    %7202 = vmatpush1.bf16.msra.mxu0 0
    %7203 = vmatprep.subr.bf16.mxu0 0
    %7204 = vmatpush1.bf16.msra.mxu0 %v7178
    %7205 = vmatprep.subr.bf16.mxu0 0
    %7206 = vmatpush1.bf16.msra.mxu0 %v7176
    %7207 = vmatprep.subr.bf16.mxu0 0
    %7208 = vmatpush1.bf16.msra.mxu0 %v7174
    %7209 = vmatprep.subr.bf16.mxu0 0
    %7210 = vmatpush1.bf16.msra.mxu0 %v7172
    %7211 = vmatprep.subr.bf16.mxu0 0
    %7212 = vmatpush2.bf16.msra.mxu0 0
    %7213 = vmatprep.subr.bf16.mxu0 0
    %7214 = vmatpush2.bf16.msra.mxu0 0
    %7215 = vmatprep.subr.bf16.mxu0 0
    %7216 = vmatpush2.bf16.msra.mxu0 0
    %7217 = vmatprep.subr.bf16.mxu0 0
    %7218 = vmatpush2.bf16.msra.mxu0 0
    %7219 = vmatprep.subr.bf16.mxu0 0
    %7220 = vmatpush2.bf16.msra.mxu0 0
    %7221 = vmatprep.subr.bf16.mxu0 0
    %7222 = vmatpush2.bf16.msra.mxu0 0
    %7223 = vmatprep.subr.bf16.mxu0 0
    %7224 = vmatpush2.bf16.msra.mxu0 0
    %7225 = vmatprep.subr.bf16.mxu0 0
    %7226 = vmatpush2.bf16.msra.mxu0 0
    %7227 = vmatprep.mubr.bf16.mxu0 0
    %7228 = vmatmul.mubr.bf16.gmra.mxu0 %v7184
    %v7229 = vpop.f32.mrf.mxu0
    %v7230 = vadd.f32 0.0, %v7229
    %v7231 = vpop.f32.mrf.mxu0
    %v7232 = vpop.f32.mrf.mxu0
    %v7233 = vadd.f32 0.0, %v7232
    %v7234 = vpop.f32.mrf.mxu0
    %7235 = vmatprep.mubr.bf16.mxu0 0
    %7236 = vmatmul.mubr.bf16.gmra.mxu0 %v7187
    %v7237 = vpop.f32.mrf.mxu0
    %v7238 = vadd.f32 0.0, %v7237
    %v7239 = vpop.f32.mrf.mxu0
    %v7240 = vpop.f32.mrf.mxu0
    %v7241 = vadd.f32 0.0, %v7240
    %v7242 = vpop.f32.mrf.mxu0
    %7243 = vmatprep.mubr.bf16.mxu0 0
    %7244 = vmatmul.mubr.bf16.gmra.mxu0 %v7190
    %v7245 = vpop.f32.mrf.mxu0
    %v7246 = vadd.f32 0.0, %v7245
    %v7247 = vpop.f32.mrf.mxu0
    %v7248 = vpop.f32.mrf.mxu0
    %v7249 = vadd.f32 0.0, %v7248
    %v7250 = vpop.f32.mrf.mxu0
    %7251 = vmatprep.mubr.bf16.mxu0 0
    %7252 = vmatmul.mubr.bf16.gmra.mxu0 %v7193
    %v7253 = vpop.f32.mrf.mxu0
    %v7254 = vadd.f32 0.0, %v7253
    %v7255 = vpop.f32.mrf.mxu0
    %v7256 = vpop.f32.mrf.mxu0
    %v7257 = vadd.f32 0.0, %v7256
    %v7258 = vpop.f32.mrf.mxu0
    %7259 = vdwg.mxu0
    %7260 = vrot.lane.b32.xlu0 %v4603, 40
    %v7261 = vpop.permute.xlu0 %7260
    %7262 = vrot.lane.b32.xlu0 %v4604, 40
    %v7263 = vpop.permute.xlu0 %7262
    %7264 = vrot.lane.b32.xlu0 %v4605, 40
    %v7265 = vpop.permute.xlu0 %7264
    %7266 = vrot.lane.b32.xlu0 %v4606, 40
    %v7267 = vpop.permute.xlu0 %7266
    %v7273 = vsel %vm727, %v7167, 0
    %v7276 = vsel %vm727, %v7168, 0
    %v7279 = vsel %vm727, %v7169, 0
    %v7282 = vsel %vm727, %v7170, 0
    %7284 = vmatprep.subr.bf16.mxu0 0
    %7285 = vmatpush1.bf16.msra.mxu0 0
    %7286 = vmatprep.subr.bf16.mxu0 0
    %7287 = vmatpush1.bf16.msra.mxu0 0
    %7288 = vmatprep.subr.bf16.mxu0 0
    %7289 = vmatpush1.bf16.msra.mxu0 0
    %7290 = vmatprep.subr.bf16.mxu0 0
    %7291 = vmatpush1.bf16.msra.mxu0 0
    %7292 = vmatprep.subr.bf16.mxu0 0
    %7293 = vmatpush1.bf16.msra.mxu0 %v7267
    %7294 = vmatprep.subr.bf16.mxu0 0
    %7295 = vmatpush1.bf16.msra.mxu0 %v7265
    %7296 = vmatprep.subr.bf16.mxu0 0
    %7297 = vmatpush1.bf16.msra.mxu0 %v7263
    %7298 = vmatprep.subr.bf16.mxu0 0
    %7299 = vmatpush1.bf16.msra.mxu0 %v7261
    %7300 = vmatprep.subr.bf16.mxu0 0
    %7301 = vmatpush2.bf16.msra.mxu0 0
    %7302 = vmatprep.subr.bf16.mxu0 0
    %7303 = vmatpush2.bf16.msra.mxu0 0
    %7304 = vmatprep.subr.bf16.mxu0 0
    %7305 = vmatpush2.bf16.msra.mxu0 0
    %7306 = vmatprep.subr.bf16.mxu0 0
    %7307 = vmatpush2.bf16.msra.mxu0 0
    %7308 = vmatprep.subr.bf16.mxu0 0
    %7309 = vmatpush2.bf16.msra.mxu0 0
    %7310 = vmatprep.subr.bf16.mxu0 0
    %7311 = vmatpush2.bf16.msra.mxu0 0
    %7312 = vmatprep.subr.bf16.mxu0 0
    %7313 = vmatpush2.bf16.msra.mxu0 0
    %7314 = vmatprep.subr.bf16.mxu0 0
    %7315 = vmatpush2.bf16.msra.mxu0 0
    %7316 = vmatprep.mubr.bf16.mxu0 0
    %7317 = vmatmul.mubr.bf16.gmra.mxu0 %v7273
    %v7318 = vpop.f32.mrf.mxu0
    %v7319 = vadd.f32 0.0, %v7318
    %v7320 = vpop.f32.mrf.mxu0
    %v7321 = vpop.f32.mrf.mxu0
    %v7322 = vadd.f32 0.0, %v7321
    %v7323 = vpop.f32.mrf.mxu0
    %7324 = vmatprep.mubr.bf16.mxu0 0
    %7325 = vmatmul.mubr.bf16.gmra.mxu0 %v7276
    %v7326 = vpop.f32.mrf.mxu0
    %v7327 = vadd.f32 0.0, %v7326
    %v7328 = vpop.f32.mrf.mxu0
    %v7329 = vpop.f32.mrf.mxu0
    %v7330 = vadd.f32 0.0, %v7329
    %v7331 = vpop.f32.mrf.mxu0
    %7332 = vmatprep.mubr.bf16.mxu0 0
    %7333 = vmatmul.mubr.bf16.gmra.mxu0 %v7279
    %v7334 = vpop.f32.mrf.mxu0
    %v7335 = vadd.f32 0.0, %v7334
    %v7336 = vpop.f32.mrf.mxu0
    %v7337 = vpop.f32.mrf.mxu0
    %v7338 = vadd.f32 0.0, %v7337
    %v7339 = vpop.f32.mrf.mxu0
    %7340 = vmatprep.mubr.bf16.mxu0 0
    %7341 = vmatmul.mubr.bf16.gmra.mxu0 %v7282
    %v7342 = vpop.f32.mrf.mxu0
    %v7343 = vadd.f32 0.0, %v7342
    %v7344 = vpop.f32.mrf.mxu0
    %v7345 = vpop.f32.mrf.mxu0
    %v7346 = vadd.f32 0.0, %v7345
    %v7347 = vpop.f32.mrf.mxu0
    %7348 = vdwg.mxu0
    %v7349 = vpack.c.bf16 %v7233, %v7230
    %v7350 = vpack.c.bf16 %v7241, %v7238
    %v7351 = vpack.c.bf16 %v7249, %v7246
    %v7352 = vpack.c.bf16 %v7257, %v7254
    %v7353 = vpack.c.bf16 %v7322, %v7319
    %v7354 = vpack.c.bf16 %v7330, %v7327
    %v7355 = vpack.c.bf16 %v7338, %v7335
    %v7356 = vpack.c.bf16 %v7346, %v7343
    %s7357 = scalar_lea.vmem %s3, 28
    %v7358 = vld [vmem:[%s7357] sm:$0xf]
    %v7360 = vsel %vm536, %v7349, 0
    %v7363 = vsel %vm536, %v7350, 0
    %v7366 = vsel %vm536, %v7351, 0
    %v7369 = vsel %vm536, %v7352, 0
    %v7372 = vsel %vm536, %v7353, 0
    %v7375 = vsel %vm536, %v7354, 0
    %v7378 = vsel %vm536, %v7355, 0
    %v7381 = vsel %vm536, %v7356, 0
    %v7384 = vsel %vm1722, %v7358, 0
    %7386 = vmatprep.subr.bf16.mxu0 0
    %7387 = vmatpush1.bf16.msra.mxu0 0
    %7388 = vmatprep.subr.bf16.mxu0 0
    %7389 = vmatpush1.bf16.msra.mxu0 0
    %7390 = vmatprep.subr.bf16.mxu0 0
    %7391 = vmatpush1.bf16.msra.mxu0 0
    %7392 = vmatprep.subr.bf16.mxu0 0
    %7393 = vmatpush1.bf16.msra.mxu0 0
    %7394 = vmatprep.subr.bf16.mxu0 0
    %7395 = vmatpush1.bf16.msra.mxu0 0
    %7396 = vmatprep.subr.bf16.mxu0 0
    %7397 = vmatpush1.bf16.msra.mxu0 0
    %7398 = vmatprep.subr.bf16.mxu0 0
    %7399 = vmatpush1.bf16.msra.mxu0 0
    %7400 = vmatprep.subr.bf16.mxu0 0
    %7401 = vmatpush1.bf16.msra.mxu0 %v7384
    %7402 = vmatprep.subr.bf16.mxu0 0
    %7403 = vmatpush2.bf16.msra.mxu0 0
    %7404 = vmatprep.subr.bf16.mxu0 0
    %7405 = vmatpush2.bf16.msra.mxu0 0
    %7406 = vmatprep.subr.bf16.mxu0 0
    %7407 = vmatpush2.bf16.msra.mxu0 0
    %7408 = vmatprep.subr.bf16.mxu0 0
    %7409 = vmatpush2.bf16.msra.mxu0 0
    %7410 = vmatprep.subr.bf16.mxu0 0
    %7411 = vmatpush2.bf16.msra.mxu0 0
    %7412 = vmatprep.subr.bf16.mxu0 0
    %7413 = vmatpush2.bf16.msra.mxu0 0
    %7414 = vmatprep.subr.bf16.mxu0 0
    %7415 = vmatpush2.bf16.msra.mxu0 0
    %7416 = vmatprep.subr.bf16.mxu0 0
    %7417 = vmatpush2.bf16.msra.mxu0 0
    %7418 = vmatprep.mubr.bf16.mxu0 0
    %7419 = vmatmul.mubr.bf16.gmra.mxu0 %v7360
    %v7420 = vpop.f32.mrf.mxu0
    %v7421 = vadd.f32 0.0, %v7420
    %v7422 = vpop.f32.mrf.mxu0
    %v7423 = vpop.f32.mrf.mxu0
    %v7424 = vadd.f32 0.0, %v7423
    %v7425 = vpop.f32.mrf.mxu0
    %7426 = vmatprep.mubr.bf16.mxu0 0
    %7427 = vmatmul.mubr.bf16.gmra.mxu0 %v7363
    %v7428 = vpop.f32.mrf.mxu0
    %v7429 = vadd.f32 0.0, %v7428
    %v7430 = vpop.f32.mrf.mxu0
    %v7431 = vpop.f32.mrf.mxu0
    %v7432 = vadd.f32 0.0, %v7431
    %v7433 = vpop.f32.mrf.mxu0
    %7434 = vmatprep.mubr.bf16.mxu0 0
    %7435 = vmatmul.mubr.bf16.gmra.mxu0 %v7366
    %v7436 = vpop.f32.mrf.mxu0
    %v7437 = vadd.f32 0.0, %v7436
    %v7438 = vpop.f32.mrf.mxu0
    %v7439 = vpop.f32.mrf.mxu0
    %v7440 = vadd.f32 0.0, %v7439
    %v7441 = vpop.f32.mrf.mxu0
    %7442 = vmatprep.mubr.bf16.mxu0 0
    %7443 = vmatmul.mubr.bf16.gmra.mxu0 %v7369
    %v7444 = vpop.f32.mrf.mxu0
    %v7445 = vadd.f32 0.0, %v7444
    %v7446 = vpop.f32.mrf.mxu0
    %v7447 = vpop.f32.mrf.mxu0
    %v7448 = vadd.f32 0.0, %v7447
    %v7449 = vpop.f32.mrf.mxu0
    %7450 = vmatprep.mubr.bf16.mxu0 0
    %7451 = vmatmul.mubr.bf16.gmra.mxu0 %v7372
    %v7452 = vpop.f32.mrf.mxu0
    %v7453 = vadd.f32 0.0, %v7452
    %v7454 = vpop.f32.mrf.mxu0
    %v7455 = vpop.f32.mrf.mxu0
    %v7456 = vadd.f32 0.0, %v7455
    %v7457 = vpop.f32.mrf.mxu0
    %7458 = vmatprep.mubr.bf16.mxu0 0
    %7459 = vmatmul.mubr.bf16.gmra.mxu0 %v7375
    %v7460 = vpop.f32.mrf.mxu0
    %v7461 = vadd.f32 0.0, %v7460
    %v7462 = vpop.f32.mrf.mxu0
    %v7463 = vpop.f32.mrf.mxu0
    %v7464 = vadd.f32 0.0, %v7463
    %v7465 = vpop.f32.mrf.mxu0
    %7466 = vmatprep.mubr.bf16.mxu0 0
    %7467 = vmatmul.mubr.bf16.gmra.mxu0 %v7378
    %v7468 = vpop.f32.mrf.mxu0
    %v7469 = vadd.f32 0.0, %v7468
    %v7470 = vpop.f32.mrf.mxu0
    %v7471 = vpop.f32.mrf.mxu0
    %v7472 = vadd.f32 0.0, %v7471
    %v7473 = vpop.f32.mrf.mxu0
    %7474 = vmatprep.mubr.bf16.mxu0 0
    %7475 = vmatmul.mubr.bf16.gmra.mxu0 %v7381
    %v7476 = vpop.f32.mrf.mxu0
    %v7477 = vadd.f32 0.0, %v7476
    %v7478 = vpop.f32.mrf.mxu0
    %v7479 = vpop.f32.mrf.mxu0
    %v7480 = vadd.f32 0.0, %v7479
    %v7481 = vpop.f32.mrf.mxu0
    %7482 = vdwg.mxu0
    %v7483 = vadd.f32 %v6752, %v7421
    %v7484 = vadd.f32 %v6753, %v7424
    %v7485 = vadd.f32 %v6754, %v7429
    %v7486 = vadd.f32 %v6755, %v7432
    %v7487 = vadd.f32 %v6756, %v7437
    %v7488 = vadd.f32 %v6757, %v7440
    %v7489 = vadd.f32 %v6758, %v7445
    %v7490 = vadd.f32 %v6759, %v7448
    %v7491 = vadd.f32 %v6760, %v7453
    %v7492 = vadd.f32 %v6761, %v7456
    %v7493 = vadd.f32 %v6762, %v7461
    %v7494 = vadd.f32 %v6763, %v7464
    %v7495 = vadd.f32 %v6764, %v7469
    %v7496 = vadd.f32 %v6765, %v7472
    %v7497 = vadd.f32 %v6766, %v7477
    %v7498 = vadd.f32 %v6767, %v7480
    %v7499 = vadd.f32 %v4159, %v7483
    %v7500 = vadd.f32 %v4160, %v7484
    %v7501 = vadd.f32 %v4161, %v7485
    %v7502 = vadd.f32 %v4162, %v7486
    %v7503 = vadd.f32 %v4163, %v7487
    %v7504 = vadd.f32 %v4164, %v7488
    %v7505 = vadd.f32 %v4165, %v7489
    %v7506 = vadd.f32 %v4166, %v7490
    %v7507 = vadd.f32 %v4167, %v7491
    %v7508 = vadd.f32 %v4168, %v7492
    %v7509 = vadd.f32 %v4169, %v7493
    %v7510 = vadd.f32 %v4170, %v7494
    %v7511 = vadd.f32 %v4171, %v7495
    %v7512 = vadd.f32 %v4172, %v7496
    %v7513 = vadd.f32 %v4173, %v7497
    %v7514 = vadd.f32 %v4174, %v7498
    %v7515 = vlaneseq
    %v7516 = vshrl.u32 %v7515, 7
    %v7517 = vsub.s32 5, %v7516
    %v7518 = vrot.slane %v4176, %v7517
    %v7519 = vadd.f32 %v7499, %v7518
    %v7520 = vadd.f32 %v7500, %v7518
    %v7521 = vadd.f32 %v7501, %v7518
    %v7522 = vadd.f32 %v7502, %v7518
    %v7523 = vadd.f32 %v7503, %v7518
    %v7524 = vadd.f32 %v7504, %v7518
    %v7525 = vadd.f32 %v7505, %v7518
    %v7526 = vadd.f32 %v7506, %v7518
    %v7527 = vadd.f32 %v7507, %v7518
    %v7528 = vadd.f32 %v7508, %v7518
    %v7529 = vadd.f32 %v7509, %v7518
    %v7530 = vadd.f32 %v7510, %v7518
    %v7531 = vadd.f32 %v7511, %v7518
    %v7532 = vadd.f32 %v7512, %v7518
    %v7533 = vadd.f32 %v7513, %v7518
    %v7534 = vadd.f32 %v7514, %v7518
    %v7535 = vsel %vm85, %v7519, 0.0
    %7536 = vadd.xlane.f32.xlu0 %v7535
    %v7537 = vpop.xlane.xlu0 %7536
    %v7538 = vsel %vm85, %v7520, 0.0
    %7539 = vadd.xlane.f32.xlu0 %v7538
    %v7540 = vpop.xlane.xlu0 %7539
    %v7541 = vsel %vm85, %v7521, 0.0
    %7542 = vadd.xlane.f32.xlu0 %v7541
    %v7543 = vpop.xlane.xlu0 %7542
    %v7544 = vsel %vm85, %v7522, 0.0
    %7545 = vadd.xlane.f32.xlu0 %v7544
    %v7546 = vpop.xlane.xlu0 %7545
    %v7547 = vsel %vm85, %v7523, 0.0
    %7548 = vadd.xlane.f32.xlu0 %v7547
    %v7549 = vpop.xlane.xlu0 %7548
    %v7550 = vsel %vm85, %v7524, 0.0
    %7551 = vadd.xlane.f32.xlu0 %v7550
    %v7552 = vpop.xlane.xlu0 %7551
    %v7553 = vsel %vm85, %v7525, 0.0
    %7554 = vadd.xlane.f32.xlu0 %v7553
    %v7555 = vpop.xlane.xlu0 %7554
    %v7556 = vsel %vm85, %v7526, 0.0
    %7557 = vadd.xlane.f32.xlu0 %v7556
    %v7558 = vpop.xlane.xlu0 %7557
    %v7559 = vsel %vm85, %v7527, 0.0
    %7560 = vadd.xlane.f32.xlu0 %v7559
    %v7561 = vpop.xlane.xlu0 %7560
    %v7562 = vsel %vm85, %v7528, 0.0
    %7563 = vadd.xlane.f32.xlu0 %v7562
    %v7564 = vpop.xlane.xlu0 %7563
    %v7565 = vsel %vm85, %v7529, 0.0
    %7566 = vadd.xlane.f32.xlu0 %v7565
    %v7567 = vpop.xlane.xlu0 %7566
    %v7568 = vsel %vm85, %v7530, 0.0
    %7569 = vadd.xlane.f32.xlu0 %v7568
    %v7570 = vpop.xlane.xlu0 %7569
    %v7571 = vsel %vm85, %v7531, 0.0
    %7572 = vadd.xlane.f32.xlu0 %v7571
    %v7573 = vpop.xlane.xlu0 %7572
    %v7574 = vsel %vm85, %v7532, 0.0
    %7575 = vadd.xlane.f32.xlu0 %v7574
    %v7576 = vpop.xlane.xlu0 %7575
    %v7577 = vsel %vm85, %v7533, 0.0
    %7578 = vadd.xlane.f32.xlu0 %v7577
    %v7579 = vpop.xlane.xlu0 %7578
    %v7580 = vsel %vm85, %v7534, 0.0
    %7581 = vadd.xlane.f32.xlu0 %v7580
    %v7582 = vpop.xlane.xlu0 %7581
    %v7583 = vmul.f32 %v7537, %v134
    %v7584 = vmul.f32 %v7540, %v134
    %v7585 = vmul.f32 %v7543, %v134
    %v7586 = vmul.f32 %v7546, %v134
    %v7587 = vmul.f32 %v7549, %v134
    %v7588 = vmul.f32 %v7552, %v134
    %v7589 = vmul.f32 %v7555, %v134
    %v7590 = vmul.f32 %v7558, %v134
    %v7591 = vmul.f32 %v7561, %v134
    %v7592 = vmul.f32 %v7564, %v134
    %v7593 = vmul.f32 %v7567, %v134
    %v7594 = vmul.f32 %v7570, %v134
    %v7595 = vmul.f32 %v7573, %v134
    %v7596 = vmul.f32 %v7576, %v134
    %v7597 = vmul.f32 %v7579, %v134
    %v7598 = vmul.f32 %v7582, %v134
    %v7599 = vsub.f32 %v7519, %v7583
    %v7600 = vsub.f32 %v7520, %v7584
    %v7601 = vsub.f32 %v7521, %v7585
    %v7602 = vsub.f32 %v7522, %v7586
    %v7603 = vsub.f32 %v7523, %v7587
    %v7604 = vsub.f32 %v7524, %v7588
    %v7605 = vsub.f32 %v7525, %v7589
    %v7606 = vsub.f32 %v7526, %v7590
    %v7607 = vsub.f32 %v7527, %v7591
    %v7608 = vsub.f32 %v7528, %v7592
    %v7609 = vsub.f32 %v7529, %v7593
    %v7610 = vsub.f32 %v7530, %v7594
    %v7611 = vsub.f32 %v7531, %v7595
    %v7612 = vsub.f32 %v7532, %v7596
    %v7613 = vsub.f32 %v7533, %v7597
    %v7614 = vsub.f32 %v7534, %v7598
    %v7615 = vmul.f32 %v7599, %v7599
    %v7616 = vmul.f32 %v7600, %v7600
    %v7617 = vmul.f32 %v7601, %v7601
    %v7618 = vmul.f32 %v7602, %v7602
    %v7619 = vmul.f32 %v7603, %v7603
    %v7620 = vmul.f32 %v7604, %v7604
    %v7621 = vmul.f32 %v7605, %v7605
    %v7622 = vmul.f32 %v7606, %v7606
    %v7623 = vmul.f32 %v7607, %v7607
    %v7624 = vmul.f32 %v7608, %v7608
    %v7625 = vmul.f32 %v7609, %v7609
    %v7626 = vmul.f32 %v7610, %v7610
    %v7627 = vmul.f32 %v7611, %v7611
    %v7628 = vmul.f32 %v7612, %v7612
    %v7629 = vmul.f32 %v7613, %v7613
    %v7630 = vmul.f32 %v7614, %v7614
    %v7631 = vsel %vm85, %v7615, 0.0
    %7632 = vadd.xlane.f32.xlu0 %v7631
    %v7633 = vpop.xlane.xlu0 %7632
    %v7634 = vsel %vm85, %v7616, 0.0
    %7635 = vadd.xlane.f32.xlu0 %v7634
    %v7636 = vpop.xlane.xlu0 %7635
    %v7637 = vsel %vm85, %v7617, 0.0
    %7638 = vadd.xlane.f32.xlu0 %v7637
    %v7639 = vpop.xlane.xlu0 %7638
    %v7640 = vsel %vm85, %v7618, 0.0
    %7641 = vadd.xlane.f32.xlu0 %v7640
    %v7642 = vpop.xlane.xlu0 %7641
    %v7643 = vsel %vm85, %v7619, 0.0
    %7644 = vadd.xlane.f32.xlu0 %v7643
    %v7645 = vpop.xlane.xlu0 %7644
    %v7646 = vsel %vm85, %v7620, 0.0
    %7647 = vadd.xlane.f32.xlu0 %v7646
    %v7648 = vpop.xlane.xlu0 %7647
    %v7649 = vsel %vm85, %v7621, 0.0
    %7650 = vadd.xlane.f32.xlu0 %v7649
    %v7651 = vpop.xlane.xlu0 %7650
    %v7652 = vsel %vm85, %v7622, 0.0
    %7653 = vadd.xlane.f32.xlu0 %v7652
    %v7654 = vpop.xlane.xlu0 %7653
    %v7655 = vsel %vm85, %v7623, 0.0
    %7656 = vadd.xlane.f32.xlu0 %v7655
    %v7657 = vpop.xlane.xlu0 %7656
    %v7658 = vsel %vm85, %v7624, 0.0
    %7659 = vadd.xlane.f32.xlu0 %v7658
    %v7660 = vpop.xlane.xlu0 %7659
    %v7661 = vsel %vm85, %v7625, 0.0
    %7662 = vadd.xlane.f32.xlu0 %v7661
    %v7663 = vpop.xlane.xlu0 %7662
    %v7664 = vsel %vm85, %v7626, 0.0
    %7665 = vadd.xlane.f32.xlu0 %v7664
    %v7666 = vpop.xlane.xlu0 %7665
    %v7667 = vsel %vm85, %v7627, 0.0
    %7668 = vadd.xlane.f32.xlu0 %v7667
    %v7669 = vpop.xlane.xlu0 %7668
    %v7670 = vsel %vm85, %v7628, 0.0
    %7671 = vadd.xlane.f32.xlu0 %v7670
    %v7672 = vpop.xlane.xlu0 %7671
    %v7673 = vsel %vm85, %v7629, 0.0
    %7674 = vadd.xlane.f32.xlu0 %v7673
    %v7675 = vpop.xlane.xlu0 %7674
    %v7676 = vsel %vm85, %v7630, 0.0
    %7677 = vadd.xlane.f32.xlu0 %v7676
    %v7678 = vpop.xlane.xlu0 %7677
    %v7679 = vmul.f32 %v7633, %v134
    %v7680 = vmul.f32 %v7636, %v134
    %v7681 = vmul.f32 %v7639, %v134
    %v7682 = vmul.f32 %v7642, %v134
    %v7683 = vmul.f32 %v7645, %v134
    %v7684 = vmul.f32 %v7648, %v134
    %v7685 = vmul.f32 %v7651, %v134
    %v7686 = vmul.f32 %v7654, %v134
    %v7687 = vmul.f32 %v7657, %v134
    %v7688 = vmul.f32 %v7660, %v134
    %v7689 = vmul.f32 %v7663, %v134
    %v7690 = vmul.f32 %v7666, %v134
    %v7691 = vmul.f32 %v7669, %v134
    %v7692 = vmul.f32 %v7672, %v134
    %v7693 = vmul.f32 %v7675, %v134
    %v7694 = vmul.f32 %v7678, %v134
    %v7695 = vadd.f32 %v7679, 1e-05
    %v7696 = vadd.f32 %v7680, 1e-05
    %v7697 = vadd.f32 %v7681, 1e-05
    %v7698 = vadd.f32 %v7682, 1e-05
    %v7699 = vadd.f32 %v7683, 1e-05
    %v7700 = vadd.f32 %v7684, 1e-05
    %v7701 = vadd.f32 %v7685, 1e-05
    %v7702 = vadd.f32 %v7686, 1e-05
    %v7703 = vadd.f32 %v7687, 1e-05
    %v7704 = vadd.f32 %v7688, 1e-05
    %v7705 = vadd.f32 %v7689, 1e-05
    %v7706 = vadd.f32 %v7690, 1e-05
    %v7707 = vadd.f32 %v7691, 1e-05
    %v7708 = vadd.f32 %v7692, 1e-05
    %v7709 = vadd.f32 %v7693, 1e-05
    %v7710 = vadd.f32 %v7694, 1e-05
    %v7711 = vrsqrt.pop %v7695
    %v7712 = vrsqrt.pop %v7696
    %v7713 = vrsqrt.pop %v7697
    %v7714 = vrsqrt.pop %v7698
    %v7715 = vrsqrt.pop %v7699
    %v7716 = vrsqrt.pop %v7700
    %v7717 = vrsqrt.pop %v7701
    %v7718 = vrsqrt.pop %v7702
    %v7719 = vrsqrt.pop %v7703
    %v7720 = vrsqrt.pop %v7704
    %v7721 = vrsqrt.pop %v7705
    %v7722 = vrsqrt.pop %v7706
    %v7723 = vrsqrt.pop %v7707
    %v7724 = vrsqrt.pop %v7708
    %v7725 = vrsqrt.pop %v7709
    %v7726 = vrsqrt.pop %v7710
    %v7727 = vmul.f32 %v7599, %v7711
    %v7728 = vmul.f32 %v7600, %v7712
    %v7729 = vmul.f32 %v7601, %v7713
    %v7730 = vmul.f32 %v7602, %v7714
    %v7731 = vmul.f32 %v7603, %v7715
    %v7732 = vmul.f32 %v7604, %v7716
    %v7733 = vmul.f32 %v7605, %v7717
    %v7734 = vmul.f32 %v7606, %v7718
    %v7735 = vmul.f32 %v7607, %v7719
    %v7736 = vmul.f32 %v7608, %v7720
    %v7737 = vmul.f32 %v7609, %v7721
    %v7738 = vmul.f32 %v7610, %v7722
    %v7739 = vmul.f32 %v7611, %v7723
    %v7740 = vmul.f32 %v7612, %v7724
    %v7741 = vmul.f32 %v7613, %v7725
    %v7742 = vmul.f32 %v7614, %v7726
    %v7743 = vlaneseq
    %v7744 = vshrl.u32 %v7743, 7
    %v7745 = vsub.s32 2, %v7744
    %v7746 = vrot.slane %v4176, %v7745
    %v7747 = vmul.f32 %v7727, %v7746
    %v7748 = vmul.f32 %v7728, %v7746
    %v7749 = vmul.f32 %v7729, %v7746
    %v7750 = vmul.f32 %v7730, %v7746
    %v7751 = vmul.f32 %v7731, %v7746
    %v7752 = vmul.f32 %v7732, %v7746
    %v7753 = vmul.f32 %v7733, %v7746
    %v7754 = vmul.f32 %v7734, %v7746
    %v7755 = vmul.f32 %v7735, %v7746
    %v7756 = vmul.f32 %v7736, %v7746
    %v7757 = vmul.f32 %v7737, %v7746
    %v7758 = vmul.f32 %v7738, %v7746
    %v7759 = vmul.f32 %v7739, %v7746
    %v7760 = vmul.f32 %v7740, %v7746
    %v7761 = vmul.f32 %v7741, %v7746
    %v7762 = vmul.f32 %v7742, %v7746
    %v7763 = vlaneseq
    %v7764 = vshrl.u32 %v7763, 7
    %v7765 = vsub.s32 3, %v7764
    %v7766 = vrot.slane %v4176, %v7765
    %v7767 = vadd.f32 %v7747, %v7766
    %v7768 = vadd.f32 %v7748, %v7766
    %v7769 = vadd.f32 %v7749, %v7766
    %v7770 = vadd.f32 %v7750, %v7766
    %v7771 = vadd.f32 %v7751, %v7766
    %v7772 = vadd.f32 %v7752, %v7766
    %v7773 = vadd.f32 %v7753, %v7766
    %v7774 = vadd.f32 %v7754, %v7766
    %v7775 = vadd.f32 %v7755, %v7766
    %v7776 = vadd.f32 %v7756, %v7766
    %v7777 = vadd.f32 %v7757, %v7766
    %v7778 = vadd.f32 %v7758, %v7766
    %v7779 = vadd.f32 %v7759, %v7766
    %v7780 = vadd.f32 %v7760, %v7766
    %v7781 = vadd.f32 %v7761, %v7766
    %v7782 = vadd.f32 %v7762, %v7766
    %v7783 = vpack.c.bf16 %v7768, %v7767
    %v7784 = vpack.c.bf16 %v7770, %v7769
    %v7785 = vpack.c.bf16 %v7772, %v7771
    %v7786 = vpack.c.bf16 %v7774, %v7773
    %v7787 = vpack.c.bf16 %v7776, %v7775
    %v7788 = vpack.c.bf16 %v7778, %v7777
    %v7789 = vpack.c.bf16 %v7780, %v7779
    %v7790 = vpack.c.bf16 %v7782, %v7781
    %s7791 = scalar_lea.vmem %s4, 16
    %v7792 = vld [vmem:[%s7791] sm:$0xf]
    %v7793 = vld [vmem:[%s7791 + $0x4] sm:$0xf]
    %v7794 = vld [vmem:[%s7791 + $0x8] sm:$0xf]
    %v7795 = vld [vmem:[%s7791 + $0xc] sm:$0xf]
    %v7796 = vlaneseq
    %v7797 = vshrl.u32 %v7796, 7
    %v7798 = vsub.s32 6, %v7797
    %v7799 = vrot.slane %v4176, %v7798
    %v7804 = vunpack.c.l.b16 %v7792
    %v7805 = vunpack.c.l.b16 %v7793
    %v7806 = vunpack.c.l.b16 %v7794
    %v7807 = vunpack.c.l.b16 %v7795
    %v7808 = vpack.c.b16 %v7805, %v7804
    %v7809 = vpack.c.b16 %v7807, %v7806
    %v7813 = vsel %vm85, %v7783, 0
    %v7816 = vsel %vm85, %v7784, 0
    %v7819 = vsel %vm85, %v7785, 0
    %v7822 = vsel %vm85, %v7786, 0
    %v7825 = vsel %vm85, %v7787, 0
    %v7828 = vsel %vm85, %v7788, 0
    %v7831 = vsel %vm85, %v7789, 0
    %v7834 = vsel %vm85, %v7790, 0
    %7836 = vmatprep.subr.bf16.mxu0 0
    %7837 = vmatpush1.bf16.msra.mxu0 0
    %7838 = vmatprep.subr.bf16.mxu0 0
    %7839 = vmatpush1.bf16.msra.mxu0 0
    %7840 = vmatprep.subr.bf16.mxu0 0
    %7841 = vmatpush1.bf16.msra.mxu0 0
    %7842 = vmatprep.subr.bf16.mxu0 0
    %7843 = vmatpush1.bf16.msra.mxu0 0
    %7844 = vmatprep.subr.bf16.mxu0 0
    %7845 = vmatpush1.bf16.msra.mxu0 0
    %7846 = vmatprep.subr.bf16.mxu0 0
    %7847 = vmatpush1.bf16.msra.mxu0 0
    %7848 = vmatprep.subr.bf16.mxu0 0
    %7849 = vmatpush1.bf16.msra.mxu0 %v7809
    %7850 = vmatprep.subr.bf16.mxu0 0
    %7851 = vmatpush1.bf16.msra.mxu0 %v7808
    %7852 = vmatprep.subr.bf16.mxu0 0
    %7853 = vmatpush2.bf16.msra.mxu0 0
    %7854 = vmatprep.subr.bf16.mxu0 0
    %7855 = vmatpush2.bf16.msra.mxu0 0
    %7856 = vmatprep.subr.bf16.mxu0 0
    %7857 = vmatpush2.bf16.msra.mxu0 0
    %7858 = vmatprep.subr.bf16.mxu0 0
    %7859 = vmatpush2.bf16.msra.mxu0 0
    %7860 = vmatprep.subr.bf16.mxu0 0
    %7861 = vmatpush2.bf16.msra.mxu0 0
    %7862 = vmatprep.subr.bf16.mxu0 0
    %7863 = vmatpush2.bf16.msra.mxu0 0
    %7864 = vmatprep.subr.bf16.mxu0 0
    %7865 = vmatpush2.bf16.msra.mxu0 0
    %7866 = vmatprep.subr.bf16.mxu0 0
    %7867 = vmatpush2.bf16.msra.mxu0 0
    %7868 = vmatprep.mubr.bf16.mxu0 0
    %7869 = vmatmul.mubr.bf16.gmra.mxu0 %v7813
    %v7870 = vpop.f32.mrf.mxu0
    %v7871 = vadd.f32 %v7799, %v7870
    %v7872 = vpop.f32.mrf.mxu0
    %v7873 = vpop.f32.mrf.mxu0
    %v7874 = vadd.f32 %v7799, %v7873
    %v7875 = vpop.f32.mrf.mxu0
    %7876 = vmatprep.mubr.bf16.mxu0 0
    %7877 = vmatmul.mubr.bf16.gmra.mxu0 %v7816
    %v7878 = vpop.f32.mrf.mxu0
    %v7879 = vadd.f32 %v7799, %v7878
    %v7880 = vpop.f32.mrf.mxu0
    %v7881 = vpop.f32.mrf.mxu0
    %v7882 = vadd.f32 %v7799, %v7881
    %v7883 = vpop.f32.mrf.mxu0
    %7884 = vmatprep.mubr.bf16.mxu0 0
    %7885 = vmatmul.mubr.bf16.gmra.mxu0 %v7819
    %v7886 = vpop.f32.mrf.mxu0
    %v7887 = vadd.f32 %v7799, %v7886
    %v7888 = vpop.f32.mrf.mxu0
    %v7889 = vpop.f32.mrf.mxu0
    %v7890 = vadd.f32 %v7799, %v7889
    %v7891 = vpop.f32.mrf.mxu0
    %7892 = vmatprep.mubr.bf16.mxu0 0
    %7893 = vmatmul.mubr.bf16.gmra.mxu0 %v7822
    %v7894 = vpop.f32.mrf.mxu0
    %v7895 = vadd.f32 %v7799, %v7894
    %v7896 = vpop.f32.mrf.mxu0
    %v7897 = vpop.f32.mrf.mxu0
    %v7898 = vadd.f32 %v7799, %v7897
    %v7899 = vpop.f32.mrf.mxu0
    %7900 = vmatprep.mubr.bf16.mxu0 0
    %7901 = vmatmul.mubr.bf16.gmra.mxu0 %v7825
    %v7902 = vpop.f32.mrf.mxu0
    %v7903 = vadd.f32 %v7799, %v7902
    %v7904 = vpop.f32.mrf.mxu0
    %v7905 = vpop.f32.mrf.mxu0
    %v7906 = vadd.f32 %v7799, %v7905
    %v7907 = vpop.f32.mrf.mxu0
    %7908 = vmatprep.mubr.bf16.mxu0 0
    %7909 = vmatmul.mubr.bf16.gmra.mxu0 %v7828
    %v7910 = vpop.f32.mrf.mxu0
    %v7911 = vadd.f32 %v7799, %v7910
    %v7912 = vpop.f32.mrf.mxu0
    %v7913 = vpop.f32.mrf.mxu0
    %v7914 = vadd.f32 %v7799, %v7913
    %v7915 = vpop.f32.mrf.mxu0
    %7916 = vmatprep.mubr.bf16.mxu0 0
    %7917 = vmatmul.mubr.bf16.gmra.mxu0 %v7831
    %v7918 = vpop.f32.mrf.mxu0
    %v7919 = vadd.f32 %v7799, %v7918
    %v7920 = vpop.f32.mrf.mxu0
    %v7921 = vpop.f32.mrf.mxu0
    %v7922 = vadd.f32 %v7799, %v7921
    %v7923 = vpop.f32.mrf.mxu0
    %7924 = vmatprep.mubr.bf16.mxu0 0
    %7925 = vmatmul.mubr.bf16.gmra.mxu0 %v7834
    %v7926 = vpop.f32.mrf.mxu0
    %v7927 = vadd.f32 %v7799, %v7926
    %v7928 = vpop.f32.mrf.mxu0
    %v7929 = vpop.f32.mrf.mxu0
    %v7930 = vadd.f32 %v7799, %v7929
    %v7931 = vpop.f32.mrf.mxu0
    %7932 = vdwg.mxu0
    %v7933 = vmul.f32 %v7871, %v7871
    %v7934 = vmul.f32 %v7874, %v7874
    %v7935 = vmul.f32 %v7879, %v7879
    %v7936 = vmul.f32 %v7882, %v7882
    %v7937 = vmul.f32 %v7887, %v7887
    %v7938 = vmul.f32 %v7890, %v7890
    %v7939 = vmul.f32 %v7895, %v7895
    %v7940 = vmul.f32 %v7898, %v7898
    %v7941 = vmul.f32 %v7903, %v7903
    %v7942 = vmul.f32 %v7906, %v7906
    %v7943 = vmul.f32 %v7911, %v7911
    %v7944 = vmul.f32 %v7914, %v7914
    %v7945 = vmul.f32 %v7919, %v7919
    %v7946 = vmul.f32 %v7922, %v7922
    %v7947 = vmul.f32 %v7927, %v7927
    %v7948 = vmul.f32 %v7930, %v7930
    %v7949 = vmul.f32 %v7871, %v7933
    %v7950 = vmul.f32 %v7874, %v7934
    %v7951 = vmul.f32 %v7879, %v7935
    %v7952 = vmul.f32 %v7882, %v7936
    %v7953 = vmul.f32 %v7887, %v7937
    %v7954 = vmul.f32 %v7890, %v7938
    %v7955 = vmul.f32 %v7895, %v7939
    %v7956 = vmul.f32 %v7898, %v7940
    %v7957 = vmul.f32 %v7903, %v7941
    %v7958 = vmul.f32 %v7906, %v7942
    %v7959 = vmul.f32 %v7911, %v7943
    %v7960 = vmul.f32 %v7914, %v7944
    %v7961 = vmul.f32 %v7919, %v7945
    %v7962 = vmul.f32 %v7922, %v7946
    %v7963 = vmul.f32 %v7927, %v7947
    %v7964 = vmul.f32 %v7930, %v7948
    %v7965 = vmul.f32 %v7949, 0.044715
    %v7966 = vmul.f32 %v7950, 0.044715
    %v7967 = vmul.f32 %v7951, 0.044715
    %v7968 = vmul.f32 %v7952, 0.044715
    %v7969 = vmul.f32 %v7953, 0.044715
    %v7970 = vmul.f32 %v7954, 0.044715
    %v7971 = vmul.f32 %v7955, 0.044715
    %v7972 = vmul.f32 %v7956, 0.044715
    %v7973 = vmul.f32 %v7957, 0.044715
    %v7974 = vmul.f32 %v7958, 0.044715
    %v7975 = vmul.f32 %v7959, 0.044715
    %v7976 = vmul.f32 %v7960, 0.044715
    %v7977 = vmul.f32 %v7961, 0.044715
    %v7978 = vmul.f32 %v7962, 0.044715
    %v7979 = vmul.f32 %v7963, 0.044715
    %v7980 = vmul.f32 %v7964, 0.044715
    %v7981 = vadd.f32 %v7871, %v7965
    %v7982 = vadd.f32 %v7874, %v7966
    %v7983 = vadd.f32 %v7879, %v7967
    %v7984 = vadd.f32 %v7882, %v7968
    %v7985 = vadd.f32 %v7887, %v7969
    %v7986 = vadd.f32 %v7890, %v7970
    %v7987 = vadd.f32 %v7895, %v7971
    %v7988 = vadd.f32 %v7898, %v7972
    %v7989 = vadd.f32 %v7903, %v7973
    %v7990 = vadd.f32 %v7906, %v7974
    %v7991 = vadd.f32 %v7911, %v7975
    %v7992 = vadd.f32 %v7914, %v7976
    %v7993 = vadd.f32 %v7919, %v7977
    %v7994 = vadd.f32 %v7922, %v7978
    %v7995 = vadd.f32 %v7927, %v7979
    %v7996 = vadd.f32 %v7930, %v7980
    %v7997 = vmul.f32 %v7981, 0.7978846
    %v7998 = vmul.f32 %v7982, 0.7978846
    %v7999 = vmul.f32 %v7983, 0.7978846
    %v8000 = vmul.f32 %v7984, 0.7978846
    %v8001 = vmul.f32 %v7985, 0.7978846
    %v8002 = vmul.f32 %v7986, 0.7978846
    %v8003 = vmul.f32 %v7987, 0.7978846
    %v8004 = vmul.f32 %v7988, 0.7978846
    %v8005 = vmul.f32 %v7989, 0.7978846
    %v8006 = vmul.f32 %v7990, 0.7978846
    %v8007 = vmul.f32 %v7991, 0.7978846
    %v8008 = vmul.f32 %v7992, 0.7978846
    %v8009 = vmul.f32 %v7993, 0.7978846
    %v8010 = vmul.f32 %v7994, 0.7978846
    %v8011 = vmul.f32 %v7995, 0.7978846
    %v8012 = vmul.f32 %v7996, 0.7978846
    %v8013 = vtanh.pop %v7997
    %v8014 = vtanh.pop %v7998
    %v8015 = vtanh.pop %v7999
    %v8016 = vtanh.pop %v8000
    %v8017 = vtanh.pop %v8001
    %v8018 = vtanh.pop %v8002
    %v8019 = vtanh.pop %v8003
    %v8020 = vtanh.pop %v8004
    %v8021 = vtanh.pop %v8005
    %v8022 = vtanh.pop %v8006
    %v8023 = vtanh.pop %v8007
    %v8024 = vtanh.pop %v8008
    %v8025 = vtanh.pop %v8009
    %v8026 = vtanh.pop %v8010
    %v8027 = vtanh.pop %v8011
    %v8028 = vtanh.pop %v8012
    %v8029 = vadd.f32 %v8013, 1.0
    %v8030 = vadd.f32 %v8014, 1.0
    %v8031 = vadd.f32 %v8015, 1.0
    %v8032 = vadd.f32 %v8016, 1.0
    %v8033 = vadd.f32 %v8017, 1.0
    %v8034 = vadd.f32 %v8018, 1.0
    %v8035 = vadd.f32 %v8019, 1.0
    %v8036 = vadd.f32 %v8020, 1.0
    %v8037 = vadd.f32 %v8021, 1.0
    %v8038 = vadd.f32 %v8022, 1.0
    %v8039 = vadd.f32 %v8023, 1.0
    %v8040 = vadd.f32 %v8024, 1.0
    %v8041 = vadd.f32 %v8025, 1.0
    %v8042 = vadd.f32 %v8026, 1.0
    %v8043 = vadd.f32 %v8027, 1.0
    %v8044 = vadd.f32 %v8028, 1.0
    %v8045 = vmul.f32 %v8029, 0.5
    %v8046 = vmul.f32 %v8030, 0.5
    %v8047 = vmul.f32 %v8031, 0.5
    %v8048 = vmul.f32 %v8032, 0.5
    %v8049 = vmul.f32 %v8033, 0.5
    %v8050 = vmul.f32 %v8034, 0.5
    %v8051 = vmul.f32 %v8035, 0.5
    %v8052 = vmul.f32 %v8036, 0.5
    %v8053 = vmul.f32 %v8037, 0.5
    %v8054 = vmul.f32 %v8038, 0.5
    %v8055 = vmul.f32 %v8039, 0.5
    %v8056 = vmul.f32 %v8040, 0.5
    %v8057 = vmul.f32 %v8041, 0.5
    %v8058 = vmul.f32 %v8042, 0.5
    %v8059 = vmul.f32 %v8043, 0.5
    %v8060 = vmul.f32 %v8044, 0.5
    %v8061 = vmul.f32 %v7871, %v8045
    %v8062 = vmul.f32 %v7874, %v8046
    %v8063 = vmul.f32 %v7879, %v8047
    %v8064 = vmul.f32 %v7882, %v8048
    %v8065 = vmul.f32 %v7887, %v8049
    %v8066 = vmul.f32 %v7890, %v8050
    %v8067 = vmul.f32 %v7895, %v8051
    %v8068 = vmul.f32 %v7898, %v8052
    %v8069 = vmul.f32 %v7903, %v8053
    %v8070 = vmul.f32 %v7906, %v8054
    %v8071 = vmul.f32 %v7911, %v8055
    %v8072 = vmul.f32 %v7914, %v8056
    %v8073 = vmul.f32 %v7919, %v8057
    %v8074 = vmul.f32 %v7922, %v8058
    %v8075 = vmul.f32 %v7927, %v8059
    %v8076 = vmul.f32 %v7930, %v8060
    %v8077 = vpack.c.bf16 %v8062, %v8061
    %v8078 = vpack.c.bf16 %v8064, %v8063
    %v8079 = vpack.c.bf16 %v8066, %v8065
    %v8080 = vpack.c.bf16 %v8068, %v8067
    %v8081 = vpack.c.bf16 %v8070, %v8069
    %v8082 = vpack.c.bf16 %v8072, %v8071
    %v8083 = vpack.c.bf16 %v8074, %v8073
    %v8084 = vpack.c.bf16 %v8076, %v8075
    %s8085 = scalar_lea.vmem %s5, 64
    %v8086 = vld [vmem:[%s8085] sm:$0xf]
    %v8087 = vld [vmem:[%s8085 + $0x4] sm:$0xf]
    %v8088 = vld [vmem:[%s8085 + $0x8] sm:$0xf]
    %v8089 = vld [vmem:[%s8085 + $0xc] sm:$0xf]
    %v8090 = vld [vmem:[%s8085 + $0x10] sm:$0xf]
    %v8091 = vld [vmem:[%s8085 + $0x14] sm:$0xf]
    %v8092 = vld [vmem:[%s8085 + $0x18] sm:$0xf]
    %v8093 = vld [vmem:[%s8085 + $0x1c] sm:$0xf]
    %v8094 = vld [vmem:[%s8085 + $0x20] sm:$0xf]
    %v8095 = vld [vmem:[%s8085 + $0x24] sm:$0xf]
    %v8096 = vld [vmem:[%s8085 + $0x28] sm:$0xf]
    %v8097 = vld [vmem:[%s8085 + $0x2c] sm:$0xf]
    %v8098 = vld [vmem:[%s8085 + $0x30] sm:$0xf]
    %v8099 = vld [vmem:[%s8085 + $0x34] sm:$0xf]
    %v8100 = vld [vmem:[%s8085 + $0x38] sm:$0xf]
    %v8101 = vld [vmem:[%s8085 + $0x3c] sm:$0xf]
    %v8102 = vlaneseq
    %v8103 = vshrl.u32 %v8102, 7
    %v8104 = vsub.s32 7, %v8103
    %v8105 = vrot.slane %v4176, %v8104
    %v8122 = vunpack.c.l.b16 %v8086
    %v8123 = vunpack.c.l.b16 %v8087
    %v8124 = vunpack.c.l.b16 %v8088
    %v8125 = vunpack.c.l.b16 %v8089
    %v8126 = vunpack.c.l.b16 %v8090
    %v8127 = vunpack.c.l.b16 %v8091
    %v8128 = vunpack.c.l.b16 %v8092
    %v8129 = vunpack.c.l.b16 %v8093
    %v8130 = vunpack.c.l.b16 %v8094
    %v8131 = vunpack.c.l.b16 %v8095
    %v8132 = vunpack.c.l.b16 %v8096
    %v8133 = vunpack.c.l.b16 %v8097
    %v8134 = vunpack.c.l.b16 %v8098
    %v8135 = vunpack.c.l.b16 %v8099
    %v8136 = vunpack.c.l.b16 %v8100
    %v8137 = vunpack.c.l.b16 %v8101
    %v8138 = vpack.c.b16 %v8123, %v8122
    %v8139 = vpack.c.b16 %v8125, %v8124
    %v8140 = vpack.c.b16 %v8127, %v8126
    %v8141 = vpack.c.b16 %v8129, %v8128
    %v8142 = vpack.c.b16 %v8131, %v8130
    %v8143 = vpack.c.b16 %v8133, %v8132
    %v8144 = vpack.c.b16 %v8135, %v8134
    %v8145 = vpack.c.b16 %v8137, %v8136
    %8154 = vmatprep.subr.bf16.mxu0 0
    %8155 = vmatpush1.bf16.msra.mxu0 %v8145
    %8156 = vmatprep.subr.bf16.mxu0 0
    %8157 = vmatpush1.bf16.msra.mxu0 %v8144
    %8158 = vmatprep.subr.bf16.mxu0 0
    %8159 = vmatpush1.bf16.msra.mxu0 %v8143
    %8160 = vmatprep.subr.bf16.mxu0 0
    %8161 = vmatpush1.bf16.msra.mxu0 %v8142
    %8162 = vmatprep.subr.bf16.mxu0 0
    %8163 = vmatpush1.bf16.msra.mxu0 %v8141
    %8164 = vmatprep.subr.bf16.mxu0 0
    %8165 = vmatpush1.bf16.msra.mxu0 %v8140
    %8166 = vmatprep.subr.bf16.mxu0 0
    %8167 = vmatpush1.bf16.msra.mxu0 %v8139
    %8168 = vmatprep.subr.bf16.mxu0 0
    %8169 = vmatpush1.bf16.msra.mxu0 %v8138
    %8170 = vmatprep.subr.bf16.mxu0 0
    %8171 = vmatpush2.bf16.msra.mxu0 0
    %8172 = vmatprep.subr.bf16.mxu0 0
    %8173 = vmatpush2.bf16.msra.mxu0 0
    %8174 = vmatprep.subr.bf16.mxu0 0
    %8175 = vmatpush2.bf16.msra.mxu0 0
    %8176 = vmatprep.subr.bf16.mxu0 0
    %8177 = vmatpush2.bf16.msra.mxu0 0
    %8178 = vmatprep.subr.bf16.mxu0 0
    %8179 = vmatpush2.bf16.msra.mxu0 0
    %8180 = vmatprep.subr.bf16.mxu0 0
    %8181 = vmatpush2.bf16.msra.mxu0 0
    %8182 = vmatprep.subr.bf16.mxu0 0
    %8183 = vmatpush2.bf16.msra.mxu0 0
    %8184 = vmatprep.subr.bf16.mxu0 0
    %8185 = vmatpush2.bf16.msra.mxu0 0
    %8186 = vmatprep.mubr.bf16.mxu0 0
    %8187 = vmatmul.mubr.bf16.gmra.mxu0 %v8077
    %v8188 = vpop.f32.mrf.mxu0
    %v8189 = vadd.f32 %v8105, %v8188
    %v8190 = vpop.f32.mrf.mxu0
    %v8191 = vpop.f32.mrf.mxu0
    %v8192 = vadd.f32 %v8105, %v8191
    %v8193 = vpop.f32.mrf.mxu0
    %8194 = vmatprep.mubr.bf16.mxu0 0
    %8195 = vmatmul.mubr.bf16.gmra.mxu0 %v8078
    %v8196 = vpop.f32.mrf.mxu0
    %v8197 = vadd.f32 %v8105, %v8196
    %v8198 = vpop.f32.mrf.mxu0
    %v8199 = vpop.f32.mrf.mxu0
    %v8200 = vadd.f32 %v8105, %v8199
    %v8201 = vpop.f32.mrf.mxu0
    %8202 = vmatprep.mubr.bf16.mxu0 0
    %8203 = vmatmul.mubr.bf16.gmra.mxu0 %v8079
    %v8204 = vpop.f32.mrf.mxu0
    %v8205 = vadd.f32 %v8105, %v8204
    %v8206 = vpop.f32.mrf.mxu0
    %v8207 = vpop.f32.mrf.mxu0
    %v8208 = vadd.f32 %v8105, %v8207
    %v8209 = vpop.f32.mrf.mxu0
    %8210 = vmatprep.mubr.bf16.mxu0 0
    %8211 = vmatmul.mubr.bf16.gmra.mxu0 %v8080
    %v8212 = vpop.f32.mrf.mxu0
    %v8213 = vadd.f32 %v8105, %v8212
    %v8214 = vpop.f32.mrf.mxu0
    %v8215 = vpop.f32.mrf.mxu0
    %v8216 = vadd.f32 %v8105, %v8215
    %v8217 = vpop.f32.mrf.mxu0
    %8218 = vmatprep.mubr.bf16.mxu0 0
    %8219 = vmatmul.mubr.bf16.gmra.mxu0 %v8081
    %v8220 = vpop.f32.mrf.mxu0
    %v8221 = vadd.f32 %v8105, %v8220
    %v8222 = vpop.f32.mrf.mxu0
    %v8223 = vpop.f32.mrf.mxu0
    %v8224 = vadd.f32 %v8105, %v8223
    %v8225 = vpop.f32.mrf.mxu0
    %8226 = vmatprep.mubr.bf16.mxu0 0
    %8227 = vmatmul.mubr.bf16.gmra.mxu0 %v8082
    %v8228 = vpop.f32.mrf.mxu0
    %v8229 = vadd.f32 %v8105, %v8228
    %v8230 = vpop.f32.mrf.mxu0
    %v8231 = vpop.f32.mrf.mxu0
    %v8232 = vadd.f32 %v8105, %v8231
    %v8233 = vpop.f32.mrf.mxu0
    %8234 = vmatprep.mubr.bf16.mxu0 0
    %8235 = vmatmul.mubr.bf16.gmra.mxu0 %v8083
    %v8236 = vpop.f32.mrf.mxu0
    %v8237 = vadd.f32 %v8105, %v8236
    %v8238 = vpop.f32.mrf.mxu0
    %v8239 = vpop.f32.mrf.mxu0
    %v8240 = vadd.f32 %v8105, %v8239
    %v8241 = vpop.f32.mrf.mxu0
    %8242 = vmatprep.mubr.bf16.mxu0 0
    %8243 = vmatmul.mubr.bf16.gmra.mxu0 %v8084
    %v8244 = vpop.f32.mrf.mxu0
    %v8245 = vadd.f32 %v8105, %v8244
    %v8246 = vpop.f32.mrf.mxu0
    %v8247 = vpop.f32.mrf.mxu0
    %v8248 = vadd.f32 %v8105, %v8247
    %v8249 = vpop.f32.mrf.mxu0
    %8250 = vdwg.mxu0
    %v8251 = vadd.f32 %v7519, %v8189
    %v8252 = vadd.f32 %v7520, %v8192
    %v8253 = vadd.f32 %v7521, %v8197
    %v8254 = vadd.f32 %v7522, %v8200
    %v8255 = vadd.f32 %v7523, %v8205
    %v8256 = vadd.f32 %v7524, %v8208
    %v8257 = vadd.f32 %v7525, %v8213
    %v8258 = vadd.f32 %v7526, %v8216
    %v8259 = vadd.f32 %v7527, %v8221
    %v8260 = vadd.f32 %v7528, %v8224
    %v8261 = vadd.f32 %v7529, %v8229
    %v8262 = vadd.f32 %v7530, %v8232
    %v8263 = vadd.f32 %v7531, %v8237
    %v8264 = vadd.f32 %v7532, %v8240
    %v8265 = vadd.f32 %v7533, %v8245
    %v8266 = vadd.f32 %v7534, %v8248
    %8267 = vst.msk [vmem:[%s7] sm:$0xff] %vm85, %v8251
    %8268 = vst.msk [vmem:[%s7 + $0x8] sm:$0xff] %vm85, %v8252
    %8269 = vst.msk [vmem:[%s7 + $0x10] sm:$0xff] %vm85, %v8253
    %8270 = vst.msk [vmem:[%s7 + $0x18] sm:$0xff] %vm85, %v8254
    %8271 = vst.msk [vmem:[%s7 + $0x20] sm:$0xff] %vm85, %v8255
    %8272 = vst.msk [vmem:[%s7 + $0x28] sm:$0xff] %vm85, %v8256
    %8273 = vst.msk [vmem:[%s7 + $0x30] sm:$0xff] %vm85, %v8257
    %8274 = vst.msk [vmem:[%s7 + $0x38] sm:$0xff] %vm85, %v8258
    %8275 = vst.msk [vmem:[%s7 + $0x40] sm:$0xff] %vm85, %v8259
    %8276 = vst.msk [vmem:[%s7 + $0x48] sm:$0xff] %vm85, %v8260
    %8277 = vst.msk [vmem:[%s7 + $0x50] sm:$0xff] %vm85, %v8261
    %8278 = vst.msk [vmem:[%s7 + $0x58] sm:$0xff] %vm85, %v8262
    %8279 = vst.msk [vmem:[%s7 + $0x60] sm:$0xff] %vm85, %v8263
    %8280 = vst.msk [vmem:[%s7 + $0x68] sm:$0xff] %vm85, %v8264
    %8281 = vst.msk [vmem:[%s7 + $0x70] sm:$0xff] %vm85, %v8265
    %8282 = vst.msk [vmem:[%s7 + $0x78] sm:$0xff] %vm85, %v8266
    // Predicated region
    $region42: #{forward.1} parent=1 // pred_check
      _
    $region43: #{forward.1} parent=1 // pred_check_branch
      %8284 = sbr.rel (0) target = $region45
    $region44: #{forward.1} parent=1 // pred_region
      _
    $region45: #{forward.1} parent=1 // pred_fallthru
      _
    // Predicated region
    $region46: #{forward.1} parent=1 // pred_check
      _
    $region47: #{forward.1} parent=1 // pred_check_branch
      %8286 = sbr.rel (0) target = $region49
    $region48: #{forward.1} parent=1 // pred_region
      _
    $region49: #{forward.1} parent=1 // pred_fallthru
      _
    %8287 = vsyncpa [#allocation3], 1
    %8288 = vsyncpa [#allocation5], 1

</llo_original>
